<compile_context>
chip_gen: v6e
topology: v6e:2x2x1
jax: 0.10.0
libtpu: 0.0.40
codegen_flags: <defaults>
</compile_context>

<pallas_src>
import numpy as np

import jax
import jax.numpy as jnp
from jax import lax
from jax.experimental import pallas as pl
from jax.experimental.pallas import tpu as pltpu

# Set to jnp.bfloat16 on v6e/v7x for higher MXU throughput at large batch.
MATMUL_DTYPE = jnp.float32


# ------------------------------ fused kernel --------------------------------

def _smallcnn_kernel(x_ref, t1_ref, b1_ref, t2_ref, b2_ref,
                     wf1_ref, bf1_ref, wf2_ref, bf2_ref, out_ref):
    """Whole SmallCNN forward for one sample; everything stays in VMEM."""
    cdt = t1_ref.dtype

    # ---- conv1 (5x5, 1->20) + bias + ReLU + 2x2 maxpool ---------------------
    # Input rows are pre-grouped by (h mod 4); conv1 output is produced in 4
    # row groups (h1 mod 4) and its columns are ordered (w1%2, w1//2, oc) so
    # both pooling directions reduce to aligned elementwise max's.
    b1 = b1_ref[...]                                              # (1, 512) f32
    wpool1 = []
    for r in range(4):                                            # h1 mod 4
        acc = None
        for kh in range(5):
            g, off = (r + kh) % 4, (r + kh) // 4
            start = 7 * g + off
            rows = x_ref[0, start:start + 6, :].astype(cdt)       # (6, 28)
            part = jnp.dot(rows, t1_ref[kh],
                           preferred_element_type=jnp.float32)    # (6, 512)
            acc = part if acc is None else acc + part
        a = jnp.maximum(acc + b1, 0.0)
        wpool1.append(jnp.maximum(a[:, :256], a[:, 256:]))        # (6, 256)
    p1_even = jnp.maximum(wpool1[0], wpool1[1]).astype(cdt)       # pool1 rows 0,2,..,10
    p1_odd = jnp.maximum(wpool1[2], wpool1[3]).astype(cdt)        # pool1 rows 1,3,..,11
    p1 = (p1_even, p1_odd)

    # ---- conv2 (5x5, 20->50) + bias + ReLU + 2x2 maxpool --------------------
    b2 = b2_ref[...]                                              # (1, 512) f32
    halves = []
    for hpar in range(2):                                         # conv2 row parity
        acc = None
        for kh in range(5):
            par, off = (kh + hpar) % 2, (kh + hpar) // 2
            src = p1[par][off:off + 4, :]                         # (4, 256)
            part = jnp.dot(src, t2_ref[kh],
                           preferred_element_type=jnp.float32)    # (4, 512)
            acc = part if acc is None else acc + part
        a = jnp.maximum(acc + b2, 0.0)
        halves.append(jnp.maximum(a[:, :256], a[:, 256:]))        # (4, 256)
    p2 = jnp.maximum(halves[0], halves[1]).astype(cdt)            # (4, 256)

    # ---- fc1 (800 -> 500) + ReLU --------------------------------------------
    acc = None
    for i2 in range(4):                                           # pooled H index
        part = jnp.dot(p2[i2:i2 + 1, :], wf1_ref[i2],
                       preferred_element_type=jnp.float32)        # (1, 512)
        acc = part if acc is None else acc + part
    h = jnp.maximum(acc + bf1_ref[...], 0.0).astype(cdt)          # (1, 512)

    # ---- fc2 (500 -> 10) + log_softmax (pad lanes carry -1e30 bias) ---------
    z = jnp.dot(h, wf2_ref[...],
                preferred_element_type=jnp.float32) + bf2_ref[...]  # (1, 128)
    m = jnp.max(z, axis=-1, keepdims=True)
    e = jnp.exp(z - m)
    out_ref[0] = (z - m) - jnp.log(jnp.sum(e, axis=-1, keepdims=True))


# --------------------------- host-side weight packing -----------------------

def pack_params(params, dtype=MATMUL_DTYPE):
    """One-time repack of PyTorch-layout weights into MXU/Toeplitz matrices."""
    w1 = np.asarray(params["conv1_w"], np.float32)     # (20, 1, 5, 5)
    b1 = np.asarray(params["conv1_b"], np.float32)     # (20,)
    w2 = np.asarray(params["conv2_w"], np.float32)     # (50, 20, 5, 5)
    b2 = np.asarray(params["conv2_b"], np.float32)     # (50,)
    f1 = np.asarray(params["fc1_w"], np.float32)       # (800, 500), (c,h,w) flatten
    g1 = np.asarray(params["fc1_b"], np.float32)       # (500,)
    f2 = np.asarray(params["fc2_w"], np.float32)       # (500, 10)
    g2 = np.asarray(params["fc2_b"], np.float32)       # (10,)

    # conv1 W-Toeplitz: T1[kh][j, col] with col = (w%2)*256 + (w//2)*20 + oc
    t1 = np.zeros((5, 28, 512), np.float32)
    bb1 = np.zeros((1, 512), np.float32)
    for w in range(24):
        cb = (w % 2) * 256 + (w // 2) * 20
        bb1[0, cb:cb + 20] = b1
        for kh in range(5):
            t1[kh, w:w + 5, cb:cb + 20] = w1[:, 0, kh, :].T       # (kw, oc)

    # conv2 W-Toeplitz: rows are pool1 cols (j1*20 + c); out col =
    # (w2%2)*256 + (w2//2)*50 + oc2
    t2 = np.zeros((5, 256, 512), np.float32)
    bb2 = np.zeros((1, 512), np.float32)
    for w in range(8):
        cb = (w % 2) * 256 + (w // 2) * 50
        bb2[0, cb:cb + 50] = b2
        for kh in range(5):
            for kw in range(5):
                j1 = w + kw
                t2[kh, j1 * 20:(j1 + 1) * 20, cb:cb + 50] = w2[:, :, kh, kw].T

    # fc1: PyTorch flatten index f = oc*16 + i2*4 + j2 ; our layout is
    # (row i2, col j2*50 + oc).
    wf1 = np.zeros((4, 256, 512), np.float32)
    for i2 in range(4):
        for j2 in range(4):
            src = np.arange(50) * 16 + i2 * 4 + j2
            wf1[i2, j2 * 50:(j2 + 1) * 50, 0:500] = f1[src, :]
    bf1 = np.zeros((1, 512), np.float32)
    bf1[0, :500] = g1

    wf2 = np.zeros((512, 128), np.float32)
    wf2[:500, :10] = f2
    bf2 = np.full((1, 128), -1e30, np.float32)          # kill pad lanes in softmax
    bf2[0, :10] = g2

    cast = lambda a: jnp.asarray(a, dtype)
    return {
        "t1": cast(t1), "b1": jnp.asarray(bb1),
        "t2": cast(t2), "b2": jnp.asarray(bb2),
        "wf1": cast(wf1), "bf1": jnp.asarray(bf1),
        "wf2": cast(wf2), "bf2": jnp.asarray(bf2),
    }


# ------------------------------ forward wrapper ------------------------------

def _prep_input(x):
    """(N,1,28,28) NCHW -> (N,28,28) with rows grouped by (h mod 4)."""
    n = x.shape[0]
    x = x.reshape(n, 28, 28)
    return x.reshape(n, 7, 4, 28).transpose(0, 2, 1, 3).reshape(n, 28, 28)


@jax.jit
def small_cnn_forward(x, packed):
    n = x.shape[0]
    xr = _prep_input(x)
    out = pl.pallas_call(
        _smallcnn_kernel,
        out_shape=jax.ShapeDtypeStruct((n, 1, 128), jnp.float32),
        grid=(n,),
        in_specs=[
            pl.BlockSpec((1, 28, 28), lambda i: (i, 0, 0)),     # input sample
            pl.BlockSpec((5, 28, 512), lambda i: (0, 0, 0)),    # conv1 Toeplitz
            pl.BlockSpec((1, 512), lambda i: (0, 0)),           # conv1 bias row
            pl.BlockSpec((5, 256, 512), lambda i: (0, 0, 0)),   # conv2 Toeplitz
            pl.BlockSpec((1, 512), lambda i: (0, 0)),           # conv2 bias row
            pl.BlockSpec((4, 256, 512), lambda i: (0, 0, 0)),   # fc1 (repacked)
            pl.BlockSpec((1, 512), lambda i: (0, 0)),           # fc1 bias row
            pl.BlockSpec((512, 128), lambda i: (0, 0)),         # fc2 (padded)
            pl.BlockSpec((1, 128), lambda i: (0, 0)),           # fc2 bias row
        ],
        out_specs=pl.BlockSpec((1, 1, 128), lambda i: (i, 0, 0)),
        compiler_params=pltpu.CompilerParams(
            dimension_semantics=("parallel",)),
    )(xr, packed["t1"], packed["b1"], packed["t2"], packed["b2"],
      packed["wf1"], packed["bf1"], packed["wf2"], packed["bf2"])
    return out[:, 0, :10]


# ----------------------------- reference (pure JAX) --------------------------

def small_cnn_reference(x, params):
    dn = ("NCHW", "OIHW", "NCHW")
    hp = lax.Precision.HIGHEST
    y = lax.conv_general_dilated(x, params["conv1_w"], (1, 1), "VALID",
                                 dimension_numbers=dn, precision=hp)
    y = jax.nn.relu(y + params["conv1_b"][None, :, None, None])
    y = lax.reduce_window(y, -jnp.inf, lax.max, (1, 1, 2, 2), (1, 1, 2, 2), "VALID")
    y = lax.conv_general_dilated(y, params["conv2_w"], (1, 1), "VALID",
                                 dimension_numbers=dn, precision=hp)
    y = jax.nn.relu(y + params["conv2_b"][None, :, None, None])
    y = lax.reduce_window(y, -jnp.inf, lax.max, (1, 1, 2, 2), (1, 1, 2, 2), "VALID")
    y = y.reshape(y.shape[0], -1)
    y = jax.nn.relu(jnp.dot(y, params["fc1_w"], precision=hp) + params["fc1_b"])
    y = jnp.dot(y, params["fc2_w"], precision=hp) + params["fc2_b"]
    return jax.nn.log_softmax(y, axis=1)


# ----------------------------- params / main --------------------------------

def init_params(key, num_classes=10):
    ks = jax.random.split(key, 8)

    def u(k, shape, fan_in):
        bound = 1.0 / jnp.sqrt(jnp.float32(fan_in))
        return jax.random.uniform(k, shape, jnp.float32, -bound, bound)

    return {
        "conv1_w": u(ks[0], (20, 1, 5, 5), 1 * 5 * 5),
        "conv1_b": u(ks[1], (20,), 1 * 5 * 5),
        "conv2_w": u(ks[2], (50, 20, 5, 5), 20 * 5 * 5),
        "conv2_b": u(ks[3], (50,), 20 * 5 * 5),
        "fc1_w":   u(ks[4], (4 * 4 * 50, 500), 4 * 4 * 50),
        "fc1_b":   u(ks[5], (500,), 4 * 4 * 50),
        "fc2_w":   u(ks[6], (500, num_classes), 500),
        "fc2_b":   u(ks[7], (10,), 500),
    }


if __name__ == "__main__":
    key = jax.random.PRNGKey(0)
    pkey, xkey = jax.random.split(key)
    params = init_params(pkey, num_classes=10)
    packed = pack_params(params)                       # one-time weight repack

    # MNIST-shaped input (1x28x28 forced by fc1 = 4*4*50), batch=2.
    x = jax.random.normal(xkey, (2, 1, 28, 28), jnp.float32)

    out = jax.block_until_ready(small_cnn_forward(x, packed))
    assert out.shape == (2, 10), out.shape

    ref = jax.block_until_ready(small_cnn_reference(x, params))
    max_diff = jnp.max(jnp.abs(out - ref))
    tol = 5e-3 if MATMUL_DTYPE == jnp.float32 else 5e-2   # loosen if bf16 MXU inputs
    assert jnp.allclose(out, ref, atol=tol, rtol=tol), f"max abs diff {max_diff}"
    # log_softmax rows should exponentiate-sum to ~1
    assert jnp.allclose(jnp.sum(jnp.exp(out), axis=1), 1.0, atol=1e-3)

    print("KERNEL_OK")
</pallas_src>

<mosaic_0001>
module attributes {stable_mosaic.version = 11 : i64} {
  func.func @_smallcnn_kernel(%arg0: i32, %arg1: memref<1x28x28xf32, #tpu.memory_space<vmem>>, %arg2: memref<5x28x512xf32, #tpu.memory_space<vmem>>, %arg3: memref<1x512xf32, #tpu.memory_space<vmem>>, %arg4: memref<5x256x512xf32, #tpu.memory_space<vmem>>, %arg5: memref<1x512xf32, #tpu.memory_space<vmem>>, %arg6: memref<4x256x512xf32, #tpu.memory_space<vmem>>, %arg7: memref<1x512xf32, #tpu.memory_space<vmem>>, %arg8: memref<512x128xf32, #tpu.memory_space<vmem>>, %arg9: memref<1x128xf32, #tpu.memory_space<vmem>>, %arg10: memref<1x1x128xf32, #tpu.memory_space<vmem>>) attributes {dimension_semantics = [#tpu.dimension_semantics<parallel>], iteration_bounds = array<i64: 2>, scalar_prefetch = 0 : i64, scratch_operands = 0 : i64, tpu.core_type = #tpu.core_type<tc>, window_params = [{transform_indices = @transform_0, window_bounds = array<i64: 1, 28, 28>}, {pipeline_mode = #tpu.pipeline_mode<synchronous>, transform_indices = @transform_1, window_bounds = array<i64: 5, 28, 512>}, {pipeline_mode = #tpu.pipeline_mode<synchronous>, transform_indices = @transform_2, window_bounds = array<i64: 1, 512>}, {pipeline_mode = #tpu.pipeline_mode<synchronous>, transform_indices = @transform_3, window_bounds = array<i64: 5, 256, 512>}, {pipeline_mode = #tpu.pipeline_mode<synchronous>, transform_indices = @transform_4, window_bounds = array<i64: 1, 512>}, {pipeline_mode = #tpu.pipeline_mode<synchronous>, transform_indices = @transform_5, window_bounds = array<i64: 4, 256, 512>}, {pipeline_mode = #tpu.pipeline_mode<synchronous>, transform_indices = @transform_6, window_bounds = array<i64: 1, 512>}, {pipeline_mode = #tpu.pipeline_mode<synchronous>, transform_indices = @transform_7, window_bounds = array<i64: 512, 128>}, {pipeline_mode = #tpu.pipeline_mode<synchronous>, transform_indices = @transform_8, window_bounds = array<i64: 1, 128>}, {transform_indices = @transform_9, window_bounds = array<i64: 1, 1, 128>}]} {
    %c0 = arith.constant 0 : index
    %c0_0 = arith.constant 0 : index
    %0 = vector.load %arg3[%c0, %c0_0] : memref<1x512xf32, #tpu.memory_space<vmem>>, vector<1x512xf32>
    %c0_1 = arith.constant 0 : index
    %c0_2 = arith.constant 0 : index
    %c0_3 = arith.constant 0 : index
    %1 = vector.load %arg1[%c0_1, %c0_2, %c0_3] : memref<1x28x28xf32, #tpu.memory_space<vmem>>, vector<1x6x28xf32>
    %2 = vector.shape_cast %1 : vector<1x6x28xf32> to vector<6x28xf32>
    %c0_4 = arith.constant 0 : index
    %c0_5 = arith.constant 0 : index
    %c0_6 = arith.constant 0 : index
    %3 = vector.load %arg2[%c0_4, %c0_5, %c0_6] : memref<5x28x512xf32, #tpu.memory_space<vmem>>, vector<1x28x512xf32>
    %4 = vector.shape_cast %3 : vector<1x28x512xf32> to vector<28x512xf32>
    %cst = arith.constant dense<0.000000e+00> : vector<6x512xf32>
    %5 = tpu.matmul %2, %4, %cst {dimension_numbers = #tpu.dot_dimension_numbers<[1], [0], [0], [1], [0, 0, 1, 1], [], []>} : vector<6x28xf32>, vector<28x512xf32>, vector<6x512xf32> -> vector<6x512xf32>
    %c0_7 = arith.constant 0 : index
    %c7 = arith.constant 7 : index
    %c0_8 = arith.constant 0 : index
    %6 = vector.load %arg1[%c0_7, %c7, %c0_8] : memref<1x28x28xf32, #tpu.memory_space<vmem>>, vector<1x6x28xf32>
    %7 = vector.shape_cast %6 : vector<1x6x28xf32> to vector<6x28xf32>
    %c1 = arith.constant 1 : index
    %c0_9 = arith.constant 0 : index
    %c0_10 = arith.constant 0 : index
    %8 = vector.load %arg2[%c1, %c0_9, %c0_10] : memref<5x28x512xf32, #tpu.memory_space<vmem>>, vector<1x28x512xf32>
    %9 = vector.shape_cast %8 : vector<1x28x512xf32> to vector<28x512xf32>
    %cst_11 = arith.constant dense<0.000000e+00> : vector<6x512xf32>
    %10 = tpu.matmul %7, %9, %cst_11 {dimension_numbers = #tpu.dot_dimension_numbers<[1], [0], [0], [1], [0, 0, 1, 1], [], []>} : vector<6x28xf32>, vector<28x512xf32>, vector<6x512xf32> -> vector<6x512xf32>
    %11 = arith.addf %5, %10 : vector<6x512xf32>
    %c0_12 = arith.constant 0 : index
    %c14 = arith.constant 14 : index
    %c0_13 = arith.constant 0 : index
    %12 = vector.load %arg1[%c0_12, %c14, %c0_13] : memref<1x28x28xf32, #tpu.memory_space<vmem>>, vector<1x6x28xf32>
    %13 = vector.shape_cast %12 : vector<1x6x28xf32> to vector<6x28xf32>
    %c2 = arith.constant 2 : index
    %c0_14 = arith.constant 0 : index
    %c0_15 = arith.constant 0 : index
    %14 = vector.load %arg2[%c2, %c0_14, %c0_15] : memref<5x28x512xf32, #tpu.memory_space<vmem>>, vector<1x28x512xf32>
    %15 = vector.shape_cast %14 : vector<1x28x512xf32> to vector<28x512xf32>
    %cst_16 = arith.constant dense<0.000000e+00> : vector<6x512xf32>
    %16 = tpu.matmul %13, %15, %cst_16 {dimension_numbers = #tpu.dot_dimension_numbers<[1], [0], [0], [1], [0, 0, 1, 1], [], []>} : vector<6x28xf32>, vector<28x512xf32>, vector<6x512xf32> -> vector<6x512xf32>
    %17 = arith.addf %11, %16 : vector<6x512xf32>
    %c0_17 = arith.constant 0 : index
    %c21 = arith.constant 21 : index
    %c0_18 = arith.constant 0 : index
    %18 = vector.load %arg1[%c0_17, %c21, %c0_18] : memref<1x28x28xf32, #tpu.memory_space<vmem>>, vector<1x6x28xf32>
    %19 = vector.shape_cast %18 : vector<1x6x28xf32> to vector<6x28xf32>
    %c3 = arith.constant 3 : index
    %c0_19 = arith.constant 0 : index
    %c0_20 = arith.constant 0 : index
    %20 = vector.load %arg2[%c3, %c0_19, %c0_20] : memref<5x28x512xf32, #tpu.memory_space<vmem>>, vector<1x28x512xf32>
    %21 = vector.shape_cast %20 : vector<1x28x512xf32> to vector<28x512xf32>
    %cst_21 = arith.constant dense<0.000000e+00> : vector<6x512xf32>
    %22 = tpu.matmul %19, %21, %cst_21 {dimension_numbers = #tpu.dot_dimension_numbers<[1], [0], [0], [1], [0, 0, 1, 1], [], []>} : vector<6x28xf32>, vector<28x512xf32>, vector<6x512xf32> -> vector<6x512xf32>
    %23 = arith.addf %17, %22 : vector<6x512xf32>
    %c0_22 = arith.constant 0 : index
    %c1_23 = arith.constant 1 : index
    %c0_24 = arith.constant 0 : index
    %24 = vector.load %arg1[%c0_22, %c1_23, %c0_24] : memref<1x28x28xf32, #tpu.memory_space<vmem>>, vector<1x6x28xf32>
    %25 = vector.shape_cast %24 : vector<1x6x28xf32> to vector<6x28xf32>
    %c4 = arith.constant 4 : index
    %c0_25 = arith.constant 0 : index
    %c0_26 = arith.constant 0 : index
    %26 = vector.load %arg2[%c4, %c0_25, %c0_26] : memref<5x28x512xf32, #tpu.memory_space<vmem>>, vector<1x28x512xf32>
    %27 = vector.shape_cast %26 : vector<1x28x512xf32> to vector<28x512xf32>
    %cst_27 = arith.constant dense<0.000000e+00> : vector<6x512xf32>
    %28 = tpu.matmul %25, %27, %cst_27 {dimension_numbers = #tpu.dot_dimension_numbers<[1], [0], [0], [1], [0, 0, 1, 1], [], []>} : vector<6x28xf32>, vector<28x512xf32>, vector<6x512xf32> -> vector<6x512xf32>
    %29 = arith.addf %23, %28 : vector<6x512xf32>
    %30 = vector.broadcast %0 : vector<1x512xf32> to vector<6x512xf32>
    %31 = arith.addf %29, %30 : vector<6x512xf32>
    %cst_28 = arith.constant 0.000000e+00 : f32
    %32 = vector.broadcast %cst_28 : f32 to vector<6x512xf32>
    %33 = arith.maximumf %31, %32 : vector<6x512xf32>
    %34 = vector.extract_strided_slice %33 {offsets = [0, 0], sizes = [6, 256], strides = [1, 1]} : vector<6x512xf32> to vector<6x256xf32>
    %35 = vector.extract_strided_slice %33 {offsets = [0, 256], sizes = [6, 256], strides = [1, 1]} : vector<6x512xf32> to vector<6x256xf32>
    %36 = arith.maximumf %34, %35 : vector<6x256xf32>
    %c0_29 = arith.constant 0 : index
    %c7_30 = arith.constant 7 : index
    %c0_31 = arith.constant 0 : index
    %37 = vector.load %arg1[%c0_29, %c7_30, %c0_31] : memref<1x28x28xf32, #tpu.memory_space<vmem>>, vector<1x6x28xf32>
    %38 = vector.shape_cast %37 : vector<1x6x28xf32> to vector<6x28xf32>
    %c0_32 = arith.constant 0 : index
    %c0_33 = arith.constant 0 : index
    %c0_34 = arith.constant 0 : index
    %39 = vector.load %arg2[%c0_32, %c0_33, %c0_34] : memref<5x28x512xf32, #tpu.memory_space<vmem>>, vector<1x28x512xf32>
    %40 = vector.shape_cast %39 : vector<1x28x512xf32> to vector<28x512xf32>
    %cst_35 = arith.constant dense<0.000000e+00> : vector<6x512xf32>
    %41 = tpu.matmul %38, %40, %cst_35 {dimension_numbers = #tpu.dot_dimension_numbers<[1], [0], [0], [1], [0, 0, 1, 1], [], []>} : vector<6x28xf32>, vector<28x512xf32>, vector<6x512xf32> -> vector<6x512xf32>
    %c0_36 = arith.constant 0 : index
    %c14_37 = arith.constant 14 : index
    %c0_38 = arith.constant 0 : index
    %42 = vector.load %arg1[%c0_36, %c14_37, %c0_38] : memref<1x28x28xf32, #tpu.memory_space<vmem>>, vector<1x6x28xf32>
    %43 = vector.shape_cast %42 : vector<1x6x28xf32> to vector<6x28xf32>
    %c1_39 = arith.constant 1 : index
    %c0_40 = arith.constant 0 : index
    %c0_41 = arith.constant 0 : index
    %44 = vector.load %arg2[%c1_39, %c0_40, %c0_41] : memref<5x28x512xf32, #tpu.memory_space<vmem>>, vector<1x28x512xf32>
    %45 = vector.shape_cast %44 : vector<1x28x512xf32> to vector<28x512xf32>
    %cst_42 = arith.constant dense<0.000000e+00> : vector<6x512xf32>
    %46 = tpu.matmul %43, %45, %cst_42 {dimension_numbers = #tpu.dot_dimension_numbers<[1], [0], [0], [1], [0, 0, 1, 1], [], []>} : vector<6x28xf32>, vector<28x512xf32>, vector<6x512xf32> -> vector<6x512xf32>
    %47 = arith.addf %41, %46 : vector<6x512xf32>
    %c0_43 = arith.constant 0 : index
    %c21_44 = arith.constant 21 : index
    %c0_45 = arith.constant 0 : index
    %48 = vector.load %arg1[%c0_43, %c21_44, %c0_45] : memref<1x28x28xf32, #tpu.memory_space<vmem>>, vector<1x6x28xf32>
    %49 = vector.shape_cast %48 : vector<1x6x28xf32> to vector<6x28xf32>
    %c2_46 = arith.constant 2 : index
    %c0_47 = arith.constant 0 : index
    %c0_48 = arith.constant 0 : index
    %50 = vector.load %arg2[%c2_46, %c0_47, %c0_48] : memref<5x28x512xf32, #tpu.memory_space<vmem>>, vector<1x28x512xf32>
    %51 = vector.shape_cast %50 : vector<1x28x512xf32> to vector<28x512xf32>
    %cst_49 = arith.constant dense<0.000000e+00> : vector<6x512xf32>
    %52 = tpu.matmul %49, %51, %cst_49 {dimension_numbers = #tpu.dot_dimension_numbers<[1], [0], [0], [1], [0, 0, 1, 1], [], []>} : vector<6x28xf32>, vector<28x512xf32>, vector<6x512xf32> -> vector<6x512xf32>
    %53 = arith.addf %47, %52 : vector<6x512xf32>
    %c0_50 = arith.constant 0 : index
    %c1_51 = arith.constant 1 : index
    %c0_52 = arith.constant 0 : index
    %54 = vector.load %arg1[%c0_50, %c1_51, %c0_52] : memref<1x28x28xf32, #tpu.memory_space<vmem>>, vector<1x6x28xf32>
    %55 = vector.shape_cast %54 : vector<1x6x28xf32> to vector<6x28xf32>
    %c3_53 = arith.constant 3 : index
    %c0_54 = arith.constant 0 : index
    %c0_55 = arith.constant 0 : index
    %56 = vector.load %arg2[%c3_53, %c0_54, %c0_55] : memref<5x28x512xf32, #tpu.memory_space<vmem>>, vector<1x28x512xf32>
    %57 = vector.shape_cast %56 : vector<1x28x512xf32> to vector<28x512xf32>
    %cst_56 = arith.constant dense<0.000000e+00> : vector<6x512xf32>
    %58 = tpu.matmul %55, %57, %cst_56 {dimension_numbers = #tpu.dot_dimension_numbers<[1], [0], [0], [1], [0, 0, 1, 1], [], []>} : vector<6x28xf32>, vector<28x512xf32>, vector<6x512xf32> -> vector<6x512xf32>
    %59 = arith.addf %53, %58 : vector<6x512xf32>
    %c0_57 = arith.constant 0 : index
    %c8 = arith.constant 8 : index
    %c0_58 = arith.constant 0 : index
    %60 = vector.load %arg1[%c0_57, %c8, %c0_58] : memref<1x28x28xf32, #tpu.memory_space<vmem>>, vector<1x6x28xf32>
    %61 = vector.shape_cast %60 : vector<1x6x28xf32> to vector<6x28xf32>
    %c4_59 = arith.constant 4 : index
    %c0_60 = arith.constant 0 : index
    %c0_61 = arith.constant 0 : index
    %62 = vector.load %arg2[%c4_59, %c0_60, %c0_61] : memref<5x28x512xf32, #tpu.memory_space<vmem>>, vector<1x28x512xf32>
    %63 = vector.shape_cast %62 : vector<1x28x512xf32> to vector<28x512xf32>
    %cst_62 = arith.constant dense<0.000000e+00> : vector<6x512xf32>
    %64 = tpu.matmul %61, %63, %cst_62 {dimension_numbers = #tpu.dot_dimension_numbers<[1], [0], [0], [1], [0, 0, 1, 1], [], []>} : vector<6x28xf32>, vector<28x512xf32>, vector<6x512xf32> -> vector<6x512xf32>
    %65 = arith.addf %59, %64 : vector<6x512xf32>
    %66 = vector.broadcast %0 : vector<1x512xf32> to vector<6x512xf32>
    %67 = arith.addf %65, %66 : vector<6x512xf32>
    %cst_63 = arith.constant 0.000000e+00 : f32
    %68 = vector.broadcast %cst_63 : f32 to vector<6x512xf32>
    %69 = arith.maximumf %67, %68 : vector<6x512xf32>
    %70 = vector.extract_strided_slice %69 {offsets = [0, 0], sizes = [6, 256], strides = [1, 1]} : vector<6x512xf32> to vector<6x256xf32>
    %71 = vector.extract_strided_slice %69 {offsets = [0, 256], sizes = [6, 256], strides = [1, 1]} : vector<6x512xf32> to vector<6x256xf32>
    %72 = arith.maximumf %70, %71 : vector<6x256xf32>
    %c0_64 = arith.constant 0 : index
    %c14_65 = arith.constant 14 : index
    %c0_66 = arith.constant 0 : index
    %73 = vector.load %arg1[%c0_64, %c14_65, %c0_66] : memref<1x28x28xf32, #tpu.memory_space<vmem>>, vector<1x6x28xf32>
    %74 = vector.shape_cast %73 : vector<1x6x28xf32> to vector<6x28xf32>
    %c0_67 = arith.constant 0 : index
    %c0_68 = arith.constant 0 : index
    %c0_69 = arith.constant 0 : index
    %75 = vector.load %arg2[%c0_67, %c0_68, %c0_69] : memref<5x28x512xf32, #tpu.memory_space<vmem>>, vector<1x28x512xf32>
    %76 = vector.shape_cast %75 : vector<1x28x512xf32> to vector<28x512xf32>
    %cst_70 = arith.constant dense<0.000000e+00> : vector<6x512xf32>
    %77 = tpu.matmul %74, %76, %cst_70 {dimension_numbers = #tpu.dot_dimension_numbers<[1], [0], [0], [1], [0, 0, 1, 1], [], []>} : vector<6x28xf32>, vector<28x512xf32>, vector<6x512xf32> -> vector<6x512xf32>
    %c0_71 = arith.constant 0 : index
    %c21_72 = arith.constant 21 : index
    %c0_73 = arith.constant 0 : index
    %78 = vector.load %arg1[%c0_71, %c21_72, %c0_73] : memref<1x28x28xf32, #tpu.memory_space<vmem>>, vector<1x6x28xf32>
    %79 = vector.shape_cast %78 : vector<1x6x28xf32> to vector<6x28xf32>
    %c1_74 = arith.constant 1 : index
    %c0_75 = arith.constant 0 : index
    %c0_76 = arith.constant 0 : index
    %80 = vector.load %arg2[%c1_74, %c0_75, %c0_76] : memref<5x28x512xf32, #tpu.memory_space<vmem>>, vector<1x28x512xf32>
    %81 = vector.shape_cast %80 : vector<1x28x512xf32> to vector<28x512xf32>
    %cst_77 = arith.constant dense<0.000000e+00> : vector<6x512xf32>
    %82 = tpu.matmul %79, %81, %cst_77 {dimension_numbers = #tpu.dot_dimension_numbers<[1], [0], [0], [1], [0, 0, 1, 1], [], []>} : vector<6x28xf32>, vector<28x512xf32>, vector<6x512xf32> -> vector<6x512xf32>
    %83 = arith.addf %77, %82 : vector<6x512xf32>
    %c0_78 = arith.constant 0 : index
    %c1_79 = arith.constant 1 : index
    %c0_80 = arith.constant 0 : index
    %84 = vector.load %arg1[%c0_78, %c1_79, %c0_80] : memref<1x28x28xf32, #tpu.memory_space<vmem>>, vector<1x6x28xf32>
    %85 = vector.shape_cast %84 : vector<1x6x28xf32> to vector<6x28xf32>
    %c2_81 = arith.constant 2 : index
    %c0_82 = arith.constant 0 : index
    %c0_83 = arith.constant 0 : index
    %86 = vector.load %arg2[%c2_81, %c0_82, %c0_83] : memref<5x28x512xf32, #tpu.memory_space<vmem>>, vector<1x28x512xf32>
    %87 = vector.shape_cast %86 : vector<1x28x512xf32> to vector<28x512xf32>
    %cst_84 = arith.constant dense<0.000000e+00> : vector<6x512xf32>
    %88 = tpu.matmul %85, %87, %cst_84 {dimension_numbers = #tpu.dot_dimension_numbers<[1], [0], [0], [1], [0, 0, 1, 1], [], []>} : vector<6x28xf32>, vector<28x512xf32>, vector<6x512xf32> -> vector<6x512xf32>
    %89 = arith.addf %83, %88 : vector<6x512xf32>
    %c0_85 = arith.constant 0 : index
    %c8_86 = arith.constant 8 : index
    %c0_87 = arith.constant 0 : index
    %90 = vector.load %arg1[%c0_85, %c8_86, %c0_87] : memref<1x28x28xf32, #tpu.memory_space<vmem>>, vector<1x6x28xf32>
    %91 = vector.shape_cast %90 : vector<1x6x28xf32> to vector<6x28xf32>
    %c3_88 = arith.constant 3 : index
    %c0_89 = arith.constant 0 : index
    %c0_90 = arith.constant 0 : index
    %92 = vector.load %arg2[%c3_88, %c0_89, %c0_90] : memref<5x28x512xf32, #tpu.memory_space<vmem>>, vector<1x28x512xf32>
    %93 = vector.shape_cast %92 : vector<1x28x512xf32> to vector<28x512xf32>
    %cst_91 = arith.constant dense<0.000000e+00> : vector<6x512xf32>
    %94 = tpu.matmul %91, %93, %cst_91 {dimension_numbers = #tpu.dot_dimension_numbers<[1], [0], [0], [1], [0, 0, 1, 1], [], []>} : vector<6x28xf32>, vector<28x512xf32>, vector<6x512xf32> -> vector<6x512xf32>
    %95 = arith.addf %89, %94 : vector<6x512xf32>
    %c0_92 = arith.constant 0 : index
    %c15 = arith.constant 15 : index
    %c0_93 = arith.constant 0 : index
    %96 = vector.load %arg1[%c0_92, %c15, %c0_93] : memref<1x28x28xf32, #tpu.memory_space<vmem>>, vector<1x6x28xf32>
    %97 = vector.shape_cast %96 : vector<1x6x28xf32> to vector<6x28xf32>
    %c4_94 = arith.constant 4 : index
    %c0_95 = arith.constant 0 : index
    %c0_96 = arith.constant 0 : index
    %98 = vector.load %arg2[%c4_94, %c0_95, %c0_96] : memref<5x28x512xf32, #tpu.memory_space<vmem>>, vector<1x28x512xf32>
    %99 = vector.shape_cast %98 : vector<1x28x512xf32> to vector<28x512xf32>
    %cst_97 = arith.constant dense<0.000000e+00> : vector<6x512xf32>
    %100 = tpu.matmul %97, %99, %cst_97 {dimension_numbers = #tpu.dot_dimension_numbers<[1], [0], [0], [1], [0, 0, 1, 1], [], []>} : vector<6x28xf32>, vector<28x512xf32>, vector<6x512xf32> -> vector<6x512xf32>
    %101 = arith.addf %95, %100 : vector<6x512xf32>
    %102 = vector.broadcast %0 : vector<1x512xf32> to vector<6x512xf32>
    %103 = arith.addf %101, %102 : vector<6x512xf32>
    %cst_98 = arith.constant 0.000000e+00 : f32
    %104 = vector.broadcast %cst_98 : f32 to vector<6x512xf32>
    %105 = arith.maximumf %103, %104 : vector<6x512xf32>
    %106 = vector.extract_strided_slice %105 {offsets = [0, 0], sizes = [6, 256], strides = [1, 1]} : vector<6x512xf32> to vector<6x256xf32>
    %107 = vector.extract_strided_slice %105 {offsets = [0, 256], sizes = [6, 256], strides = [1, 1]} : vector<6x512xf32> to vector<6x256xf32>
    %108 = arith.maximumf %106, %107 : vector<6x256xf32>
    %c0_99 = arith.constant 0 : index
    %c21_100 = arith.constant 21 : index
    %c0_101 = arith.constant 0 : index
    %109 = vector.load %arg1[%c0_99, %c21_100, %c0_101] : memref<1x28x28xf32, #tpu.memory_space<vmem>>, vector<1x6x28xf32>
    %110 = vector.shape_cast %109 : vector<1x6x28xf32> to vector<6x28xf32>
    %c0_102 = arith.constant 0 : index
    %c0_103 = arith.constant 0 : index
    %c0_104 = arith.constant 0 : index
    %111 = vector.load %arg2[%c0_102, %c0_103, %c0_104] : memref<5x28x512xf32, #tpu.memory_space<vmem>>, vector<1x28x512xf32>
    %112 = vector.shape_cast %111 : vector<1x28x512xf32> to vector<28x512xf32>
    %cst_105 = arith.constant dense<0.000000e+00> : vector<6x512xf32>
    %113 = tpu.matmul %110, %112, %cst_105 {dimension_numbers = #tpu.dot_dimension_numbers<[1], [0], [0], [1], [0, 0, 1, 1], [], []>} : vector<6x28xf32>, vector<28x512xf32>, vector<6x512xf32> -> vector<6x512xf32>
    %c0_106 = arith.constant 0 : index
    %c1_107 = arith.constant 1 : index
    %c0_108 = arith.constant 0 : index
    %114 = vector.load %arg1[%c0_106, %c1_107, %c0_108] : memref<1x28x28xf32, #tpu.memory_space<vmem>>, vector<1x6x28xf32>
    %115 = vector.shape_cast %114 : vector<1x6x28xf32> to vector<6x28xf32>
    %c1_109 = arith.constant 1 : index
    %c0_110 = arith.constant 0 : index
    %c0_111 = arith.constant 0 : index
    %116 = vector.load %arg2[%c1_109, %c0_110, %c0_111] : memref<5x28x512xf32, #tpu.memory_space<vmem>>, vector<1x28x512xf32>
    %117 = vector.shape_cast %116 : vector<1x28x512xf32> to vector<28x512xf32>
    %cst_112 = arith.constant dense<0.000000e+00> : vector<6x512xf32>
    %118 = tpu.matmul %115, %117, %cst_112 {dimension_numbers = #tpu.dot_dimension_numbers<[1], [0], [0], [1], [0, 0, 1, 1], [], []>} : vector<6x28xf32>, vector<28x512xf32>, vector<6x512xf32> -> vector<6x512xf32>
    %119 = arith.addf %113, %118 : vector<6x512xf32>
    %c0_113 = arith.constant 0 : index
    %c8_114 = arith.constant 8 : index
    %c0_115 = arith.constant 0 : index
    %120 = vector.load %arg1[%c0_113, %c8_114, %c0_115] : memref<1x28x28xf32, #tpu.memory_space<vmem>>, vector<1x6x28xf32>
    %121 = vector.shape_cast %120 : vector<1x6x28xf32> to vector<6x28xf32>
    %c2_116 = arith.constant 2 : index
    %c0_117 = arith.constant 0 : index
    %c0_118 = arith.constant 0 : index
    %122 = vector.load %arg2[%c2_116, %c0_117, %c0_118] : memref<5x28x512xf32, #tpu.memory_space<vmem>>, vector<1x28x512xf32>
    %123 = vector.shape_cast %122 : vector<1x28x512xf32> to vector<28x512xf32>
    %cst_119 = arith.constant dense<0.000000e+00> : vector<6x512xf32>
    %124 = tpu.matmul %121, %123, %cst_119 {dimension_numbers = #tpu.dot_dimension_numbers<[1], [0], [0], [1], [0, 0, 1, 1], [], []>} : vector<6x28xf32>, vector<28x512xf32>, vector<6x512xf32> -> vector<6x512xf32>
    %125 = arith.addf %119, %124 : vector<6x512xf32>
    %c0_120 = arith.constant 0 : index
    %c15_121 = arith.constant 15 : index
    %c0_122 = arith.constant 0 : index
    %126 = vector.load %arg1[%c0_120, %c15_121, %c0_122] : memref<1x28x28xf32, #tpu.memory_space<vmem>>, vector<1x6x28xf32>
    %127 = vector.shape_cast %126 : vector<1x6x28xf32> to vector<6x28xf32>
    %c3_123 = arith.constant 3 : index
    %c0_124 = arith.constant 0 : index
    %c0_125 = arith.constant 0 : index
    %128 = vector.load %arg2[%c3_123, %c0_124, %c0_125] : memref<5x28x512xf32, #tpu.memory_space<vmem>>, vector<1x28x512xf32>
    %129 = vector.shape_cast %128 : vector<1x28x512xf32> to vector<28x512xf32>
    %cst_126 = arith.constant dense<0.000000e+00> : vector<6x512xf32>
    %130 = tpu.matmul %127, %129, %cst_126 {dimension_numbers = #tpu.dot_dimension_numbers<[1], [0], [0], [1], [0, 0, 1, 1], [], []>} : vector<6x28xf32>, vector<28x512xf32>, vector<6x512xf32> -> vector<6x512xf32>
    %131 = arith.addf %125, %130 : vector<6x512xf32>
    %c0_127 = arith.constant 0 : index
    %c22 = arith.constant 22 : index
    %c0_128 = arith.constant 0 : index
    %132 = vector.load %arg1[%c0_127, %c22, %c0_128] : memref<1x28x28xf32, #tpu.memory_space<vmem>>, vector<1x6x28xf32>
    %133 = vector.shape_cast %132 : vector<1x6x28xf32> to vector<6x28xf32>
    %c4_129 = arith.constant 4 : index
    %c0_130 = arith.constant 0 : index
    %c0_131 = arith.constant 0 : index
    %134 = vector.load %arg2[%c4_129, %c0_130, %c0_131] : memref<5x28x512xf32, #tpu.memory_space<vmem>>, vector<1x28x512xf32>
    %135 = vector.shape_cast %134 : vector<1x28x512xf32> to vector<28x512xf32>
    %cst_132 = arith.constant dense<0.000000e+00> : vector<6x512xf32>
    %136 = tpu.matmul %133, %135, %cst_132 {dimension_numbers = #tpu.dot_dimension_numbers<[1], [0], [0], [1], [0, 0, 1, 1], [], []>} : vector<6x28xf32>, vector<28x512xf32>, vector<6x512xf32> -> vector<6x512xf32>
    %137 = arith.addf %131, %136 : vector<6x512xf32>
    %138 = vector.broadcast %0 : vector<1x512xf32> to vector<6x512xf32>
    %139 = arith.addf %137, %138 : vector<6x512xf32>
    %cst_133 = arith.constant 0.000000e+00 : f32
    %140 = vector.broadcast %cst_133 : f32 to vector<6x512xf32>
    %141 = arith.maximumf %139, %140 : vector<6x512xf32>
    %142 = vector.extract_strided_slice %141 {offsets = [0, 0], sizes = [6, 256], strides = [1, 1]} : vector<6x512xf32> to vector<6x256xf32>
    %143 = vector.extract_strided_slice %141 {offsets = [0, 256], sizes = [6, 256], strides = [1, 1]} : vector<6x512xf32> to vector<6x256xf32>
    %144 = arith.maximumf %142, %143 : vector<6x256xf32>
    %145 = arith.maximumf %36, %72 : vector<6x256xf32>
    %146 = arith.maximumf %108, %144 : vector<6x256xf32>
    %c0_134 = arith.constant 0 : index
    %c0_135 = arith.constant 0 : index
    %147 = vector.load %arg5[%c0_134, %c0_135] : memref<1x512xf32, #tpu.memory_space<vmem>>, vector<1x512xf32>
    %148 = vector.extract_strided_slice %145 {offsets = [0, 0], sizes = [4, 256], strides = [1, 1]} : vector<6x256xf32> to vector<4x256xf32>
    %c0_136 = arith.constant 0 : index
    %c0_137 = arith.constant 0 : index
    %c0_138 = arith.constant 0 : index
    %149 = vector.load %arg4[%c0_136, %c0_137, %c0_138] : memref<5x256x512xf32, #tpu.memory_space<vmem>>, vector<1x256x512xf32>
    %150 = vector.shape_cast %149 : vector<1x256x512xf32> to vector<256x512xf32>
    %cst_139 = arith.constant dense<0.000000e+00> : vector<4x512xf32>
    %151 = tpu.matmul %148, %150, %cst_139 {dimension_numbers = #tpu.dot_dimension_numbers<[1], [0], [0], [1], [0, 0, 1, 1], [], []>} : vector<4x256xf32>, vector<256x512xf32>, vector<4x512xf32> -> vector<4x512xf32>
    %152 = vector.extract_strided_slice %146 {offsets = [0, 0], sizes = [4, 256], strides = [1, 1]} : vector<6x256xf32> to vector<4x256xf32>
    %c1_140 = arith.constant 1 : index
    %c0_141 = arith.constant 0 : index
    %c0_142 = arith.constant 0 : index
    %153 = vector.load %arg4[%c1_140, %c0_141, %c0_142] : memref<5x256x512xf32, #tpu.memory_space<vmem>>, vector<1x256x512xf32>
    %154 = vector.shape_cast %153 : vector<1x256x512xf32> to vector<256x512xf32>
    %cst_143 = arith.constant dense<0.000000e+00> : vector<4x512xf32>
    %155 = tpu.matmul %152, %154, %cst_143 {dimension_numbers = #tpu.dot_dimension_numbers<[1], [0], [0], [1], [0, 0, 1, 1], [], []>} : vector<4x256xf32>, vector<256x512xf32>, vector<4x512xf32> -> vector<4x512xf32>
    %156 = arith.addf %151, %155 : vector<4x512xf32>
    %157 = vector.extract_strided_slice %145 {offsets = [1, 0], sizes = [4, 256], strides = [1, 1]} : vector<6x256xf32> to vector<4x256xf32>
    %c2_144 = arith.constant 2 : index
    %c0_145 = arith.constant 0 : index
    %c0_146 = arith.constant 0 : index
    %158 = vector.load %arg4[%c2_144, %c0_145, %c0_146] : memref<5x256x512xf32, #tpu.memory_space<vmem>>, vector<1x256x512xf32>
    %159 = vector.shape_cast %158 : vector<1x256x512xf32> to vector<256x512xf32>
    %cst_147 = arith.constant dense<0.000000e+00> : vector<4x512xf32>
    %160 = tpu.matmul %157, %159, %cst_147 {dimension_numbers = #tpu.dot_dimension_numbers<[1], [0], [0], [1], [0, 0, 1, 1], [], []>} : vector<4x256xf32>, vector<256x512xf32>, vector<4x512xf32> -> vector<4x512xf32>
    %161 = arith.addf %156, %160 : vector<4x512xf32>
    %162 = vector.extract_strided_slice %146 {offsets = [1, 0], sizes = [4, 256], strides = [1, 1]} : vector<6x256xf32> to vector<4x256xf32>
    %c3_148 = arith.constant 3 : index
    %c0_149 = arith.constant 0 : index
    %c0_150 = arith.constant 0 : index
    %163 = vector.load %arg4[%c3_148, %c0_149, %c0_150] : memref<5x256x512xf32, #tpu.memory_space<vmem>>, vector<1x256x512xf32>
    %164 = vector.shape_cast %163 : vector<1x256x512xf32> to vector<256x512xf32>
    %cst_151 = arith.constant dense<0.000000e+00> : vector<4x512xf32>
    %165 = tpu.matmul %162, %164, %cst_151 {dimension_numbers = #tpu.dot_dimension_numbers<[1], [0], [0], [1], [0, 0, 1, 1], [], []>} : vector<4x256xf32>, vector<256x512xf32>, vector<4x512xf32> -> vector<4x512xf32>
    %166 = arith.addf %161, %165 : vector<4x512xf32>
    %167 = vector.extract_strided_slice %145 {offsets = [2, 0], sizes = [4, 256], strides = [1, 1]} : vector<6x256xf32> to vector<4x256xf32>
    %c4_152 = arith.constant 4 : index
    %c0_153 = arith.constant 0 : index
    %c0_154 = arith.constant 0 : index
    %168 = vector.load %arg4[%c4_152, %c0_153, %c0_154] : memref<5x256x512xf32, #tpu.memory_space<vmem>>, vector<1x256x512xf32>
    %169 = vector.shape_cast %168 : vector<1x256x512xf32> to vector<256x512xf32>
    %cst_155 = arith.constant dense<0.000000e+00> : vector<4x512xf32>
    %170 = tpu.matmul %167, %169, %cst_155 {dimension_numbers = #tpu.dot_dimension_numbers<[1], [0], [0], [1], [0, 0, 1, 1], [], []>} : vector<4x256xf32>, vector<256x512xf32>, vector<4x512xf32> -> vector<4x512xf32>
    %171 = arith.addf %166, %170 : vector<4x512xf32>
    %172 = vector.broadcast %147 : vector<1x512xf32> to vector<4x512xf32>
    %173 = arith.addf %171, %172 : vector<4x512xf32>
    %cst_156 = arith.constant 0.000000e+00 : f32
    %174 = vector.broadcast %cst_156 : f32 to vector<4x512xf32>
    %175 = arith.maximumf %173, %174 : vector<4x512xf32>
    %176 = vector.extract_strided_slice %175 {offsets = [0, 0], sizes = [4, 256], strides = [1, 1]} : vector<4x512xf32> to vector<4x256xf32>
    %177 = vector.extract_strided_slice %175 {offsets = [0, 256], sizes = [4, 256], strides = [1, 1]} : vector<4x512xf32> to vector<4x256xf32>
    %178 = arith.maximumf %176, %177 : vector<4x256xf32>
    %179 = vector.extract_strided_slice %146 {offsets = [0, 0], sizes = [4, 256], strides = [1, 1]} : vector<6x256xf32> to vector<4x256xf32>
    %c0_157 = arith.constant 0 : index
    %c0_158 = arith.constant 0 : index
    %c0_159 = arith.constant 0 : index
    %180 = vector.load %arg4[%c0_157, %c0_158, %c0_159] : memref<5x256x512xf32, #tpu.memory_space<vmem>>, vector<1x256x512xf32>
    %181 = vector.shape_cast %180 : vector<1x256x512xf32> to vector<256x512xf32>
    %cst_160 = arith.constant dense<0.000000e+00> : vector<4x512xf32>
    %182 = tpu.matmul %179, %181, %cst_160 {dimension_numbers = #tpu.dot_dimension_numbers<[1], [0], [0], [1], [0, 0, 1, 1], [], []>} : vector<4x256xf32>, vector<256x512xf32>, vector<4x512xf32> -> vector<4x512xf32>
    %183 = vector.extract_strided_slice %145 {offsets = [1, 0], sizes = [4, 256], strides = [1, 1]} : vector<6x256xf32> to vector<4x256xf32>
    %c1_161 = arith.constant 1 : index
    %c0_162 = arith.constant 0 : index
    %c0_163 = arith.constant 0 : index
    %184 = vector.load %arg4[%c1_161, %c0_162, %c0_163] : memref<5x256x512xf32, #tpu.memory_space<vmem>>, vector<1x256x512xf32>
    %185 = vector.shape_cast %184 : vector<1x256x512xf32> to vector<256x512xf32>
    %cst_164 = arith.constant dense<0.000000e+00> : vector<4x512xf32>
    %186 = tpu.matmul %183, %185, %cst_164 {dimension_numbers = #tpu.dot_dimension_numbers<[1], [0], [0], [1], [0, 0, 1, 1], [], []>} : vector<4x256xf32>, vector<256x512xf32>, vector<4x512xf32> -> vector<4x512xf32>
    %187 = arith.addf %182, %186 : vector<4x512xf32>
    %188 = vector.extract_strided_slice %146 {offsets = [1, 0], sizes = [4, 256], strides = [1, 1]} : vector<6x256xf32> to vector<4x256xf32>
    %c2_165 = arith.constant 2 : index
    %c0_166 = arith.constant 0 : index
    %c0_167 = arith.constant 0 : index
    %189 = vector.load %arg4[%c2_165, %c0_166, %c0_167] : memref<5x256x512xf32, #tpu.memory_space<vmem>>, vector<1x256x512xf32>
    %190 = vector.shape_cast %189 : vector<1x256x512xf32> to vector<256x512xf32>
    %cst_168 = arith.constant dense<0.000000e+00> : vector<4x512xf32>
    %191 = tpu.matmul %188, %190, %cst_168 {dimension_numbers = #tpu.dot_dimension_numbers<[1], [0], [0], [1], [0, 0, 1, 1], [], []>} : vector<4x256xf32>, vector<256x512xf32>, vector<4x512xf32> -> vector<4x512xf32>
    %192 = arith.addf %187, %191 : vector<4x512xf32>
    %193 = vector.extract_strided_slice %145 {offsets = [2, 0], sizes = [4, 256], strides = [1, 1]} : vector<6x256xf32> to vector<4x256xf32>
    %c3_169 = arith.constant 3 : index
    %c0_170 = arith.constant 0 : index
    %c0_171 = arith.constant 0 : index
    %194 = vector.load %arg4[%c3_169, %c0_170, %c0_171] : memref<5x256x512xf32, #tpu.memory_space<vmem>>, vector<1x256x512xf32>
    %195 = vector.shape_cast %194 : vector<1x256x512xf32> to vector<256x512xf32>
    %cst_172 = arith.constant dense<0.000000e+00> : vector<4x512xf32>
    %196 = tpu.matmul %193, %195, %cst_172 {dimension_numbers = #tpu.dot_dimension_numbers<[1], [0], [0], [1], [0, 0, 1, 1], [], []>} : vector<4x256xf32>, vector<256x512xf32>, vector<4x512xf32> -> vector<4x512xf32>
    %197 = arith.addf %192, %196 : vector<4x512xf32>
    %198 = vector.extract_strided_slice %146 {offsets = [2, 0], sizes = [4, 256], strides = [1, 1]} : vector<6x256xf32> to vector<4x256xf32>
    %c4_173 = arith.constant 4 : index
    %c0_174 = arith.constant 0 : index
    %c0_175 = arith.constant 0 : index
    %199 = vector.load %arg4[%c4_173, %c0_174, %c0_175] : memref<5x256x512xf32, #tpu.memory_space<vmem>>, vector<1x256x512xf32>
    %200 = vector.shape_cast %199 : vector<1x256x512xf32> to vector<256x512xf32>
    %cst_176 = arith.constant dense<0.000000e+00> : vector<4x512xf32>
    %201 = tpu.matmul %198, %200, %cst_176 {dimension_numbers = #tpu.dot_dimension_numbers<[1], [0], [0], [1], [0, 0, 1, 1], [], []>} : vector<4x256xf32>, vector<256x512xf32>, vector<4x512xf32> -> vector<4x512xf32>
    %202 = arith.addf %197, %201 : vector<4x512xf32>
    %203 = vector.broadcast %147 : vector<1x512xf32> to vector<4x512xf32>
    %204 = arith.addf %202, %203 : vector<4x512xf32>
    %cst_177 = arith.constant 0.000000e+00 : f32
    %205 = vector.broadcast %cst_177 : f32 to vector<4x512xf32>
    %206 = arith.maximumf %204, %205 : vector<4x512xf32>
    %207 = vector.extract_strided_slice %206 {offsets = [0, 0], sizes = [4, 256], strides = [1, 1]} : vector<4x512xf32> to vector<4x256xf32>
    %208 = vector.extract_strided_slice %206 {offsets = [0, 256], sizes = [4, 256], strides = [1, 1]} : vector<4x512xf32> to vector<4x256xf32>
    %209 = arith.maximumf %207, %208 : vector<4x256xf32>
    %210 = arith.maximumf %178, %209 : vector<4x256xf32>
    %211 = vector.extract_strided_slice %210 {offsets = [0, 0], sizes = [1, 256], strides = [1, 1]} : vector<4x256xf32> to vector<1x256xf32>
    %c0_178 = arith.constant 0 : index
    %c0_179 = arith.constant 0 : index
    %c0_180 = arith.constant 0 : index
    %212 = vector.load %arg6[%c0_178, %c0_179, %c0_180] : memref<4x256x512xf32, #tpu.memory_space<vmem>>, vector<1x256x512xf32>
    %213 = vector.shape_cast %212 : vector<1x256x512xf32> to vector<256x512xf32>
    %cst_181 = arith.constant dense<0.000000e+00> : vector<1x512xf32>
    %214 = tpu.matmul %211, %213, %cst_181 {dimension_numbers = #tpu.dot_dimension_numbers<[1], [0], [0], [1], [0, 0, 1, 1], [], []>} : vector<1x256xf32>, vector<256x512xf32>, vector<1x512xf32> -> vector<1x512xf32>
    %215 = vector.extract_strided_slice %210 {offsets = [1, 0], sizes = [1, 256], strides = [1, 1]} : vector<4x256xf32> to vector<1x256xf32>
    %c1_182 = arith.constant 1 : index
    %c0_183 = arith.constant 0 : index
    %c0_184 = arith.constant 0 : index
    %216 = vector.load %arg6[%c1_182, %c0_183, %c0_184] : memref<4x256x512xf32, #tpu.memory_space<vmem>>, vector<1x256x512xf32>
    %217 = vector.shape_cast %216 : vector<1x256x512xf32> to vector<256x512xf32>
    %cst_185 = arith.constant dense<0.000000e+00> : vector<1x512xf32>
    %218 = tpu.matmul %215, %217, %cst_185 {dimension_numbers = #tpu.dot_dimension_numbers<[1], [0], [0], [1], [0, 0, 1, 1], [], []>} : vector<1x256xf32>, vector<256x512xf32>, vector<1x512xf32> -> vector<1x512xf32>
    %219 = arith.addf %214, %218 : vector<1x512xf32>
    %220 = vector.extract_strided_slice %210 {offsets = [2, 0], sizes = [1, 256], strides = [1, 1]} : vector<4x256xf32> to vector<1x256xf32>
    %c2_186 = arith.constant 2 : index
    %c0_187 = arith.constant 0 : index
    %c0_188 = arith.constant 0 : index
    %221 = vector.load %arg6[%c2_186, %c0_187, %c0_188] : memref<4x256x512xf32, #tpu.memory_space<vmem>>, vector<1x256x512xf32>
    %222 = vector.shape_cast %221 : vector<1x256x512xf32> to vector<256x512xf32>
    %cst_189 = arith.constant dense<0.000000e+00> : vector<1x512xf32>
    %223 = tpu.matmul %220, %222, %cst_189 {dimension_numbers = #tpu.dot_dimension_numbers<[1], [0], [0], [1], [0, 0, 1, 1], [], []>} : vector<1x256xf32>, vector<256x512xf32>, vector<1x512xf32> -> vector<1x512xf32>
    %224 = arith.addf %219, %223 : vector<1x512xf32>
    %225 = vector.extract_strided_slice %210 {offsets = [3, 0], sizes = [1, 256], strides = [1, 1]} : vector<4x256xf32> to vector<1x256xf32>
    %c3_190 = arith.constant 3 : index
    %c0_191 = arith.constant 0 : index
    %c0_192 = arith.constant 0 : index
    %226 = vector.load %arg6[%c3_190, %c0_191, %c0_192] : memref<4x256x512xf32, #tpu.memory_space<vmem>>, vector<1x256x512xf32>
    %227 = vector.shape_cast %226 : vector<1x256x512xf32> to vector<256x512xf32>
    %cst_193 = arith.constant dense<0.000000e+00> : vector<1x512xf32>
    %228 = tpu.matmul %225, %227, %cst_193 {dimension_numbers = #tpu.dot_dimension_numbers<[1], [0], [0], [1], [0, 0, 1, 1], [], []>} : vector<1x256xf32>, vector<256x512xf32>, vector<1x512xf32> -> vector<1x512xf32>
    %229 = arith.addf %224, %228 : vector<1x512xf32>
    %c0_194 = arith.constant 0 : index
    %c0_195 = arith.constant 0 : index
    %230 = vector.load %arg7[%c0_194, %c0_195] : memref<1x512xf32, #tpu.memory_space<vmem>>, vector<1x512xf32>
    %231 = arith.addf %229, %230 : vector<1x512xf32>
    %cst_196 = arith.constant 0.000000e+00 : f32
    %232 = vector.broadcast %cst_196 : f32 to vector<1x512xf32>
    %233 = arith.maximumf %231, %232 : vector<1x512xf32>
    %c0_197 = arith.constant 0 : index
    %c0_198 = arith.constant 0 : index
    %234 = vector.load %arg8[%c0_197, %c0_198] : memref<512x128xf32, #tpu.memory_space<vmem>>, vector<512x128xf32>
    %cst_199 = arith.constant dense<0.000000e+00> : vector<1x128xf32>
    %235 = tpu.matmul %233, %234, %cst_199 {dimension_numbers = #tpu.dot_dimension_numbers<[1], [0], [0], [1], [0, 0, 1, 1], [], []>} : vector<1x512xf32>, vector<512x128xf32>, vector<1x128xf32> -> vector<1x128xf32>
    %c0_200 = arith.constant 0 : index
    %c0_201 = arith.constant 0 : index
    %236 = vector.load %arg9[%c0_200, %c0_201] : memref<1x128xf32, #tpu.memory_space<vmem>>, vector<1x128xf32>
    %237 = arith.addf %235, %236 : vector<1x128xf32>
    %cst_202 = arith.constant dense<0xFF800000> : vector<1xf32>
    %238 = vector.multi_reduction <maximumf>, %237, %cst_202 [1] : vector<1x128xf32> to vector<1xf32>
    %239 = vector.shape_cast %238 : vector<1xf32> to vector<1x1xf32>
    %240 = vector.broadcast %239 : vector<1x1xf32> to vector<1x128xf32>
    %241 = arith.subf %237, %240 : vector<1x128xf32>
    %242 = math.exp %241 : vector<1x128xf32>
    %243 = vector.broadcast %239 : vector<1x1xf32> to vector<1x128xf32>
    %244 = arith.subf %237, %243 : vector<1x128xf32>
    %cst_203 = arith.constant dense<0.000000e+00> : vector<1xf32>
    %245 = vector.multi_reduction <add>, %242, %cst_203 [1] : vector<1x128xf32> to vector<1xf32>
    %246 = vector.shape_cast %245 : vector<1xf32> to vector<1x1xf32>
    %247 = math.log %246 : vector<1x1xf32>
    %248 = vector.broadcast %247 : vector<1x1xf32> to vector<1x128xf32>
    %249 = arith.subf %244, %248 : vector<1x128xf32>
    %c0_204 = arith.constant 0 : index
    %c0_205 = arith.constant 0 : index
    %c0_206 = arith.constant 0 : index
    %250 = vector.load %arg10[%c0_204, %c0_205, %c0_206] : memref<1x1x128xf32, #tpu.memory_space<vmem>>, vector<1x1x128xf32>
    %251 = vector.shape_cast %250 : vector<1x1x128xf32> to vector<1x128xf32>
    %252 = vector.shape_cast %249 : vector<1x128xf32> to vector<1x1x128xf32>
    tpu.vector_store %arg10[%c0_204, %c0_205, %c0_206], %252 {strides = array<i32>} : memref<1x1x128xf32, #tpu.memory_space<vmem>>, vector<1x1x128xf32>,
    return
  }
  func.func @transform_0(%arg0: i32) -> (i32, i32, i32) {
    %c0_i32 = arith.constant 0 : i32
    %c0_i32_0 = arith.constant 0 : i32
    %c0_i32_1 = arith.constant 0 : i32
    return %arg0, %c0_i32, %c0_i32_0 : i32, i32, i32
  }
  func.func @transform_1(%arg0: i32) -> (i32, i32, i32) {
    %c0_i32 = arith.constant 0 : i32
    %c0_i32_0 = arith.constant 0 : i32
    %c0_i32_1 = arith.constant 0 : i32
    %c0_i32_2 = arith.constant 0 : i32
    return %c0_i32, %c0_i32_0, %c0_i32_1 : i32, i32, i32
  }
  func.func @transform_2(%arg0: i32) -> (i32, i32) {
    %c0_i32 = arith.constant 0 : i32
    %c0_i32_0 = arith.constant 0 : i32
    %c0_i32_1 = arith.constant 0 : i32
    return %c0_i32, %c0_i32_0 : i32, i32
  }
  func.func @transform_3(%arg0: i32) -> (i32, i32, i32) {
    %c0_i32 = arith.constant 0 : i32
    %c0_i32_0 = arith.constant 0 : i32
    %c0_i32_1 = arith.constant 0 : i32
    %c0_i32_2 = arith.constant 0 : i32
    return %c0_i32, %c0_i32_0, %c0_i32_1 : i32, i32, i32
  }
  func.func @transform_4(%arg0: i32) -> (i32, i32) {
    %c0_i32 = arith.constant 0 : i32
    %c0_i32_0 = arith.constant 0 : i32
    %c0_i32_1 = arith.constant 0 : i32
    return %c0_i32, %c0_i32_0 : i32, i32
  }
  func.func @transform_5(%arg0: i32) -> (i32, i32, i32) {
    %c0_i32 = arith.constant 0 : i32
    %c0_i32_0 = arith.constant 0 : i32
    %c0_i32_1 = arith.constant 0 : i32
    %c0_i32_2 = arith.constant 0 : i32
    return %c0_i32, %c0_i32_0, %c0_i32_1 : i32, i32, i32
  }
  func.func @transform_6(%arg0: i32) -> (i32, i32) {
    %c0_i32 = arith.constant 0 : i32
    %c0_i32_0 = arith.constant 0 : i32
    %c0_i32_1 = arith.constant 0 : i32
    return %c0_i32, %c0_i32_0 : i32, i32
  }
  func.func @transform_7(%arg0: i32) -> (i32, i32) {
    %c0_i32 = arith.constant 0 : i32
    %c0_i32_0 = arith.constant 0 : i32
    %c0_i32_1 = arith.constant 0 : i32
    return %c0_i32, %c0_i32_0 : i32, i32
  }
  func.func @transform_8(%arg0: i32) -> (i32, i32) {
    %c0_i32 = arith.constant 0 : i32
    %c0_i32_0 = arith.constant 0 : i32
    %c0_i32_1 = arith.constant 0 : i32
    return %c0_i32, %c0_i32_0 : i32, i32
  }
  func.func @transform_9(%arg0: i32) -> (i32, i32, i32) {
    %c0_i32 = arith.constant 0 : i32
    %c0_i32_0 = arith.constant 0 : i32
    %c0_i32_1 = arith.constant 0 : i32
    return %arg0, %c0_i32, %c0_i32_0 : i32, i32, i32
  }
}

</mosaic_0001>

<llo_original>
// kernel: small_cnn_forward.1
$region0: #{small_cnn_forward.1}
  #allocation0 [shape = 'u32[]', space=smem, size = 0x4, offset = 0x4, fixed_abs, tag = 'smem constant byte address 0x4 - core index']
  #allocation1 [shape = 'u32[144,128]{1,0:T(1,128)}', space=vmem, size = 0x12000, scoped, tag = 'internal scratch']
  %s0 = inlined_call_operand.vmem [shape: f32[2,28,28], index: 0, kind: input, shape index: {}]
  %s1 = inlined_call_operand.hbm [shape: f32[5,28,512], index: 1, kind: input, shape index: {}]
  %s2 = inlined_call_operand.hbm [shape: f32[1,512], index: 2, kind: input, shape index: {}]
  %s3 = inlined_call_operand.hbm [shape: f32[5,256,512], index: 3, kind: input, shape index: {}]
  %s4 = inlined_call_operand.hbm [shape: f32[1,512], index: 4, kind: input, shape index: {}]
  %s5 = inlined_call_operand.hbm [shape: f32[4,256,512], index: 5, kind: input, shape index: {}]
  %s6 = inlined_call_operand.hbm [shape: f32[1,512], index: 6, kind: input, shape index: {}]
  %s7 = inlined_call_operand.hbm [shape: f32[512,128], index: 7, kind: input, shape index: {}]
  %s8 = inlined_call_operand.hbm [shape: f32[1,128], index: 8, kind: input, shape index: {}]
  %s9 = inlined_call_operand.hbm [shape: f32[2,1,128], index: 9, kind: output, shape index: {}]
  %s10 = sld [smem:[#allocation0]]
  $region101: #{small_cnn_forward.1} parent=0
    _
  %s12 = ssub.s32 1, %s10
  %s13 = scalar_select 0, %s12, %s10
  $region1: #{small_cnn_forward.1} parent=0
    #allocation2 [shape = 'u8[327680]{0}', space=vmem, size = 0x50000, scoped, tag = 'input window, operand 1, single buffered']
    #allocation3 [shape = 's32[2]{0}', space=sflag, size = 0x8, scoped, tag = 'scoped memory for small_cnn_forward.1']
    #allocation4 [shape = 's32[2]{0}', space=sflag, size = 0x8, scoped, tag = 'scoped memory for small_cnn_forward.1']
    #allocation5 [shape = 'u8[2048]{0}', space=vmem, size = 0x800, scoped, tag = 'input window, operand 2, single buffered']
    #allocation6 [shape = 's32[1]{0}', space=sflag, size = 0x4, scoped, tag = 'scoped memory for small_cnn_forward.1']
    #allocation7 [shape = 'u8[2621440]{0}', space=vmem, size = 0x280000, scoped, tag = 'input window, operand 3, single buffered']
    #allocation8 [shape = 'u8[2048]{0}', space=vmem, size = 0x800, scoped, tag = 'input window, operand 4, single buffered']
    #allocation9 [shape = 's32[1]{0}', space=sflag, size = 0x4, scoped, tag = 'scoped memory for small_cnn_forward.1']
    #allocation10 [shape = 'u8[2097152]{0}', space=vmem, size = 0x200000, scoped, tag = 'input window, operand 5, single buffered']
    #allocation11 [shape = 'u8[2048]{0}', space=vmem, size = 0x800, scoped, tag = 'input window, operand 6, single buffered']
    #allocation12 [shape = 's32[1]{0}', space=sflag, size = 0x4, scoped, tag = 'scoped memory for small_cnn_forward.1']
    #allocation13 [shape = 'u8[262144]{0}', space=vmem, size = 0x40000, scoped, tag = 'input window, operand 7, single buffered']
    #allocation14 [shape = 'u8[512]{0}', space=vmem, size = 0x400, scoped, tag = 'input window, operand 8, single buffered']
    #allocation15 [shape = 's32[1]{0}', space=sflag, size = 0x4, scoped, tag = 'scoped memory for small_cnn_forward.1']
    #allocation16 [shape = 'u8[1024]{0}', space=vmem, size = 0x400, scoped, tag = 'output window, operand 0']
    %14 = vsyncpa [#allocation3], 0
    %15 = vsyncpa [#allocation6], 0
    %16 = vsyncpa [#allocation9], 0
    %17 = vsyncpa [#allocation12], 0
    %18 = vsyncpa [#allocation15], 0
    %19 = vsyncpa [#allocation4], 0
    %s20 = scalar_lea.sflag [#allocation4], 1
    %21 = vsyncpa %s20, 0
    loop: start=0, step=1, limit=4
    $region2: #{small_cnn_forward.1} parent=1 // loop_pre_header
      _
    $region3: #{small_cnn_forward.1} parent=1 // loop_header
      %s23 = sphi 0, %s27
      %p24 = scmp.ge.s32.totalorder %s23, 4
      %s33 = sphi 0, %s35
      %s36 = sphi 0, %s33
      %s37 = sphi 0, %s36
      %s53 = sphi 0, %s37
      %s57 = sphi 0, %s57
      %s59 = sphi 0, %s57
      %s60 = sphi 0, %s59
      %s74 = sphi 0, %s60
      %s78 = sphi 0, %s78
      %s80 = sphi 0, %s78
      %s81 = sphi 0, %s80
      %s95 = sphi 0, %s81
      %s99 = sphi 0, %s99
      %s101 = sphi 0, %s99
      %s102 = sphi 0, %s101
      %s116 = sphi 0, %s102
      %s120 = sphi 0, %s120
      %s122 = sphi 0, %s120
      %s123 = sphi 0, %s122
      %s137 = sphi 0, %s123
      %s141 = sphi 0, %s141
      %s143 = sphi 0, %s141
      %s144 = sphi 0, %s143
      %s158 = sphi 0, %s144
      %s162 = sphi 0, %s162
      %s164 = sphi 0, %s162
      %s165 = sphi 0, %s164
      %s179 = sphi 0, %s165
      %s183 = sphi 0, %s183
      %s185 = sphi 0, %s183
      %s186 = sphi 0, %s185
      %s200 = sphi 0, %s186
      %s204 = sphi 0, %s204
      %s206 = sphi 0, %s204
      %s207 = sphi 0, %s206
      %s221 = sphi 0, %s207
      %s227 = sphi 0, %s229
      %s230 = sphi 0, %s227
      %s231 = sphi 0, %s230
      %s247 = sphi 0, %s231
    $region4: #{small_cnn_forward.1} parent=1 // loop_header_branch
      %26 = sbr.rel (%p24) target = $region8
    $region5: #{small_cnn_forward.1} parent=1 // loop_body
      %s28 = ssub.s32 %s23, 1
      %s29 = ssub.s32 %s23, 2
      %s30 = sadd.s32 %s23, 1
      %s31 = ssub.s32 %s23, %s30
      %p32 = scmp.eq.s32.totalorder %s31, 0
      %s34 = sadd.s32 %s33, 1
      %s35 = scalar_select %p32, %s33, %s34
      %p38 = pneg %p32
      %p39 = scmp.eq.s32.totalorder %s23, 1
      %p40 = por %p38, %p39
      %p41 = scmp.ne.s32.totalorder %s33, %s36
      %p42 = scmp.eq.s32.totalorder %s23, 0
      %p43 = por %p41, %p42
      %p44 = scmp.ne.s32.totalorder %s33, %s36
      %p45 = scmp.eq.s32.totalorder %s28, 1
      %p46 = por %p44, %p45
      %p47 = scmp.ne.s32.totalorder %s36, %s37
      %p48 = scmp.eq.s32.totalorder %s28, 0
      %p49 = por %p47, %p48
      %p50 = scmp.ne.s32.totalorder %s36, %s37
      %p51 = scmp.eq.s32.totalorder %s29, 1
      %p52 = por %p50, %p51
      %p54 = scmp.ne.s32.totalorder %s37, %s53
      %p55 = scmp.eq.s32.totalorder %s29, 0
      %p56 = por %p54, %p55
      %s58 = sadd.s32 %s57, 1
      %p61 = scmp.eq.s32.totalorder %s23, 1
      %p62 = scmp.ne.s32.totalorder %s57, %s59
      %p63 = scmp.eq.s32.totalorder %s23, 0
      %p64 = por %p62, %p63
      %p65 = scmp.ne.s32.totalorder %s57, %s59
      %p66 = scmp.eq.s32.totalorder %s28, 1
      %p67 = por %p65, %p66
      %p68 = scmp.ne.s32.totalorder %s59, %s60
      %p69 = scmp.eq.s32.totalorder %s28, 0
      %p70 = por %p68, %p69
      %p71 = scmp.ne.s32.totalorder %s59, %s60
      %p72 = scmp.eq.s32.totalorder %s29, 1
      %p73 = por %p71, %p72
      %p75 = scmp.ne.s32.totalorder %s60, %s74
      %p76 = scmp.eq.s32.totalorder %s29, 0
      %p77 = por %p75, %p76
      %s79 = sadd.s32 %s78, 1
      %p82 = scmp.eq.s32.totalorder %s23, 1
      %p83 = scmp.ne.s32.totalorder %s78, %s80
      %p84 = scmp.eq.s32.totalorder %s23, 0
      %p85 = por %p83, %p84
      %p86 = scmp.ne.s32.totalorder %s78, %s80
      %p87 = scmp.eq.s32.totalorder %s28, 1
      %p88 = por %p86, %p87
      %p89 = scmp.ne.s32.totalorder %s80, %s81
      %p90 = scmp.eq.s32.totalorder %s28, 0
      %p91 = por %p89, %p90
      %p92 = scmp.ne.s32.totalorder %s80, %s81
      %p93 = scmp.eq.s32.totalorder %s29, 1
      %p94 = por %p92, %p93
      %p96 = scmp.ne.s32.totalorder %s81, %s95
      %p97 = scmp.eq.s32.totalorder %s29, 0
      %p98 = por %p96, %p97
      %s100 = sadd.s32 %s99, 1
      %p103 = scmp.eq.s32.totalorder %s23, 1
      %p104 = scmp.ne.s32.totalorder %s99, %s101
      %p105 = scmp.eq.s32.totalorder %s23, 0
      %p106 = por %p104, %p105
      %p107 = scmp.ne.s32.totalorder %s99, %s101
      %p108 = scmp.eq.s32.totalorder %s28, 1
      %p109 = por %p107, %p108
      %p110 = scmp.ne.s32.totalorder %s101, %s102
      %p111 = scmp.eq.s32.totalorder %s28, 0
      %p112 = por %p110, %p111
      %p113 = scmp.ne.s32.totalorder %s101, %s102
      %p114 = scmp.eq.s32.totalorder %s29, 1
      %p115 = por %p113, %p114
      %p117 = scmp.ne.s32.totalorder %s102, %s116
      %p118 = scmp.eq.s32.totalorder %s29, 0
      %p119 = por %p117, %p118
      %s121 = sadd.s32 %s120, 1
      %p124 = scmp.eq.s32.totalorder %s23, 1
      %p125 = scmp.ne.s32.totalorder %s120, %s122
      %p126 = scmp.eq.s32.totalorder %s23, 0
      %p127 = por %p125, %p126
      %p128 = scmp.ne.s32.totalorder %s120, %s122
      %p129 = scmp.eq.s32.totalorder %s28, 1
      %p130 = por %p128, %p129
      %p131 = scmp.ne.s32.totalorder %s122, %s123
      %p132 = scmp.eq.s32.totalorder %s28, 0
      %p133 = por %p131, %p132
      %p134 = scmp.ne.s32.totalorder %s122, %s123
      %p135 = scmp.eq.s32.totalorder %s29, 1
      %p136 = por %p134, %p135
      %p138 = scmp.ne.s32.totalorder %s123, %s137
      %p139 = scmp.eq.s32.totalorder %s29, 0
      %p140 = por %p138, %p139
      %s142 = sadd.s32 %s141, 1
      %p145 = scmp.eq.s32.totalorder %s23, 1
      %p146 = scmp.ne.s32.totalorder %s141, %s143
      %p147 = scmp.eq.s32.totalorder %s23, 0
      %p148 = por %p146, %p147
      %p149 = scmp.ne.s32.totalorder %s141, %s143
      %p150 = scmp.eq.s32.totalorder %s28, 1
      %p151 = por %p149, %p150
      %p152 = scmp.ne.s32.totalorder %s143, %s144
      %p153 = scmp.eq.s32.totalorder %s28, 0
      %p154 = por %p152, %p153
      %p155 = scmp.ne.s32.totalorder %s143, %s144
      %p156 = scmp.eq.s32.totalorder %s29, 1
      %p157 = por %p155, %p156
      %p159 = scmp.ne.s32.totalorder %s144, %s158
      %p160 = scmp.eq.s32.totalorder %s29, 0
      %p161 = por %p159, %p160
      %s163 = sadd.s32 %s162, 1
      %p166 = scmp.eq.s32.totalorder %s23, 1
      %p167 = scmp.ne.s32.totalorder %s162, %s164
      %p168 = scmp.eq.s32.totalorder %s23, 0
      %p169 = por %p167, %p168
      %p170 = scmp.ne.s32.totalorder %s162, %s164
      %p171 = scmp.eq.s32.totalorder %s28, 1
      %p172 = por %p170, %p171
      %p173 = scmp.ne.s32.totalorder %s164, %s165
      %p174 = scmp.eq.s32.totalorder %s28, 0
      %p175 = por %p173, %p174
      %p176 = scmp.ne.s32.totalorder %s164, %s165
      %p177 = scmp.eq.s32.totalorder %s29, 1
      %p178 = por %p176, %p177
      %p180 = scmp.ne.s32.totalorder %s165, %s179
      %p181 = scmp.eq.s32.totalorder %s29, 0
      %p182 = por %p180, %p181
      %s184 = sadd.s32 %s183, 1
      %p187 = scmp.eq.s32.totalorder %s23, 1
      %p188 = scmp.ne.s32.totalorder %s183, %s185
      %p189 = scmp.eq.s32.totalorder %s23, 0
      %p190 = por %p188, %p189
      %p191 = scmp.ne.s32.totalorder %s183, %s185
      %p192 = scmp.eq.s32.totalorder %s28, 1
      %p193 = por %p191, %p192
      %p194 = scmp.ne.s32.totalorder %s185, %s186
      %p195 = scmp.eq.s32.totalorder %s28, 0
      %p196 = por %p194, %p195
      %p197 = scmp.ne.s32.totalorder %s185, %s186
      %p198 = scmp.eq.s32.totalorder %s29, 1
      %p199 = por %p197, %p198
      %p201 = scmp.ne.s32.totalorder %s186, %s200
      %p202 = scmp.eq.s32.totalorder %s29, 0
      %p203 = por %p201, %p202
      %s205 = sadd.s32 %s204, 1
      %p208 = scmp.eq.s32.totalorder %s23, 1
      %p209 = scmp.ne.s32.totalorder %s204, %s206
      %p210 = scmp.eq.s32.totalorder %s23, 0
      %p211 = por %p209, %p210
      %p212 = scmp.ne.s32.totalorder %s204, %s206
      %p213 = scmp.eq.s32.totalorder %s28, 1
      %p214 = por %p212, %p213
      %p215 = scmp.ne.s32.totalorder %s206, %s207
      %p216 = scmp.eq.s32.totalorder %s28, 0
      %p217 = por %p215, %p216
      %p218 = scmp.ne.s32.totalorder %s206, %s207
      %p219 = scmp.eq.s32.totalorder %s29, 1
      %p220 = por %p218, %p219
      %p222 = scmp.ne.s32.totalorder %s207, %s221
      %p223 = scmp.eq.s32.totalorder %s29, 0
      %p224 = por %p222, %p223
      %s225 = ssub.s32 %s23, %s30
      %p226 = scmp.eq.s32.totalorder %s225, 0
      %s228 = sadd.s32 %s227, 1
      %s229 = scalar_select %p226, %s227, %s228
      %p232 = pneg %p226
      %p233 = scmp.eq.s32.totalorder %s23, 1
      %p234 = por %p232, %p233
      %p235 = scmp.ne.s32.totalorder %s227, %s230
      %p236 = scmp.eq.s32.totalorder %s23, 0
      %p237 = por %p235, %p236
      %p238 = scmp.ne.s32.totalorder %s227, %s230
      %p239 = scmp.eq.s32.totalorder %s28, 1
      %p240 = por %p238, %p239
      %p241 = scmp.ne.s32.totalorder %s230, %s231
      %p242 = scmp.eq.s32.totalorder %s28, 0
      %p243 = por %p241, %p242
      %p244 = scmp.ne.s32.totalorder %s230, %s231
      %p245 = scmp.eq.s32.totalorder %s29, 1
      %p246 = por %p244, %p245
      %p248 = scmp.ne.s32.totalorder %s231, %s247
      %p249 = scmp.eq.s32.totalorder %s29, 0
      %p250 = por %p248, %p249
      %p251 = scmp.le.s32.totalorder 1, %s23
      %p252 = scmp.lt.s32.totalorder %s23, 3
      %p253 = pnand %p251, %p252
      %p254 = pneg %p253
      // Predicated region
      $region9: #{small_cnn_forward.1} parent=5 // pred_check
        _
      $region10: #{small_cnn_forward.1} parent=5 // pred_check_branch
        %256 = sbr.rel (%p253) target = $region12
      $region11: #{small_cnn_forward.1} parent=5 // pred_region
        %s257 = ssub.s32 %s23, 1
        // Predicated region
        $region13: #{small_cnn_forward.1} parent=11 // pred_check
          %p258 = pneg %p70
        $region14: #{small_cnn_forward.1} parent=11 // pred_check_branch
          %260 = sbr.rel (%p258) target = $region16
        $region15: #{small_cnn_forward.1} parent=11 // pred_region
          %s262 = ssub.s32 10240, 10240
          %263 = vsyncadd [#allocation3], %s262
          %s264 = sshll.u32 [#allocation2], 4
          %s265 = int_to_ptr.vmem [resolvable:$true] %s264
          %270 = dma.hbm_to_vmem [thread:$0]  %s1, 10240, %s265, [#allocation3], 512, 512, 32
        $region16: #{small_cnn_forward.1} parent=11 // pred_fallthru
          _
        // Predicated region
        $region17: #{small_cnn_forward.1} parent=11 // pred_check
          %p271 = pneg %p91
        $region18: #{small_cnn_forward.1} parent=11 // pred_check_branch
          %273 = sbr.rel (%p271) target = $region20
        $region19: #{small_cnn_forward.1} parent=11 // pred_region
          %s275 = ssub.s32 64, 64
          %276 = vsyncadd [#allocation6], %s275
          %s278 = sshll.u32 [#allocation5], 4
          %s279 = int_to_ptr.vmem [resolvable:$true] %s278
          %281 = dma.hbm_to_vmem [thread:$0]  %s2, 64, %s279, [#allocation6]
        $region20: #{small_cnn_forward.1} parent=11 // pred_fallthru
          _
        // Predicated region
        $region21: #{small_cnn_forward.1} parent=11 // pred_check
          %p282 = pneg %p112
        $region22: #{small_cnn_forward.1} parent=11 // pred_check_branch
          %284 = sbr.rel (%p282) target = $region24
        $region23: #{small_cnn_forward.1} parent=11 // pred_region
          %s286 = ssub.s32 81920, 81920
          %287 = vsyncadd [#allocation6], %s286
          %s288 = sshll.u32 [#allocation7], 4
          %s289 = int_to_ptr.vmem [resolvable:$true] %s288
          %294 = dma.hbm_to_vmem [thread:$0]  %s3, 81920, %s289, [#allocation6], 512, 512, 32
        $region24: #{small_cnn_forward.1} parent=11 // pred_fallthru
          _
        // Predicated region
        $region25: #{small_cnn_forward.1} parent=11 // pred_check
          %p295 = pneg %p133
        $region26: #{small_cnn_forward.1} parent=11 // pred_check_branch
          %297 = sbr.rel (%p295) target = $region28
        $region27: #{small_cnn_forward.1} parent=11 // pred_region
          %s299 = ssub.s32 64, 64
          %300 = vsyncadd [#allocation9], %s299
          %s302 = sshll.u32 [#allocation8], 4
          %s303 = int_to_ptr.vmem [resolvable:$true] %s302
          %305 = dma.hbm_to_vmem [thread:$0]  %s4, 64, %s303, [#allocation9]
        $region28: #{small_cnn_forward.1} parent=11 // pred_fallthru
          _
        // Predicated region
        $region29: #{small_cnn_forward.1} parent=11 // pred_check
          %p306 = pneg %p154
        $region30: #{small_cnn_forward.1} parent=11 // pred_check_branch
          %308 = sbr.rel (%p306) target = $region32
        $region31: #{small_cnn_forward.1} parent=11 // pred_region
          %s310 = ssub.s32 65536, 65536
          %311 = vsyncadd [#allocation9], %s310
          %s312 = sshll.u32 [#allocation10], 4
          %s313 = int_to_ptr.vmem [resolvable:$true] %s312
          %318 = dma.hbm_to_vmem [thread:$0]  %s5, 65536, %s313, [#allocation9], 512, 512, 32
        $region32: #{small_cnn_forward.1} parent=11 // pred_fallthru
          _
        // Predicated region
        $region33: #{small_cnn_forward.1} parent=11 // pred_check
          %p319 = pneg %p175
        $region34: #{small_cnn_forward.1} parent=11 // pred_check_branch
          %321 = sbr.rel (%p319) target = $region36
        $region35: #{small_cnn_forward.1} parent=11 // pred_region
          %s323 = ssub.s32 64, 64
          %324 = vsyncadd [#allocation12], %s323
          %s326 = sshll.u32 [#allocation11], 4
          %s327 = int_to_ptr.vmem [resolvable:$true] %s326
          %329 = dma.hbm_to_vmem [thread:$0]  %s6, 64, %s327, [#allocation12]
        $region36: #{small_cnn_forward.1} parent=11 // pred_fallthru
          _
        // Predicated region
        $region37: #{small_cnn_forward.1} parent=11 // pred_check
          %p330 = pneg %p196
        $region38: #{small_cnn_forward.1} parent=11 // pred_check_branch
          %332 = sbr.rel (%p330) target = $region40
        $region39: #{small_cnn_forward.1} parent=11 // pred_region
          %s334 = ssub.s32 8192, 8192
          %335 = vsyncadd [#allocation12], %s334
          %s336 = sshll.u32 [#allocation13], 4
          %s337 = int_to_ptr.vmem [resolvable:$true] %s336
          %342 = dma.hbm_to_vmem [thread:$0]  %s7, 8192, %s337, [#allocation12], 128, 128, 8
        $region40: #{small_cnn_forward.1} parent=11 // pred_fallthru
          _
        // Predicated region
        $region41: #{small_cnn_forward.1} parent=11 // pred_check
          %p343 = pneg %p217
        $region42: #{small_cnn_forward.1} parent=11 // pred_check_branch
          %345 = sbr.rel (%p343) target = $region44
        $region43: #{small_cnn_forward.1} parent=11 // pred_region
          %s347 = ssub.s32 16, 16
          %348 = vsyncadd [#allocation15], %s347
          %s350 = sshll.u32 [#allocation14], 4
          %s351 = int_to_ptr.vmem [resolvable:$true] %s350
          %353 = dma.hbm_to_vmem [thread:$0]  %s8, 16, %s351, [#allocation15]
        $region44: #{small_cnn_forward.1} parent=11 // pred_fallthru
          _
      $region12: #{small_cnn_forward.1} parent=5 // pred_fallthru
        _
      %p354 = scmp.lt.s32.totalorder %s23, 2
      // Predicated region
      $region45: #{small_cnn_forward.1} parent=5 // pred_check
        %p355 = pneg %p354
      $region46: #{small_cnn_forward.1} parent=5 // pred_check_branch
        %357 = sbr.rel (%p355) target = $region48
      $region47: #{small_cnn_forward.1} parent=5 // pred_region
        // Predicated region
        $region49: #{small_cnn_forward.1} parent=47 // pred_check
          %p358 = pneg %p43
        $region50: #{small_cnn_forward.1} parent=47 // pred_check_branch
          %360 = sbr.rel (%p358) target = $region52
        $region51: #{small_cnn_forward.1} parent=47 // pred_region
          %p361 = scmp.lt.s32.totalorder %s23, 1
          %s362 = scalar_select %p361, %s23, 1
          %s363 = smul.addr %s362, 4
          %s364 = smul.addr %s363, 8
          %s365 = scalar_lea.vmem %s0, %s364
        $region52: #{small_cnn_forward.1} parent=47 // pred_fallthru
          _
      $region48: #{small_cnn_forward.1} parent=5 // pred_fallthru
        _
      %p366 = scmp.le.s32.totalorder 1, %s23
      %p367 = scmp.lt.s32.totalorder %s23, 3
      %p368 = pnand %p366, %p367
      %p369 = pneg %p368
      // Predicated region
      $region53: #{small_cnn_forward.1} parent=5 // pred_check
        _
      $region54: #{small_cnn_forward.1} parent=5 // pred_check_branch
        %371 = sbr.rel (%p368) target = $region56
      $region55: #{small_cnn_forward.1} parent=5 // pred_region
        %s372 = ssub.s32 %s23, 1
        // Predicated region
        $region57: #{small_cnn_forward.1} parent=55 // pred_check
          %p373 = pneg %p70
        $region58: #{small_cnn_forward.1} parent=55 // pred_check_branch
          %375 = sbr.rel (%p373) target = $region60
        $region59: #{small_cnn_forward.1} parent=55 // pred_region
          %376 = dma.done [#allocation3], 10240
        $region60: #{small_cnn_forward.1} parent=55 // pred_fallthru
          _
        // Predicated region
        $region61: #{small_cnn_forward.1} parent=55 // pred_check
          %p377 = pneg %p91
        $region62: #{small_cnn_forward.1} parent=55 // pred_check_branch
          %379 = sbr.rel (%p377) target = $region64
        $region63: #{small_cnn_forward.1} parent=55 // pred_region
          %380 = dma.done [#allocation6], 64
        $region64: #{small_cnn_forward.1} parent=55 // pred_fallthru
          _
        // Predicated region
        $region65: #{small_cnn_forward.1} parent=55 // pred_check
          %p381 = pneg %p112
        $region66: #{small_cnn_forward.1} parent=55 // pred_check_branch
          %383 = sbr.rel (%p381) target = $region68
        $region67: #{small_cnn_forward.1} parent=55 // pred_region
          %384 = dma.done [#allocation6], 81920
        $region68: #{small_cnn_forward.1} parent=55 // pred_fallthru
          _
        // Predicated region
        $region69: #{small_cnn_forward.1} parent=55 // pred_check
          %p385 = pneg %p133
        $region70: #{small_cnn_forward.1} parent=55 // pred_check_branch
          %387 = sbr.rel (%p385) target = $region72
        $region71: #{small_cnn_forward.1} parent=55 // pred_region
          %388 = dma.done [#allocation9], 64
        $region72: #{small_cnn_forward.1} parent=55 // pred_fallthru
          _
        // Predicated region
        $region73: #{small_cnn_forward.1} parent=55 // pred_check
          %p389 = pneg %p154
        $region74: #{small_cnn_forward.1} parent=55 // pred_check_branch
          %391 = sbr.rel (%p389) target = $region76
        $region75: #{small_cnn_forward.1} parent=55 // pred_region
          %392 = dma.done [#allocation9], 65536
        $region76: #{small_cnn_forward.1} parent=55 // pred_fallthru
          _
        // Predicated region
        $region77: #{small_cnn_forward.1} parent=55 // pred_check
          %p393 = pneg %p175
        $region78: #{small_cnn_forward.1} parent=55 // pred_check_branch
          %395 = sbr.rel (%p393) target = $region80
        $region79: #{small_cnn_forward.1} parent=55 // pred_region
          %396 = dma.done [#allocation12], 64
        $region80: #{small_cnn_forward.1} parent=55 // pred_fallthru
          _
        // Predicated region
        $region81: #{small_cnn_forward.1} parent=55 // pred_check
          %p397 = pneg %p196
        $region82: #{small_cnn_forward.1} parent=55 // pred_check_branch
          %399 = sbr.rel (%p397) target = $region84
        $region83: #{small_cnn_forward.1} parent=55 // pred_region
          %400 = dma.done [#allocation12], 8192
        $region84: #{small_cnn_forward.1} parent=55 // pred_fallthru
          _
        // Predicated region
        $region85: #{small_cnn_forward.1} parent=55 // pred_check
          %p401 = pneg %p217
        $region86: #{small_cnn_forward.1} parent=55 // pred_check_branch
          %403 = sbr.rel (%p401) target = $region88
        $region87: #{small_cnn_forward.1} parent=55 // pred_region
          %404 = dma.done [#allocation15], 16
        $region88: #{small_cnn_forward.1} parent=55 // pred_fallthru
          _
        %p405 = scmp.lt.s32.totalorder %s28, 1
        %s406 = scalar_select %p405, %s28, 1
        %s407 = smul.addr %s406, 4
        %s408 = smul.addr %s407, 8
        %s409 = scalar_lea.vmem %s0, %s408
        %p410 = pneg %p49
        %p411 = pneg %p46
        %p412 = pneg %p70
        %p413 = pneg %p67
        %p414 = pneg %p91
        %p415 = pneg %p88
        %p416 = pneg %p112
        %p417 = pneg %p109
        %p418 = pneg %p133
        %p419 = pneg %p130
        %p420 = pneg %p154
        %p421 = pneg %p151
        %p422 = pneg %p175
        %p423 = pneg %p172
        %p424 = pneg %p196
        %p425 = pneg %p193
        %p426 = pneg %p217
        %p427 = pneg %p214
        %p428 = pneg %p243
        %p429 = pneg %p240
        %s430 = sand.u32 %s230, 1
        %s431 = scalar_lea.sflag [#allocation4], %s430
        %s432 = sand.u32 %s230, 1
        %s433 = scalar_lea.vmem [#allocation16], %s432
        %p434 = scmp.lt.s32.totalorder %s28, 1
        %s435 = scalar_select %p434, %s28, 1
        %s436 = smul.addr %s435, 4
        %s437 = smul.addr %s436, 8
        %s438 = scalar_lea.vmem %s0, %s437
        %v439 = vld [vmem:[#allocation5] sm:$0xf]
        %v440 = vld [vmem:[%s438] sm:$0x3f]
        %v441 = vld [vmem:[#allocation2] sm:$0xff]
        %v442 = vld [vmem:[#allocation2 + $0x8] sm:$0xff]
        %v443 = vld [vmem:[#allocation2 + $0x10] sm:$0xff]
        %v444 = vld [vmem:[#allocation2 + $0x18] sm:$0xff]
        %v445 = vld [vmem:[#allocation2 + $0x20] sm:$0xff]
        %v446 = vld [vmem:[#allocation2 + $0x28] sm:$0xff]
        %v447 = vld [vmem:[#allocation2 + $0x30] sm:$0xff]
        %v448 = vld [vmem:[#allocation2 + $0x38] sm:$0xff]
        %v449 = vld [vmem:[#allocation2 + $0x40] sm:$0xff]
        %v450 = vld [vmem:[#allocation2 + $0x48] sm:$0xff]
        %v451 = vld [vmem:[#allocation2 + $0x50] sm:$0xff]
        %v452 = vld [vmem:[#allocation2 + $0x58] sm:$0xff]
        %v453 = vld [vmem:[#allocation2 + $0x60] sm:$0xf]
        %v454 = vld [vmem:[#allocation2 + $0x68] sm:$0xf]
        %v455 = vld [vmem:[#allocation2 + $0x70] sm:$0xf]
        %v456 = vld [vmem:[#allocation2 + $0x78] sm:$0xf]
        %v457 = vld [vmem:[%s438 + $0x7] sm:$0x3f]
        %s458 = scalar_lea.vmem [#allocation2], 128
        %v459 = vld [vmem:[%s458] sm:$0xff]
        %v460 = vld [vmem:[%s458 + $0x8] sm:$0xff]
        %v461 = vld [vmem:[%s458 + $0x10] sm:$0xff]
        %v462 = vld [vmem:[%s458 + $0x18] sm:$0xff]
        %v463 = vld [vmem:[%s458 + $0x20] sm:$0xff]
        %v464 = vld [vmem:[%s458 + $0x28] sm:$0xff]
        %v465 = vld [vmem:[%s458 + $0x30] sm:$0xff]
        %v466 = vld [vmem:[%s458 + $0x38] sm:$0xff]
        %v467 = vld [vmem:[%s458 + $0x40] sm:$0xff]
        %v468 = vld [vmem:[%s458 + $0x48] sm:$0xff]
        %v469 = vld [vmem:[%s458 + $0x50] sm:$0xff]
        %v470 = vld [vmem:[%s458 + $0x58] sm:$0xff]
        %v471 = vld [vmem:[%s458 + $0x60] sm:$0xf]
        %v472 = vld [vmem:[%s458 + $0x68] sm:$0xf]
        %v473 = vld [vmem:[%s458 + $0x70] sm:$0xf]
        %v474 = vld [vmem:[%s458 + $0x78] sm:$0xf]
        %vm475 = vcmask 228352
        %v477 = vsel %vm475, %v457, 0
        %vm479 = vcmask 1043456
        %v481 = vsel %vm479, %v471, 0
        %v484 = vsel %vm479, %v472, 0
        %v487 = vsel %vm479, %v473, 0
        %v490 = vsel %vm479, %v474, 0
        %492 = vmatprep.subr.mxu0 0.0
        %493 = vmatpush1.msra.mxu0 0.0
        %494 = vmatprep.subr.mxu0 0.0
        %495 = vmatpush1.msra.mxu0 0.0
        %496 = vmatprep.subr.mxu0 0.0
        %497 = vmatpush1.msra.mxu0 0.0
        %498 = vmatprep.subr.mxu0 0.0
        %499 = vmatpush1.msra.mxu0 0.0
        %500 = vmatprep.subr.mxu0 0.0
        %501 = vmatpush1.msra.mxu0 0.0
        %502 = vmatprep.subr.mxu0 0.0
        %503 = vmatpush1.msra.mxu0 0.0
        %504 = vmatprep.subr.mxu0 0.0
        %505 = vmatpush1.msra.mxu0 0.0
        %506 = vmatprep.subr.mxu0 0.0
        %507 = vmatpush1.msra.mxu0 0.0
        %508 = vmatprep.subr.mxu0 0.0
        %509 = vmatpush1.msra.mxu0 0.0
        %510 = vmatprep.subr.mxu0 0.0
        %511 = vmatpush1.msra.mxu0 0.0
        %512 = vmatprep.subr.mxu0 0.0
        %513 = vmatpush1.msra.mxu0 0.0
        %514 = vmatprep.subr.mxu0 0.0
        %515 = vmatpush1.msra.mxu0 0.0
        %516 = vmatprep.subr.mxu0 %v484
        %517 = vmatpush1.msra.mxu0 %v481
        %518 = vmatprep.subr.mxu0 %v468
        %519 = vmatpush1.msra.mxu0 %v467
        %520 = vmatprep.subr.mxu0 %v464
        %521 = vmatpush1.msra.mxu0 %v463
        %522 = vmatprep.subr.mxu0 %v460
        %523 = vmatpush1.msra.mxu0 %v459
        %524 = vmatprep.subr.mxu0 0.0
        %525 = vmatpush2.msra.mxu0 0.0
        %526 = vmatprep.subr.mxu0 0.0
        %527 = vmatpush2.msra.mxu0 0.0
        %528 = vmatprep.subr.mxu0 0.0
        %529 = vmatpush2.msra.mxu0 0.0
        %530 = vmatprep.subr.mxu0 0.0
        %531 = vmatpush2.msra.mxu0 0.0
        %532 = vmatprep.subr.mxu0 0.0
        %533 = vmatpush2.msra.mxu0 0.0
        %534 = vmatprep.subr.mxu0 0.0
        %535 = vmatpush2.msra.mxu0 0.0
        %536 = vmatprep.subr.mxu0 0.0
        %537 = vmatpush2.msra.mxu0 0.0
        %538 = vmatprep.subr.mxu0 0.0
        %539 = vmatpush2.msra.mxu0 0.0
        %540 = vmatprep.subr.mxu0 0.0
        %541 = vmatpush2.msra.mxu0 0.0
        %542 = vmatprep.subr.mxu0 0.0
        %543 = vmatpush2.msra.mxu0 0.0
        %544 = vmatprep.subr.mxu0 0.0
        %545 = vmatpush2.msra.mxu0 0.0
        %546 = vmatprep.subr.mxu0 0.0
        %547 = vmatpush2.msra.mxu0 0.0
        %548 = vmatprep.subr.mxu0 0.0
        %549 = vmatpush2.msra.mxu0 0.0
        %550 = vmatprep.subr.mxu0 0.0
        %551 = vmatpush2.msra.mxu0 0.0
        %552 = vmatprep.subr.mxu0 0.0
        %553 = vmatpush2.msra.mxu0 0.0
        %554 = vmatprep.subr.mxu0 0.0
        %555 = vmatpush2.msra.mxu0 0.0
        %556 = vmatprep.mubr.f32.mxu0 0.0
        %557 = vmatmul.mubr.f32.gmra.mxu0 %v477
        %v558 = vpop.f32.mrf.mxu0
        %v559 = vadd.f32 0.0, %v558
        %v560 = vpop.f32.mrf.mxu0
        %v561 = vadd.f32 0.0, %v560
        %562 = vdwg.mxu0
        %563 = vmatprep.subr.mxu0 0.0
        %564 = vmatpush1.msra.mxu0 0.0
        %565 = vmatprep.subr.mxu0 0.0
        %566 = vmatpush1.msra.mxu0 0.0
        %567 = vmatprep.subr.mxu0 0.0
        %568 = vmatpush1.msra.mxu0 0.0
        %569 = vmatprep.subr.mxu0 0.0
        %570 = vmatpush1.msra.mxu0 0.0
        %571 = vmatprep.subr.mxu0 0.0
        %572 = vmatpush1.msra.mxu0 0.0
        %573 = vmatprep.subr.mxu0 0.0
        %574 = vmatpush1.msra.mxu0 0.0
        %575 = vmatprep.subr.mxu0 0.0
        %576 = vmatpush1.msra.mxu0 0.0
        %577 = vmatprep.subr.mxu0 0.0
        %578 = vmatpush1.msra.mxu0 0.0
        %579 = vmatprep.subr.mxu0 0.0
        %580 = vmatpush1.msra.mxu0 0.0
        %581 = vmatprep.subr.mxu0 0.0
        %582 = vmatpush1.msra.mxu0 0.0
        %583 = vmatprep.subr.mxu0 0.0
        %584 = vmatpush1.msra.mxu0 0.0
        %585 = vmatprep.subr.mxu0 0.0
        %586 = vmatpush1.msra.mxu0 0.0
        %587 = vmatprep.subr.mxu0 %v490
        %588 = vmatpush1.msra.mxu0 %v487
        %589 = vmatprep.subr.mxu0 %v470
        %590 = vmatpush1.msra.mxu0 %v469
        %591 = vmatprep.subr.mxu0 %v466
        %592 = vmatpush1.msra.mxu0 %v465
        %593 = vmatprep.subr.mxu0 %v462
        %594 = vmatpush1.msra.mxu0 %v461
        %595 = vmatprep.subr.mxu0 0.0
        %596 = vmatpush2.msra.mxu0 0.0
        %597 = vmatprep.subr.mxu0 0.0
        %598 = vmatpush2.msra.mxu0 0.0
        %599 = vmatprep.subr.mxu0 0.0
        %600 = vmatpush2.msra.mxu0 0.0
        %601 = vmatprep.subr.mxu0 0.0
        %602 = vmatpush2.msra.mxu0 0.0
        %603 = vmatprep.subr.mxu0 0.0
        %604 = vmatpush2.msra.mxu0 0.0
        %605 = vmatprep.subr.mxu0 0.0
        %606 = vmatpush2.msra.mxu0 0.0
        %607 = vmatprep.subr.mxu0 0.0
        %608 = vmatpush2.msra.mxu0 0.0
        %609 = vmatprep.subr.mxu0 0.0
        %610 = vmatpush2.msra.mxu0 0.0
        %611 = vmatprep.subr.mxu0 0.0
        %612 = vmatpush2.msra.mxu0 0.0
        %613 = vmatprep.subr.mxu0 0.0
        %614 = vmatpush2.msra.mxu0 0.0
        %615 = vmatprep.subr.mxu0 0.0
        %616 = vmatpush2.msra.mxu0 0.0
        %617 = vmatprep.subr.mxu0 0.0
        %618 = vmatpush2.msra.mxu0 0.0
        %619 = vmatprep.subr.mxu0 0.0
        %620 = vmatpush2.msra.mxu0 0.0
        %621 = vmatprep.subr.mxu0 0.0
        %622 = vmatpush2.msra.mxu0 0.0
        %623 = vmatprep.subr.mxu0 0.0
        %624 = vmatpush2.msra.mxu0 0.0
        %625 = vmatprep.subr.mxu0 0.0
        %626 = vmatpush2.msra.mxu0 0.0
        %627 = vmatprep.mubr.f32.mxu0 0.0
        %628 = vmatmul.mubr.f32.gmra.mxu0 %v477
        %v629 = vpop.f32.mrf.mxu0
        %v630 = vadd.f32 0.0, %v629
        %v631 = vpop.f32.mrf.mxu0
        %v632 = vadd.f32 0.0, %v631
        %633 = vdwg.mxu0
        %v635 = vsel %vm475, %v440, 0
        %v638 = vsel %vm479, %v453, 0
        %v641 = vsel %vm479, %v454, 0
        %v644 = vsel %vm479, %v455, 0
        %v647 = vsel %vm479, %v456, 0
        %649 = vmatprep.subr.mxu0 0.0
        %650 = vmatpush1.msra.mxu0 0.0
        %651 = vmatprep.subr.mxu0 0.0
        %652 = vmatpush1.msra.mxu0 0.0
        %653 = vmatprep.subr.mxu0 0.0
        %654 = vmatpush1.msra.mxu0 0.0
        %655 = vmatprep.subr.mxu0 0.0
        %656 = vmatpush1.msra.mxu0 0.0
        %657 = vmatprep.subr.mxu0 0.0
        %658 = vmatpush1.msra.mxu0 0.0
        %659 = vmatprep.subr.mxu0 0.0
        %660 = vmatpush1.msra.mxu0 0.0
        %661 = vmatprep.subr.mxu0 0.0
        %662 = vmatpush1.msra.mxu0 0.0
        %663 = vmatprep.subr.mxu0 0.0
        %664 = vmatpush1.msra.mxu0 0.0
        %665 = vmatprep.subr.mxu0 0.0
        %666 = vmatpush1.msra.mxu0 0.0
        %667 = vmatprep.subr.mxu0 0.0
        %668 = vmatpush1.msra.mxu0 0.0
        %669 = vmatprep.subr.mxu0 0.0
        %670 = vmatpush1.msra.mxu0 0.0
        %671 = vmatprep.subr.mxu0 0.0
        %672 = vmatpush1.msra.mxu0 0.0
        %673 = vmatprep.subr.mxu0 %v641
        %674 = vmatpush1.msra.mxu0 %v638
        %675 = vmatprep.subr.mxu0 %v450
        %676 = vmatpush1.msra.mxu0 %v449
        %677 = vmatprep.subr.mxu0 %v446
        %678 = vmatpush1.msra.mxu0 %v445
        %679 = vmatprep.subr.mxu0 %v442
        %680 = vmatpush1.msra.mxu0 %v441
        %681 = vmatprep.subr.mxu0 0.0
        %682 = vmatpush2.msra.mxu0 0.0
        %683 = vmatprep.subr.mxu0 0.0
        %684 = vmatpush2.msra.mxu0 0.0
        %685 = vmatprep.subr.mxu0 0.0
        %686 = vmatpush2.msra.mxu0 0.0
        %687 = vmatprep.subr.mxu0 0.0
        %688 = vmatpush2.msra.mxu0 0.0
        %689 = vmatprep.subr.mxu0 0.0
        %690 = vmatpush2.msra.mxu0 0.0
        %691 = vmatprep.subr.mxu0 0.0
        %692 = vmatpush2.msra.mxu0 0.0
        %693 = vmatprep.subr.mxu0 0.0
        %694 = vmatpush2.msra.mxu0 0.0
        %695 = vmatprep.subr.mxu0 0.0
        %696 = vmatpush2.msra.mxu0 0.0
        %697 = vmatprep.subr.mxu0 0.0
        %698 = vmatpush2.msra.mxu0 0.0
        %699 = vmatprep.subr.mxu0 0.0
        %700 = vmatpush2.msra.mxu0 0.0
        %701 = vmatprep.subr.mxu0 0.0
        %702 = vmatpush2.msra.mxu0 0.0
        %703 = vmatprep.subr.mxu0 0.0
        %704 = vmatpush2.msra.mxu0 0.0
        %705 = vmatprep.subr.mxu0 0.0
        %706 = vmatpush2.msra.mxu0 0.0
        %707 = vmatprep.subr.mxu0 0.0
        %708 = vmatpush2.msra.mxu0 0.0
        %709 = vmatprep.subr.mxu0 0.0
        %710 = vmatpush2.msra.mxu0 0.0
        %711 = vmatprep.subr.mxu0 0.0
        %712 = vmatpush2.msra.mxu0 0.0
        %713 = vmatprep.mubr.f32.mxu0 0.0
        %714 = vmatmul.mubr.f32.gmra.mxu0 %v635
        %v715 = vpop.f32.mrf.mxu0
        %v716 = vadd.f32 %v559, %v715
        %v717 = vpop.f32.mrf.mxu0
        %v718 = vadd.f32 %v561, %v717
        %719 = vdwg.mxu0
        %720 = vmatprep.subr.mxu0 0.0
        %721 = vmatpush1.msra.mxu0 0.0
        %722 = vmatprep.subr.mxu0 0.0
        %723 = vmatpush1.msra.mxu0 0.0
        %724 = vmatprep.subr.mxu0 0.0
        %725 = vmatpush1.msra.mxu0 0.0
        %726 = vmatprep.subr.mxu0 0.0
        %727 = vmatpush1.msra.mxu0 0.0
        %728 = vmatprep.subr.mxu0 0.0
        %729 = vmatpush1.msra.mxu0 0.0
        %730 = vmatprep.subr.mxu0 0.0
        %731 = vmatpush1.msra.mxu0 0.0
        %732 = vmatprep.subr.mxu0 0.0
        %733 = vmatpush1.msra.mxu0 0.0
        %734 = vmatprep.subr.mxu0 0.0
        %735 = vmatpush1.msra.mxu0 0.0
        %736 = vmatprep.subr.mxu0 0.0
        %737 = vmatpush1.msra.mxu0 0.0
        %738 = vmatprep.subr.mxu0 0.0
        %739 = vmatpush1.msra.mxu0 0.0
        %740 = vmatprep.subr.mxu0 0.0
        %741 = vmatpush1.msra.mxu0 0.0
        %742 = vmatprep.subr.mxu0 0.0
        %743 = vmatpush1.msra.mxu0 0.0
        %744 = vmatprep.subr.mxu0 %v647
        %745 = vmatpush1.msra.mxu0 %v644
        %746 = vmatprep.subr.mxu0 %v452
        %747 = vmatpush1.msra.mxu0 %v451
        %748 = vmatprep.subr.mxu0 %v448
        %749 = vmatpush1.msra.mxu0 %v447
        %750 = vmatprep.subr.mxu0 %v444
        %751 = vmatpush1.msra.mxu0 %v443
        %752 = vmatprep.subr.mxu0 0.0
        %753 = vmatpush2.msra.mxu0 0.0
        %754 = vmatprep.subr.mxu0 0.0
        %755 = vmatpush2.msra.mxu0 0.0
        %756 = vmatprep.subr.mxu0 0.0
        %757 = vmatpush2.msra.mxu0 0.0
        %758 = vmatprep.subr.mxu0 0.0
        %759 = vmatpush2.msra.mxu0 0.0
        %760 = vmatprep.subr.mxu0 0.0
        %761 = vmatpush2.msra.mxu0 0.0
        %762 = vmatprep.subr.mxu0 0.0
        %763 = vmatpush2.msra.mxu0 0.0
        %764 = vmatprep.subr.mxu0 0.0
        %765 = vmatpush2.msra.mxu0 0.0
        %766 = vmatprep.subr.mxu0 0.0
        %767 = vmatpush2.msra.mxu0 0.0
        %768 = vmatprep.subr.mxu0 0.0
        %769 = vmatpush2.msra.mxu0 0.0
        %770 = vmatprep.subr.mxu0 0.0
        %771 = vmatpush2.msra.mxu0 0.0
        %772 = vmatprep.subr.mxu0 0.0
        %773 = vmatpush2.msra.mxu0 0.0
        %774 = vmatprep.subr.mxu0 0.0
        %775 = vmatpush2.msra.mxu0 0.0
        %776 = vmatprep.subr.mxu0 0.0
        %777 = vmatpush2.msra.mxu0 0.0
        %778 = vmatprep.subr.mxu0 0.0
        %779 = vmatpush2.msra.mxu0 0.0
        %780 = vmatprep.subr.mxu0 0.0
        %781 = vmatpush2.msra.mxu0 0.0
        %782 = vmatprep.subr.mxu0 0.0
        %783 = vmatpush2.msra.mxu0 0.0
        %784 = vmatprep.mubr.f32.mxu0 0.0
        %785 = vmatmul.mubr.f32.gmra.mxu0 %v635
        %v786 = vpop.f32.mrf.mxu0
        %v787 = vadd.f32 %v630, %v786
        %v788 = vpop.f32.mrf.mxu0
        %v789 = vadd.f32 %v632, %v788
        %790 = vdwg.mxu0
        %v791 = vld [vmem:[%s438 + $0xe] sm:$0x3f]
        %s792 = scalar_lea.vmem [#allocation2], 256
        %v793 = vld [vmem:[%s792] sm:$0xff]
        %v794 = vld [vmem:[%s792 + $0x8] sm:$0xff]
        %v795 = vld [vmem:[%s792 + $0x10] sm:$0xff]
        %v796 = vld [vmem:[%s792 + $0x18] sm:$0xff]
        %v797 = vld [vmem:[%s792 + $0x20] sm:$0xff]
        %v798 = vld [vmem:[%s792 + $0x28] sm:$0xff]
        %v799 = vld [vmem:[%s792 + $0x30] sm:$0xff]
        %v800 = vld [vmem:[%s792 + $0x38] sm:$0xff]
        %v801 = vld [vmem:[%s792 + $0x40] sm:$0xff]
        %v802 = vld [vmem:[%s792 + $0x48] sm:$0xff]
        %v803 = vld [vmem:[%s792 + $0x50] sm:$0xff]
        %v804 = vld [vmem:[%s792 + $0x58] sm:$0xff]
        %v805 = vld [vmem:[%s792 + $0x60] sm:$0xf]
        %v806 = vld [vmem:[%s792 + $0x68] sm:$0xf]
        %v807 = vld [vmem:[%s792 + $0x70] sm:$0xf]
        %v808 = vld [vmem:[%s792 + $0x78] sm:$0xf]
        %v810 = vsel %vm475, %v791, 0
        %v813 = vsel %vm479, %v805, 0
        %v816 = vsel %vm479, %v806, 0
        %v819 = vsel %vm479, %v807, 0
        %v822 = vsel %vm479, %v808, 0
        %824 = vmatprep.subr.mxu0 0.0
        %825 = vmatpush1.msra.mxu0 0.0
        %826 = vmatprep.subr.mxu0 0.0
        %827 = vmatpush1.msra.mxu0 0.0
        %828 = vmatprep.subr.mxu0 0.0
        %829 = vmatpush1.msra.mxu0 0.0
        %830 = vmatprep.subr.mxu0 0.0
        %831 = vmatpush1.msra.mxu0 0.0
        %832 = vmatprep.subr.mxu0 0.0
        %833 = vmatpush1.msra.mxu0 0.0
        %834 = vmatprep.subr.mxu0 0.0
        %835 = vmatpush1.msra.mxu0 0.0
        %836 = vmatprep.subr.mxu0 0.0
        %837 = vmatpush1.msra.mxu0 0.0
        %838 = vmatprep.subr.mxu0 0.0
        %839 = vmatpush1.msra.mxu0 0.0
        %840 = vmatprep.subr.mxu0 0.0
        %841 = vmatpush1.msra.mxu0 0.0
        %842 = vmatprep.subr.mxu0 0.0
        %843 = vmatpush1.msra.mxu0 0.0
        %844 = vmatprep.subr.mxu0 0.0
        %845 = vmatpush1.msra.mxu0 0.0
        %846 = vmatprep.subr.mxu0 0.0
        %847 = vmatpush1.msra.mxu0 0.0
        %848 = vmatprep.subr.mxu0 %v816
        %849 = vmatpush1.msra.mxu0 %v813
        %850 = vmatprep.subr.mxu0 %v802
        %851 = vmatpush1.msra.mxu0 %v801
        %852 = vmatprep.subr.mxu0 %v798
        %853 = vmatpush1.msra.mxu0 %v797
        %854 = vmatprep.subr.mxu0 %v794
        %855 = vmatpush1.msra.mxu0 %v793
        %856 = vmatprep.subr.mxu0 0.0
        %857 = vmatpush2.msra.mxu0 0.0
        %858 = vmatprep.subr.mxu0 0.0
        %859 = vmatpush2.msra.mxu0 0.0
        %860 = vmatprep.subr.mxu0 0.0
        %861 = vmatpush2.msra.mxu0 0.0
        %862 = vmatprep.subr.mxu0 0.0
        %863 = vmatpush2.msra.mxu0 0.0
        %864 = vmatprep.subr.mxu0 0.0
        %865 = vmatpush2.msra.mxu0 0.0
        %866 = vmatprep.subr.mxu0 0.0
        %867 = vmatpush2.msra.mxu0 0.0
        %868 = vmatprep.subr.mxu0 0.0
        %869 = vmatpush2.msra.mxu0 0.0
        %870 = vmatprep.subr.mxu0 0.0
        %871 = vmatpush2.msra.mxu0 0.0
        %872 = vmatprep.subr.mxu0 0.0
        %873 = vmatpush2.msra.mxu0 0.0
        %874 = vmatprep.subr.mxu0 0.0
        %875 = vmatpush2.msra.mxu0 0.0
        %876 = vmatprep.subr.mxu0 0.0
        %877 = vmatpush2.msra.mxu0 0.0
        %878 = vmatprep.subr.mxu0 0.0
        %879 = vmatpush2.msra.mxu0 0.0
        %880 = vmatprep.subr.mxu0 0.0
        %881 = vmatpush2.msra.mxu0 0.0
        %882 = vmatprep.subr.mxu0 0.0
        %883 = vmatpush2.msra.mxu0 0.0
        %884 = vmatprep.subr.mxu0 0.0
        %885 = vmatpush2.msra.mxu0 0.0
        %886 = vmatprep.subr.mxu0 0.0
        %887 = vmatpush2.msra.mxu0 0.0
        %888 = vmatprep.mubr.f32.mxu0 0.0
        %889 = vmatmul.mubr.f32.gmra.mxu0 %v810
        %v890 = vpop.f32.mrf.mxu0
        %v891 = vadd.f32 0.0, %v890
        %v892 = vpop.f32.mrf.mxu0
        %v893 = vadd.f32 0.0, %v892
        %894 = vdwg.mxu0
        %895 = vmatprep.subr.mxu0 0.0
        %896 = vmatpush1.msra.mxu0 0.0
        %897 = vmatprep.subr.mxu0 0.0
        %898 = vmatpush1.msra.mxu0 0.0
        %899 = vmatprep.subr.mxu0 0.0
        %900 = vmatpush1.msra.mxu0 0.0
        %901 = vmatprep.subr.mxu0 0.0
        %902 = vmatpush1.msra.mxu0 0.0
        %903 = vmatprep.subr.mxu0 0.0
        %904 = vmatpush1.msra.mxu0 0.0
        %905 = vmatprep.subr.mxu0 0.0
        %906 = vmatpush1.msra.mxu0 0.0
        %907 = vmatprep.subr.mxu0 0.0
        %908 = vmatpush1.msra.mxu0 0.0
        %909 = vmatprep.subr.mxu0 0.0
        %910 = vmatpush1.msra.mxu0 0.0
        %911 = vmatprep.subr.mxu0 0.0
        %912 = vmatpush1.msra.mxu0 0.0
        %913 = vmatprep.subr.mxu0 0.0
        %914 = vmatpush1.msra.mxu0 0.0
        %915 = vmatprep.subr.mxu0 0.0
        %916 = vmatpush1.msra.mxu0 0.0
        %917 = vmatprep.subr.mxu0 0.0
        %918 = vmatpush1.msra.mxu0 0.0
        %919 = vmatprep.subr.mxu0 %v822
        %920 = vmatpush1.msra.mxu0 %v819
        %921 = vmatprep.subr.mxu0 %v804
        %922 = vmatpush1.msra.mxu0 %v803
        %923 = vmatprep.subr.mxu0 %v800
        %924 = vmatpush1.msra.mxu0 %v799
        %925 = vmatprep.subr.mxu0 %v796
        %926 = vmatpush1.msra.mxu0 %v795
        %927 = vmatprep.subr.mxu0 0.0
        %928 = vmatpush2.msra.mxu0 0.0
        %929 = vmatprep.subr.mxu0 0.0
        %930 = vmatpush2.msra.mxu0 0.0
        %931 = vmatprep.subr.mxu0 0.0
        %932 = vmatpush2.msra.mxu0 0.0
        %933 = vmatprep.subr.mxu0 0.0
        %934 = vmatpush2.msra.mxu0 0.0
        %935 = vmatprep.subr.mxu0 0.0
        %936 = vmatpush2.msra.mxu0 0.0
        %937 = vmatprep.subr.mxu0 0.0
        %938 = vmatpush2.msra.mxu0 0.0
        %939 = vmatprep.subr.mxu0 0.0
        %940 = vmatpush2.msra.mxu0 0.0
        %941 = vmatprep.subr.mxu0 0.0
        %942 = vmatpush2.msra.mxu0 0.0
        %943 = vmatprep.subr.mxu0 0.0
        %944 = vmatpush2.msra.mxu0 0.0
        %945 = vmatprep.subr.mxu0 0.0
        %946 = vmatpush2.msra.mxu0 0.0
        %947 = vmatprep.subr.mxu0 0.0
        %948 = vmatpush2.msra.mxu0 0.0
        %949 = vmatprep.subr.mxu0 0.0
        %950 = vmatpush2.msra.mxu0 0.0
        %951 = vmatprep.subr.mxu0 0.0
        %952 = vmatpush2.msra.mxu0 0.0
        %953 = vmatprep.subr.mxu0 0.0
        %954 = vmatpush2.msra.mxu0 0.0
        %955 = vmatprep.subr.mxu0 0.0
        %956 = vmatpush2.msra.mxu0 0.0
        %957 = vmatprep.subr.mxu0 0.0
        %958 = vmatpush2.msra.mxu0 0.0
        %959 = vmatprep.mubr.f32.mxu0 0.0
        %960 = vmatmul.mubr.f32.gmra.mxu0 %v810
        %v961 = vpop.f32.mrf.mxu0
        %v962 = vadd.f32 0.0, %v961
        %v963 = vpop.f32.mrf.mxu0
        %v964 = vadd.f32 0.0, %v963
        %965 = vdwg.mxu0
        %v966 = vadd.f32 %v716, %v891
        %v967 = vadd.f32 %v718, %v893
        %v968 = vadd.f32 %v787, %v962
        %v969 = vadd.f32 %v789, %v964
        %v970 = vld [vmem:[%s438 + $0x15] sm:$0x3f]
        %s971 = scalar_lea.vmem [#allocation2], 384
        %v972 = vld [vmem:[%s971] sm:$0xff]
        %v973 = vld [vmem:[%s971 + $0x8] sm:$0xff]
        %v974 = vld [vmem:[%s971 + $0x10] sm:$0xff]
        %v975 = vld [vmem:[%s971 + $0x18] sm:$0xff]
        %v976 = vld [vmem:[%s971 + $0x20] sm:$0xff]
        %v977 = vld [vmem:[%s971 + $0x28] sm:$0xff]
        %v978 = vld [vmem:[%s971 + $0x30] sm:$0xff]
        %v979 = vld [vmem:[%s971 + $0x38] sm:$0xff]
        %v980 = vld [vmem:[%s971 + $0x40] sm:$0xff]
        %v981 = vld [vmem:[%s971 + $0x48] sm:$0xff]
        %v982 = vld [vmem:[%s971 + $0x50] sm:$0xff]
        %v983 = vld [vmem:[%s971 + $0x58] sm:$0xff]
        %v984 = vld [vmem:[%s971 + $0x60] sm:$0xf]
        %v985 = vld [vmem:[%s971 + $0x68] sm:$0xf]
        %v986 = vld [vmem:[%s971 + $0x70] sm:$0xf]
        %v987 = vld [vmem:[%s971 + $0x78] sm:$0xf]
        %v989 = vsel %vm475, %v970, 0
        %v992 = vsel %vm479, %v984, 0
        %v995 = vsel %vm479, %v985, 0
        %v998 = vsel %vm479, %v986, 0
        %v1001 = vsel %vm479, %v987, 0
        %1003 = vmatprep.subr.mxu0 0.0
        %1004 = vmatpush1.msra.mxu0 0.0
        %1005 = vmatprep.subr.mxu0 0.0
        %1006 = vmatpush1.msra.mxu0 0.0
        %1007 = vmatprep.subr.mxu0 0.0
        %1008 = vmatpush1.msra.mxu0 0.0
        %1009 = vmatprep.subr.mxu0 0.0
        %1010 = vmatpush1.msra.mxu0 0.0
        %1011 = vmatprep.subr.mxu0 0.0
        %1012 = vmatpush1.msra.mxu0 0.0
        %1013 = vmatprep.subr.mxu0 0.0
        %1014 = vmatpush1.msra.mxu0 0.0
        %1015 = vmatprep.subr.mxu0 0.0
        %1016 = vmatpush1.msra.mxu0 0.0
        %1017 = vmatprep.subr.mxu0 0.0
        %1018 = vmatpush1.msra.mxu0 0.0
        %1019 = vmatprep.subr.mxu0 0.0
        %1020 = vmatpush1.msra.mxu0 0.0
        %1021 = vmatprep.subr.mxu0 0.0
        %1022 = vmatpush1.msra.mxu0 0.0
        %1023 = vmatprep.subr.mxu0 0.0
        %1024 = vmatpush1.msra.mxu0 0.0
        %1025 = vmatprep.subr.mxu0 0.0
        %1026 = vmatpush1.msra.mxu0 0.0
        %1027 = vmatprep.subr.mxu0 %v995
        %1028 = vmatpush1.msra.mxu0 %v992
        %1029 = vmatprep.subr.mxu0 %v981
        %1030 = vmatpush1.msra.mxu0 %v980
        %1031 = vmatprep.subr.mxu0 %v977
        %1032 = vmatpush1.msra.mxu0 %v976
        %1033 = vmatprep.subr.mxu0 %v973
        %1034 = vmatpush1.msra.mxu0 %v972
        %1035 = vmatprep.subr.mxu0 0.0
        %1036 = vmatpush2.msra.mxu0 0.0
        %1037 = vmatprep.subr.mxu0 0.0
        %1038 = vmatpush2.msra.mxu0 0.0
        %1039 = vmatprep.subr.mxu0 0.0
        %1040 = vmatpush2.msra.mxu0 0.0
        %1041 = vmatprep.subr.mxu0 0.0
        %1042 = vmatpush2.msra.mxu0 0.0
        %1043 = vmatprep.subr.mxu0 0.0
        %1044 = vmatpush2.msra.mxu0 0.0
        %1045 = vmatprep.subr.mxu0 0.0
        %1046 = vmatpush2.msra.mxu0 0.0
        %1047 = vmatprep.subr.mxu0 0.0
        %1048 = vmatpush2.msra.mxu0 0.0
        %1049 = vmatprep.subr.mxu0 0.0
        %1050 = vmatpush2.msra.mxu0 0.0
        %1051 = vmatprep.subr.mxu0 0.0
        %1052 = vmatpush2.msra.mxu0 0.0
        %1053 = vmatprep.subr.mxu0 0.0
        %1054 = vmatpush2.msra.mxu0 0.0
        %1055 = vmatprep.subr.mxu0 0.0
        %1056 = vmatpush2.msra.mxu0 0.0
        %1057 = vmatprep.subr.mxu0 0.0
        %1058 = vmatpush2.msra.mxu0 0.0
        %1059 = vmatprep.subr.mxu0 0.0
        %1060 = vmatpush2.msra.mxu0 0.0
        %1061 = vmatprep.subr.mxu0 0.0
        %1062 = vmatpush2.msra.mxu0 0.0
        %1063 = vmatprep.subr.mxu0 0.0
        %1064 = vmatpush2.msra.mxu0 0.0
        %1065 = vmatprep.subr.mxu0 0.0
        %1066 = vmatpush2.msra.mxu0 0.0
        %1067 = vmatprep.mubr.f32.mxu0 0.0
        %1068 = vmatmul.mubr.f32.gmra.mxu0 %v989
        %v1069 = vpop.f32.mrf.mxu0
        %v1070 = vadd.f32 0.0, %v1069
        %v1071 = vpop.f32.mrf.mxu0
        %v1072 = vadd.f32 0.0, %v1071
        %1073 = vdwg.mxu0
        %1074 = vmatprep.subr.mxu0 0.0
        %1075 = vmatpush1.msra.mxu0 0.0
        %1076 = vmatprep.subr.mxu0 0.0
        %1077 = vmatpush1.msra.mxu0 0.0
        %1078 = vmatprep.subr.mxu0 0.0
        %1079 = vmatpush1.msra.mxu0 0.0
        %1080 = vmatprep.subr.mxu0 0.0
        %1081 = vmatpush1.msra.mxu0 0.0
        %1082 = vmatprep.subr.mxu0 0.0
        %1083 = vmatpush1.msra.mxu0 0.0
        %1084 = vmatprep.subr.mxu0 0.0
        %1085 = vmatpush1.msra.mxu0 0.0
        %1086 = vmatprep.subr.mxu0 0.0
        %1087 = vmatpush1.msra.mxu0 0.0
        %1088 = vmatprep.subr.mxu0 0.0
        %1089 = vmatpush1.msra.mxu0 0.0
        %1090 = vmatprep.subr.mxu0 0.0
        %1091 = vmatpush1.msra.mxu0 0.0
        %1092 = vmatprep.subr.mxu0 0.0
        %1093 = vmatpush1.msra.mxu0 0.0
        %1094 = vmatprep.subr.mxu0 0.0
        %1095 = vmatpush1.msra.mxu0 0.0
        %1096 = vmatprep.subr.mxu0 0.0
        %1097 = vmatpush1.msra.mxu0 0.0
        %1098 = vmatprep.subr.mxu0 %v1001
        %1099 = vmatpush1.msra.mxu0 %v998
        %1100 = vmatprep.subr.mxu0 %v983
        %1101 = vmatpush1.msra.mxu0 %v982
        %1102 = vmatprep.subr.mxu0 %v979
        %1103 = vmatpush1.msra.mxu0 %v978
        %1104 = vmatprep.subr.mxu0 %v975
        %1105 = vmatpush1.msra.mxu0 %v974
        %1106 = vmatprep.subr.mxu0 0.0
        %1107 = vmatpush2.msra.mxu0 0.0
        %1108 = vmatprep.subr.mxu0 0.0
        %1109 = vmatpush2.msra.mxu0 0.0
        %1110 = vmatprep.subr.mxu0 0.0
        %1111 = vmatpush2.msra.mxu0 0.0
        %1112 = vmatprep.subr.mxu0 0.0
        %1113 = vmatpush2.msra.mxu0 0.0
        %1114 = vmatprep.subr.mxu0 0.0
        %1115 = vmatpush2.msra.mxu0 0.0
        %1116 = vmatprep.subr.mxu0 0.0
        %1117 = vmatpush2.msra.mxu0 0.0
        %1118 = vmatprep.subr.mxu0 0.0
        %1119 = vmatpush2.msra.mxu0 0.0
        %1120 = vmatprep.subr.mxu0 0.0
        %1121 = vmatpush2.msra.mxu0 0.0
        %1122 = vmatprep.subr.mxu0 0.0
        %1123 = vmatpush2.msra.mxu0 0.0
        %1124 = vmatprep.subr.mxu0 0.0
        %1125 = vmatpush2.msra.mxu0 0.0
        %1126 = vmatprep.subr.mxu0 0.0
        %1127 = vmatpush2.msra.mxu0 0.0
        %1128 = vmatprep.subr.mxu0 0.0
        %1129 = vmatpush2.msra.mxu0 0.0
        %1130 = vmatprep.subr.mxu0 0.0
        %1131 = vmatpush2.msra.mxu0 0.0
        %1132 = vmatprep.subr.mxu0 0.0
        %1133 = vmatpush2.msra.mxu0 0.0
        %1134 = vmatprep.subr.mxu0 0.0
        %1135 = vmatpush2.msra.mxu0 0.0
        %1136 = vmatprep.subr.mxu0 0.0
        %1137 = vmatpush2.msra.mxu0 0.0
        %1138 = vmatprep.mubr.f32.mxu0 0.0
        %1139 = vmatmul.mubr.f32.gmra.mxu0 %v989
        %v1140 = vpop.f32.mrf.mxu0
        %v1141 = vadd.f32 0.0, %v1140
        %v1142 = vpop.f32.mrf.mxu0
        %v1143 = vadd.f32 0.0, %v1142
        %1144 = vdwg.mxu0
        %v1145 = vadd.f32 %v966, %v1070
        %v1146 = vadd.f32 %v967, %v1072
        %v1147 = vadd.f32 %v968, %v1141
        %v1148 = vadd.f32 %v969, %v1143
        %v1149 = vld [vmem:[%s438 + $0x1] sm:$0x3f]
        %s1150 = scalar_lea.vmem [#allocation2], 512
        %v1151 = vld [vmem:[%s1150] sm:$0xff]
        %v1152 = vld [vmem:[%s1150 + $0x8] sm:$0xff]
        %v1153 = vld [vmem:[%s1150 + $0x10] sm:$0xff]
        %v1154 = vld [vmem:[%s1150 + $0x18] sm:$0xff]
        %v1155 = vld [vmem:[%s1150 + $0x20] sm:$0xff]
        %v1156 = vld [vmem:[%s1150 + $0x28] sm:$0xff]
        %v1157 = vld [vmem:[%s1150 + $0x30] sm:$0xff]
        %v1158 = vld [vmem:[%s1150 + $0x38] sm:$0xff]
        %v1159 = vld [vmem:[%s1150 + $0x40] sm:$0xff]
        %v1160 = vld [vmem:[%s1150 + $0x48] sm:$0xff]
        %v1161 = vld [vmem:[%s1150 + $0x50] sm:$0xff]
        %v1162 = vld [vmem:[%s1150 + $0x58] sm:$0xff]
        %v1163 = vld [vmem:[%s1150 + $0x60] sm:$0xf]
        %v1164 = vld [vmem:[%s1150 + $0x68] sm:$0xf]
        %v1165 = vld [vmem:[%s1150 + $0x70] sm:$0xf]
        %v1166 = vld [vmem:[%s1150 + $0x78] sm:$0xf]
        %v1168 = vsel %vm475, %v1149, 0
        %v1171 = vsel %vm479, %v1163, 0
        %v1174 = vsel %vm479, %v1164, 0
        %v1177 = vsel %vm479, %v1165, 0
        %v1180 = vsel %vm479, %v1166, 0
        %1182 = vmatprep.subr.mxu0 0.0
        %1183 = vmatpush1.msra.mxu0 0.0
        %1184 = vmatprep.subr.mxu0 0.0
        %1185 = vmatpush1.msra.mxu0 0.0
        %1186 = vmatprep.subr.mxu0 0.0
        %1187 = vmatpush1.msra.mxu0 0.0
        %1188 = vmatprep.subr.mxu0 0.0
        %1189 = vmatpush1.msra.mxu0 0.0
        %1190 = vmatprep.subr.mxu0 0.0
        %1191 = vmatpush1.msra.mxu0 0.0
        %1192 = vmatprep.subr.mxu0 0.0
        %1193 = vmatpush1.msra.mxu0 0.0
        %1194 = vmatprep.subr.mxu0 0.0
        %1195 = vmatpush1.msra.mxu0 0.0
        %1196 = vmatprep.subr.mxu0 0.0
        %1197 = vmatpush1.msra.mxu0 0.0
        %1198 = vmatprep.subr.mxu0 0.0
        %1199 = vmatpush1.msra.mxu0 0.0
        %1200 = vmatprep.subr.mxu0 0.0
        %1201 = vmatpush1.msra.mxu0 0.0
        %1202 = vmatprep.subr.mxu0 0.0
        %1203 = vmatpush1.msra.mxu0 0.0
        %1204 = vmatprep.subr.mxu0 0.0
        %1205 = vmatpush1.msra.mxu0 0.0
        %1206 = vmatprep.subr.mxu0 %v1174
        %1207 = vmatpush1.msra.mxu0 %v1171
        %1208 = vmatprep.subr.mxu0 %v1160
        %1209 = vmatpush1.msra.mxu0 %v1159
        %1210 = vmatprep.subr.mxu0 %v1156
        %1211 = vmatpush1.msra.mxu0 %v1155
        %1212 = vmatprep.subr.mxu0 %v1152
        %1213 = vmatpush1.msra.mxu0 %v1151
        %1214 = vmatprep.subr.mxu0 0.0
        %1215 = vmatpush2.msra.mxu0 0.0
        %1216 = vmatprep.subr.mxu0 0.0
        %1217 = vmatpush2.msra.mxu0 0.0
        %1218 = vmatprep.subr.mxu0 0.0
        %1219 = vmatpush2.msra.mxu0 0.0
        %1220 = vmatprep.subr.mxu0 0.0
        %1221 = vmatpush2.msra.mxu0 0.0
        %1222 = vmatprep.subr.mxu0 0.0
        %1223 = vmatpush2.msra.mxu0 0.0
        %1224 = vmatprep.subr.mxu0 0.0
        %1225 = vmatpush2.msra.mxu0 0.0
        %1226 = vmatprep.subr.mxu0 0.0
        %1227 = vmatpush2.msra.mxu0 0.0
        %1228 = vmatprep.subr.mxu0 0.0
        %1229 = vmatpush2.msra.mxu0 0.0
        %1230 = vmatprep.subr.mxu0 0.0
        %1231 = vmatpush2.msra.mxu0 0.0
        %1232 = vmatprep.subr.mxu0 0.0
        %1233 = vmatpush2.msra.mxu0 0.0
        %1234 = vmatprep.subr.mxu0 0.0
        %1235 = vmatpush2.msra.mxu0 0.0
        %1236 = vmatprep.subr.mxu0 0.0
        %1237 = vmatpush2.msra.mxu0 0.0
        %1238 = vmatprep.subr.mxu0 0.0
        %1239 = vmatpush2.msra.mxu0 0.0
        %1240 = vmatprep.subr.mxu0 0.0
        %1241 = vmatpush2.msra.mxu0 0.0
        %1242 = vmatprep.subr.mxu0 0.0
        %1243 = vmatpush2.msra.mxu0 0.0
        %1244 = vmatprep.subr.mxu0 0.0
        %1245 = vmatpush2.msra.mxu0 0.0
        %1246 = vmatprep.mubr.f32.mxu0 0.0
        %1247 = vmatmul.mubr.f32.gmra.mxu0 %v1168
        %v1248 = vpop.f32.mrf.mxu0
        %v1249 = vadd.f32 0.0, %v1248
        %v1250 = vpop.f32.mrf.mxu0
        %v1251 = vadd.f32 0.0, %v1250
        %1252 = vdwg.mxu0
        %1253 = vmatprep.subr.mxu0 0.0
        %1254 = vmatpush1.msra.mxu0 0.0
        %1255 = vmatprep.subr.mxu0 0.0
        %1256 = vmatpush1.msra.mxu0 0.0
        %1257 = vmatprep.subr.mxu0 0.0
        %1258 = vmatpush1.msra.mxu0 0.0
        %1259 = vmatprep.subr.mxu0 0.0
        %1260 = vmatpush1.msra.mxu0 0.0
        %1261 = vmatprep.subr.mxu0 0.0
        %1262 = vmatpush1.msra.mxu0 0.0
        %1263 = vmatprep.subr.mxu0 0.0
        %1264 = vmatpush1.msra.mxu0 0.0
        %1265 = vmatprep.subr.mxu0 0.0
        %1266 = vmatpush1.msra.mxu0 0.0
        %1267 = vmatprep.subr.mxu0 0.0
        %1268 = vmatpush1.msra.mxu0 0.0
        %1269 = vmatprep.subr.mxu0 0.0
        %1270 = vmatpush1.msra.mxu0 0.0
        %1271 = vmatprep.subr.mxu0 0.0
        %1272 = vmatpush1.msra.mxu0 0.0
        %1273 = vmatprep.subr.mxu0 0.0
        %1274 = vmatpush1.msra.mxu0 0.0
        %1275 = vmatprep.subr.mxu0 0.0
        %1276 = vmatpush1.msra.mxu0 0.0
        %1277 = vmatprep.subr.mxu0 %v1180
        %1278 = vmatpush1.msra.mxu0 %v1177
        %1279 = vmatprep.subr.mxu0 %v1162
        %1280 = vmatpush1.msra.mxu0 %v1161
        %1281 = vmatprep.subr.mxu0 %v1158
        %1282 = vmatpush1.msra.mxu0 %v1157
        %1283 = vmatprep.subr.mxu0 %v1154
        %1284 = vmatpush1.msra.mxu0 %v1153
        %1285 = vmatprep.subr.mxu0 0.0
        %1286 = vmatpush2.msra.mxu0 0.0
        %1287 = vmatprep.subr.mxu0 0.0
        %1288 = vmatpush2.msra.mxu0 0.0
        %1289 = vmatprep.subr.mxu0 0.0
        %1290 = vmatpush2.msra.mxu0 0.0
        %1291 = vmatprep.subr.mxu0 0.0
        %1292 = vmatpush2.msra.mxu0 0.0
        %1293 = vmatprep.subr.mxu0 0.0
        %1294 = vmatpush2.msra.mxu0 0.0
        %1295 = vmatprep.subr.mxu0 0.0
        %1296 = vmatpush2.msra.mxu0 0.0
        %1297 = vmatprep.subr.mxu0 0.0
        %1298 = vmatpush2.msra.mxu0 0.0
        %1299 = vmatprep.subr.mxu0 0.0
        %1300 = vmatpush2.msra.mxu0 0.0
        %1301 = vmatprep.subr.mxu0 0.0
        %1302 = vmatpush2.msra.mxu0 0.0
        %1303 = vmatprep.subr.mxu0 0.0
        %1304 = vmatpush2.msra.mxu0 0.0
        %1305 = vmatprep.subr.mxu0 0.0
        %1306 = vmatpush2.msra.mxu0 0.0
        %1307 = vmatprep.subr.mxu0 0.0
        %1308 = vmatpush2.msra.mxu0 0.0
        %1309 = vmatprep.subr.mxu0 0.0
        %1310 = vmatpush2.msra.mxu0 0.0
        %1311 = vmatprep.subr.mxu0 0.0
        %1312 = vmatpush2.msra.mxu0 0.0
        %1313 = vmatprep.subr.mxu0 0.0
        %1314 = vmatpush2.msra.mxu0 0.0
        %1315 = vmatprep.subr.mxu0 0.0
        %1316 = vmatpush2.msra.mxu0 0.0
        %1317 = vmatprep.mubr.f32.mxu0 0.0
        %1318 = vmatmul.mubr.f32.gmra.mxu0 %v1168
        %v1319 = vpop.f32.mrf.mxu0
        %v1320 = vadd.f32 0.0, %v1319
        %v1321 = vpop.f32.mrf.mxu0
        %v1322 = vadd.f32 0.0, %v1321
        %1323 = vdwg.mxu0
        %v1324 = vadd.f32 %v1145, %v1249
        %v1325 = vadd.f32 %v1146, %v1251
        %v1326 = vadd.f32 %v1147, %v1320
        %v1327 = vadd.f32 %v1148, %v1322
        %v1329 = vlaneseq
        %v1330 = vshrl.u32 %v1329, 7
        %v1331 = vsub.s32 0, %v1330
        %v1332 = vrot.slane %v439, %v1331
        %v1333 = vlaneseq
        %v1334 = vshrl.u32 %v1333, 7
        %v1335 = vsub.s32 1, %v1334
        %v1336 = vrot.slane %v439, %v1335
        %v1337 = vlaneseq
        %v1338 = vshrl.u32 %v1337, 7
        %v1339 = vsub.s32 2, %v1338
        %v1340 = vrot.slane %v439, %v1339
        %v1341 = vlaneseq
        %v1342 = vshrl.u32 %v1341, 7
        %v1343 = vsub.s32 3, %v1342
        %v1344 = vrot.slane %v439, %v1343
        %v1349 = vadd.f32 %v1324, %v1332
        %v1350 = vadd.f32 %v1325, %v1336
        %v1351 = vadd.f32 %v1326, %v1340
        %v1352 = vadd.f32 %v1327, %v1344
        %v1353 = vmax.f32 %v1349, 0.0
        %v1354 = vmax.f32 %v1350, 0.0
        %v1355 = vmax.f32 %v1351, 0.0
        %v1356 = vmax.f32 %v1352, 0.0
        %v1357 = vmax.f32 %v1353, %v1355
        %v1358 = vmax.f32 %v1354, %v1356
        %1359 = vmatprep.subr.mxu0 0.0
        %1360 = vmatpush1.msra.mxu0 0.0
        %1361 = vmatprep.subr.mxu0 0.0
        %1362 = vmatpush1.msra.mxu0 0.0
        %1363 = vmatprep.subr.mxu0 0.0
        %1364 = vmatpush1.msra.mxu0 0.0
        %1365 = vmatprep.subr.mxu0 0.0
        %1366 = vmatpush1.msra.mxu0 0.0
        %1367 = vmatprep.subr.mxu0 0.0
        %1368 = vmatpush1.msra.mxu0 0.0
        %1369 = vmatprep.subr.mxu0 0.0
        %1370 = vmatpush1.msra.mxu0 0.0
        %1371 = vmatprep.subr.mxu0 0.0
        %1372 = vmatpush1.msra.mxu0 0.0
        %1373 = vmatprep.subr.mxu0 0.0
        %1374 = vmatpush1.msra.mxu0 0.0
        %1375 = vmatprep.subr.mxu0 0.0
        %1376 = vmatpush1.msra.mxu0 0.0
        %1377 = vmatprep.subr.mxu0 0.0
        %1378 = vmatpush1.msra.mxu0 0.0
        %1379 = vmatprep.subr.mxu0 0.0
        %1380 = vmatpush1.msra.mxu0 0.0
        %1381 = vmatprep.subr.mxu0 0.0
        %1382 = vmatpush1.msra.mxu0 0.0
        %1383 = vmatprep.subr.mxu0 %v484
        %1384 = vmatpush1.msra.mxu0 %v481
        %1385 = vmatprep.subr.mxu0 %v468
        %1386 = vmatpush1.msra.mxu0 %v467
        %1387 = vmatprep.subr.mxu0 %v464
        %1388 = vmatpush1.msra.mxu0 %v463
        %1389 = vmatprep.subr.mxu0 %v460
        %1390 = vmatpush1.msra.mxu0 %v459
        %1391 = vmatprep.subr.mxu0 0.0
        %1392 = vmatpush2.msra.mxu0 0.0
        %1393 = vmatprep.subr.mxu0 0.0
        %1394 = vmatpush2.msra.mxu0 0.0
        %1395 = vmatprep.subr.mxu0 0.0
        %1396 = vmatpush2.msra.mxu0 0.0
        %1397 = vmatprep.subr.mxu0 0.0
        %1398 = vmatpush2.msra.mxu0 0.0
        %1399 = vmatprep.subr.mxu0 0.0
        %1400 = vmatpush2.msra.mxu0 0.0
        %1401 = vmatprep.subr.mxu0 0.0
        %1402 = vmatpush2.msra.mxu0 0.0
        %1403 = vmatprep.subr.mxu0 0.0
        %1404 = vmatpush2.msra.mxu0 0.0
        %1405 = vmatprep.subr.mxu0 0.0
        %1406 = vmatpush2.msra.mxu0 0.0
        %1407 = vmatprep.subr.mxu0 0.0
        %1408 = vmatpush2.msra.mxu0 0.0
        %1409 = vmatprep.subr.mxu0 0.0
        %1410 = vmatpush2.msra.mxu0 0.0
        %1411 = vmatprep.subr.mxu0 0.0
        %1412 = vmatpush2.msra.mxu0 0.0
        %1413 = vmatprep.subr.mxu0 0.0
        %1414 = vmatpush2.msra.mxu0 0.0
        %1415 = vmatprep.subr.mxu0 0.0
        %1416 = vmatpush2.msra.mxu0 0.0
        %1417 = vmatprep.subr.mxu0 0.0
        %1418 = vmatpush2.msra.mxu0 0.0
        %1419 = vmatprep.subr.mxu0 0.0
        %1420 = vmatpush2.msra.mxu0 0.0
        %1421 = vmatprep.subr.mxu0 0.0
        %1422 = vmatpush2.msra.mxu0 0.0
        %1423 = vmatprep.mubr.f32.mxu0 0.0
        %1424 = vmatmul.mubr.f32.gmra.mxu0 %v810
        %v1425 = vpop.f32.mrf.mxu0
        %v1426 = vadd.f32 0.0, %v1425
        %v1427 = vpop.f32.mrf.mxu0
        %v1428 = vadd.f32 0.0, %v1427
        %1429 = vdwg.mxu0
        %1430 = vmatprep.subr.mxu0 0.0
        %1431 = vmatpush1.msra.mxu0 0.0
        %1432 = vmatprep.subr.mxu0 0.0
        %1433 = vmatpush1.msra.mxu0 0.0
        %1434 = vmatprep.subr.mxu0 0.0
        %1435 = vmatpush1.msra.mxu0 0.0
        %1436 = vmatprep.subr.mxu0 0.0
        %1437 = vmatpush1.msra.mxu0 0.0
        %1438 = vmatprep.subr.mxu0 0.0
        %1439 = vmatpush1.msra.mxu0 0.0
        %1440 = vmatprep.subr.mxu0 0.0
        %1441 = vmatpush1.msra.mxu0 0.0
        %1442 = vmatprep.subr.mxu0 0.0
        %1443 = vmatpush1.msra.mxu0 0.0
        %1444 = vmatprep.subr.mxu0 0.0
        %1445 = vmatpush1.msra.mxu0 0.0
        %1446 = vmatprep.subr.mxu0 0.0
        %1447 = vmatpush1.msra.mxu0 0.0
        %1448 = vmatprep.subr.mxu0 0.0
        %1449 = vmatpush1.msra.mxu0 0.0
        %1450 = vmatprep.subr.mxu0 0.0
        %1451 = vmatpush1.msra.mxu0 0.0
        %1452 = vmatprep.subr.mxu0 0.0
        %1453 = vmatpush1.msra.mxu0 0.0
        %1454 = vmatprep.subr.mxu0 %v490
        %1455 = vmatpush1.msra.mxu0 %v487
        %1456 = vmatprep.subr.mxu0 %v470
        %1457 = vmatpush1.msra.mxu0 %v469
        %1458 = vmatprep.subr.mxu0 %v466
        %1459 = vmatpush1.msra.mxu0 %v465
        %1460 = vmatprep.subr.mxu0 %v462
        %1461 = vmatpush1.msra.mxu0 %v461
        %1462 = vmatprep.subr.mxu0 0.0
        %1463 = vmatpush2.msra.mxu0 0.0
        %1464 = vmatprep.subr.mxu0 0.0
        %1465 = vmatpush2.msra.mxu0 0.0
        %1466 = vmatprep.subr.mxu0 0.0
        %1467 = vmatpush2.msra.mxu0 0.0
        %1468 = vmatprep.subr.mxu0 0.0
        %1469 = vmatpush2.msra.mxu0 0.0
        %1470 = vmatprep.subr.mxu0 0.0
        %1471 = vmatpush2.msra.mxu0 0.0
        %1472 = vmatprep.subr.mxu0 0.0
        %1473 = vmatpush2.msra.mxu0 0.0
        %1474 = vmatprep.subr.mxu0 0.0
        %1475 = vmatpush2.msra.mxu0 0.0
        %1476 = vmatprep.subr.mxu0 0.0
        %1477 = vmatpush2.msra.mxu0 0.0
        %1478 = vmatprep.subr.mxu0 0.0
        %1479 = vmatpush2.msra.mxu0 0.0
        %1480 = vmatprep.subr.mxu0 0.0
        %1481 = vmatpush2.msra.mxu0 0.0
        %1482 = vmatprep.subr.mxu0 0.0
        %1483 = vmatpush2.msra.mxu0 0.0
        %1484 = vmatprep.subr.mxu0 0.0
        %1485 = vmatpush2.msra.mxu0 0.0
        %1486 = vmatprep.subr.mxu0 0.0
        %1487 = vmatpush2.msra.mxu0 0.0
        %1488 = vmatprep.subr.mxu0 0.0
        %1489 = vmatpush2.msra.mxu0 0.0
        %1490 = vmatprep.subr.mxu0 0.0
        %1491 = vmatpush2.msra.mxu0 0.0
        %1492 = vmatprep.subr.mxu0 0.0
        %1493 = vmatpush2.msra.mxu0 0.0
        %1494 = vmatprep.mubr.f32.mxu0 0.0
        %1495 = vmatmul.mubr.f32.gmra.mxu0 %v810
        %v1496 = vpop.f32.mrf.mxu0
        %v1497 = vadd.f32 0.0, %v1496
        %v1498 = vpop.f32.mrf.mxu0
        %v1499 = vadd.f32 0.0, %v1498
        %1500 = vdwg.mxu0
        %1501 = vmatprep.subr.mxu0 0.0
        %1502 = vmatpush1.msra.mxu0 0.0
        %1503 = vmatprep.subr.mxu0 0.0
        %1504 = vmatpush1.msra.mxu0 0.0
        %1505 = vmatprep.subr.mxu0 0.0
        %1506 = vmatpush1.msra.mxu0 0.0
        %1507 = vmatprep.subr.mxu0 0.0
        %1508 = vmatpush1.msra.mxu0 0.0
        %1509 = vmatprep.subr.mxu0 0.0
        %1510 = vmatpush1.msra.mxu0 0.0
        %1511 = vmatprep.subr.mxu0 0.0
        %1512 = vmatpush1.msra.mxu0 0.0
        %1513 = vmatprep.subr.mxu0 0.0
        %1514 = vmatpush1.msra.mxu0 0.0
        %1515 = vmatprep.subr.mxu0 0.0
        %1516 = vmatpush1.msra.mxu0 0.0
        %1517 = vmatprep.subr.mxu0 0.0
        %1518 = vmatpush1.msra.mxu0 0.0
        %1519 = vmatprep.subr.mxu0 0.0
        %1520 = vmatpush1.msra.mxu0 0.0
        %1521 = vmatprep.subr.mxu0 0.0
        %1522 = vmatpush1.msra.mxu0 0.0
        %1523 = vmatprep.subr.mxu0 0.0
        %1524 = vmatpush1.msra.mxu0 0.0
        %1525 = vmatprep.subr.mxu0 %v641
        %1526 = vmatpush1.msra.mxu0 %v638
        %1527 = vmatprep.subr.mxu0 %v450
        %1528 = vmatpush1.msra.mxu0 %v449
        %1529 = vmatprep.subr.mxu0 %v446
        %1530 = vmatpush1.msra.mxu0 %v445
        %1531 = vmatprep.subr.mxu0 %v442
        %1532 = vmatpush1.msra.mxu0 %v441
        %1533 = vmatprep.subr.mxu0 0.0
        %1534 = vmatpush2.msra.mxu0 0.0
        %1535 = vmatprep.subr.mxu0 0.0
        %1536 = vmatpush2.msra.mxu0 0.0
        %1537 = vmatprep.subr.mxu0 0.0
        %1538 = vmatpush2.msra.mxu0 0.0
        %1539 = vmatprep.subr.mxu0 0.0
        %1540 = vmatpush2.msra.mxu0 0.0
        %1541 = vmatprep.subr.mxu0 0.0
        %1542 = vmatpush2.msra.mxu0 0.0
        %1543 = vmatprep.subr.mxu0 0.0
        %1544 = vmatpush2.msra.mxu0 0.0
        %1545 = vmatprep.subr.mxu0 0.0
        %1546 = vmatpush2.msra.mxu0 0.0
        %1547 = vmatprep.subr.mxu0 0.0
        %1548 = vmatpush2.msra.mxu0 0.0
        %1549 = vmatprep.subr.mxu0 0.0
        %1550 = vmatpush2.msra.mxu0 0.0
        %1551 = vmatprep.subr.mxu0 0.0
        %1552 = vmatpush2.msra.mxu0 0.0
        %1553 = vmatprep.subr.mxu0 0.0
        %1554 = vmatpush2.msra.mxu0 0.0
        %1555 = vmatprep.subr.mxu0 0.0
        %1556 = vmatpush2.msra.mxu0 0.0
        %1557 = vmatprep.subr.mxu0 0.0
        %1558 = vmatpush2.msra.mxu0 0.0
        %1559 = vmatprep.subr.mxu0 0.0
        %1560 = vmatpush2.msra.mxu0 0.0
        %1561 = vmatprep.subr.mxu0 0.0
        %1562 = vmatpush2.msra.mxu0 0.0
        %1563 = vmatprep.subr.mxu0 0.0
        %1564 = vmatpush2.msra.mxu0 0.0
        %1565 = vmatprep.mubr.f32.mxu0 0.0
        %1566 = vmatmul.mubr.f32.gmra.mxu0 %v477
        %v1567 = vpop.f32.mrf.mxu0
        %v1568 = vadd.f32 %v1426, %v1567
        %v1569 = vpop.f32.mrf.mxu0
        %v1570 = vadd.f32 %v1428, %v1569
        %1571 = vdwg.mxu0
        %1572 = vmatprep.subr.mxu0 0.0
        %1573 = vmatpush1.msra.mxu0 0.0
        %1574 = vmatprep.subr.mxu0 0.0
        %1575 = vmatpush1.msra.mxu0 0.0
        %1576 = vmatprep.subr.mxu0 0.0
        %1577 = vmatpush1.msra.mxu0 0.0
        %1578 = vmatprep.subr.mxu0 0.0
        %1579 = vmatpush1.msra.mxu0 0.0
        %1580 = vmatprep.subr.mxu0 0.0
        %1581 = vmatpush1.msra.mxu0 0.0
        %1582 = vmatprep.subr.mxu0 0.0
        %1583 = vmatpush1.msra.mxu0 0.0
        %1584 = vmatprep.subr.mxu0 0.0
        %1585 = vmatpush1.msra.mxu0 0.0
        %1586 = vmatprep.subr.mxu0 0.0
        %1587 = vmatpush1.msra.mxu0 0.0
        %1588 = vmatprep.subr.mxu0 0.0
        %1589 = vmatpush1.msra.mxu0 0.0
        %1590 = vmatprep.subr.mxu0 0.0
        %1591 = vmatpush1.msra.mxu0 0.0
        %1592 = vmatprep.subr.mxu0 0.0
        %1593 = vmatpush1.msra.mxu0 0.0
        %1594 = vmatprep.subr.mxu0 0.0
        %1595 = vmatpush1.msra.mxu0 0.0
        %1596 = vmatprep.subr.mxu0 %v647
        %1597 = vmatpush1.msra.mxu0 %v644
        %1598 = vmatprep.subr.mxu0 %v452
        %1599 = vmatpush1.msra.mxu0 %v451
        %1600 = vmatprep.subr.mxu0 %v448
        %1601 = vmatpush1.msra.mxu0 %v447
        %1602 = vmatprep.subr.mxu0 %v444
        %1603 = vmatpush1.msra.mxu0 %v443
        %1604 = vmatprep.subr.mxu0 0.0
        %1605 = vmatpush2.msra.mxu0 0.0
        %1606 = vmatprep.subr.mxu0 0.0
        %1607 = vmatpush2.msra.mxu0 0.0
        %1608 = vmatprep.subr.mxu0 0.0
        %1609 = vmatpush2.msra.mxu0 0.0
        %1610 = vmatprep.subr.mxu0 0.0
        %1611 = vmatpush2.msra.mxu0 0.0
        %1612 = vmatprep.subr.mxu0 0.0
        %1613 = vmatpush2.msra.mxu0 0.0
        %1614 = vmatprep.subr.mxu0 0.0
        %1615 = vmatpush2.msra.mxu0 0.0
        %1616 = vmatprep.subr.mxu0 0.0
        %1617 = vmatpush2.msra.mxu0 0.0
        %1618 = vmatprep.subr.mxu0 0.0
        %1619 = vmatpush2.msra.mxu0 0.0
        %1620 = vmatprep.subr.mxu0 0.0
        %1621 = vmatpush2.msra.mxu0 0.0
        %1622 = vmatprep.subr.mxu0 0.0
        %1623 = vmatpush2.msra.mxu0 0.0
        %1624 = vmatprep.subr.mxu0 0.0
        %1625 = vmatpush2.msra.mxu0 0.0
        %1626 = vmatprep.subr.mxu0 0.0
        %1627 = vmatpush2.msra.mxu0 0.0
        %1628 = vmatprep.subr.mxu0 0.0
        %1629 = vmatpush2.msra.mxu0 0.0
        %1630 = vmatprep.subr.mxu0 0.0
        %1631 = vmatpush2.msra.mxu0 0.0
        %1632 = vmatprep.subr.mxu0 0.0
        %1633 = vmatpush2.msra.mxu0 0.0
        %1634 = vmatprep.subr.mxu0 0.0
        %1635 = vmatpush2.msra.mxu0 0.0
        %1636 = vmatprep.mubr.f32.mxu0 0.0
        %1637 = vmatmul.mubr.f32.gmra.mxu0 %v477
        %v1638 = vpop.f32.mrf.mxu0
        %v1639 = vadd.f32 %v1497, %v1638
        %v1640 = vpop.f32.mrf.mxu0
        %v1641 = vadd.f32 %v1499, %v1640
        %1642 = vdwg.mxu0
        %1643 = vmatprep.subr.mxu0 0.0
        %1644 = vmatpush1.msra.mxu0 0.0
        %1645 = vmatprep.subr.mxu0 0.0
        %1646 = vmatpush1.msra.mxu0 0.0
        %1647 = vmatprep.subr.mxu0 0.0
        %1648 = vmatpush1.msra.mxu0 0.0
        %1649 = vmatprep.subr.mxu0 0.0
        %1650 = vmatpush1.msra.mxu0 0.0
        %1651 = vmatprep.subr.mxu0 0.0
        %1652 = vmatpush1.msra.mxu0 0.0
        %1653 = vmatprep.subr.mxu0 0.0
        %1654 = vmatpush1.msra.mxu0 0.0
        %1655 = vmatprep.subr.mxu0 0.0
        %1656 = vmatpush1.msra.mxu0 0.0
        %1657 = vmatprep.subr.mxu0 0.0
        %1658 = vmatpush1.msra.mxu0 0.0
        %1659 = vmatprep.subr.mxu0 0.0
        %1660 = vmatpush1.msra.mxu0 0.0
        %1661 = vmatprep.subr.mxu0 0.0
        %1662 = vmatpush1.msra.mxu0 0.0
        %1663 = vmatprep.subr.mxu0 0.0
        %1664 = vmatpush1.msra.mxu0 0.0
        %1665 = vmatprep.subr.mxu0 0.0
        %1666 = vmatpush1.msra.mxu0 0.0
        %1667 = vmatprep.subr.mxu0 %v816
        %1668 = vmatpush1.msra.mxu0 %v813
        %1669 = vmatprep.subr.mxu0 %v802
        %1670 = vmatpush1.msra.mxu0 %v801
        %1671 = vmatprep.subr.mxu0 %v798
        %1672 = vmatpush1.msra.mxu0 %v797
        %1673 = vmatprep.subr.mxu0 %v794
        %1674 = vmatpush1.msra.mxu0 %v793
        %1675 = vmatprep.subr.mxu0 0.0
        %1676 = vmatpush2.msra.mxu0 0.0
        %1677 = vmatprep.subr.mxu0 0.0
        %1678 = vmatpush2.msra.mxu0 0.0
        %1679 = vmatprep.subr.mxu0 0.0
        %1680 = vmatpush2.msra.mxu0 0.0
        %1681 = vmatprep.subr.mxu0 0.0
        %1682 = vmatpush2.msra.mxu0 0.0
        %1683 = vmatprep.subr.mxu0 0.0
        %1684 = vmatpush2.msra.mxu0 0.0
        %1685 = vmatprep.subr.mxu0 0.0
        %1686 = vmatpush2.msra.mxu0 0.0
        %1687 = vmatprep.subr.mxu0 0.0
        %1688 = vmatpush2.msra.mxu0 0.0
        %1689 = vmatprep.subr.mxu0 0.0
        %1690 = vmatpush2.msra.mxu0 0.0
        %1691 = vmatprep.subr.mxu0 0.0
        %1692 = vmatpush2.msra.mxu0 0.0
        %1693 = vmatprep.subr.mxu0 0.0
        %1694 = vmatpush2.msra.mxu0 0.0
        %1695 = vmatprep.subr.mxu0 0.0
        %1696 = vmatpush2.msra.mxu0 0.0
        %1697 = vmatprep.subr.mxu0 0.0
        %1698 = vmatpush2.msra.mxu0 0.0
        %1699 = vmatprep.subr.mxu0 0.0
        %1700 = vmatpush2.msra.mxu0 0.0
        %1701 = vmatprep.subr.mxu0 0.0
        %1702 = vmatpush2.msra.mxu0 0.0
        %1703 = vmatprep.subr.mxu0 0.0
        %1704 = vmatpush2.msra.mxu0 0.0
        %1705 = vmatprep.subr.mxu0 0.0
        %1706 = vmatpush2.msra.mxu0 0.0
        %1707 = vmatprep.mubr.f32.mxu0 0.0
        %1708 = vmatmul.mubr.f32.gmra.mxu0 %v989
        %v1709 = vpop.f32.mrf.mxu0
        %v1710 = vadd.f32 0.0, %v1709
        %v1711 = vpop.f32.mrf.mxu0
        %v1712 = vadd.f32 0.0, %v1711
        %1713 = vdwg.mxu0
        %1714 = vmatprep.subr.mxu0 0.0
        %1715 = vmatpush1.msra.mxu0 0.0
        %1716 = vmatprep.subr.mxu0 0.0
        %1717 = vmatpush1.msra.mxu0 0.0
        %1718 = vmatprep.subr.mxu0 0.0
        %1719 = vmatpush1.msra.mxu0 0.0
        %1720 = vmatprep.subr.mxu0 0.0
        %1721 = vmatpush1.msra.mxu0 0.0
        %1722 = vmatprep.subr.mxu0 0.0
        %1723 = vmatpush1.msra.mxu0 0.0
        %1724 = vmatprep.subr.mxu0 0.0
        %1725 = vmatpush1.msra.mxu0 0.0
        %1726 = vmatprep.subr.mxu0 0.0
        %1727 = vmatpush1.msra.mxu0 0.0
        %1728 = vmatprep.subr.mxu0 0.0
        %1729 = vmatpush1.msra.mxu0 0.0
        %1730 = vmatprep.subr.mxu0 0.0
        %1731 = vmatpush1.msra.mxu0 0.0
        %1732 = vmatprep.subr.mxu0 0.0
        %1733 = vmatpush1.msra.mxu0 0.0
        %1734 = vmatprep.subr.mxu0 0.0
        %1735 = vmatpush1.msra.mxu0 0.0
        %1736 = vmatprep.subr.mxu0 0.0
        %1737 = vmatpush1.msra.mxu0 0.0
        %1738 = vmatprep.subr.mxu0 %v822
        %1739 = vmatpush1.msra.mxu0 %v819
        %1740 = vmatprep.subr.mxu0 %v804
        %1741 = vmatpush1.msra.mxu0 %v803
        %1742 = vmatprep.subr.mxu0 %v800
        %1743 = vmatpush1.msra.mxu0 %v799
        %1744 = vmatprep.subr.mxu0 %v796
        %1745 = vmatpush1.msra.mxu0 %v795
        %1746 = vmatprep.subr.mxu0 0.0
        %1747 = vmatpush2.msra.mxu0 0.0
        %1748 = vmatprep.subr.mxu0 0.0
        %1749 = vmatpush2.msra.mxu0 0.0
        %1750 = vmatprep.subr.mxu0 0.0
        %1751 = vmatpush2.msra.mxu0 0.0
        %1752 = vmatprep.subr.mxu0 0.0
        %1753 = vmatpush2.msra.mxu0 0.0
        %1754 = vmatprep.subr.mxu0 0.0
        %1755 = vmatpush2.msra.mxu0 0.0
        %1756 = vmatprep.subr.mxu0 0.0
        %1757 = vmatpush2.msra.mxu0 0.0
        %1758 = vmatprep.subr.mxu0 0.0
        %1759 = vmatpush2.msra.mxu0 0.0
        %1760 = vmatprep.subr.mxu0 0.0
        %1761 = vmatpush2.msra.mxu0 0.0
        %1762 = vmatprep.subr.mxu0 0.0
        %1763 = vmatpush2.msra.mxu0 0.0
        %1764 = vmatprep.subr.mxu0 0.0
        %1765 = vmatpush2.msra.mxu0 0.0
        %1766 = vmatprep.subr.mxu0 0.0
        %1767 = vmatpush2.msra.mxu0 0.0
        %1768 = vmatprep.subr.mxu0 0.0
        %1769 = vmatpush2.msra.mxu0 0.0
        %1770 = vmatprep.subr.mxu0 0.0
        %1771 = vmatpush2.msra.mxu0 0.0
        %1772 = vmatprep.subr.mxu0 0.0
        %1773 = vmatpush2.msra.mxu0 0.0
        %1774 = vmatprep.subr.mxu0 0.0
        %1775 = vmatpush2.msra.mxu0 0.0
        %1776 = vmatprep.subr.mxu0 0.0
        %1777 = vmatpush2.msra.mxu0 0.0
        %1778 = vmatprep.mubr.f32.mxu0 0.0
        %1779 = vmatmul.mubr.f32.gmra.mxu0 %v989
        %v1780 = vpop.f32.mrf.mxu0
        %v1781 = vadd.f32 0.0, %v1780
        %v1782 = vpop.f32.mrf.mxu0
        %v1783 = vadd.f32 0.0, %v1782
        %1784 = vdwg.mxu0
        %v1785 = vadd.f32 %v1568, %v1710
        %v1786 = vadd.f32 %v1570, %v1712
        %v1787 = vadd.f32 %v1639, %v1781
        %v1788 = vadd.f32 %v1641, %v1783
        %1789 = vmatprep.subr.mxu0 0.0
        %1790 = vmatpush1.msra.mxu0 0.0
        %1791 = vmatprep.subr.mxu0 0.0
        %1792 = vmatpush1.msra.mxu0 0.0
        %1793 = vmatprep.subr.mxu0 0.0
        %1794 = vmatpush1.msra.mxu0 0.0
        %1795 = vmatprep.subr.mxu0 0.0
        %1796 = vmatpush1.msra.mxu0 0.0
        %1797 = vmatprep.subr.mxu0 0.0
        %1798 = vmatpush1.msra.mxu0 0.0
        %1799 = vmatprep.subr.mxu0 0.0
        %1800 = vmatpush1.msra.mxu0 0.0
        %1801 = vmatprep.subr.mxu0 0.0
        %1802 = vmatpush1.msra.mxu0 0.0
        %1803 = vmatprep.subr.mxu0 0.0
        %1804 = vmatpush1.msra.mxu0 0.0
        %1805 = vmatprep.subr.mxu0 0.0
        %1806 = vmatpush1.msra.mxu0 0.0
        %1807 = vmatprep.subr.mxu0 0.0
        %1808 = vmatpush1.msra.mxu0 0.0
        %1809 = vmatprep.subr.mxu0 0.0
        %1810 = vmatpush1.msra.mxu0 0.0
        %1811 = vmatprep.subr.mxu0 0.0
        %1812 = vmatpush1.msra.mxu0 0.0
        %1813 = vmatprep.subr.mxu0 %v995
        %1814 = vmatpush1.msra.mxu0 %v992
        %1815 = vmatprep.subr.mxu0 %v981
        %1816 = vmatpush1.msra.mxu0 %v980
        %1817 = vmatprep.subr.mxu0 %v977
        %1818 = vmatpush1.msra.mxu0 %v976
        %1819 = vmatprep.subr.mxu0 %v973
        %1820 = vmatpush1.msra.mxu0 %v972
        %1821 = vmatprep.subr.mxu0 0.0
        %1822 = vmatpush2.msra.mxu0 0.0
        %1823 = vmatprep.subr.mxu0 0.0
        %1824 = vmatpush2.msra.mxu0 0.0
        %1825 = vmatprep.subr.mxu0 0.0
        %1826 = vmatpush2.msra.mxu0 0.0
        %1827 = vmatprep.subr.mxu0 0.0
        %1828 = vmatpush2.msra.mxu0 0.0
        %1829 = vmatprep.subr.mxu0 0.0
        %1830 = vmatpush2.msra.mxu0 0.0
        %1831 = vmatprep.subr.mxu0 0.0
        %1832 = vmatpush2.msra.mxu0 0.0
        %1833 = vmatprep.subr.mxu0 0.0
        %1834 = vmatpush2.msra.mxu0 0.0
        %1835 = vmatprep.subr.mxu0 0.0
        %1836 = vmatpush2.msra.mxu0 0.0
        %1837 = vmatprep.subr.mxu0 0.0
        %1838 = vmatpush2.msra.mxu0 0.0
        %1839 = vmatprep.subr.mxu0 0.0
        %1840 = vmatpush2.msra.mxu0 0.0
        %1841 = vmatprep.subr.mxu0 0.0
        %1842 = vmatpush2.msra.mxu0 0.0
        %1843 = vmatprep.subr.mxu0 0.0
        %1844 = vmatpush2.msra.mxu0 0.0
        %1845 = vmatprep.subr.mxu0 0.0
        %1846 = vmatpush2.msra.mxu0 0.0
        %1847 = vmatprep.subr.mxu0 0.0
        %1848 = vmatpush2.msra.mxu0 0.0
        %1849 = vmatprep.subr.mxu0 0.0
        %1850 = vmatpush2.msra.mxu0 0.0
        %1851 = vmatprep.subr.mxu0 0.0
        %1852 = vmatpush2.msra.mxu0 0.0
        %1853 = vmatprep.mubr.f32.mxu0 0.0
        %1854 = vmatmul.mubr.f32.gmra.mxu0 %v1168
        %v1855 = vpop.f32.mrf.mxu0
        %v1856 = vadd.f32 0.0, %v1855
        %v1857 = vpop.f32.mrf.mxu0
        %v1858 = vadd.f32 0.0, %v1857
        %1859 = vdwg.mxu0
        %1860 = vmatprep.subr.mxu0 0.0
        %1861 = vmatpush1.msra.mxu0 0.0
        %1862 = vmatprep.subr.mxu0 0.0
        %1863 = vmatpush1.msra.mxu0 0.0
        %1864 = vmatprep.subr.mxu0 0.0
        %1865 = vmatpush1.msra.mxu0 0.0
        %1866 = vmatprep.subr.mxu0 0.0
        %1867 = vmatpush1.msra.mxu0 0.0
        %1868 = vmatprep.subr.mxu0 0.0
        %1869 = vmatpush1.msra.mxu0 0.0
        %1870 = vmatprep.subr.mxu0 0.0
        %1871 = vmatpush1.msra.mxu0 0.0
        %1872 = vmatprep.subr.mxu0 0.0
        %1873 = vmatpush1.msra.mxu0 0.0
        %1874 = vmatprep.subr.mxu0 0.0
        %1875 = vmatpush1.msra.mxu0 0.0
        %1876 = vmatprep.subr.mxu0 0.0
        %1877 = vmatpush1.msra.mxu0 0.0
        %1878 = vmatprep.subr.mxu0 0.0
        %1879 = vmatpush1.msra.mxu0 0.0
        %1880 = vmatprep.subr.mxu0 0.0
        %1881 = vmatpush1.msra.mxu0 0.0
        %1882 = vmatprep.subr.mxu0 0.0
        %1883 = vmatpush1.msra.mxu0 0.0
        %1884 = vmatprep.subr.mxu0 %v1001
        %1885 = vmatpush1.msra.mxu0 %v998
        %1886 = vmatprep.subr.mxu0 %v983
        %1887 = vmatpush1.msra.mxu0 %v982
        %1888 = vmatprep.subr.mxu0 %v979
        %1889 = vmatpush1.msra.mxu0 %v978
        %1890 = vmatprep.subr.mxu0 %v975
        %1891 = vmatpush1.msra.mxu0 %v974
        %1892 = vmatprep.subr.mxu0 0.0
        %1893 = vmatpush2.msra.mxu0 0.0
        %1894 = vmatprep.subr.mxu0 0.0
        %1895 = vmatpush2.msra.mxu0 0.0
        %1896 = vmatprep.subr.mxu0 0.0
        %1897 = vmatpush2.msra.mxu0 0.0
        %1898 = vmatprep.subr.mxu0 0.0
        %1899 = vmatpush2.msra.mxu0 0.0
        %1900 = vmatprep.subr.mxu0 0.0
        %1901 = vmatpush2.msra.mxu0 0.0
        %1902 = vmatprep.subr.mxu0 0.0
        %1903 = vmatpush2.msra.mxu0 0.0
        %1904 = vmatprep.subr.mxu0 0.0
        %1905 = vmatpush2.msra.mxu0 0.0
        %1906 = vmatprep.subr.mxu0 0.0
        %1907 = vmatpush2.msra.mxu0 0.0
        %1908 = vmatprep.subr.mxu0 0.0
        %1909 = vmatpush2.msra.mxu0 0.0
        %1910 = vmatprep.subr.mxu0 0.0
        %1911 = vmatpush2.msra.mxu0 0.0
        %1912 = vmatprep.subr.mxu0 0.0
        %1913 = vmatpush2.msra.mxu0 0.0
        %1914 = vmatprep.subr.mxu0 0.0
        %1915 = vmatpush2.msra.mxu0 0.0
        %1916 = vmatprep.subr.mxu0 0.0
        %1917 = vmatpush2.msra.mxu0 0.0
        %1918 = vmatprep.subr.mxu0 0.0
        %1919 = vmatpush2.msra.mxu0 0.0
        %1920 = vmatprep.subr.mxu0 0.0
        %1921 = vmatpush2.msra.mxu0 0.0
        %1922 = vmatprep.subr.mxu0 0.0
        %1923 = vmatpush2.msra.mxu0 0.0
        %1924 = vmatprep.mubr.f32.mxu0 0.0
        %1925 = vmatmul.mubr.f32.gmra.mxu0 %v1168
        %v1926 = vpop.f32.mrf.mxu0
        %v1927 = vadd.f32 0.0, %v1926
        %v1928 = vpop.f32.mrf.mxu0
        %v1929 = vadd.f32 0.0, %v1928
        %1930 = vdwg.mxu0
        %v1931 = vadd.f32 %v1785, %v1856
        %v1932 = vadd.f32 %v1786, %v1858
        %v1933 = vadd.f32 %v1787, %v1927
        %v1934 = vadd.f32 %v1788, %v1929
        %v1935 = vld [vmem:[%s438 + $0x8] sm:$0x3f]
        %v1937 = vsel %vm475, %v1935, 0
        %1939 = vmatprep.subr.mxu0 0.0
        %1940 = vmatpush1.msra.mxu0 0.0
        %1941 = vmatprep.subr.mxu0 0.0
        %1942 = vmatpush1.msra.mxu0 0.0
        %1943 = vmatprep.subr.mxu0 0.0
        %1944 = vmatpush1.msra.mxu0 0.0
        %1945 = vmatprep.subr.mxu0 0.0
        %1946 = vmatpush1.msra.mxu0 0.0
        %1947 = vmatprep.subr.mxu0 0.0
        %1948 = vmatpush1.msra.mxu0 0.0
        %1949 = vmatprep.subr.mxu0 0.0
        %1950 = vmatpush1.msra.mxu0 0.0
        %1951 = vmatprep.subr.mxu0 0.0
        %1952 = vmatpush1.msra.mxu0 0.0
        %1953 = vmatprep.subr.mxu0 0.0
        %1954 = vmatpush1.msra.mxu0 0.0
        %1955 = vmatprep.subr.mxu0 0.0
        %1956 = vmatpush1.msra.mxu0 0.0
        %1957 = vmatprep.subr.mxu0 0.0
        %1958 = vmatpush1.msra.mxu0 0.0
        %1959 = vmatprep.subr.mxu0 0.0
        %1960 = vmatpush1.msra.mxu0 0.0
        %1961 = vmatprep.subr.mxu0 0.0
        %1962 = vmatpush1.msra.mxu0 0.0
        %1963 = vmatprep.subr.mxu0 %v1174
        %1964 = vmatpush1.msra.mxu0 %v1171
        %1965 = vmatprep.subr.mxu0 %v1160
        %1966 = vmatpush1.msra.mxu0 %v1159
        %1967 = vmatprep.subr.mxu0 %v1156
        %1968 = vmatpush1.msra.mxu0 %v1155
        %1969 = vmatprep.subr.mxu0 %v1152
        %1970 = vmatpush1.msra.mxu0 %v1151
        %1971 = vmatprep.subr.mxu0 0.0
        %1972 = vmatpush2.msra.mxu0 0.0
        %1973 = vmatprep.subr.mxu0 0.0
        %1974 = vmatpush2.msra.mxu0 0.0
        %1975 = vmatprep.subr.mxu0 0.0
        %1976 = vmatpush2.msra.mxu0 0.0
        %1977 = vmatprep.subr.mxu0 0.0
        %1978 = vmatpush2.msra.mxu0 0.0
        %1979 = vmatprep.subr.mxu0 0.0
        %1980 = vmatpush2.msra.mxu0 0.0
        %1981 = vmatprep.subr.mxu0 0.0
        %1982 = vmatpush2.msra.mxu0 0.0
        %1983 = vmatprep.subr.mxu0 0.0
        %1984 = vmatpush2.msra.mxu0 0.0
        %1985 = vmatprep.subr.mxu0 0.0
        %1986 = vmatpush2.msra.mxu0 0.0
        %1987 = vmatprep.subr.mxu0 0.0
        %1988 = vmatpush2.msra.mxu0 0.0
        %1989 = vmatprep.subr.mxu0 0.0
        %1990 = vmatpush2.msra.mxu0 0.0
        %1991 = vmatprep.subr.mxu0 0.0
        %1992 = vmatpush2.msra.mxu0 0.0
        %1993 = vmatprep.subr.mxu0 0.0
        %1994 = vmatpush2.msra.mxu0 0.0
        %1995 = vmatprep.subr.mxu0 0.0
        %1996 = vmatpush2.msra.mxu0 0.0
        %1997 = vmatprep.subr.mxu0 0.0
        %1998 = vmatpush2.msra.mxu0 0.0
        %1999 = vmatprep.subr.mxu0 0.0
        %2000 = vmatpush2.msra.mxu0 0.0
        %2001 = vmatprep.subr.mxu0 0.0
        %2002 = vmatpush2.msra.mxu0 0.0
        %2003 = vmatprep.mubr.f32.mxu0 0.0
        %2004 = vmatmul.mubr.f32.gmra.mxu0 %v1937
        %v2005 = vpop.f32.mrf.mxu0
        %v2006 = vadd.f32 0.0, %v2005
        %v2007 = vpop.f32.mrf.mxu0
        %v2008 = vadd.f32 0.0, %v2007
        %2009 = vdwg.mxu0
        %2010 = vmatprep.subr.mxu0 0.0
        %2011 = vmatpush1.msra.mxu0 0.0
        %2012 = vmatprep.subr.mxu0 0.0
        %2013 = vmatpush1.msra.mxu0 0.0
        %2014 = vmatprep.subr.mxu0 0.0
        %2015 = vmatpush1.msra.mxu0 0.0
        %2016 = vmatprep.subr.mxu0 0.0
        %2017 = vmatpush1.msra.mxu0 0.0
        %2018 = vmatprep.subr.mxu0 0.0
        %2019 = vmatpush1.msra.mxu0 0.0
        %2020 = vmatprep.subr.mxu0 0.0
        %2021 = vmatpush1.msra.mxu0 0.0
        %2022 = vmatprep.subr.mxu0 0.0
        %2023 = vmatpush1.msra.mxu0 0.0
        %2024 = vmatprep.subr.mxu0 0.0
        %2025 = vmatpush1.msra.mxu0 0.0
        %2026 = vmatprep.subr.mxu0 0.0
        %2027 = vmatpush1.msra.mxu0 0.0
        %2028 = vmatprep.subr.mxu0 0.0
        %2029 = vmatpush1.msra.mxu0 0.0
        %2030 = vmatprep.subr.mxu0 0.0
        %2031 = vmatpush1.msra.mxu0 0.0
        %2032 = vmatprep.subr.mxu0 0.0
        %2033 = vmatpush1.msra.mxu0 0.0
        %2034 = vmatprep.subr.mxu0 %v1180
        %2035 = vmatpush1.msra.mxu0 %v1177
        %2036 = vmatprep.subr.mxu0 %v1162
        %2037 = vmatpush1.msra.mxu0 %v1161
        %2038 = vmatprep.subr.mxu0 %v1158
        %2039 = vmatpush1.msra.mxu0 %v1157
        %2040 = vmatprep.subr.mxu0 %v1154
        %2041 = vmatpush1.msra.mxu0 %v1153
        %2042 = vmatprep.subr.mxu0 0.0
        %2043 = vmatpush2.msra.mxu0 0.0
        %2044 = vmatprep.subr.mxu0 0.0
        %2045 = vmatpush2.msra.mxu0 0.0
        %2046 = vmatprep.subr.mxu0 0.0
        %2047 = vmatpush2.msra.mxu0 0.0
        %2048 = vmatprep.subr.mxu0 0.0
        %2049 = vmatpush2.msra.mxu0 0.0
        %2050 = vmatprep.subr.mxu0 0.0
        %2051 = vmatpush2.msra.mxu0 0.0
        %2052 = vmatprep.subr.mxu0 0.0
        %2053 = vmatpush2.msra.mxu0 0.0
        %2054 = vmatprep.subr.mxu0 0.0
        %2055 = vmatpush2.msra.mxu0 0.0
        %2056 = vmatprep.subr.mxu0 0.0
        %2057 = vmatpush2.msra.mxu0 0.0
        %2058 = vmatprep.subr.mxu0 0.0
        %2059 = vmatpush2.msra.mxu0 0.0
        %2060 = vmatprep.subr.mxu0 0.0
        %2061 = vmatpush2.msra.mxu0 0.0
        %2062 = vmatprep.subr.mxu0 0.0
        %2063 = vmatpush2.msra.mxu0 0.0
        %2064 = vmatprep.subr.mxu0 0.0
        %2065 = vmatpush2.msra.mxu0 0.0
        %2066 = vmatprep.subr.mxu0 0.0
        %2067 = vmatpush2.msra.mxu0 0.0
        %2068 = vmatprep.subr.mxu0 0.0
        %2069 = vmatpush2.msra.mxu0 0.0
        %2070 = vmatprep.subr.mxu0 0.0
        %2071 = vmatpush2.msra.mxu0 0.0
        %2072 = vmatprep.subr.mxu0 0.0
        %2073 = vmatpush2.msra.mxu0 0.0
        %2074 = vmatprep.mubr.f32.mxu0 0.0
        %2075 = vmatmul.mubr.f32.gmra.mxu0 %v1937
        %v2076 = vpop.f32.mrf.mxu0
        %v2077 = vadd.f32 0.0, %v2076
        %v2078 = vpop.f32.mrf.mxu0
        %v2079 = vadd.f32 0.0, %v2078
        %2080 = vdwg.mxu0
        %v2081 = vadd.f32 %v1931, %v2006
        %v2082 = vadd.f32 %v1932, %v2008
        %v2083 = vadd.f32 %v1933, %v2077
        %v2084 = vadd.f32 %v1934, %v2079
        %v2085 = vadd.f32 %v2081, %v1332
        %v2086 = vadd.f32 %v2082, %v1336
        %v2087 = vadd.f32 %v2083, %v1340
        %v2088 = vadd.f32 %v2084, %v1344
        %v2089 = vmax.f32 %v2085, 0.0
        %v2090 = vmax.f32 %v2086, 0.0
        %v2091 = vmax.f32 %v2087, 0.0
        %v2092 = vmax.f32 %v2088, 0.0
        %v2093 = vmax.f32 %v2089, %v2091
        %v2094 = vmax.f32 %v2090, %v2092
        %2095 = vmatprep.subr.mxu0 0.0
        %2096 = vmatpush1.msra.mxu0 0.0
        %2097 = vmatprep.subr.mxu0 0.0
        %2098 = vmatpush1.msra.mxu0 0.0
        %2099 = vmatprep.subr.mxu0 0.0
        %2100 = vmatpush1.msra.mxu0 0.0
        %2101 = vmatprep.subr.mxu0 0.0
        %2102 = vmatpush1.msra.mxu0 0.0
        %2103 = vmatprep.subr.mxu0 0.0
        %2104 = vmatpush1.msra.mxu0 0.0
        %2105 = vmatprep.subr.mxu0 0.0
        %2106 = vmatpush1.msra.mxu0 0.0
        %2107 = vmatprep.subr.mxu0 0.0
        %2108 = vmatpush1.msra.mxu0 0.0
        %2109 = vmatprep.subr.mxu0 0.0
        %2110 = vmatpush1.msra.mxu0 0.0
        %2111 = vmatprep.subr.mxu0 0.0
        %2112 = vmatpush1.msra.mxu0 0.0
        %2113 = vmatprep.subr.mxu0 0.0
        %2114 = vmatpush1.msra.mxu0 0.0
        %2115 = vmatprep.subr.mxu0 0.0
        %2116 = vmatpush1.msra.mxu0 0.0
        %2117 = vmatprep.subr.mxu0 0.0
        %2118 = vmatpush1.msra.mxu0 0.0
        %2119 = vmatprep.subr.mxu0 %v484
        %2120 = vmatpush1.msra.mxu0 %v481
        %2121 = vmatprep.subr.mxu0 %v468
        %2122 = vmatpush1.msra.mxu0 %v467
        %2123 = vmatprep.subr.mxu0 %v464
        %2124 = vmatpush1.msra.mxu0 %v463
        %2125 = vmatprep.subr.mxu0 %v460
        %2126 = vmatpush1.msra.mxu0 %v459
        %2127 = vmatprep.subr.mxu0 0.0
        %2128 = vmatpush2.msra.mxu0 0.0
        %2129 = vmatprep.subr.mxu0 0.0
        %2130 = vmatpush2.msra.mxu0 0.0
        %2131 = vmatprep.subr.mxu0 0.0
        %2132 = vmatpush2.msra.mxu0 0.0
        %2133 = vmatprep.subr.mxu0 0.0
        %2134 = vmatpush2.msra.mxu0 0.0
        %2135 = vmatprep.subr.mxu0 0.0
        %2136 = vmatpush2.msra.mxu0 0.0
        %2137 = vmatprep.subr.mxu0 0.0
        %2138 = vmatpush2.msra.mxu0 0.0
        %2139 = vmatprep.subr.mxu0 0.0
        %2140 = vmatpush2.msra.mxu0 0.0
        %2141 = vmatprep.subr.mxu0 0.0
        %2142 = vmatpush2.msra.mxu0 0.0
        %2143 = vmatprep.subr.mxu0 0.0
        %2144 = vmatpush2.msra.mxu0 0.0
        %2145 = vmatprep.subr.mxu0 0.0
        %2146 = vmatpush2.msra.mxu0 0.0
        %2147 = vmatprep.subr.mxu0 0.0
        %2148 = vmatpush2.msra.mxu0 0.0
        %2149 = vmatprep.subr.mxu0 0.0
        %2150 = vmatpush2.msra.mxu0 0.0
        %2151 = vmatprep.subr.mxu0 0.0
        %2152 = vmatpush2.msra.mxu0 0.0
        %2153 = vmatprep.subr.mxu0 0.0
        %2154 = vmatpush2.msra.mxu0 0.0
        %2155 = vmatprep.subr.mxu0 0.0
        %2156 = vmatpush2.msra.mxu0 0.0
        %2157 = vmatprep.subr.mxu0 0.0
        %2158 = vmatpush2.msra.mxu0 0.0
        %2159 = vmatprep.mubr.f32.mxu0 0.0
        %2160 = vmatmul.mubr.f32.gmra.mxu0 %v989
        %v2161 = vpop.f32.mrf.mxu0
        %v2162 = vadd.f32 0.0, %v2161
        %v2163 = vpop.f32.mrf.mxu0
        %v2164 = vadd.f32 0.0, %v2163
        %2165 = vdwg.mxu0
        %2166 = vmatprep.subr.mxu0 0.0
        %2167 = vmatpush1.msra.mxu0 0.0
        %2168 = vmatprep.subr.mxu0 0.0
        %2169 = vmatpush1.msra.mxu0 0.0
        %2170 = vmatprep.subr.mxu0 0.0
        %2171 = vmatpush1.msra.mxu0 0.0
        %2172 = vmatprep.subr.mxu0 0.0
        %2173 = vmatpush1.msra.mxu0 0.0
        %2174 = vmatprep.subr.mxu0 0.0
        %2175 = vmatpush1.msra.mxu0 0.0
        %2176 = vmatprep.subr.mxu0 0.0
        %2177 = vmatpush1.msra.mxu0 0.0
        %2178 = vmatprep.subr.mxu0 0.0
        %2179 = vmatpush1.msra.mxu0 0.0
        %2180 = vmatprep.subr.mxu0 0.0
        %2181 = vmatpush1.msra.mxu0 0.0
        %2182 = vmatprep.subr.mxu0 0.0
        %2183 = vmatpush1.msra.mxu0 0.0
        %2184 = vmatprep.subr.mxu0 0.0
        %2185 = vmatpush1.msra.mxu0 0.0
        %2186 = vmatprep.subr.mxu0 0.0
        %2187 = vmatpush1.msra.mxu0 0.0
        %2188 = vmatprep.subr.mxu0 0.0
        %2189 = vmatpush1.msra.mxu0 0.0
        %2190 = vmatprep.subr.mxu0 %v490
        %2191 = vmatpush1.msra.mxu0 %v487
        %2192 = vmatprep.subr.mxu0 %v470
        %2193 = vmatpush1.msra.mxu0 %v469
        %2194 = vmatprep.subr.mxu0 %v466
        %2195 = vmatpush1.msra.mxu0 %v465
        %2196 = vmatprep.subr.mxu0 %v462
        %2197 = vmatpush1.msra.mxu0 %v461
        %2198 = vmatprep.subr.mxu0 0.0
        %2199 = vmatpush2.msra.mxu0 0.0
        %2200 = vmatprep.subr.mxu0 0.0
        %2201 = vmatpush2.msra.mxu0 0.0
        %2202 = vmatprep.subr.mxu0 0.0
        %2203 = vmatpush2.msra.mxu0 0.0
        %2204 = vmatprep.subr.mxu0 0.0
        %2205 = vmatpush2.msra.mxu0 0.0
        %2206 = vmatprep.subr.mxu0 0.0
        %2207 = vmatpush2.msra.mxu0 0.0
        %2208 = vmatprep.subr.mxu0 0.0
        %2209 = vmatpush2.msra.mxu0 0.0
        %2210 = vmatprep.subr.mxu0 0.0
        %2211 = vmatpush2.msra.mxu0 0.0
        %2212 = vmatprep.subr.mxu0 0.0
        %2213 = vmatpush2.msra.mxu0 0.0
        %2214 = vmatprep.subr.mxu0 0.0
        %2215 = vmatpush2.msra.mxu0 0.0
        %2216 = vmatprep.subr.mxu0 0.0
        %2217 = vmatpush2.msra.mxu0 0.0
        %2218 = vmatprep.subr.mxu0 0.0
        %2219 = vmatpush2.msra.mxu0 0.0
        %2220 = vmatprep.subr.mxu0 0.0
        %2221 = vmatpush2.msra.mxu0 0.0
        %2222 = vmatprep.subr.mxu0 0.0
        %2223 = vmatpush2.msra.mxu0 0.0
        %2224 = vmatprep.subr.mxu0 0.0
        %2225 = vmatpush2.msra.mxu0 0.0
        %2226 = vmatprep.subr.mxu0 0.0
        %2227 = vmatpush2.msra.mxu0 0.0
        %2228 = vmatprep.subr.mxu0 0.0
        %2229 = vmatpush2.msra.mxu0 0.0
        %2230 = vmatprep.mubr.f32.mxu0 0.0
        %2231 = vmatmul.mubr.f32.gmra.mxu0 %v989
        %v2232 = vpop.f32.mrf.mxu0
        %v2233 = vadd.f32 0.0, %v2232
        %v2234 = vpop.f32.mrf.mxu0
        %v2235 = vadd.f32 0.0, %v2234
        %2236 = vdwg.mxu0
        %2237 = vmatprep.subr.mxu0 0.0
        %2238 = vmatpush1.msra.mxu0 0.0
        %2239 = vmatprep.subr.mxu0 0.0
        %2240 = vmatpush1.msra.mxu0 0.0
        %2241 = vmatprep.subr.mxu0 0.0
        %2242 = vmatpush1.msra.mxu0 0.0
        %2243 = vmatprep.subr.mxu0 0.0
        %2244 = vmatpush1.msra.mxu0 0.0
        %2245 = vmatprep.subr.mxu0 0.0
        %2246 = vmatpush1.msra.mxu0 0.0
        %2247 = vmatprep.subr.mxu0 0.0
        %2248 = vmatpush1.msra.mxu0 0.0
        %2249 = vmatprep.subr.mxu0 0.0
        %2250 = vmatpush1.msra.mxu0 0.0
        %2251 = vmatprep.subr.mxu0 0.0
        %2252 = vmatpush1.msra.mxu0 0.0
        %2253 = vmatprep.subr.mxu0 0.0
        %2254 = vmatpush1.msra.mxu0 0.0
        %2255 = vmatprep.subr.mxu0 0.0
        %2256 = vmatpush1.msra.mxu0 0.0
        %2257 = vmatprep.subr.mxu0 0.0
        %2258 = vmatpush1.msra.mxu0 0.0
        %2259 = vmatprep.subr.mxu0 0.0
        %2260 = vmatpush1.msra.mxu0 0.0
        %2261 = vmatprep.subr.mxu0 %v641
        %2262 = vmatpush1.msra.mxu0 %v638
        %2263 = vmatprep.subr.mxu0 %v450
        %2264 = vmatpush1.msra.mxu0 %v449
        %2265 = vmatprep.subr.mxu0 %v446
        %2266 = vmatpush1.msra.mxu0 %v445
        %2267 = vmatprep.subr.mxu0 %v442
        %2268 = vmatpush1.msra.mxu0 %v441
        %2269 = vmatprep.subr.mxu0 0.0
        %2270 = vmatpush2.msra.mxu0 0.0
        %2271 = vmatprep.subr.mxu0 0.0
        %2272 = vmatpush2.msra.mxu0 0.0
        %2273 = vmatprep.subr.mxu0 0.0
        %2274 = vmatpush2.msra.mxu0 0.0
        %2275 = vmatprep.subr.mxu0 0.0
        %2276 = vmatpush2.msra.mxu0 0.0
        %2277 = vmatprep.subr.mxu0 0.0
        %2278 = vmatpush2.msra.mxu0 0.0
        %2279 = vmatprep.subr.mxu0 0.0
        %2280 = vmatpush2.msra.mxu0 0.0
        %2281 = vmatprep.subr.mxu0 0.0
        %2282 = vmatpush2.msra.mxu0 0.0
        %2283 = vmatprep.subr.mxu0 0.0
        %2284 = vmatpush2.msra.mxu0 0.0
        %2285 = vmatprep.subr.mxu0 0.0
        %2286 = vmatpush2.msra.mxu0 0.0
        %2287 = vmatprep.subr.mxu0 0.0
        %2288 = vmatpush2.msra.mxu0 0.0
        %2289 = vmatprep.subr.mxu0 0.0
        %2290 = vmatpush2.msra.mxu0 0.0
        %2291 = vmatprep.subr.mxu0 0.0
        %2292 = vmatpush2.msra.mxu0 0.0
        %2293 = vmatprep.subr.mxu0 0.0
        %2294 = vmatpush2.msra.mxu0 0.0
        %2295 = vmatprep.subr.mxu0 0.0
        %2296 = vmatpush2.msra.mxu0 0.0
        %2297 = vmatprep.subr.mxu0 0.0
        %2298 = vmatpush2.msra.mxu0 0.0
        %2299 = vmatprep.subr.mxu0 0.0
        %2300 = vmatpush2.msra.mxu0 0.0
        %2301 = vmatprep.mubr.f32.mxu0 0.0
        %2302 = vmatmul.mubr.f32.gmra.mxu0 %v810
        %v2303 = vpop.f32.mrf.mxu0
        %v2304 = vadd.f32 %v2162, %v2303
        %v2305 = vpop.f32.mrf.mxu0
        %v2306 = vadd.f32 %v2164, %v2305
        %2307 = vdwg.mxu0
        %2308 = vmatprep.subr.mxu0 0.0
        %2309 = vmatpush1.msra.mxu0 0.0
        %2310 = vmatprep.subr.mxu0 0.0
        %2311 = vmatpush1.msra.mxu0 0.0
        %2312 = vmatprep.subr.mxu0 0.0
        %2313 = vmatpush1.msra.mxu0 0.0
        %2314 = vmatprep.subr.mxu0 0.0
        %2315 = vmatpush1.msra.mxu0 0.0
        %2316 = vmatprep.subr.mxu0 0.0
        %2317 = vmatpush1.msra.mxu0 0.0
        %2318 = vmatprep.subr.mxu0 0.0
        %2319 = vmatpush1.msra.mxu0 0.0
        %2320 = vmatprep.subr.mxu0 0.0
        %2321 = vmatpush1.msra.mxu0 0.0
        %2322 = vmatprep.subr.mxu0 0.0
        %2323 = vmatpush1.msra.mxu0 0.0
        %2324 = vmatprep.subr.mxu0 0.0
        %2325 = vmatpush1.msra.mxu0 0.0
        %2326 = vmatprep.subr.mxu0 0.0
        %2327 = vmatpush1.msra.mxu0 0.0
        %2328 = vmatprep.subr.mxu0 0.0
        %2329 = vmatpush1.msra.mxu0 0.0
        %2330 = vmatprep.subr.mxu0 0.0
        %2331 = vmatpush1.msra.mxu0 0.0
        %2332 = vmatprep.subr.mxu0 %v647
        %2333 = vmatpush1.msra.mxu0 %v644
        %2334 = vmatprep.subr.mxu0 %v452
        %2335 = vmatpush1.msra.mxu0 %v451
        %2336 = vmatprep.subr.mxu0 %v448
        %2337 = vmatpush1.msra.mxu0 %v447
        %2338 = vmatprep.subr.mxu0 %v444
        %2339 = vmatpush1.msra.mxu0 %v443
        %2340 = vmatprep.subr.mxu0 0.0
        %2341 = vmatpush2.msra.mxu0 0.0
        %2342 = vmatprep.subr.mxu0 0.0
        %2343 = vmatpush2.msra.mxu0 0.0
        %2344 = vmatprep.subr.mxu0 0.0
        %2345 = vmatpush2.msra.mxu0 0.0
        %2346 = vmatprep.subr.mxu0 0.0
        %2347 = vmatpush2.msra.mxu0 0.0
        %2348 = vmatprep.subr.mxu0 0.0
        %2349 = vmatpush2.msra.mxu0 0.0
        %2350 = vmatprep.subr.mxu0 0.0
        %2351 = vmatpush2.msra.mxu0 0.0
        %2352 = vmatprep.subr.mxu0 0.0
        %2353 = vmatpush2.msra.mxu0 0.0
        %2354 = vmatprep.subr.mxu0 0.0
        %2355 = vmatpush2.msra.mxu0 0.0
        %2356 = vmatprep.subr.mxu0 0.0
        %2357 = vmatpush2.msra.mxu0 0.0
        %2358 = vmatprep.subr.mxu0 0.0
        %2359 = vmatpush2.msra.mxu0 0.0
        %2360 = vmatprep.subr.mxu0 0.0
        %2361 = vmatpush2.msra.mxu0 0.0
        %2362 = vmatprep.subr.mxu0 0.0
        %2363 = vmatpush2.msra.mxu0 0.0
        %2364 = vmatprep.subr.mxu0 0.0
        %2365 = vmatpush2.msra.mxu0 0.0
        %2366 = vmatprep.subr.mxu0 0.0
        %2367 = vmatpush2.msra.mxu0 0.0
        %2368 = vmatprep.subr.mxu0 0.0
        %2369 = vmatpush2.msra.mxu0 0.0
        %2370 = vmatprep.subr.mxu0 0.0
        %2371 = vmatpush2.msra.mxu0 0.0
        %2372 = vmatprep.mubr.f32.mxu0 0.0
        %2373 = vmatmul.mubr.f32.gmra.mxu0 %v810
        %v2374 = vpop.f32.mrf.mxu0
        %v2375 = vadd.f32 %v2233, %v2374
        %v2376 = vpop.f32.mrf.mxu0
        %v2377 = vadd.f32 %v2235, %v2376
        %2378 = vdwg.mxu0
        %2379 = vmatprep.subr.mxu0 0.0
        %2380 = vmatpush1.msra.mxu0 0.0
        %2381 = vmatprep.subr.mxu0 0.0
        %2382 = vmatpush1.msra.mxu0 0.0
        %2383 = vmatprep.subr.mxu0 0.0
        %2384 = vmatpush1.msra.mxu0 0.0
        %2385 = vmatprep.subr.mxu0 0.0
        %2386 = vmatpush1.msra.mxu0 0.0
        %2387 = vmatprep.subr.mxu0 0.0
        %2388 = vmatpush1.msra.mxu0 0.0
        %2389 = vmatprep.subr.mxu0 0.0
        %2390 = vmatpush1.msra.mxu0 0.0
        %2391 = vmatprep.subr.mxu0 0.0
        %2392 = vmatpush1.msra.mxu0 0.0
        %2393 = vmatprep.subr.mxu0 0.0
        %2394 = vmatpush1.msra.mxu0 0.0
        %2395 = vmatprep.subr.mxu0 0.0
        %2396 = vmatpush1.msra.mxu0 0.0
        %2397 = vmatprep.subr.mxu0 0.0
        %2398 = vmatpush1.msra.mxu0 0.0
        %2399 = vmatprep.subr.mxu0 0.0
        %2400 = vmatpush1.msra.mxu0 0.0
        %2401 = vmatprep.subr.mxu0 0.0
        %2402 = vmatpush1.msra.mxu0 0.0
        %2403 = vmatprep.subr.mxu0 %v816
        %2404 = vmatpush1.msra.mxu0 %v813
        %2405 = vmatprep.subr.mxu0 %v802
        %2406 = vmatpush1.msra.mxu0 %v801
        %2407 = vmatprep.subr.mxu0 %v798
        %2408 = vmatpush1.msra.mxu0 %v797
        %2409 = vmatprep.subr.mxu0 %v794
        %2410 = vmatpush1.msra.mxu0 %v793
        %2411 = vmatprep.subr.mxu0 0.0
        %2412 = vmatpush2.msra.mxu0 0.0
        %2413 = vmatprep.subr.mxu0 0.0
        %2414 = vmatpush2.msra.mxu0 0.0
        %2415 = vmatprep.subr.mxu0 0.0
        %2416 = vmatpush2.msra.mxu0 0.0
        %2417 = vmatprep.subr.mxu0 0.0
        %2418 = vmatpush2.msra.mxu0 0.0
        %2419 = vmatprep.subr.mxu0 0.0
        %2420 = vmatpush2.msra.mxu0 0.0
        %2421 = vmatprep.subr.mxu0 0.0
        %2422 = vmatpush2.msra.mxu0 0.0
        %2423 = vmatprep.subr.mxu0 0.0
        %2424 = vmatpush2.msra.mxu0 0.0
        %2425 = vmatprep.subr.mxu0 0.0
        %2426 = vmatpush2.msra.mxu0 0.0
        %2427 = vmatprep.subr.mxu0 0.0
        %2428 = vmatpush2.msra.mxu0 0.0
        %2429 = vmatprep.subr.mxu0 0.0
        %2430 = vmatpush2.msra.mxu0 0.0
        %2431 = vmatprep.subr.mxu0 0.0
        %2432 = vmatpush2.msra.mxu0 0.0
        %2433 = vmatprep.subr.mxu0 0.0
        %2434 = vmatpush2.msra.mxu0 0.0
        %2435 = vmatprep.subr.mxu0 0.0
        %2436 = vmatpush2.msra.mxu0 0.0
        %2437 = vmatprep.subr.mxu0 0.0
        %2438 = vmatpush2.msra.mxu0 0.0
        %2439 = vmatprep.subr.mxu0 0.0
        %2440 = vmatpush2.msra.mxu0 0.0
        %2441 = vmatprep.subr.mxu0 0.0
        %2442 = vmatpush2.msra.mxu0 0.0
        %2443 = vmatprep.mubr.f32.mxu0 0.0
        %2444 = vmatmul.mubr.f32.gmra.mxu0 %v1168
        %v2445 = vpop.f32.mrf.mxu0
        %v2446 = vadd.f32 0.0, %v2445
        %v2447 = vpop.f32.mrf.mxu0
        %v2448 = vadd.f32 0.0, %v2447
        %2449 = vdwg.mxu0
        %2450 = vmatprep.subr.mxu0 0.0
        %2451 = vmatpush1.msra.mxu0 0.0
        %2452 = vmatprep.subr.mxu0 0.0
        %2453 = vmatpush1.msra.mxu0 0.0
        %2454 = vmatprep.subr.mxu0 0.0
        %2455 = vmatpush1.msra.mxu0 0.0
        %2456 = vmatprep.subr.mxu0 0.0
        %2457 = vmatpush1.msra.mxu0 0.0
        %2458 = vmatprep.subr.mxu0 0.0
        %2459 = vmatpush1.msra.mxu0 0.0
        %2460 = vmatprep.subr.mxu0 0.0
        %2461 = vmatpush1.msra.mxu0 0.0
        %2462 = vmatprep.subr.mxu0 0.0
        %2463 = vmatpush1.msra.mxu0 0.0
        %2464 = vmatprep.subr.mxu0 0.0
        %2465 = vmatpush1.msra.mxu0 0.0
        %2466 = vmatprep.subr.mxu0 0.0
        %2467 = vmatpush1.msra.mxu0 0.0
        %2468 = vmatprep.subr.mxu0 0.0
        %2469 = vmatpush1.msra.mxu0 0.0
        %2470 = vmatprep.subr.mxu0 0.0
        %2471 = vmatpush1.msra.mxu0 0.0
        %2472 = vmatprep.subr.mxu0 0.0
        %2473 = vmatpush1.msra.mxu0 0.0
        %2474 = vmatprep.subr.mxu0 %v822
        %2475 = vmatpush1.msra.mxu0 %v819
        %2476 = vmatprep.subr.mxu0 %v804
        %2477 = vmatpush1.msra.mxu0 %v803
        %2478 = vmatprep.subr.mxu0 %v800
        %2479 = vmatpush1.msra.mxu0 %v799
        %2480 = vmatprep.subr.mxu0 %v796
        %2481 = vmatpush1.msra.mxu0 %v795
        %2482 = vmatprep.subr.mxu0 0.0
        %2483 = vmatpush2.msra.mxu0 0.0
        %2484 = vmatprep.subr.mxu0 0.0
        %2485 = vmatpush2.msra.mxu0 0.0
        %2486 = vmatprep.subr.mxu0 0.0
        %2487 = vmatpush2.msra.mxu0 0.0
        %2488 = vmatprep.subr.mxu0 0.0
        %2489 = vmatpush2.msra.mxu0 0.0
        %2490 = vmatprep.subr.mxu0 0.0
        %2491 = vmatpush2.msra.mxu0 0.0
        %2492 = vmatprep.subr.mxu0 0.0
        %2493 = vmatpush2.msra.mxu0 0.0
        %2494 = vmatprep.subr.mxu0 0.0
        %2495 = vmatpush2.msra.mxu0 0.0
        %2496 = vmatprep.subr.mxu0 0.0
        %2497 = vmatpush2.msra.mxu0 0.0
        %2498 = vmatprep.subr.mxu0 0.0
        %2499 = vmatpush2.msra.mxu0 0.0
        %2500 = vmatprep.subr.mxu0 0.0
        %2501 = vmatpush2.msra.mxu0 0.0
        %2502 = vmatprep.subr.mxu0 0.0
        %2503 = vmatpush2.msra.mxu0 0.0
        %2504 = vmatprep.subr.mxu0 0.0
        %2505 = vmatpush2.msra.mxu0 0.0
        %2506 = vmatprep.subr.mxu0 0.0
        %2507 = vmatpush2.msra.mxu0 0.0
        %2508 = vmatprep.subr.mxu0 0.0
        %2509 = vmatpush2.msra.mxu0 0.0
        %2510 = vmatprep.subr.mxu0 0.0
        %2511 = vmatpush2.msra.mxu0 0.0
        %2512 = vmatprep.subr.mxu0 0.0
        %2513 = vmatpush2.msra.mxu0 0.0
        %2514 = vmatprep.mubr.f32.mxu0 0.0
        %2515 = vmatmul.mubr.f32.gmra.mxu0 %v1168
        %v2516 = vpop.f32.mrf.mxu0
        %v2517 = vadd.f32 0.0, %v2516
        %v2518 = vpop.f32.mrf.mxu0
        %v2519 = vadd.f32 0.0, %v2518
        %2520 = vdwg.mxu0
        %v2521 = vadd.f32 %v2304, %v2446
        %v2522 = vadd.f32 %v2306, %v2448
        %v2523 = vadd.f32 %v2375, %v2517
        %v2524 = vadd.f32 %v2377, %v2519
        %2525 = vmatprep.subr.mxu0 0.0
        %2526 = vmatpush1.msra.mxu0 0.0
        %2527 = vmatprep.subr.mxu0 0.0
        %2528 = vmatpush1.msra.mxu0 0.0
        %2529 = vmatprep.subr.mxu0 0.0
        %2530 = vmatpush1.msra.mxu0 0.0
        %2531 = vmatprep.subr.mxu0 0.0
        %2532 = vmatpush1.msra.mxu0 0.0
        %2533 = vmatprep.subr.mxu0 0.0
        %2534 = vmatpush1.msra.mxu0 0.0
        %2535 = vmatprep.subr.mxu0 0.0
        %2536 = vmatpush1.msra.mxu0 0.0
        %2537 = vmatprep.subr.mxu0 0.0
        %2538 = vmatpush1.msra.mxu0 0.0
        %2539 = vmatprep.subr.mxu0 0.0
        %2540 = vmatpush1.msra.mxu0 0.0
        %2541 = vmatprep.subr.mxu0 0.0
        %2542 = vmatpush1.msra.mxu0 0.0
        %2543 = vmatprep.subr.mxu0 0.0
        %2544 = vmatpush1.msra.mxu0 0.0
        %2545 = vmatprep.subr.mxu0 0.0
        %2546 = vmatpush1.msra.mxu0 0.0
        %2547 = vmatprep.subr.mxu0 0.0
        %2548 = vmatpush1.msra.mxu0 0.0
        %2549 = vmatprep.subr.mxu0 %v995
        %2550 = vmatpush1.msra.mxu0 %v992
        %2551 = vmatprep.subr.mxu0 %v981
        %2552 = vmatpush1.msra.mxu0 %v980
        %2553 = vmatprep.subr.mxu0 %v977
        %2554 = vmatpush1.msra.mxu0 %v976
        %2555 = vmatprep.subr.mxu0 %v973
        %2556 = vmatpush1.msra.mxu0 %v972
        %2557 = vmatprep.subr.mxu0 0.0
        %2558 = vmatpush2.msra.mxu0 0.0
        %2559 = vmatprep.subr.mxu0 0.0
        %2560 = vmatpush2.msra.mxu0 0.0
        %2561 = vmatprep.subr.mxu0 0.0
        %2562 = vmatpush2.msra.mxu0 0.0
        %2563 = vmatprep.subr.mxu0 0.0
        %2564 = vmatpush2.msra.mxu0 0.0
        %2565 = vmatprep.subr.mxu0 0.0
        %2566 = vmatpush2.msra.mxu0 0.0
        %2567 = vmatprep.subr.mxu0 0.0
        %2568 = vmatpush2.msra.mxu0 0.0
        %2569 = vmatprep.subr.mxu0 0.0
        %2570 = vmatpush2.msra.mxu0 0.0
        %2571 = vmatprep.subr.mxu0 0.0
        %2572 = vmatpush2.msra.mxu0 0.0
        %2573 = vmatprep.subr.mxu0 0.0
        %2574 = vmatpush2.msra.mxu0 0.0
        %2575 = vmatprep.subr.mxu0 0.0
        %2576 = vmatpush2.msra.mxu0 0.0
        %2577 = vmatprep.subr.mxu0 0.0
        %2578 = vmatpush2.msra.mxu0 0.0
        %2579 = vmatprep.subr.mxu0 0.0
        %2580 = vmatpush2.msra.mxu0 0.0
        %2581 = vmatprep.subr.mxu0 0.0
        %2582 = vmatpush2.msra.mxu0 0.0
        %2583 = vmatprep.subr.mxu0 0.0
        %2584 = vmatpush2.msra.mxu0 0.0
        %2585 = vmatprep.subr.mxu0 0.0
        %2586 = vmatpush2.msra.mxu0 0.0
        %2587 = vmatprep.subr.mxu0 0.0
        %2588 = vmatpush2.msra.mxu0 0.0
        %2589 = vmatprep.mubr.f32.mxu0 0.0
        %2590 = vmatmul.mubr.f32.gmra.mxu0 %v1937
        %v2591 = vpop.f32.mrf.mxu0
        %v2592 = vadd.f32 0.0, %v2591
        %v2593 = vpop.f32.mrf.mxu0
        %v2594 = vadd.f32 0.0, %v2593
        %2595 = vdwg.mxu0
        %2596 = vmatprep.subr.mxu0 0.0
        %2597 = vmatpush1.msra.mxu0 0.0
        %2598 = vmatprep.subr.mxu0 0.0
        %2599 = vmatpush1.msra.mxu0 0.0
        %2600 = vmatprep.subr.mxu0 0.0
        %2601 = vmatpush1.msra.mxu0 0.0
        %2602 = vmatprep.subr.mxu0 0.0
        %2603 = vmatpush1.msra.mxu0 0.0
        %2604 = vmatprep.subr.mxu0 0.0
        %2605 = vmatpush1.msra.mxu0 0.0
        %2606 = vmatprep.subr.mxu0 0.0
        %2607 = vmatpush1.msra.mxu0 0.0
        %2608 = vmatprep.subr.mxu0 0.0
        %2609 = vmatpush1.msra.mxu0 0.0
        %2610 = vmatprep.subr.mxu0 0.0
        %2611 = vmatpush1.msra.mxu0 0.0
        %2612 = vmatprep.subr.mxu0 0.0
        %2613 = vmatpush1.msra.mxu0 0.0
        %2614 = vmatprep.subr.mxu0 0.0
        %2615 = vmatpush1.msra.mxu0 0.0
        %2616 = vmatprep.subr.mxu0 0.0
        %2617 = vmatpush1.msra.mxu0 0.0
        %2618 = vmatprep.subr.mxu0 0.0
        %2619 = vmatpush1.msra.mxu0 0.0
        %2620 = vmatprep.subr.mxu0 %v1001
        %2621 = vmatpush1.msra.mxu0 %v998
        %2622 = vmatprep.subr.mxu0 %v983
        %2623 = vmatpush1.msra.mxu0 %v982
        %2624 = vmatprep.subr.mxu0 %v979
        %2625 = vmatpush1.msra.mxu0 %v978
        %2626 = vmatprep.subr.mxu0 %v975
        %2627 = vmatpush1.msra.mxu0 %v974
        %2628 = vmatprep.subr.mxu0 0.0
        %2629 = vmatpush2.msra.mxu0 0.0
        %2630 = vmatprep.subr.mxu0 0.0
        %2631 = vmatpush2.msra.mxu0 0.0
        %2632 = vmatprep.subr.mxu0 0.0
        %2633 = vmatpush2.msra.mxu0 0.0
        %2634 = vmatprep.subr.mxu0 0.0
        %2635 = vmatpush2.msra.mxu0 0.0
        %2636 = vmatprep.subr.mxu0 0.0
        %2637 = vmatpush2.msra.mxu0 0.0
        %2638 = vmatprep.subr.mxu0 0.0
        %2639 = vmatpush2.msra.mxu0 0.0
        %2640 = vmatprep.subr.mxu0 0.0
        %2641 = vmatpush2.msra.mxu0 0.0
        %2642 = vmatprep.subr.mxu0 0.0
        %2643 = vmatpush2.msra.mxu0 0.0
        %2644 = vmatprep.subr.mxu0 0.0
        %2645 = vmatpush2.msra.mxu0 0.0
        %2646 = vmatprep.subr.mxu0 0.0
        %2647 = vmatpush2.msra.mxu0 0.0
        %2648 = vmatprep.subr.mxu0 0.0
        %2649 = vmatpush2.msra.mxu0 0.0
        %2650 = vmatprep.subr.mxu0 0.0
        %2651 = vmatpush2.msra.mxu0 0.0
        %2652 = vmatprep.subr.mxu0 0.0
        %2653 = vmatpush2.msra.mxu0 0.0
        %2654 = vmatprep.subr.mxu0 0.0
        %2655 = vmatpush2.msra.mxu0 0.0
        %2656 = vmatprep.subr.mxu0 0.0
        %2657 = vmatpush2.msra.mxu0 0.0
        %2658 = vmatprep.subr.mxu0 0.0
        %2659 = vmatpush2.msra.mxu0 0.0
        %2660 = vmatprep.mubr.f32.mxu0 0.0
        %2661 = vmatmul.mubr.f32.gmra.mxu0 %v1937
        %v2662 = vpop.f32.mrf.mxu0
        %v2663 = vadd.f32 0.0, %v2662
        %v2664 = vpop.f32.mrf.mxu0
        %v2665 = vadd.f32 0.0, %v2664
        %2666 = vdwg.mxu0
        %v2667 = vadd.f32 %v2521, %v2592
        %v2668 = vadd.f32 %v2522, %v2594
        %v2669 = vadd.f32 %v2523, %v2663
        %v2670 = vadd.f32 %v2524, %v2665
        %v2671 = vld [vmem:[%s438 + $0xf] sm:$0x3f]
        %v2673 = vsel %vm475, %v2671, 0
        %2675 = vmatprep.subr.mxu0 0.0
        %2676 = vmatpush1.msra.mxu0 0.0
        %2677 = vmatprep.subr.mxu0 0.0
        %2678 = vmatpush1.msra.mxu0 0.0
        %2679 = vmatprep.subr.mxu0 0.0
        %2680 = vmatpush1.msra.mxu0 0.0
        %2681 = vmatprep.subr.mxu0 0.0
        %2682 = vmatpush1.msra.mxu0 0.0
        %2683 = vmatprep.subr.mxu0 0.0
        %2684 = vmatpush1.msra.mxu0 0.0
        %2685 = vmatprep.subr.mxu0 0.0
        %2686 = vmatpush1.msra.mxu0 0.0
        %2687 = vmatprep.subr.mxu0 0.0
        %2688 = vmatpush1.msra.mxu0 0.0
        %2689 = vmatprep.subr.mxu0 0.0
        %2690 = vmatpush1.msra.mxu0 0.0
        %2691 = vmatprep.subr.mxu0 0.0
        %2692 = vmatpush1.msra.mxu0 0.0
        %2693 = vmatprep.subr.mxu0 0.0
        %2694 = vmatpush1.msra.mxu0 0.0
        %2695 = vmatprep.subr.mxu0 0.0
        %2696 = vmatpush1.msra.mxu0 0.0
        %2697 = vmatprep.subr.mxu0 0.0
        %2698 = vmatpush1.msra.mxu0 0.0
        %2699 = vmatprep.subr.mxu0 %v1174
        %2700 = vmatpush1.msra.mxu0 %v1171
        %2701 = vmatprep.subr.mxu0 %v1160
        %2702 = vmatpush1.msra.mxu0 %v1159
        %2703 = vmatprep.subr.mxu0 %v1156
        %2704 = vmatpush1.msra.mxu0 %v1155
        %2705 = vmatprep.subr.mxu0 %v1152
        %2706 = vmatpush1.msra.mxu0 %v1151
        %2707 = vmatprep.subr.mxu0 0.0
        %2708 = vmatpush2.msra.mxu0 0.0
        %2709 = vmatprep.subr.mxu0 0.0
        %2710 = vmatpush2.msra.mxu0 0.0
        %2711 = vmatprep.subr.mxu0 0.0
        %2712 = vmatpush2.msra.mxu0 0.0
        %2713 = vmatprep.subr.mxu0 0.0
        %2714 = vmatpush2.msra.mxu0 0.0
        %2715 = vmatprep.subr.mxu0 0.0
        %2716 = vmatpush2.msra.mxu0 0.0
        %2717 = vmatprep.subr.mxu0 0.0
        %2718 = vmatpush2.msra.mxu0 0.0
        %2719 = vmatprep.subr.mxu0 0.0
        %2720 = vmatpush2.msra.mxu0 0.0
        %2721 = vmatprep.subr.mxu0 0.0
        %2722 = vmatpush2.msra.mxu0 0.0
        %2723 = vmatprep.subr.mxu0 0.0
        %2724 = vmatpush2.msra.mxu0 0.0
        %2725 = vmatprep.subr.mxu0 0.0
        %2726 = vmatpush2.msra.mxu0 0.0
        %2727 = vmatprep.subr.mxu0 0.0
        %2728 = vmatpush2.msra.mxu0 0.0
        %2729 = vmatprep.subr.mxu0 0.0
        %2730 = vmatpush2.msra.mxu0 0.0
        %2731 = vmatprep.subr.mxu0 0.0
        %2732 = vmatpush2.msra.mxu0 0.0
        %2733 = vmatprep.subr.mxu0 0.0
        %2734 = vmatpush2.msra.mxu0 0.0
        %2735 = vmatprep.subr.mxu0 0.0
        %2736 = vmatpush2.msra.mxu0 0.0
        %2737 = vmatprep.subr.mxu0 0.0
        %2738 = vmatpush2.msra.mxu0 0.0
        %2739 = vmatprep.mubr.f32.mxu0 0.0
        %2740 = vmatmul.mubr.f32.gmra.mxu0 %v2673
        %v2741 = vpop.f32.mrf.mxu0
        %v2742 = vadd.f32 0.0, %v2741
        %v2743 = vpop.f32.mrf.mxu0
        %v2744 = vadd.f32 0.0, %v2743
        %2745 = vdwg.mxu0
        %2746 = vmatprep.subr.mxu0 0.0
        %2747 = vmatpush1.msra.mxu0 0.0
        %2748 = vmatprep.subr.mxu0 0.0
        %2749 = vmatpush1.msra.mxu0 0.0
        %2750 = vmatprep.subr.mxu0 0.0
        %2751 = vmatpush1.msra.mxu0 0.0
        %2752 = vmatprep.subr.mxu0 0.0
        %2753 = vmatpush1.msra.mxu0 0.0
        %2754 = vmatprep.subr.mxu0 0.0
        %2755 = vmatpush1.msra.mxu0 0.0
        %2756 = vmatprep.subr.mxu0 0.0
        %2757 = vmatpush1.msra.mxu0 0.0
        %2758 = vmatprep.subr.mxu0 0.0
        %2759 = vmatpush1.msra.mxu0 0.0
        %2760 = vmatprep.subr.mxu0 0.0
        %2761 = vmatpush1.msra.mxu0 0.0
        %2762 = vmatprep.subr.mxu0 0.0
        %2763 = vmatpush1.msra.mxu0 0.0
        %2764 = vmatprep.subr.mxu0 0.0
        %2765 = vmatpush1.msra.mxu0 0.0
        %2766 = vmatprep.subr.mxu0 0.0
        %2767 = vmatpush1.msra.mxu0 0.0
        %2768 = vmatprep.subr.mxu0 0.0
        %2769 = vmatpush1.msra.mxu0 0.0
        %2770 = vmatprep.subr.mxu0 %v1180
        %2771 = vmatpush1.msra.mxu0 %v1177
        %2772 = vmatprep.subr.mxu0 %v1162
        %2773 = vmatpush1.msra.mxu0 %v1161
        %2774 = vmatprep.subr.mxu0 %v1158
        %2775 = vmatpush1.msra.mxu0 %v1157
        %2776 = vmatprep.subr.mxu0 %v1154
        %2777 = vmatpush1.msra.mxu0 %v1153
        %2778 = vmatprep.subr.mxu0 0.0
        %2779 = vmatpush2.msra.mxu0 0.0
        %2780 = vmatprep.subr.mxu0 0.0
        %2781 = vmatpush2.msra.mxu0 0.0
        %2782 = vmatprep.subr.mxu0 0.0
        %2783 = vmatpush2.msra.mxu0 0.0
        %2784 = vmatprep.subr.mxu0 0.0
        %2785 = vmatpush2.msra.mxu0 0.0
        %2786 = vmatprep.subr.mxu0 0.0
        %2787 = vmatpush2.msra.mxu0 0.0
        %2788 = vmatprep.subr.mxu0 0.0
        %2789 = vmatpush2.msra.mxu0 0.0
        %2790 = vmatprep.subr.mxu0 0.0
        %2791 = vmatpush2.msra.mxu0 0.0
        %2792 = vmatprep.subr.mxu0 0.0
        %2793 = vmatpush2.msra.mxu0 0.0
        %2794 = vmatprep.subr.mxu0 0.0
        %2795 = vmatpush2.msra.mxu0 0.0
        %2796 = vmatprep.subr.mxu0 0.0
        %2797 = vmatpush2.msra.mxu0 0.0
        %2798 = vmatprep.subr.mxu0 0.0
        %2799 = vmatpush2.msra.mxu0 0.0
        %2800 = vmatprep.subr.mxu0 0.0
        %2801 = vmatpush2.msra.mxu0 0.0
        %2802 = vmatprep.subr.mxu0 0.0
        %2803 = vmatpush2.msra.mxu0 0.0
        %2804 = vmatprep.subr.mxu0 0.0
        %2805 = vmatpush2.msra.mxu0 0.0
        %2806 = vmatprep.subr.mxu0 0.0
        %2807 = vmatpush2.msra.mxu0 0.0
        %2808 = vmatprep.subr.mxu0 0.0
        %2809 = vmatpush2.msra.mxu0 0.0
        %2810 = vmatprep.mubr.f32.mxu0 0.0
        %2811 = vmatmul.mubr.f32.gmra.mxu0 %v2673
        %v2812 = vpop.f32.mrf.mxu0
        %v2813 = vadd.f32 0.0, %v2812
        %v2814 = vpop.f32.mrf.mxu0
        %v2815 = vadd.f32 0.0, %v2814
        %2816 = vdwg.mxu0
        %v2817 = vadd.f32 %v2667, %v2742
        %v2818 = vadd.f32 %v2668, %v2744
        %v2819 = vadd.f32 %v2669, %v2813
        %v2820 = vadd.f32 %v2670, %v2815
        %v2821 = vadd.f32 %v2817, %v1332
        %v2822 = vadd.f32 %v2818, %v1336
        %v2823 = vadd.f32 %v2819, %v1340
        %v2824 = vadd.f32 %v2820, %v1344
        %v2825 = vmax.f32 %v2821, 0.0
        %v2826 = vmax.f32 %v2822, 0.0
        %v2827 = vmax.f32 %v2823, 0.0
        %v2828 = vmax.f32 %v2824, 0.0
        %v2829 = vmax.f32 %v2825, %v2827
        %v2830 = vmax.f32 %v2826, %v2828
        %2831 = vmatprep.subr.mxu0 0.0
        %2832 = vmatpush1.msra.mxu0 0.0
        %2833 = vmatprep.subr.mxu0 0.0
        %2834 = vmatpush1.msra.mxu0 0.0
        %2835 = vmatprep.subr.mxu0 0.0
        %2836 = vmatpush1.msra.mxu0 0.0
        %2837 = vmatprep.subr.mxu0 0.0
        %2838 = vmatpush1.msra.mxu0 0.0
        %2839 = vmatprep.subr.mxu0 0.0
        %2840 = vmatpush1.msra.mxu0 0.0
        %2841 = vmatprep.subr.mxu0 0.0
        %2842 = vmatpush1.msra.mxu0 0.0
        %2843 = vmatprep.subr.mxu0 0.0
        %2844 = vmatpush1.msra.mxu0 0.0
        %2845 = vmatprep.subr.mxu0 0.0
        %2846 = vmatpush1.msra.mxu0 0.0
        %2847 = vmatprep.subr.mxu0 0.0
        %2848 = vmatpush1.msra.mxu0 0.0
        %2849 = vmatprep.subr.mxu0 0.0
        %2850 = vmatpush1.msra.mxu0 0.0
        %2851 = vmatprep.subr.mxu0 0.0
        %2852 = vmatpush1.msra.mxu0 0.0
        %2853 = vmatprep.subr.mxu0 0.0
        %2854 = vmatpush1.msra.mxu0 0.0
        %2855 = vmatprep.subr.mxu0 %v484
        %2856 = vmatpush1.msra.mxu0 %v481
        %2857 = vmatprep.subr.mxu0 %v468
        %2858 = vmatpush1.msra.mxu0 %v467
        %2859 = vmatprep.subr.mxu0 %v464
        %2860 = vmatpush1.msra.mxu0 %v463
        %2861 = vmatprep.subr.mxu0 %v460
        %2862 = vmatpush1.msra.mxu0 %v459
        %2863 = vmatprep.subr.mxu0 0.0
        %2864 = vmatpush2.msra.mxu0 0.0
        %2865 = vmatprep.subr.mxu0 0.0
        %2866 = vmatpush2.msra.mxu0 0.0
        %2867 = vmatprep.subr.mxu0 0.0
        %2868 = vmatpush2.msra.mxu0 0.0
        %2869 = vmatprep.subr.mxu0 0.0
        %2870 = vmatpush2.msra.mxu0 0.0
        %2871 = vmatprep.subr.mxu0 0.0
        %2872 = vmatpush2.msra.mxu0 0.0
        %2873 = vmatprep.subr.mxu0 0.0
        %2874 = vmatpush2.msra.mxu0 0.0
        %2875 = vmatprep.subr.mxu0 0.0
        %2876 = vmatpush2.msra.mxu0 0.0
        %2877 = vmatprep.subr.mxu0 0.0
        %2878 = vmatpush2.msra.mxu0 0.0
        %2879 = vmatprep.subr.mxu0 0.0
        %2880 = vmatpush2.msra.mxu0 0.0
        %2881 = vmatprep.subr.mxu0 0.0
        %2882 = vmatpush2.msra.mxu0 0.0
        %2883 = vmatprep.subr.mxu0 0.0
        %2884 = vmatpush2.msra.mxu0 0.0
        %2885 = vmatprep.subr.mxu0 0.0
        %2886 = vmatpush2.msra.mxu0 0.0
        %2887 = vmatprep.subr.mxu0 0.0
        %2888 = vmatpush2.msra.mxu0 0.0
        %2889 = vmatprep.subr.mxu0 0.0
        %2890 = vmatpush2.msra.mxu0 0.0
        %2891 = vmatprep.subr.mxu0 0.0
        %2892 = vmatpush2.msra.mxu0 0.0
        %2893 = vmatprep.subr.mxu0 0.0
        %2894 = vmatpush2.msra.mxu0 0.0
        %2895 = vmatprep.mubr.f32.mxu0 0.0
        %2896 = vmatmul.mubr.f32.gmra.mxu0 %v1168
        %v2897 = vpop.f32.mrf.mxu0
        %v2898 = vadd.f32 0.0, %v2897
        %v2899 = vpop.f32.mrf.mxu0
        %v2900 = vadd.f32 0.0, %v2899
        %2901 = vdwg.mxu0
        %2902 = vmatprep.subr.mxu0 0.0
        %2903 = vmatpush1.msra.mxu0 0.0
        %2904 = vmatprep.subr.mxu0 0.0
        %2905 = vmatpush1.msra.mxu0 0.0
        %2906 = vmatprep.subr.mxu0 0.0
        %2907 = vmatpush1.msra.mxu0 0.0
        %2908 = vmatprep.subr.mxu0 0.0
        %2909 = vmatpush1.msra.mxu0 0.0
        %2910 = vmatprep.subr.mxu0 0.0
        %2911 = vmatpush1.msra.mxu0 0.0
        %2912 = vmatprep.subr.mxu0 0.0
        %2913 = vmatpush1.msra.mxu0 0.0
        %2914 = vmatprep.subr.mxu0 0.0
        %2915 = vmatpush1.msra.mxu0 0.0
        %2916 = vmatprep.subr.mxu0 0.0
        %2917 = vmatpush1.msra.mxu0 0.0
        %2918 = vmatprep.subr.mxu0 0.0
        %2919 = vmatpush1.msra.mxu0 0.0
        %2920 = vmatprep.subr.mxu0 0.0
        %2921 = vmatpush1.msra.mxu0 0.0
        %2922 = vmatprep.subr.mxu0 0.0
        %2923 = vmatpush1.msra.mxu0 0.0
        %2924 = vmatprep.subr.mxu0 0.0
        %2925 = vmatpush1.msra.mxu0 0.0
        %2926 = vmatprep.subr.mxu0 %v490
        %2927 = vmatpush1.msra.mxu0 %v487
        %2928 = vmatprep.subr.mxu0 %v470
        %2929 = vmatpush1.msra.mxu0 %v469
        %2930 = vmatprep.subr.mxu0 %v466
        %2931 = vmatpush1.msra.mxu0 %v465
        %2932 = vmatprep.subr.mxu0 %v462
        %2933 = vmatpush1.msra.mxu0 %v461
        %2934 = vmatprep.subr.mxu0 0.0
        %2935 = vmatpush2.msra.mxu0 0.0
        %2936 = vmatprep.subr.mxu0 0.0
        %2937 = vmatpush2.msra.mxu0 0.0
        %2938 = vmatprep.subr.mxu0 0.0
        %2939 = vmatpush2.msra.mxu0 0.0
        %2940 = vmatprep.subr.mxu0 0.0
        %2941 = vmatpush2.msra.mxu0 0.0
        %2942 = vmatprep.subr.mxu0 0.0
        %2943 = vmatpush2.msra.mxu0 0.0
        %2944 = vmatprep.subr.mxu0 0.0
        %2945 = vmatpush2.msra.mxu0 0.0
        %2946 = vmatprep.subr.mxu0 0.0
        %2947 = vmatpush2.msra.mxu0 0.0
        %2948 = vmatprep.subr.mxu0 0.0
        %2949 = vmatpush2.msra.mxu0 0.0
        %2950 = vmatprep.subr.mxu0 0.0
        %2951 = vmatpush2.msra.mxu0 0.0
        %2952 = vmatprep.subr.mxu0 0.0
        %2953 = vmatpush2.msra.mxu0 0.0
        %2954 = vmatprep.subr.mxu0 0.0
        %2955 = vmatpush2.msra.mxu0 0.0
        %2956 = vmatprep.subr.mxu0 0.0
        %2957 = vmatpush2.msra.mxu0 0.0
        %2958 = vmatprep.subr.mxu0 0.0
        %2959 = vmatpush2.msra.mxu0 0.0
        %2960 = vmatprep.subr.mxu0 0.0
        %2961 = vmatpush2.msra.mxu0 0.0
        %2962 = vmatprep.subr.mxu0 0.0
        %2963 = vmatpush2.msra.mxu0 0.0
        %2964 = vmatprep.subr.mxu0 0.0
        %2965 = vmatpush2.msra.mxu0 0.0
        %2966 = vmatprep.mubr.f32.mxu0 0.0
        %2967 = vmatmul.mubr.f32.gmra.mxu0 %v1168
        %v2968 = vpop.f32.mrf.mxu0
        %v2969 = vadd.f32 0.0, %v2968
        %v2970 = vpop.f32.mrf.mxu0
        %v2971 = vadd.f32 0.0, %v2970
        %2972 = vdwg.mxu0
        %2973 = vmatprep.subr.mxu0 0.0
        %2974 = vmatpush1.msra.mxu0 0.0
        %2975 = vmatprep.subr.mxu0 0.0
        %2976 = vmatpush1.msra.mxu0 0.0
        %2977 = vmatprep.subr.mxu0 0.0
        %2978 = vmatpush1.msra.mxu0 0.0
        %2979 = vmatprep.subr.mxu0 0.0
        %2980 = vmatpush1.msra.mxu0 0.0
        %2981 = vmatprep.subr.mxu0 0.0
        %2982 = vmatpush1.msra.mxu0 0.0
        %2983 = vmatprep.subr.mxu0 0.0
        %2984 = vmatpush1.msra.mxu0 0.0
        %2985 = vmatprep.subr.mxu0 0.0
        %2986 = vmatpush1.msra.mxu0 0.0
        %2987 = vmatprep.subr.mxu0 0.0
        %2988 = vmatpush1.msra.mxu0 0.0
        %2989 = vmatprep.subr.mxu0 0.0
        %2990 = vmatpush1.msra.mxu0 0.0
        %2991 = vmatprep.subr.mxu0 0.0
        %2992 = vmatpush1.msra.mxu0 0.0
        %2993 = vmatprep.subr.mxu0 0.0
        %2994 = vmatpush1.msra.mxu0 0.0
        %2995 = vmatprep.subr.mxu0 0.0
        %2996 = vmatpush1.msra.mxu0 0.0
        %2997 = vmatprep.subr.mxu0 %v641
        %2998 = vmatpush1.msra.mxu0 %v638
        %2999 = vmatprep.subr.mxu0 %v450
        %3000 = vmatpush1.msra.mxu0 %v449
        %3001 = vmatprep.subr.mxu0 %v446
        %3002 = vmatpush1.msra.mxu0 %v445
        %3003 = vmatprep.subr.mxu0 %v442
        %3004 = vmatpush1.msra.mxu0 %v441
        %3005 = vmatprep.subr.mxu0 0.0
        %3006 = vmatpush2.msra.mxu0 0.0
        %3007 = vmatprep.subr.mxu0 0.0
        %3008 = vmatpush2.msra.mxu0 0.0
        %3009 = vmatprep.subr.mxu0 0.0
        %3010 = vmatpush2.msra.mxu0 0.0
        %3011 = vmatprep.subr.mxu0 0.0
        %3012 = vmatpush2.msra.mxu0 0.0
        %3013 = vmatprep.subr.mxu0 0.0
        %3014 = vmatpush2.msra.mxu0 0.0
        %3015 = vmatprep.subr.mxu0 0.0
        %3016 = vmatpush2.msra.mxu0 0.0
        %3017 = vmatprep.subr.mxu0 0.0
        %3018 = vmatpush2.msra.mxu0 0.0
        %3019 = vmatprep.subr.mxu0 0.0
        %3020 = vmatpush2.msra.mxu0 0.0
        %3021 = vmatprep.subr.mxu0 0.0
        %3022 = vmatpush2.msra.mxu0 0.0
        %3023 = vmatprep.subr.mxu0 0.0
        %3024 = vmatpush2.msra.mxu0 0.0
        %3025 = vmatprep.subr.mxu0 0.0
        %3026 = vmatpush2.msra.mxu0 0.0
        %3027 = vmatprep.subr.mxu0 0.0
        %3028 = vmatpush2.msra.mxu0 0.0
        %3029 = vmatprep.subr.mxu0 0.0
        %3030 = vmatpush2.msra.mxu0 0.0
        %3031 = vmatprep.subr.mxu0 0.0
        %3032 = vmatpush2.msra.mxu0 0.0
        %3033 = vmatprep.subr.mxu0 0.0
        %3034 = vmatpush2.msra.mxu0 0.0
        %3035 = vmatprep.subr.mxu0 0.0
        %3036 = vmatpush2.msra.mxu0 0.0
        %3037 = vmatprep.mubr.f32.mxu0 0.0
        %3038 = vmatmul.mubr.f32.gmra.mxu0 %v989
        %v3039 = vpop.f32.mrf.mxu0
        %v3040 = vadd.f32 %v2898, %v3039
        %v3041 = vpop.f32.mrf.mxu0
        %v3042 = vadd.f32 %v2900, %v3041
        %3043 = vdwg.mxu0
        %3044 = vmatprep.subr.mxu0 0.0
        %3045 = vmatpush1.msra.mxu0 0.0
        %3046 = vmatprep.subr.mxu0 0.0
        %3047 = vmatpush1.msra.mxu0 0.0
        %3048 = vmatprep.subr.mxu0 0.0
        %3049 = vmatpush1.msra.mxu0 0.0
        %3050 = vmatprep.subr.mxu0 0.0
        %3051 = vmatpush1.msra.mxu0 0.0
        %3052 = vmatprep.subr.mxu0 0.0
        %3053 = vmatpush1.msra.mxu0 0.0
        %3054 = vmatprep.subr.mxu0 0.0
        %3055 = vmatpush1.msra.mxu0 0.0
        %3056 = vmatprep.subr.mxu0 0.0
        %3057 = vmatpush1.msra.mxu0 0.0
        %3058 = vmatprep.subr.mxu0 0.0
        %3059 = vmatpush1.msra.mxu0 0.0
        %3060 = vmatprep.subr.mxu0 0.0
        %3061 = vmatpush1.msra.mxu0 0.0
        %3062 = vmatprep.subr.mxu0 0.0
        %3063 = vmatpush1.msra.mxu0 0.0
        %3064 = vmatprep.subr.mxu0 0.0
        %3065 = vmatpush1.msra.mxu0 0.0
        %3066 = vmatprep.subr.mxu0 0.0
        %3067 = vmatpush1.msra.mxu0 0.0
        %3068 = vmatprep.subr.mxu0 %v647
        %3069 = vmatpush1.msra.mxu0 %v644
        %3070 = vmatprep.subr.mxu0 %v452
        %3071 = vmatpush1.msra.mxu0 %v451
        %3072 = vmatprep.subr.mxu0 %v448
        %3073 = vmatpush1.msra.mxu0 %v447
        %3074 = vmatprep.subr.mxu0 %v444
        %3075 = vmatpush1.msra.mxu0 %v443
        %3076 = vmatprep.subr.mxu0 0.0
        %3077 = vmatpush2.msra.mxu0 0.0
        %3078 = vmatprep.subr.mxu0 0.0
        %3079 = vmatpush2.msra.mxu0 0.0
        %3080 = vmatprep.subr.mxu0 0.0
        %3081 = vmatpush2.msra.mxu0 0.0
        %3082 = vmatprep.subr.mxu0 0.0
        %3083 = vmatpush2.msra.mxu0 0.0
        %3084 = vmatprep.subr.mxu0 0.0
        %3085 = vmatpush2.msra.mxu0 0.0
        %3086 = vmatprep.subr.mxu0 0.0
        %3087 = vmatpush2.msra.mxu0 0.0
        %3088 = vmatprep.subr.mxu0 0.0
        %3089 = vmatpush2.msra.mxu0 0.0
        %3090 = vmatprep.subr.mxu0 0.0
        %3091 = vmatpush2.msra.mxu0 0.0
        %3092 = vmatprep.subr.mxu0 0.0
        %3093 = vmatpush2.msra.mxu0 0.0
        %3094 = vmatprep.subr.mxu0 0.0
        %3095 = vmatpush2.msra.mxu0 0.0
        %3096 = vmatprep.subr.mxu0 0.0
        %3097 = vmatpush2.msra.mxu0 0.0
        %3098 = vmatprep.subr.mxu0 0.0
        %3099 = vmatpush2.msra.mxu0 0.0
        %3100 = vmatprep.subr.mxu0 0.0
        %3101 = vmatpush2.msra.mxu0 0.0
        %3102 = vmatprep.subr.mxu0 0.0
        %3103 = vmatpush2.msra.mxu0 0.0
        %3104 = vmatprep.subr.mxu0 0.0
        %3105 = vmatpush2.msra.mxu0 0.0
        %3106 = vmatprep.subr.mxu0 0.0
        %3107 = vmatpush2.msra.mxu0 0.0
        %3108 = vmatprep.mubr.f32.mxu0 0.0
        %3109 = vmatmul.mubr.f32.gmra.mxu0 %v989
        %v3110 = vpop.f32.mrf.mxu0
        %v3111 = vadd.f32 %v2969, %v3110
        %v3112 = vpop.f32.mrf.mxu0
        %v3113 = vadd.f32 %v2971, %v3112
        %3114 = vdwg.mxu0
        %3115 = vmatprep.subr.mxu0 0.0
        %3116 = vmatpush1.msra.mxu0 0.0
        %3117 = vmatprep.subr.mxu0 0.0
        %3118 = vmatpush1.msra.mxu0 0.0
        %3119 = vmatprep.subr.mxu0 0.0
        %3120 = vmatpush1.msra.mxu0 0.0
        %3121 = vmatprep.subr.mxu0 0.0
        %3122 = vmatpush1.msra.mxu0 0.0
        %3123 = vmatprep.subr.mxu0 0.0
        %3124 = vmatpush1.msra.mxu0 0.0
        %3125 = vmatprep.subr.mxu0 0.0
        %3126 = vmatpush1.msra.mxu0 0.0
        %3127 = vmatprep.subr.mxu0 0.0
        %3128 = vmatpush1.msra.mxu0 0.0
        %3129 = vmatprep.subr.mxu0 0.0
        %3130 = vmatpush1.msra.mxu0 0.0
        %3131 = vmatprep.subr.mxu0 0.0
        %3132 = vmatpush1.msra.mxu0 0.0
        %3133 = vmatprep.subr.mxu0 0.0
        %3134 = vmatpush1.msra.mxu0 0.0
        %3135 = vmatprep.subr.mxu0 0.0
        %3136 = vmatpush1.msra.mxu0 0.0
        %3137 = vmatprep.subr.mxu0 0.0
        %3138 = vmatpush1.msra.mxu0 0.0
        %3139 = vmatprep.subr.mxu0 %v816
        %3140 = vmatpush1.msra.mxu0 %v813
        %3141 = vmatprep.subr.mxu0 %v802
        %3142 = vmatpush1.msra.mxu0 %v801
        %3143 = vmatprep.subr.mxu0 %v798
        %3144 = vmatpush1.msra.mxu0 %v797
        %3145 = vmatprep.subr.mxu0 %v794
        %3146 = vmatpush1.msra.mxu0 %v793
        %3147 = vmatprep.subr.mxu0 0.0
        %3148 = vmatpush2.msra.mxu0 0.0
        %3149 = vmatprep.subr.mxu0 0.0
        %3150 = vmatpush2.msra.mxu0 0.0
        %3151 = vmatprep.subr.mxu0 0.0
        %3152 = vmatpush2.msra.mxu0 0.0
        %3153 = vmatprep.subr.mxu0 0.0
        %3154 = vmatpush2.msra.mxu0 0.0
        %3155 = vmatprep.subr.mxu0 0.0
        %3156 = vmatpush2.msra.mxu0 0.0
        %3157 = vmatprep.subr.mxu0 0.0
        %3158 = vmatpush2.msra.mxu0 0.0
        %3159 = vmatprep.subr.mxu0 0.0
        %3160 = vmatpush2.msra.mxu0 0.0
        %3161 = vmatprep.subr.mxu0 0.0
        %3162 = vmatpush2.msra.mxu0 0.0
        %3163 = vmatprep.subr.mxu0 0.0
        %3164 = vmatpush2.msra.mxu0 0.0
        %3165 = vmatprep.subr.mxu0 0.0
        %3166 = vmatpush2.msra.mxu0 0.0
        %3167 = vmatprep.subr.mxu0 0.0
        %3168 = vmatpush2.msra.mxu0 0.0
        %3169 = vmatprep.subr.mxu0 0.0
        %3170 = vmatpush2.msra.mxu0 0.0
        %3171 = vmatprep.subr.mxu0 0.0
        %3172 = vmatpush2.msra.mxu0 0.0
        %3173 = vmatprep.subr.mxu0 0.0
        %3174 = vmatpush2.msra.mxu0 0.0
        %3175 = vmatprep.subr.mxu0 0.0
        %3176 = vmatpush2.msra.mxu0 0.0
        %3177 = vmatprep.subr.mxu0 0.0
        %3178 = vmatpush2.msra.mxu0 0.0
        %3179 = vmatprep.mubr.f32.mxu0 0.0
        %3180 = vmatmul.mubr.f32.gmra.mxu0 %v1937
        %v3181 = vpop.f32.mrf.mxu0
        %v3182 = vadd.f32 0.0, %v3181
        %v3183 = vpop.f32.mrf.mxu0
        %v3184 = vadd.f32 0.0, %v3183
        %3185 = vdwg.mxu0
        %3186 = vmatprep.subr.mxu0 0.0
        %3187 = vmatpush1.msra.mxu0 0.0
        %3188 = vmatprep.subr.mxu0 0.0
        %3189 = vmatpush1.msra.mxu0 0.0
        %3190 = vmatprep.subr.mxu0 0.0
        %3191 = vmatpush1.msra.mxu0 0.0
        %3192 = vmatprep.subr.mxu0 0.0
        %3193 = vmatpush1.msra.mxu0 0.0
        %3194 = vmatprep.subr.mxu0 0.0
        %3195 = vmatpush1.msra.mxu0 0.0
        %3196 = vmatprep.subr.mxu0 0.0
        %3197 = vmatpush1.msra.mxu0 0.0
        %3198 = vmatprep.subr.mxu0 0.0
        %3199 = vmatpush1.msra.mxu0 0.0
        %3200 = vmatprep.subr.mxu0 0.0
        %3201 = vmatpush1.msra.mxu0 0.0
        %3202 = vmatprep.subr.mxu0 0.0
        %3203 = vmatpush1.msra.mxu0 0.0
        %3204 = vmatprep.subr.mxu0 0.0
        %3205 = vmatpush1.msra.mxu0 0.0
        %3206 = vmatprep.subr.mxu0 0.0
        %3207 = vmatpush1.msra.mxu0 0.0
        %3208 = vmatprep.subr.mxu0 0.0
        %3209 = vmatpush1.msra.mxu0 0.0
        %3210 = vmatprep.subr.mxu0 %v822
        %3211 = vmatpush1.msra.mxu0 %v819
        %3212 = vmatprep.subr.mxu0 %v804
        %3213 = vmatpush1.msra.mxu0 %v803
        %3214 = vmatprep.subr.mxu0 %v800
        %3215 = vmatpush1.msra.mxu0 %v799
        %3216 = vmatprep.subr.mxu0 %v796
        %3217 = vmatpush1.msra.mxu0 %v795
        %3218 = vmatprep.subr.mxu0 0.0
        %3219 = vmatpush2.msra.mxu0 0.0
        %3220 = vmatprep.subr.mxu0 0.0
        %3221 = vmatpush2.msra.mxu0 0.0
        %3222 = vmatprep.subr.mxu0 0.0
        %3223 = vmatpush2.msra.mxu0 0.0
        %3224 = vmatprep.subr.mxu0 0.0
        %3225 = vmatpush2.msra.mxu0 0.0
        %3226 = vmatprep.subr.mxu0 0.0
        %3227 = vmatpush2.msra.mxu0 0.0
        %3228 = vmatprep.subr.mxu0 0.0
        %3229 = vmatpush2.msra.mxu0 0.0
        %3230 = vmatprep.subr.mxu0 0.0
        %3231 = vmatpush2.msra.mxu0 0.0
        %3232 = vmatprep.subr.mxu0 0.0
        %3233 = vmatpush2.msra.mxu0 0.0
        %3234 = vmatprep.subr.mxu0 0.0
        %3235 = vmatpush2.msra.mxu0 0.0
        %3236 = vmatprep.subr.mxu0 0.0
        %3237 = vmatpush2.msra.mxu0 0.0
        %3238 = vmatprep.subr.mxu0 0.0
        %3239 = vmatpush2.msra.mxu0 0.0
        %3240 = vmatprep.subr.mxu0 0.0
        %3241 = vmatpush2.msra.mxu0 0.0
        %3242 = vmatprep.subr.mxu0 0.0
        %3243 = vmatpush2.msra.mxu0 0.0
        %3244 = vmatprep.subr.mxu0 0.0
        %3245 = vmatpush2.msra.mxu0 0.0
        %3246 = vmatprep.subr.mxu0 0.0
        %3247 = vmatpush2.msra.mxu0 0.0
        %3248 = vmatprep.subr.mxu0 0.0
        %3249 = vmatpush2.msra.mxu0 0.0
        %3250 = vmatprep.mubr.f32.mxu0 0.0
        %3251 = vmatmul.mubr.f32.gmra.mxu0 %v1937
        %v3252 = vpop.f32.mrf.mxu0
        %v3253 = vadd.f32 0.0, %v3252
        %v3254 = vpop.f32.mrf.mxu0
        %v3255 = vadd.f32 0.0, %v3254
        %3256 = vdwg.mxu0
        %v3257 = vadd.f32 %v3040, %v3182
        %v3258 = vadd.f32 %v3042, %v3184
        %v3259 = vadd.f32 %v3111, %v3253
        %v3260 = vadd.f32 %v3113, %v3255
        %3261 = vmatprep.subr.mxu0 0.0
        %3262 = vmatpush1.msra.mxu0 0.0
        %3263 = vmatprep.subr.mxu0 0.0
        %3264 = vmatpush1.msra.mxu0 0.0
        %3265 = vmatprep.subr.mxu0 0.0
        %3266 = vmatpush1.msra.mxu0 0.0
        %3267 = vmatprep.subr.mxu0 0.0
        %3268 = vmatpush1.msra.mxu0 0.0
        %3269 = vmatprep.subr.mxu0 0.0
        %3270 = vmatpush1.msra.mxu0 0.0
        %3271 = vmatprep.subr.mxu0 0.0
        %3272 = vmatpush1.msra.mxu0 0.0
        %3273 = vmatprep.subr.mxu0 0.0
        %3274 = vmatpush1.msra.mxu0 0.0
        %3275 = vmatprep.subr.mxu0 0.0
        %3276 = vmatpush1.msra.mxu0 0.0
        %3277 = vmatprep.subr.mxu0 0.0
        %3278 = vmatpush1.msra.mxu0 0.0
        %3279 = vmatprep.subr.mxu0 0.0
        %3280 = vmatpush1.msra.mxu0 0.0
        %3281 = vmatprep.subr.mxu0 0.0
        %3282 = vmatpush1.msra.mxu0 0.0
        %3283 = vmatprep.subr.mxu0 0.0
        %3284 = vmatpush1.msra.mxu0 0.0
        %3285 = vmatprep.subr.mxu0 %v995
        %3286 = vmatpush1.msra.mxu0 %v992
        %3287 = vmatprep.subr.mxu0 %v981
        %3288 = vmatpush1.msra.mxu0 %v980
        %3289 = vmatprep.subr.mxu0 %v977
        %3290 = vmatpush1.msra.mxu0 %v976
        %3291 = vmatprep.subr.mxu0 %v973
        %3292 = vmatpush1.msra.mxu0 %v972
        %3293 = vmatprep.subr.mxu0 0.0
        %3294 = vmatpush2.msra.mxu0 0.0
        %3295 = vmatprep.subr.mxu0 0.0
        %3296 = vmatpush2.msra.mxu0 0.0
        %3297 = vmatprep.subr.mxu0 0.0
        %3298 = vmatpush2.msra.mxu0 0.0
        %3299 = vmatprep.subr.mxu0 0.0
        %3300 = vmatpush2.msra.mxu0 0.0
        %3301 = vmatprep.subr.mxu0 0.0
        %3302 = vmatpush2.msra.mxu0 0.0
        %3303 = vmatprep.subr.mxu0 0.0
        %3304 = vmatpush2.msra.mxu0 0.0
        %3305 = vmatprep.subr.mxu0 0.0
        %3306 = vmatpush2.msra.mxu0 0.0
        %3307 = vmatprep.subr.mxu0 0.0
        %3308 = vmatpush2.msra.mxu0 0.0
        %3309 = vmatprep.subr.mxu0 0.0
        %3310 = vmatpush2.msra.mxu0 0.0
        %3311 = vmatprep.subr.mxu0 0.0
        %3312 = vmatpush2.msra.mxu0 0.0
        %3313 = vmatprep.subr.mxu0 0.0
        %3314 = vmatpush2.msra.mxu0 0.0
        %3315 = vmatprep.subr.mxu0 0.0
        %3316 = vmatpush2.msra.mxu0 0.0
        %3317 = vmatprep.subr.mxu0 0.0
        %3318 = vmatpush2.msra.mxu0 0.0
        %3319 = vmatprep.subr.mxu0 0.0
        %3320 = vmatpush2.msra.mxu0 0.0
        %3321 = vmatprep.subr.mxu0 0.0
        %3322 = vmatpush2.msra.mxu0 0.0
        %3323 = vmatprep.subr.mxu0 0.0
        %3324 = vmatpush2.msra.mxu0 0.0
        %3325 = vmatprep.mubr.f32.mxu0 0.0
        %3326 = vmatmul.mubr.f32.gmra.mxu0 %v2673
        %v3327 = vpop.f32.mrf.mxu0
        %v3328 = vadd.f32 0.0, %v3327
        %v3329 = vpop.f32.mrf.mxu0
        %v3330 = vadd.f32 0.0, %v3329
        %3331 = vdwg.mxu0
        %3332 = vmatprep.subr.mxu0 0.0
        %3333 = vmatpush1.msra.mxu0 0.0
        %3334 = vmatprep.subr.mxu0 0.0
        %3335 = vmatpush1.msra.mxu0 0.0
        %3336 = vmatprep.subr.mxu0 0.0
        %3337 = vmatpush1.msra.mxu0 0.0
        %3338 = vmatprep.subr.mxu0 0.0
        %3339 = vmatpush1.msra.mxu0 0.0
        %3340 = vmatprep.subr.mxu0 0.0
        %3341 = vmatpush1.msra.mxu0 0.0
        %3342 = vmatprep.subr.mxu0 0.0
        %3343 = vmatpush1.msra.mxu0 0.0
        %3344 = vmatprep.subr.mxu0 0.0
        %3345 = vmatpush1.msra.mxu0 0.0
        %3346 = vmatprep.subr.mxu0 0.0
        %3347 = vmatpush1.msra.mxu0 0.0
        %3348 = vmatprep.subr.mxu0 0.0
        %3349 = vmatpush1.msra.mxu0 0.0
        %3350 = vmatprep.subr.mxu0 0.0
        %3351 = vmatpush1.msra.mxu0 0.0
        %3352 = vmatprep.subr.mxu0 0.0
        %3353 = vmatpush1.msra.mxu0 0.0
        %3354 = vmatprep.subr.mxu0 0.0
        %3355 = vmatpush1.msra.mxu0 0.0
        %3356 = vmatprep.subr.mxu0 %v1001
        %3357 = vmatpush1.msra.mxu0 %v998
        %3358 = vmatprep.subr.mxu0 %v983
        %3359 = vmatpush1.msra.mxu0 %v982
        %3360 = vmatprep.subr.mxu0 %v979
        %3361 = vmatpush1.msra.mxu0 %v978
        %3362 = vmatprep.subr.mxu0 %v975
        %3363 = vmatpush1.msra.mxu0 %v974
        %3364 = vmatprep.subr.mxu0 0.0
        %3365 = vmatpush2.msra.mxu0 0.0
        %3366 = vmatprep.subr.mxu0 0.0
        %3367 = vmatpush2.msra.mxu0 0.0
        %3368 = vmatprep.subr.mxu0 0.0
        %3369 = vmatpush2.msra.mxu0 0.0
        %3370 = vmatprep.subr.mxu0 0.0
        %3371 = vmatpush2.msra.mxu0 0.0
        %3372 = vmatprep.subr.mxu0 0.0
        %3373 = vmatpush2.msra.mxu0 0.0
        %3374 = vmatprep.subr.mxu0 0.0
        %3375 = vmatpush2.msra.mxu0 0.0
        %3376 = vmatprep.subr.mxu0 0.0
        %3377 = vmatpush2.msra.mxu0 0.0
        %3378 = vmatprep.subr.mxu0 0.0
        %3379 = vmatpush2.msra.mxu0 0.0
        %3380 = vmatprep.subr.mxu0 0.0
        %3381 = vmatpush2.msra.mxu0 0.0
        %3382 = vmatprep.subr.mxu0 0.0
        %3383 = vmatpush2.msra.mxu0 0.0
        %3384 = vmatprep.subr.mxu0 0.0
        %3385 = vmatpush2.msra.mxu0 0.0
        %3386 = vmatprep.subr.mxu0 0.0
        %3387 = vmatpush2.msra.mxu0 0.0
        %3388 = vmatprep.subr.mxu0 0.0
        %3389 = vmatpush2.msra.mxu0 0.0
        %3390 = vmatprep.subr.mxu0 0.0
        %3391 = vmatpush2.msra.mxu0 0.0
        %3392 = vmatprep.subr.mxu0 0.0
        %3393 = vmatpush2.msra.mxu0 0.0
        %3394 = vmatprep.subr.mxu0 0.0
        %3395 = vmatpush2.msra.mxu0 0.0
        %3396 = vmatprep.mubr.f32.mxu0 0.0
        %3397 = vmatmul.mubr.f32.gmra.mxu0 %v2673
        %v3398 = vpop.f32.mrf.mxu0
        %v3399 = vadd.f32 0.0, %v3398
        %v3400 = vpop.f32.mrf.mxu0
        %v3401 = vadd.f32 0.0, %v3400
        %3402 = vdwg.mxu0
        %v3403 = vadd.f32 %v3257, %v3328
        %v3404 = vadd.f32 %v3258, %v3330
        %v3405 = vadd.f32 %v3259, %v3399
        %v3406 = vadd.f32 %v3260, %v3401
        %v3407 = vld [vmem:[%s438 + $0x16] sm:$0x3f]
        %v3409 = vsel %vm475, %v3407, 0
        %3411 = vmatprep.subr.mxu0 0.0
        %3412 = vmatpush1.msra.mxu0 0.0
        %3413 = vmatprep.subr.mxu0 0.0
        %3414 = vmatpush1.msra.mxu0 0.0
        %3415 = vmatprep.subr.mxu0 0.0
        %3416 = vmatpush1.msra.mxu0 0.0
        %3417 = vmatprep.subr.mxu0 0.0
        %3418 = vmatpush1.msra.mxu0 0.0
        %3419 = vmatprep.subr.mxu0 0.0
        %3420 = vmatpush1.msra.mxu0 0.0
        %3421 = vmatprep.subr.mxu0 0.0
        %3422 = vmatpush1.msra.mxu0 0.0
        %3423 = vmatprep.subr.mxu0 0.0
        %3424 = vmatpush1.msra.mxu0 0.0
        %3425 = vmatprep.subr.mxu0 0.0
        %3426 = vmatpush1.msra.mxu0 0.0
        %3427 = vmatprep.subr.mxu0 0.0
        %3428 = vmatpush1.msra.mxu0 0.0
        %3429 = vmatprep.subr.mxu0 0.0
        %3430 = vmatpush1.msra.mxu0 0.0
        %3431 = vmatprep.subr.mxu0 0.0
        %3432 = vmatpush1.msra.mxu0 0.0
        %3433 = vmatprep.subr.mxu0 0.0
        %3434 = vmatpush1.msra.mxu0 0.0
        %3435 = vmatprep.subr.mxu0 %v1174
        %3436 = vmatpush1.msra.mxu0 %v1171
        %3437 = vmatprep.subr.mxu0 %v1160
        %3438 = vmatpush1.msra.mxu0 %v1159
        %3439 = vmatprep.subr.mxu0 %v1156
        %3440 = vmatpush1.msra.mxu0 %v1155
        %3441 = vmatprep.subr.mxu0 %v1152
        %3442 = vmatpush1.msra.mxu0 %v1151
        %3443 = vmatprep.subr.mxu0 0.0
        %3444 = vmatpush2.msra.mxu0 0.0
        %3445 = vmatprep.subr.mxu0 0.0
        %3446 = vmatpush2.msra.mxu0 0.0
        %3447 = vmatprep.subr.mxu0 0.0
        %3448 = vmatpush2.msra.mxu0 0.0
        %3449 = vmatprep.subr.mxu0 0.0
        %3450 = vmatpush2.msra.mxu0 0.0
        %3451 = vmatprep.subr.mxu0 0.0
        %3452 = vmatpush2.msra.mxu0 0.0
        %3453 = vmatprep.subr.mxu0 0.0
        %3454 = vmatpush2.msra.mxu0 0.0
        %3455 = vmatprep.subr.mxu0 0.0
        %3456 = vmatpush2.msra.mxu0 0.0
        %3457 = vmatprep.subr.mxu0 0.0
        %3458 = vmatpush2.msra.mxu0 0.0
        %3459 = vmatprep.subr.mxu0 0.0
        %3460 = vmatpush2.msra.mxu0 0.0
        %3461 = vmatprep.subr.mxu0 0.0
        %3462 = vmatpush2.msra.mxu0 0.0
        %3463 = vmatprep.subr.mxu0 0.0
        %3464 = vmatpush2.msra.mxu0 0.0
        %3465 = vmatprep.subr.mxu0 0.0
        %3466 = vmatpush2.msra.mxu0 0.0
        %3467 = vmatprep.subr.mxu0 0.0
        %3468 = vmatpush2.msra.mxu0 0.0
        %3469 = vmatprep.subr.mxu0 0.0
        %3470 = vmatpush2.msra.mxu0 0.0
        %3471 = vmatprep.subr.mxu0 0.0
        %3472 = vmatpush2.msra.mxu0 0.0
        %3473 = vmatprep.subr.mxu0 0.0
        %3474 = vmatpush2.msra.mxu0 0.0
        %3475 = vmatprep.mubr.f32.mxu0 0.0
        %3476 = vmatmul.mubr.f32.gmra.mxu0 %v3409
        %v3477 = vpop.f32.mrf.mxu0
        %v3478 = vadd.f32 0.0, %v3477
        %v3479 = vpop.f32.mrf.mxu0
        %v3480 = vadd.f32 0.0, %v3479
        %3481 = vdwg.mxu0
        %3482 = vmatprep.subr.mxu0 0.0
        %3483 = vmatpush1.msra.mxu0 0.0
        %3484 = vmatprep.subr.mxu0 0.0
        %3485 = vmatpush1.msra.mxu0 0.0
        %3486 = vmatprep.subr.mxu0 0.0
        %3487 = vmatpush1.msra.mxu0 0.0
        %3488 = vmatprep.subr.mxu0 0.0
        %3489 = vmatpush1.msra.mxu0 0.0
        %3490 = vmatprep.subr.mxu0 0.0
        %3491 = vmatpush1.msra.mxu0 0.0
        %3492 = vmatprep.subr.mxu0 0.0
        %3493 = vmatpush1.msra.mxu0 0.0
        %3494 = vmatprep.subr.mxu0 0.0
        %3495 = vmatpush1.msra.mxu0 0.0
        %3496 = vmatprep.subr.mxu0 0.0
        %3497 = vmatpush1.msra.mxu0 0.0
        %3498 = vmatprep.subr.mxu0 0.0
        %3499 = vmatpush1.msra.mxu0 0.0
        %3500 = vmatprep.subr.mxu0 0.0
        %3501 = vmatpush1.msra.mxu0 0.0
        %3502 = vmatprep.subr.mxu0 0.0
        %3503 = vmatpush1.msra.mxu0 0.0
        %3504 = vmatprep.subr.mxu0 0.0
        %3505 = vmatpush1.msra.mxu0 0.0
        %3506 = vmatprep.subr.mxu0 %v1180
        %3507 = vmatpush1.msra.mxu0 %v1177
        %3508 = vmatprep.subr.mxu0 %v1162
        %3509 = vmatpush1.msra.mxu0 %v1161
        %3510 = vmatprep.subr.mxu0 %v1158
        %3511 = vmatpush1.msra.mxu0 %v1157
        %3512 = vmatprep.subr.mxu0 %v1154
        %3513 = vmatpush1.msra.mxu0 %v1153
        %3514 = vmatprep.subr.mxu0 0.0
        %3515 = vmatpush2.msra.mxu0 0.0
        %3516 = vmatprep.subr.mxu0 0.0
        %3517 = vmatpush2.msra.mxu0 0.0
        %3518 = vmatprep.subr.mxu0 0.0
        %3519 = vmatpush2.msra.mxu0 0.0
        %3520 = vmatprep.subr.mxu0 0.0
        %3521 = vmatpush2.msra.mxu0 0.0
        %3522 = vmatprep.subr.mxu0 0.0
        %3523 = vmatpush2.msra.mxu0 0.0
        %3524 = vmatprep.subr.mxu0 0.0
        %3525 = vmatpush2.msra.mxu0 0.0
        %3526 = vmatprep.subr.mxu0 0.0
        %3527 = vmatpush2.msra.mxu0 0.0
        %3528 = vmatprep.subr.mxu0 0.0
        %3529 = vmatpush2.msra.mxu0 0.0
        %3530 = vmatprep.subr.mxu0 0.0
        %3531 = vmatpush2.msra.mxu0 0.0
        %3532 = vmatprep.subr.mxu0 0.0
        %3533 = vmatpush2.msra.mxu0 0.0
        %3534 = vmatprep.subr.mxu0 0.0
        %3535 = vmatpush2.msra.mxu0 0.0
        %3536 = vmatprep.subr.mxu0 0.0
        %3537 = vmatpush2.msra.mxu0 0.0
        %3538 = vmatprep.subr.mxu0 0.0
        %3539 = vmatpush2.msra.mxu0 0.0
        %3540 = vmatprep.subr.mxu0 0.0
        %3541 = vmatpush2.msra.mxu0 0.0
        %3542 = vmatprep.subr.mxu0 0.0
        %3543 = vmatpush2.msra.mxu0 0.0
        %3544 = vmatprep.subr.mxu0 0.0
        %3545 = vmatpush2.msra.mxu0 0.0
        %3546 = vmatprep.mubr.f32.mxu0 0.0
        %3547 = vmatmul.mubr.f32.gmra.mxu0 %v3409
        %v3548 = vpop.f32.mrf.mxu0
        %v3549 = vadd.f32 0.0, %v3548
        %v3550 = vpop.f32.mrf.mxu0
        %v3551 = vadd.f32 0.0, %v3550
        %3552 = vdwg.mxu0
        %v3553 = vadd.f32 %v3403, %v3478
        %v3554 = vadd.f32 %v3404, %v3480
        %v3555 = vadd.f32 %v3405, %v3549
        %v3556 = vadd.f32 %v3406, %v3551
        %v3557 = vadd.f32 %v3553, %v1332
        %v3558 = vadd.f32 %v3554, %v1336
        %v3559 = vadd.f32 %v3555, %v1340
        %v3560 = vadd.f32 %v3556, %v1344
        %v3561 = vmax.f32 %v3557, 0.0
        %v3562 = vmax.f32 %v3558, 0.0
        %v3563 = vmax.f32 %v3559, 0.0
        %v3564 = vmax.f32 %v3560, 0.0
        %v3565 = vmax.f32 %v3561, %v3563
        %v3566 = vmax.f32 %v3562, %v3564
        %v3567 = vmax.f32 %v1357, %v2093
        %v3568 = vmax.f32 %v1358, %v2094
        %v3569 = vmax.f32 %v2829, %v3565
        %v3570 = vmax.f32 %v2830, %v3566
        %v3571 = vld [vmem:[#allocation8] sm:$0xf]
        %v3572 = vld [vmem:[#allocation7] sm:$0xff]
        %v3573 = vld [vmem:[#allocation7 + $0x8] sm:$0xff]
        %v3574 = vld [vmem:[#allocation7 + $0x10] sm:$0xff]
        %v3575 = vld [vmem:[#allocation7 + $0x18] sm:$0xff]
        %v3576 = vld [vmem:[#allocation7 + $0x20] sm:$0xff]
        %v3577 = vld [vmem:[#allocation7 + $0x28] sm:$0xff]
        %v3578 = vld [vmem:[#allocation7 + $0x30] sm:$0xff]
        %v3579 = vld [vmem:[#allocation7 + $0x38] sm:$0xff]
        %v3580 = vld [vmem:[#allocation7 + $0x40] sm:$0xff]
        %v3581 = vld [vmem:[#allocation7 + $0x48] sm:$0xff]
        %v3582 = vld [vmem:[#allocation7 + $0x50] sm:$0xff]
        %v3583 = vld [vmem:[#allocation7 + $0x58] sm:$0xff]
        %v3584 = vld [vmem:[#allocation7 + $0x60] sm:$0xff]
        %v3585 = vld [vmem:[#allocation7 + $0x68] sm:$0xff]
        %v3586 = vld [vmem:[#allocation7 + $0x70] sm:$0xff]
        %v3587 = vld [vmem:[#allocation7 + $0x78] sm:$0xff]
        %v3588 = vld [vmem:[#allocation7 + $0x80] sm:$0xff]
        %v3589 = vld [vmem:[#allocation7 + $0x88] sm:$0xff]
        %v3590 = vld [vmem:[#allocation7 + $0x90] sm:$0xff]
        %v3591 = vld [vmem:[#allocation7 + $0x98] sm:$0xff]
        %v3592 = vld [vmem:[#allocation7 + $0xa0] sm:$0xff]
        %v3593 = vld [vmem:[#allocation7 + $0xa8] sm:$0xff]
        %v3594 = vld [vmem:[#allocation7 + $0xb0] sm:$0xff]
        %v3595 = vld [vmem:[#allocation7 + $0xb8] sm:$0xff]
        %v3596 = vld [vmem:[#allocation7 + $0xc0] sm:$0xff]
        %v3597 = vld [vmem:[#allocation7 + $0xc8] sm:$0xff]
        %v3598 = vld [vmem:[#allocation7 + $0xd0] sm:$0xff]
        %v3599 = vld [vmem:[#allocation7 + $0xd8] sm:$0xff]
        %v3600 = vld [vmem:[#allocation7 + $0xe0] sm:$0xff]
        %v3601 = vld [vmem:[#allocation7 + $0xe8] sm:$0xff]
        %v3602 = vld [vmem:[#allocation7 + $0xf0] sm:$0xff]
        %v3603 = vld [vmem:[#allocation7 + $0xf8] sm:$0xff]
        %v3604 = vld [vmem:[#allocation7 + $0x100] sm:$0xff]
        %v3605 = vld [vmem:[#allocation7 + $0x108] sm:$0xff]
        %v3606 = vld [vmem:[#allocation7 + $0x110] sm:$0xff]
        %v3607 = vld [vmem:[#allocation7 + $0x118] sm:$0xff]
        %v3608 = vld [vmem:[#allocation7 + $0x120] sm:$0xff]
        %v3609 = vld [vmem:[#allocation7 + $0x128] sm:$0xff]
        %v3610 = vld [vmem:[#allocation7 + $0x130] sm:$0xff]
        %v3611 = vld [vmem:[#allocation7 + $0x138] sm:$0xff]
        %v3612 = vld [vmem:[#allocation7 + $0x140] sm:$0xff]
        %v3613 = vld [vmem:[#allocation7 + $0x148] sm:$0xff]
        %v3614 = vld [vmem:[#allocation7 + $0x150] sm:$0xff]
        %v3615 = vld [vmem:[#allocation7 + $0x158] sm:$0xff]
        %v3616 = vld [vmem:[#allocation7 + $0x160] sm:$0xff]
        %v3617 = vld [vmem:[#allocation7 + $0x168] sm:$0xff]
        %v3618 = vld [vmem:[#allocation7 + $0x170] sm:$0xff]
        %v3619 = vld [vmem:[#allocation7 + $0x178] sm:$0xff]
        %v3620 = vld [vmem:[#allocation7 + $0x180] sm:$0xff]
        %v3621 = vld [vmem:[#allocation7 + $0x188] sm:$0xff]
        %v3622 = vld [vmem:[#allocation7 + $0x190] sm:$0xff]
        %v3623 = vld [vmem:[#allocation7 + $0x198] sm:$0xff]
        %v3624 = vld [vmem:[#allocation7 + $0x1a0] sm:$0xff]
        %v3625 = vld [vmem:[#allocation7 + $0x1a8] sm:$0xff]
        %v3626 = vld [vmem:[#allocation7 + $0x1b0] sm:$0xff]
        %v3627 = vld [vmem:[#allocation7 + $0x1b8] sm:$0xff]
        %v3628 = vld [vmem:[#allocation7 + $0x1c0] sm:$0xff]
        %v3629 = vld [vmem:[#allocation7 + $0x1c8] sm:$0xff]
        %v3630 = vld [vmem:[#allocation7 + $0x1d0] sm:$0xff]
        %v3631 = vld [vmem:[#allocation7 + $0x1d8] sm:$0xff]
        %v3632 = vld [vmem:[#allocation7 + $0x1e0] sm:$0xff]
        %v3633 = vld [vmem:[#allocation7 + $0x1e8] sm:$0xff]
        %v3634 = vld [vmem:[#allocation7 + $0x1f0] sm:$0xff]
        %v3635 = vld [vmem:[#allocation7 + $0x1f8] sm:$0xff]
        %v3636 = vld [vmem:[#allocation7 + $0x200] sm:$0xff]
        %v3637 = vld [vmem:[#allocation7 + $0x208] sm:$0xff]
        %v3638 = vld [vmem:[#allocation7 + $0x210] sm:$0xff]
        %v3639 = vld [vmem:[#allocation7 + $0x218] sm:$0xff]
        %v3640 = vld [vmem:[#allocation7 + $0x220] sm:$0xff]
        %v3641 = vld [vmem:[#allocation7 + $0x228] sm:$0xff]
        %v3642 = vld [vmem:[#allocation7 + $0x230] sm:$0xff]
        %v3643 = vld [vmem:[#allocation7 + $0x238] sm:$0xff]
        %v3644 = vld [vmem:[#allocation7 + $0x240] sm:$0xff]
        %v3645 = vld [vmem:[#allocation7 + $0x248] sm:$0xff]
        %v3646 = vld [vmem:[#allocation7 + $0x250] sm:$0xff]
        %v3647 = vld [vmem:[#allocation7 + $0x258] sm:$0xff]
        %v3648 = vld [vmem:[#allocation7 + $0x260] sm:$0xff]
        %v3649 = vld [vmem:[#allocation7 + $0x268] sm:$0xff]
        %v3650 = vld [vmem:[#allocation7 + $0x270] sm:$0xff]
        %v3651 = vld [vmem:[#allocation7 + $0x278] sm:$0xff]
        %v3652 = vld [vmem:[#allocation7 + $0x280] sm:$0xff]
        %v3653 = vld [vmem:[#allocation7 + $0x288] sm:$0xff]
        %v3654 = vld [vmem:[#allocation7 + $0x290] sm:$0xff]
        %v3655 = vld [vmem:[#allocation7 + $0x298] sm:$0xff]
        %v3656 = vld [vmem:[#allocation7 + $0x2a0] sm:$0xff]
        %v3657 = vld [vmem:[#allocation7 + $0x2a8] sm:$0xff]
        %v3658 = vld [vmem:[#allocation7 + $0x2b0] sm:$0xff]
        %v3659 = vld [vmem:[#allocation7 + $0x2b8] sm:$0xff]
        %v3660 = vld [vmem:[#allocation7 + $0x2c0] sm:$0xff]
        %v3661 = vld [vmem:[#allocation7 + $0x2c8] sm:$0xff]
        %v3662 = vld [vmem:[#allocation7 + $0x2d0] sm:$0xff]
        %v3663 = vld [vmem:[#allocation7 + $0x2d8] sm:$0xff]
        %v3664 = vld [vmem:[#allocation7 + $0x2e0] sm:$0xff]
        %v3665 = vld [vmem:[#allocation7 + $0x2e8] sm:$0xff]
        %v3666 = vld [vmem:[#allocation7 + $0x2f0] sm:$0xff]
        %v3667 = vld [vmem:[#allocation7 + $0x2f8] sm:$0xff]
        %v3668 = vld [vmem:[#allocation7 + $0x300] sm:$0xff]
        %v3669 = vld [vmem:[#allocation7 + $0x308] sm:$0xff]
        %v3670 = vld [vmem:[#allocation7 + $0x310] sm:$0xff]
        %v3671 = vld [vmem:[#allocation7 + $0x318] sm:$0xff]
        %v3672 = vld [vmem:[#allocation7 + $0x320] sm:$0xff]
        %v3673 = vld [vmem:[#allocation7 + $0x328] sm:$0xff]
        %v3674 = vld [vmem:[#allocation7 + $0x330] sm:$0xff]
        %v3675 = vld [vmem:[#allocation7 + $0x338] sm:$0xff]
        %v3676 = vld [vmem:[#allocation7 + $0x340] sm:$0xff]
        %v3677 = vld [vmem:[#allocation7 + $0x348] sm:$0xff]
        %v3678 = vld [vmem:[#allocation7 + $0x350] sm:$0xff]
        %v3679 = vld [vmem:[#allocation7 + $0x358] sm:$0xff]
        %v3680 = vld [vmem:[#allocation7 + $0x360] sm:$0xff]
        %v3681 = vld [vmem:[#allocation7 + $0x368] sm:$0xff]
        %v3682 = vld [vmem:[#allocation7 + $0x370] sm:$0xff]
        %v3683 = vld [vmem:[#allocation7 + $0x378] sm:$0xff]
        %v3684 = vld [vmem:[#allocation7 + $0x380] sm:$0xff]
        %v3685 = vld [vmem:[#allocation7 + $0x388] sm:$0xff]
        %v3686 = vld [vmem:[#allocation7 + $0x390] sm:$0xff]
        %v3687 = vld [vmem:[#allocation7 + $0x398] sm:$0xff]
        %v3688 = vld [vmem:[#allocation7 + $0x3a0] sm:$0xff]
        %v3689 = vld [vmem:[#allocation7 + $0x3a8] sm:$0xff]
        %v3690 = vld [vmem:[#allocation7 + $0x3b0] sm:$0xff]
        %v3691 = vld [vmem:[#allocation7 + $0x3b8] sm:$0xff]
        %v3692 = vld [vmem:[#allocation7 + $0x3c0] sm:$0xff]
        %v3693 = vld [vmem:[#allocation7 + $0x3c8] sm:$0xff]
        %v3694 = vld [vmem:[#allocation7 + $0x3d0] sm:$0xff]
        %v3695 = vld [vmem:[#allocation7 + $0x3d8] sm:$0xff]
        %v3696 = vld [vmem:[#allocation7 + $0x3e0] sm:$0xff]
        %v3697 = vld [vmem:[#allocation7 + $0x3e8] sm:$0xff]
        %v3698 = vld [vmem:[#allocation7 + $0x3f0] sm:$0xff]
        %v3699 = vld [vmem:[#allocation7 + $0x3f8] sm:$0xff]
        %s3700 = scalar_lea.vmem [#allocation7], 1024
        %v3701 = vld [vmem:[%s3700] sm:$0xff]
        %v3702 = vld [vmem:[%s3700 + $0x8] sm:$0xff]
        %v3703 = vld [vmem:[%s3700 + $0x10] sm:$0xff]
        %v3704 = vld [vmem:[%s3700 + $0x18] sm:$0xff]
        %v3705 = vld [vmem:[%s3700 + $0x20] sm:$0xff]
        %v3706 = vld [vmem:[%s3700 + $0x28] sm:$0xff]
        %v3707 = vld [vmem:[%s3700 + $0x30] sm:$0xff]
        %v3708 = vld [vmem:[%s3700 + $0x38] sm:$0xff]
        %v3709 = vld [vmem:[%s3700 + $0x40] sm:$0xff]
        %v3710 = vld [vmem:[%s3700 + $0x48] sm:$0xff]
        %v3711 = vld [vmem:[%s3700 + $0x50] sm:$0xff]
        %v3712 = vld [vmem:[%s3700 + $0x58] sm:$0xff]
        %v3713 = vld [vmem:[%s3700 + $0x60] sm:$0xff]
        %v3714 = vld [vmem:[%s3700 + $0x68] sm:$0xff]
        %v3715 = vld [vmem:[%s3700 + $0x70] sm:$0xff]
        %v3716 = vld [vmem:[%s3700 + $0x78] sm:$0xff]
        %v3717 = vld [vmem:[%s3700 + $0x80] sm:$0xff]
        %v3718 = vld [vmem:[%s3700 + $0x88] sm:$0xff]
        %v3719 = vld [vmem:[%s3700 + $0x90] sm:$0xff]
        %v3720 = vld [vmem:[%s3700 + $0x98] sm:$0xff]
        %v3721 = vld [vmem:[%s3700 + $0xa0] sm:$0xff]
        %v3722 = vld [vmem:[%s3700 + $0xa8] sm:$0xff]
        %v3723 = vld [vmem:[%s3700 + $0xb0] sm:$0xff]
        %v3724 = vld [vmem:[%s3700 + $0xb8] sm:$0xff]
        %v3725 = vld [vmem:[%s3700 + $0xc0] sm:$0xff]
        %v3726 = vld [vmem:[%s3700 + $0xc8] sm:$0xff]
        %v3727 = vld [vmem:[%s3700 + $0xd0] sm:$0xff]
        %v3728 = vld [vmem:[%s3700 + $0xd8] sm:$0xff]
        %v3729 = vld [vmem:[%s3700 + $0xe0] sm:$0xff]
        %v3730 = vld [vmem:[%s3700 + $0xe8] sm:$0xff]
        %v3731 = vld [vmem:[%s3700 + $0xf0] sm:$0xff]
        %v3732 = vld [vmem:[%s3700 + $0xf8] sm:$0xff]
        %v3733 = vld [vmem:[%s3700 + $0x100] sm:$0xff]
        %v3734 = vld [vmem:[%s3700 + $0x108] sm:$0xff]
        %v3735 = vld [vmem:[%s3700 + $0x110] sm:$0xff]
        %v3736 = vld [vmem:[%s3700 + $0x118] sm:$0xff]
        %v3737 = vld [vmem:[%s3700 + $0x120] sm:$0xff]
        %v3738 = vld [vmem:[%s3700 + $0x128] sm:$0xff]
        %v3739 = vld [vmem:[%s3700 + $0x130] sm:$0xff]
        %v3740 = vld [vmem:[%s3700 + $0x138] sm:$0xff]
        %v3741 = vld [vmem:[%s3700 + $0x140] sm:$0xff]
        %v3742 = vld [vmem:[%s3700 + $0x148] sm:$0xff]
        %v3743 = vld [vmem:[%s3700 + $0x150] sm:$0xff]
        %v3744 = vld [vmem:[%s3700 + $0x158] sm:$0xff]
        %v3745 = vld [vmem:[%s3700 + $0x160] sm:$0xff]
        %v3746 = vld [vmem:[%s3700 + $0x168] sm:$0xff]
        %v3747 = vld [vmem:[%s3700 + $0x170] sm:$0xff]
        %v3748 = vld [vmem:[%s3700 + $0x178] sm:$0xff]
        %v3749 = vld [vmem:[%s3700 + $0x180] sm:$0xff]
        %v3750 = vld [vmem:[%s3700 + $0x188] sm:$0xff]
        %v3751 = vld [vmem:[%s3700 + $0x190] sm:$0xff]
        %v3752 = vld [vmem:[%s3700 + $0x198] sm:$0xff]
        %v3753 = vld [vmem:[%s3700 + $0x1a0] sm:$0xff]
        %v3754 = vld [vmem:[%s3700 + $0x1a8] sm:$0xff]
        %v3755 = vld [vmem:[%s3700 + $0x1b0] sm:$0xff]
        %v3756 = vld [vmem:[%s3700 + $0x1b8] sm:$0xff]
        %v3757 = vld [vmem:[%s3700 + $0x1c0] sm:$0xff]
        %v3758 = vld [vmem:[%s3700 + $0x1c8] sm:$0xff]
        %v3759 = vld [vmem:[%s3700 + $0x1d0] sm:$0xff]
        %v3760 = vld [vmem:[%s3700 + $0x1d8] sm:$0xff]
        %v3761 = vld [vmem:[%s3700 + $0x1e0] sm:$0xff]
        %v3762 = vld [vmem:[%s3700 + $0x1e8] sm:$0xff]
        %v3763 = vld [vmem:[%s3700 + $0x1f0] sm:$0xff]
        %v3764 = vld [vmem:[%s3700 + $0x1f8] sm:$0xff]
        %v3765 = vld [vmem:[%s3700 + $0x200] sm:$0xff]
        %v3766 = vld [vmem:[%s3700 + $0x208] sm:$0xff]
        %v3767 = vld [vmem:[%s3700 + $0x210] sm:$0xff]
        %v3768 = vld [vmem:[%s3700 + $0x218] sm:$0xff]
        %v3769 = vld [vmem:[%s3700 + $0x220] sm:$0xff]
        %v3770 = vld [vmem:[%s3700 + $0x228] sm:$0xff]
        %v3771 = vld [vmem:[%s3700 + $0x230] sm:$0xff]
        %v3772 = vld [vmem:[%s3700 + $0x238] sm:$0xff]
        %v3773 = vld [vmem:[%s3700 + $0x240] sm:$0xff]
        %v3774 = vld [vmem:[%s3700 + $0x248] sm:$0xff]
        %v3775 = vld [vmem:[%s3700 + $0x250] sm:$0xff]
        %v3776 = vld [vmem:[%s3700 + $0x258] sm:$0xff]
        %v3777 = vld [vmem:[%s3700 + $0x260] sm:$0xff]
        %v3778 = vld [vmem:[%s3700 + $0x268] sm:$0xff]
        %v3779 = vld [vmem:[%s3700 + $0x270] sm:$0xff]
        %v3780 = vld [vmem:[%s3700 + $0x278] sm:$0xff]
        %v3781 = vld [vmem:[%s3700 + $0x280] sm:$0xff]
        %v3782 = vld [vmem:[%s3700 + $0x288] sm:$0xff]
        %v3783 = vld [vmem:[%s3700 + $0x290] sm:$0xff]
        %v3784 = vld [vmem:[%s3700 + $0x298] sm:$0xff]
        %v3785 = vld [vmem:[%s3700 + $0x2a0] sm:$0xff]
        %v3786 = vld [vmem:[%s3700 + $0x2a8] sm:$0xff]
        %v3787 = vld [vmem:[%s3700 + $0x2b0] sm:$0xff]
        %v3788 = vld [vmem:[%s3700 + $0x2b8] sm:$0xff]
        %v3789 = vld [vmem:[%s3700 + $0x2c0] sm:$0xff]
        %v3790 = vld [vmem:[%s3700 + $0x2c8] sm:$0xff]
        %v3791 = vld [vmem:[%s3700 + $0x2d0] sm:$0xff]
        %v3792 = vld [vmem:[%s3700 + $0x2d8] sm:$0xff]
        %v3793 = vld [vmem:[%s3700 + $0x2e0] sm:$0xff]
        %v3794 = vld [vmem:[%s3700 + $0x2e8] sm:$0xff]
        %v3795 = vld [vmem:[%s3700 + $0x2f0] sm:$0xff]
        %v3796 = vld [vmem:[%s3700 + $0x2f8] sm:$0xff]
        %v3797 = vld [vmem:[%s3700 + $0x300] sm:$0xff]
        %v3798 = vld [vmem:[%s3700 + $0x308] sm:$0xff]
        %v3799 = vld [vmem:[%s3700 + $0x310] sm:$0xff]
        %v3800 = vld [vmem:[%s3700 + $0x318] sm:$0xff]
        %v3801 = vld [vmem:[%s3700 + $0x320] sm:$0xff]
        %v3802 = vld [vmem:[%s3700 + $0x328] sm:$0xff]
        %v3803 = vld [vmem:[%s3700 + $0x330] sm:$0xff]
        %v3804 = vld [vmem:[%s3700 + $0x338] sm:$0xff]
        %v3805 = vld [vmem:[%s3700 + $0x340] sm:$0xff]
        %v3806 = vld [vmem:[%s3700 + $0x348] sm:$0xff]
        %v3807 = vld [vmem:[%s3700 + $0x350] sm:$0xff]
        %v3808 = vld [vmem:[%s3700 + $0x358] sm:$0xff]
        %v3809 = vld [vmem:[%s3700 + $0x360] sm:$0xff]
        %v3810 = vld [vmem:[%s3700 + $0x368] sm:$0xff]
        %v3811 = vld [vmem:[%s3700 + $0x370] sm:$0xff]
        %v3812 = vld [vmem:[%s3700 + $0x378] sm:$0xff]
        %v3813 = vld [vmem:[%s3700 + $0x380] sm:$0xff]
        %v3814 = vld [vmem:[%s3700 + $0x388] sm:$0xff]
        %v3815 = vld [vmem:[%s3700 + $0x390] sm:$0xff]
        %v3816 = vld [vmem:[%s3700 + $0x398] sm:$0xff]
        %v3817 = vld [vmem:[%s3700 + $0x3a0] sm:$0xff]
        %v3818 = vld [vmem:[%s3700 + $0x3a8] sm:$0xff]
        %v3819 = vld [vmem:[%s3700 + $0x3b0] sm:$0xff]
        %v3820 = vld [vmem:[%s3700 + $0x3b8] sm:$0xff]
        %v3821 = vld [vmem:[%s3700 + $0x3c0] sm:$0xff]
        %v3822 = vld [vmem:[%s3700 + $0x3c8] sm:$0xff]
        %v3823 = vld [vmem:[%s3700 + $0x3d0] sm:$0xff]
        %v3824 = vld [vmem:[%s3700 + $0x3d8] sm:$0xff]
        %v3825 = vld [vmem:[%s3700 + $0x3e0] sm:$0xff]
        %v3826 = vld [vmem:[%s3700 + $0x3e8] sm:$0xff]
        %v3827 = vld [vmem:[%s3700 + $0x3f0] sm:$0xff]
        %v3828 = vld [vmem:[%s3700 + $0x3f8] sm:$0xff]
        %3829 = vmatprep.subr.mxu0 %v3762
        %3830 = vmatpush1.msra.mxu0 %v3761
        %3831 = vmatprep.subr.mxu0 %v3758
        %3832 = vmatpush1.msra.mxu0 %v3757
        %3833 = vmatprep.subr.mxu0 %v3754
        %3834 = vmatpush1.msra.mxu0 %v3753
        %3835 = vmatprep.subr.mxu0 %v3750
        %3836 = vmatpush1.msra.mxu0 %v3749
        %3837 = vmatprep.subr.mxu0 %v3746
        %3838 = vmatpush1.msra.mxu0 %v3745
        %3839 = vmatprep.subr.mxu0 %v3742
        %3840 = vmatpush1.msra.mxu0 %v3741
        %3841 = vmatprep.subr.mxu0 %v3738
        %3842 = vmatpush1.msra.mxu0 %v3737
        %3843 = vmatprep.subr.mxu0 %v3734
        %3844 = vmatpush1.msra.mxu0 %v3733
        %3845 = vmatprep.subr.mxu0 %v3730
        %3846 = vmatpush1.msra.mxu0 %v3729
        %3847 = vmatprep.subr.mxu0 %v3726
        %3848 = vmatpush1.msra.mxu0 %v3725
        %3849 = vmatprep.subr.mxu0 %v3722
        %3850 = vmatpush1.msra.mxu0 %v3721
        %3851 = vmatprep.subr.mxu0 %v3718
        %3852 = vmatpush1.msra.mxu0 %v3717
        %3853 = vmatprep.subr.mxu0 %v3714
        %3854 = vmatpush1.msra.mxu0 %v3713
        %3855 = vmatprep.subr.mxu0 %v3710
        %3856 = vmatpush1.msra.mxu0 %v3709
        %3857 = vmatprep.subr.mxu0 %v3706
        %3858 = vmatpush1.msra.mxu0 %v3705
        %3859 = vmatprep.subr.mxu0 %v3702
        %3860 = vmatpush1.msra.mxu0 %v3701
        %3861 = vmatprep.subr.mxu0 %v3826
        %3862 = vmatpush2.msra.mxu0 %v3825
        %3863 = vmatprep.subr.mxu0 %v3822
        %3864 = vmatpush2.msra.mxu0 %v3821
        %3865 = vmatprep.subr.mxu0 %v3818
        %3866 = vmatpush2.msra.mxu0 %v3817
        %3867 = vmatprep.subr.mxu0 %v3814
        %3868 = vmatpush2.msra.mxu0 %v3813
        %3869 = vmatprep.subr.mxu0 %v3810
        %3870 = vmatpush2.msra.mxu0 %v3809
        %3871 = vmatprep.subr.mxu0 %v3806
        %3872 = vmatpush2.msra.mxu0 %v3805
        %3873 = vmatprep.subr.mxu0 %v3802
        %3874 = vmatpush2.msra.mxu0 %v3801
        %3875 = vmatprep.subr.mxu0 %v3798
        %3876 = vmatpush2.msra.mxu0 %v3797
        %3877 = vmatprep.subr.mxu0 %v3794
        %3878 = vmatpush2.msra.mxu0 %v3793
        %3879 = vmatprep.subr.mxu0 %v3790
        %3880 = vmatpush2.msra.mxu0 %v3789
        %3881 = vmatprep.subr.mxu0 %v3786
        %3882 = vmatpush2.msra.mxu0 %v3785
        %3883 = vmatprep.subr.mxu0 %v3782
        %3884 = vmatpush2.msra.mxu0 %v3781
        %3885 = vmatprep.subr.mxu0 %v3778
        %3886 = vmatpush2.msra.mxu0 %v3777
        %3887 = vmatprep.subr.mxu0 %v3774
        %3888 = vmatpush2.msra.mxu0 %v3773
        %3889 = vmatprep.subr.mxu0 %v3770
        %3890 = vmatpush2.msra.mxu0 %v3769
        %3891 = vmatprep.subr.mxu0 %v3766
        %3892 = vmatpush2.msra.mxu0 %v3765
        %3893 = vmatprep.mubr.f32.mxu0 %v3570
        %3894 = vmatmul.mubr.f32.gmra.mxu0 %v3569
        %v3895 = vpop.f32.mrf.mxu0
        %v3896 = vadd.f32 0.0, %v3895
        %v3897 = vpop.f32.mrf.mxu0
        %v3898 = vadd.f32 0.0, %v3897
        %3899 = vdwg.mxu0
        %3900 = vmatprep.subr.mxu0 %v3764
        %3901 = vmatpush1.msra.mxu0 %v3763
        %3902 = vmatprep.subr.mxu0 %v3760
        %3903 = vmatpush1.msra.mxu0 %v3759
        %3904 = vmatprep.subr.mxu0 %v3756
        %3905 = vmatpush1.msra.mxu0 %v3755
        %3906 = vmatprep.subr.mxu0 %v3752
        %3907 = vmatpush1.msra.mxu0 %v3751
        %3908 = vmatprep.subr.mxu0 %v3748
        %3909 = vmatpush1.msra.mxu0 %v3747
        %3910 = vmatprep.subr.mxu0 %v3744
        %3911 = vmatpush1.msra.mxu0 %v3743
        %3912 = vmatprep.subr.mxu0 %v3740
        %3913 = vmatpush1.msra.mxu0 %v3739
        %3914 = vmatprep.subr.mxu0 %v3736
        %3915 = vmatpush1.msra.mxu0 %v3735
        %3916 = vmatprep.subr.mxu0 %v3732
        %3917 = vmatpush1.msra.mxu0 %v3731
        %3918 = vmatprep.subr.mxu0 %v3728
        %3919 = vmatpush1.msra.mxu0 %v3727
        %3920 = vmatprep.subr.mxu0 %v3724
        %3921 = vmatpush1.msra.mxu0 %v3723
        %3922 = vmatprep.subr.mxu0 %v3720
        %3923 = vmatpush1.msra.mxu0 %v3719
        %3924 = vmatprep.subr.mxu0 %v3716
        %3925 = vmatpush1.msra.mxu0 %v3715
        %3926 = vmatprep.subr.mxu0 %v3712
        %3927 = vmatpush1.msra.mxu0 %v3711
        %3928 = vmatprep.subr.mxu0 %v3708
        %3929 = vmatpush1.msra.mxu0 %v3707
        %3930 = vmatprep.subr.mxu0 %v3704
        %3931 = vmatpush1.msra.mxu0 %v3703
        %3932 = vmatprep.subr.mxu0 %v3828
        %3933 = vmatpush2.msra.mxu0 %v3827
        %3934 = vmatprep.subr.mxu0 %v3824
        %3935 = vmatpush2.msra.mxu0 %v3823
        %3936 = vmatprep.subr.mxu0 %v3820
        %3937 = vmatpush2.msra.mxu0 %v3819
        %3938 = vmatprep.subr.mxu0 %v3816
        %3939 = vmatpush2.msra.mxu0 %v3815
        %3940 = vmatprep.subr.mxu0 %v3812
        %3941 = vmatpush2.msra.mxu0 %v3811
        %3942 = vmatprep.subr.mxu0 %v3808
        %3943 = vmatpush2.msra.mxu0 %v3807
        %3944 = vmatprep.subr.mxu0 %v3804
        %3945 = vmatpush2.msra.mxu0 %v3803
        %3946 = vmatprep.subr.mxu0 %v3800
        %3947 = vmatpush2.msra.mxu0 %v3799
        %3948 = vmatprep.subr.mxu0 %v3796
        %3949 = vmatpush2.msra.mxu0 %v3795
        %3950 = vmatprep.subr.mxu0 %v3792
        %3951 = vmatpush2.msra.mxu0 %v3791
        %3952 = vmatprep.subr.mxu0 %v3788
        %3953 = vmatpush2.msra.mxu0 %v3787
        %3954 = vmatprep.subr.mxu0 %v3784
        %3955 = vmatpush2.msra.mxu0 %v3783
        %3956 = vmatprep.subr.mxu0 %v3780
        %3957 = vmatpush2.msra.mxu0 %v3779
        %3958 = vmatprep.subr.mxu0 %v3776
        %3959 = vmatpush2.msra.mxu0 %v3775
        %3960 = vmatprep.subr.mxu0 %v3772
        %3961 = vmatpush2.msra.mxu0 %v3771
        %3962 = vmatprep.subr.mxu0 %v3768
        %3963 = vmatpush2.msra.mxu0 %v3767
        %3964 = vmatprep.mubr.f32.mxu0 %v3570
        %3965 = vmatmul.mubr.f32.gmra.mxu0 %v3569
        %v3966 = vpop.f32.mrf.mxu0
        %v3967 = vadd.f32 0.0, %v3966
        %v3968 = vpop.f32.mrf.mxu0
        %v3969 = vadd.f32 0.0, %v3968
        %3970 = vdwg.mxu0
        %3971 = vmatprep.subr.mxu0 %v3633
        %3972 = vmatpush1.msra.mxu0 %v3632
        %3973 = vmatprep.subr.mxu0 %v3629
        %3974 = vmatpush1.msra.mxu0 %v3628
        %3975 = vmatprep.subr.mxu0 %v3625
        %3976 = vmatpush1.msra.mxu0 %v3624
        %3977 = vmatprep.subr.mxu0 %v3621
        %3978 = vmatpush1.msra.mxu0 %v3620
        %3979 = vmatprep.subr.mxu0 %v3617
        %3980 = vmatpush1.msra.mxu0 %v3616
        %3981 = vmatprep.subr.mxu0 %v3613
        %3982 = vmatpush1.msra.mxu0 %v3612
        %3983 = vmatprep.subr.mxu0 %v3609
        %3984 = vmatpush1.msra.mxu0 %v3608
        %3985 = vmatprep.subr.mxu0 %v3605
        %3986 = vmatpush1.msra.mxu0 %v3604
        %3987 = vmatprep.subr.mxu0 %v3601
        %3988 = vmatpush1.msra.mxu0 %v3600
        %3989 = vmatprep.subr.mxu0 %v3597
        %3990 = vmatpush1.msra.mxu0 %v3596
        %3991 = vmatprep.subr.mxu0 %v3593
        %3992 = vmatpush1.msra.mxu0 %v3592
        %3993 = vmatprep.subr.mxu0 %v3589
        %3994 = vmatpush1.msra.mxu0 %v3588
        %3995 = vmatprep.subr.mxu0 %v3585
        %3996 = vmatpush1.msra.mxu0 %v3584
        %3997 = vmatprep.subr.mxu0 %v3581
        %3998 = vmatpush1.msra.mxu0 %v3580
        %3999 = vmatprep.subr.mxu0 %v3577
        %4000 = vmatpush1.msra.mxu0 %v3576
        %4001 = vmatprep.subr.mxu0 %v3573
        %4002 = vmatpush1.msra.mxu0 %v3572
        %4003 = vmatprep.subr.mxu0 %v3697
        %4004 = vmatpush2.msra.mxu0 %v3696
        %4005 = vmatprep.subr.mxu0 %v3693
        %4006 = vmatpush2.msra.mxu0 %v3692
        %4007 = vmatprep.subr.mxu0 %v3689
        %4008 = vmatpush2.msra.mxu0 %v3688
        %4009 = vmatprep.subr.mxu0 %v3685
        %4010 = vmatpush2.msra.mxu0 %v3684
        %4011 = vmatprep.subr.mxu0 %v3681
        %4012 = vmatpush2.msra.mxu0 %v3680
        %4013 = vmatprep.subr.mxu0 %v3677
        %4014 = vmatpush2.msra.mxu0 %v3676
        %4015 = vmatprep.subr.mxu0 %v3673
        %4016 = vmatpush2.msra.mxu0 %v3672
        %4017 = vmatprep.subr.mxu0 %v3669
        %4018 = vmatpush2.msra.mxu0 %v3668
        %4019 = vmatprep.subr.mxu0 %v3665
        %4020 = vmatpush2.msra.mxu0 %v3664
        %4021 = vmatprep.subr.mxu0 %v3661
        %4022 = vmatpush2.msra.mxu0 %v3660
        %4023 = vmatprep.subr.mxu0 %v3657
        %4024 = vmatpush2.msra.mxu0 %v3656
        %4025 = vmatprep.subr.mxu0 %v3653
        %4026 = vmatpush2.msra.mxu0 %v3652
        %4027 = vmatprep.subr.mxu0 %v3649
        %4028 = vmatpush2.msra.mxu0 %v3648
        %4029 = vmatprep.subr.mxu0 %v3645
        %4030 = vmatpush2.msra.mxu0 %v3644
        %4031 = vmatprep.subr.mxu0 %v3641
        %4032 = vmatpush2.msra.mxu0 %v3640
        %4033 = vmatprep.subr.mxu0 %v3637
        %4034 = vmatpush2.msra.mxu0 %v3636
        %4035 = vmatprep.mubr.f32.mxu0 %v3568
        %4036 = vmatmul.mubr.f32.gmra.mxu0 %v3567
        %v4037 = vpop.f32.mrf.mxu0
        %v4038 = vadd.f32 %v3896, %v4037
        %v4039 = vpop.f32.mrf.mxu0
        %v4040 = vadd.f32 %v3898, %v4039
        %4041 = vdwg.mxu0
        %4042 = vmatprep.subr.mxu0 %v3635
        %4043 = vmatpush1.msra.mxu0 %v3634
        %4044 = vmatprep.subr.mxu0 %v3631
        %4045 = vmatpush1.msra.mxu0 %v3630
        %4046 = vmatprep.subr.mxu0 %v3627
        %4047 = vmatpush1.msra.mxu0 %v3626
        %4048 = vmatprep.subr.mxu0 %v3623
        %4049 = vmatpush1.msra.mxu0 %v3622
        %4050 = vmatprep.subr.mxu0 %v3619
        %4051 = vmatpush1.msra.mxu0 %v3618
        %4052 = vmatprep.subr.mxu0 %v3615
        %4053 = vmatpush1.msra.mxu0 %v3614
        %4054 = vmatprep.subr.mxu0 %v3611
        %4055 = vmatpush1.msra.mxu0 %v3610
        %4056 = vmatprep.subr.mxu0 %v3607
        %4057 = vmatpush1.msra.mxu0 %v3606
        %4058 = vmatprep.subr.mxu0 %v3603
        %4059 = vmatpush1.msra.mxu0 %v3602
        %4060 = vmatprep.subr.mxu0 %v3599
        %4061 = vmatpush1.msra.mxu0 %v3598
        %4062 = vmatprep.subr.mxu0 %v3595
        %4063 = vmatpush1.msra.mxu0 %v3594
        %4064 = vmatprep.subr.mxu0 %v3591
        %4065 = vmatpush1.msra.mxu0 %v3590
        %4066 = vmatprep.subr.mxu0 %v3587
        %4067 = vmatpush1.msra.mxu0 %v3586
        %4068 = vmatprep.subr.mxu0 %v3583
        %4069 = vmatpush1.msra.mxu0 %v3582
        %4070 = vmatprep.subr.mxu0 %v3579
        %4071 = vmatpush1.msra.mxu0 %v3578
        %4072 = vmatprep.subr.mxu0 %v3575
        %4073 = vmatpush1.msra.mxu0 %v3574
        %4074 = vmatprep.subr.mxu0 %v3699
        %4075 = vmatpush2.msra.mxu0 %v3698
        %4076 = vmatprep.subr.mxu0 %v3695
        %4077 = vmatpush2.msra.mxu0 %v3694
        %4078 = vmatprep.subr.mxu0 %v3691
        %4079 = vmatpush2.msra.mxu0 %v3690
        %4080 = vmatprep.subr.mxu0 %v3687
        %4081 = vmatpush2.msra.mxu0 %v3686
        %4082 = vmatprep.subr.mxu0 %v3683
        %4083 = vmatpush2.msra.mxu0 %v3682
        %4084 = vmatprep.subr.mxu0 %v3679
        %4085 = vmatpush2.msra.mxu0 %v3678
        %4086 = vmatprep.subr.mxu0 %v3675
        %4087 = vmatpush2.msra.mxu0 %v3674
        %4088 = vmatprep.subr.mxu0 %v3671
        %4089 = vmatpush2.msra.mxu0 %v3670
        %4090 = vmatprep.subr.mxu0 %v3667
        %4091 = vmatpush2.msra.mxu0 %v3666
        %4092 = vmatprep.subr.mxu0 %v3663
        %4093 = vmatpush2.msra.mxu0 %v3662
        %4094 = vmatprep.subr.mxu0 %v3659
        %4095 = vmatpush2.msra.mxu0 %v3658
        %4096 = vmatprep.subr.mxu0 %v3655
        %4097 = vmatpush2.msra.mxu0 %v3654
        %4098 = vmatprep.subr.mxu0 %v3651
        %4099 = vmatpush2.msra.mxu0 %v3650
        %4100 = vmatprep.subr.mxu0 %v3647
        %4101 = vmatpush2.msra.mxu0 %v3646
        %4102 = vmatprep.subr.mxu0 %v3643
        %4103 = vmatpush2.msra.mxu0 %v3642
        %4104 = vmatprep.subr.mxu0 %v3639
        %4105 = vmatpush2.msra.mxu0 %v3638
        %4106 = vmatprep.mubr.f32.mxu0 %v3568
        %4107 = vmatmul.mubr.f32.gmra.mxu0 %v3567
        %v4108 = vpop.f32.mrf.mxu0
        %v4109 = vadd.f32 %v3967, %v4108
        %v4110 = vpop.f32.mrf.mxu0
        %v4111 = vadd.f32 %v3969, %v4110
        %4112 = vdwg.mxu0
        %s4113 = scalar_lea.vmem [#allocation7], 2048
        %v4114 = vld [vmem:[%s4113] sm:$0xff]
        %v4115 = vld [vmem:[%s4113 + $0x8] sm:$0xff]
        %v4116 = vld [vmem:[%s4113 + $0x10] sm:$0xff]
        %v4117 = vld [vmem:[%s4113 + $0x18] sm:$0xff]
        %v4118 = vld [vmem:[%s4113 + $0x20] sm:$0xff]
        %v4119 = vld [vmem:[%s4113 + $0x28] sm:$0xff]
        %v4120 = vld [vmem:[%s4113 + $0x30] sm:$0xff]
        %v4121 = vld [vmem:[%s4113 + $0x38] sm:$0xff]
        %v4122 = vld [vmem:[%s4113 + $0x40] sm:$0xff]
        %v4123 = vld [vmem:[%s4113 + $0x48] sm:$0xff]
        %v4124 = vld [vmem:[%s4113 + $0x50] sm:$0xff]
        %v4125 = vld [vmem:[%s4113 + $0x58] sm:$0xff]
        %v4126 = vld [vmem:[%s4113 + $0x60] sm:$0xff]
        %v4127 = vld [vmem:[%s4113 + $0x68] sm:$0xff]
        %v4128 = vld [vmem:[%s4113 + $0x70] sm:$0xff]
        %v4129 = vld [vmem:[%s4113 + $0x78] sm:$0xff]
        %v4130 = vld [vmem:[%s4113 + $0x80] sm:$0xff]
        %v4131 = vld [vmem:[%s4113 + $0x88] sm:$0xff]
        %v4132 = vld [vmem:[%s4113 + $0x90] sm:$0xff]
        %v4133 = vld [vmem:[%s4113 + $0x98] sm:$0xff]
        %v4134 = vld [vmem:[%s4113 + $0xa0] sm:$0xff]
        %v4135 = vld [vmem:[%s4113 + $0xa8] sm:$0xff]
        %v4136 = vld [vmem:[%s4113 + $0xb0] sm:$0xff]
        %v4137 = vld [vmem:[%s4113 + $0xb8] sm:$0xff]
        %v4138 = vld [vmem:[%s4113 + $0xc0] sm:$0xff]
        %v4139 = vld [vmem:[%s4113 + $0xc8] sm:$0xff]
        %v4140 = vld [vmem:[%s4113 + $0xd0] sm:$0xff]
        %v4141 = vld [vmem:[%s4113 + $0xd8] sm:$0xff]
        %v4142 = vld [vmem:[%s4113 + $0xe0] sm:$0xff]
        %v4143 = vld [vmem:[%s4113 + $0xe8] sm:$0xff]
        %v4144 = vld [vmem:[%s4113 + $0xf0] sm:$0xff]
        %v4145 = vld [vmem:[%s4113 + $0xf8] sm:$0xff]
        %v4146 = vld [vmem:[%s4113 + $0x100] sm:$0xff]
        %v4147 = vld [vmem:[%s4113 + $0x108] sm:$0xff]
        %v4148 = vld [vmem:[%s4113 + $0x110] sm:$0xff]
        %v4149 = vld [vmem:[%s4113 + $0x118] sm:$0xff]
        %v4150 = vld [vmem:[%s4113 + $0x120] sm:$0xff]
        %v4151 = vld [vmem:[%s4113 + $0x128] sm:$0xff]
        %v4152 = vld [vmem:[%s4113 + $0x130] sm:$0xff]
        %v4153 = vld [vmem:[%s4113 + $0x138] sm:$0xff]
        %v4154 = vld [vmem:[%s4113 + $0x140] sm:$0xff]
        %v4155 = vld [vmem:[%s4113 + $0x148] sm:$0xff]
        %v4156 = vld [vmem:[%s4113 + $0x150] sm:$0xff]
        %v4157 = vld [vmem:[%s4113 + $0x158] sm:$0xff]
        %v4158 = vld [vmem:[%s4113 + $0x160] sm:$0xff]
        %v4159 = vld [vmem:[%s4113 + $0x168] sm:$0xff]
        %v4160 = vld [vmem:[%s4113 + $0x170] sm:$0xff]
        %v4161 = vld [vmem:[%s4113 + $0x178] sm:$0xff]
        %v4162 = vld [vmem:[%s4113 + $0x180] sm:$0xff]
        %v4163 = vld [vmem:[%s4113 + $0x188] sm:$0xff]
        %v4164 = vld [vmem:[%s4113 + $0x190] sm:$0xff]
        %v4165 = vld [vmem:[%s4113 + $0x198] sm:$0xff]
        %v4166 = vld [vmem:[%s4113 + $0x1a0] sm:$0xff]
        %v4167 = vld [vmem:[%s4113 + $0x1a8] sm:$0xff]
        %v4168 = vld [vmem:[%s4113 + $0x1b0] sm:$0xff]
        %v4169 = vld [vmem:[%s4113 + $0x1b8] sm:$0xff]
        %v4170 = vld [vmem:[%s4113 + $0x1c0] sm:$0xff]
        %v4171 = vld [vmem:[%s4113 + $0x1c8] sm:$0xff]
        %v4172 = vld [vmem:[%s4113 + $0x1d0] sm:$0xff]
        %v4173 = vld [vmem:[%s4113 + $0x1d8] sm:$0xff]
        %v4174 = vld [vmem:[%s4113 + $0x1e0] sm:$0xff]
        %v4175 = vld [vmem:[%s4113 + $0x1e8] sm:$0xff]
        %v4176 = vld [vmem:[%s4113 + $0x1f0] sm:$0xff]
        %v4177 = vld [vmem:[%s4113 + $0x1f8] sm:$0xff]
        %v4178 = vld [vmem:[%s4113 + $0x200] sm:$0xff]
        %v4179 = vld [vmem:[%s4113 + $0x208] sm:$0xff]
        %v4180 = vld [vmem:[%s4113 + $0x210] sm:$0xff]
        %v4181 = vld [vmem:[%s4113 + $0x218] sm:$0xff]
        %v4182 = vld [vmem:[%s4113 + $0x220] sm:$0xff]
        %v4183 = vld [vmem:[%s4113 + $0x228] sm:$0xff]
        %v4184 = vld [vmem:[%s4113 + $0x230] sm:$0xff]
        %v4185 = vld [vmem:[%s4113 + $0x238] sm:$0xff]
        %v4186 = vld [vmem:[%s4113 + $0x240] sm:$0xff]
        %v4187 = vld [vmem:[%s4113 + $0x248] sm:$0xff]
        %v4188 = vld [vmem:[%s4113 + $0x250] sm:$0xff]
        %v4189 = vld [vmem:[%s4113 + $0x258] sm:$0xff]
        %v4190 = vld [vmem:[%s4113 + $0x260] sm:$0xff]
        %v4191 = vld [vmem:[%s4113 + $0x268] sm:$0xff]
        %v4192 = vld [vmem:[%s4113 + $0x270] sm:$0xff]
        %v4193 = vld [vmem:[%s4113 + $0x278] sm:$0xff]
        %v4194 = vld [vmem:[%s4113 + $0x280] sm:$0xff]
        %v4195 = vld [vmem:[%s4113 + $0x288] sm:$0xff]
        %v4196 = vld [vmem:[%s4113 + $0x290] sm:$0xff]
        %v4197 = vld [vmem:[%s4113 + $0x298] sm:$0xff]
        %v4198 = vld [vmem:[%s4113 + $0x2a0] sm:$0xff]
        %v4199 = vld [vmem:[%s4113 + $0x2a8] sm:$0xff]
        %v4200 = vld [vmem:[%s4113 + $0x2b0] sm:$0xff]
        %v4201 = vld [vmem:[%s4113 + $0x2b8] sm:$0xff]
        %v4202 = vld [vmem:[%s4113 + $0x2c0] sm:$0xff]
        %v4203 = vld [vmem:[%s4113 + $0x2c8] sm:$0xff]
        %v4204 = vld [vmem:[%s4113 + $0x2d0] sm:$0xff]
        %v4205 = vld [vmem:[%s4113 + $0x2d8] sm:$0xff]
        %v4206 = vld [vmem:[%s4113 + $0x2e0] sm:$0xff]
        %v4207 = vld [vmem:[%s4113 + $0x2e8] sm:$0xff]
        %v4208 = vld [vmem:[%s4113 + $0x2f0] sm:$0xff]
        %v4209 = vld [vmem:[%s4113 + $0x2f8] sm:$0xff]
        %v4210 = vld [vmem:[%s4113 + $0x300] sm:$0xff]
        %v4211 = vld [vmem:[%s4113 + $0x308] sm:$0xff]
        %v4212 = vld [vmem:[%s4113 + $0x310] sm:$0xff]
        %v4213 = vld [vmem:[%s4113 + $0x318] sm:$0xff]
        %v4214 = vld [vmem:[%s4113 + $0x320] sm:$0xff]
        %v4215 = vld [vmem:[%s4113 + $0x328] sm:$0xff]
        %v4216 = vld [vmem:[%s4113 + $0x330] sm:$0xff]
        %v4217 = vld [vmem:[%s4113 + $0x338] sm:$0xff]
        %v4218 = vld [vmem:[%s4113 + $0x340] sm:$0xff]
        %v4219 = vld [vmem:[%s4113 + $0x348] sm:$0xff]
        %v4220 = vld [vmem:[%s4113 + $0x350] sm:$0xff]
        %v4221 = vld [vmem:[%s4113 + $0x358] sm:$0xff]
        %v4222 = vld [vmem:[%s4113 + $0x360] sm:$0xff]
        %v4223 = vld [vmem:[%s4113 + $0x368] sm:$0xff]
        %v4224 = vld [vmem:[%s4113 + $0x370] sm:$0xff]
        %v4225 = vld [vmem:[%s4113 + $0x378] sm:$0xff]
        %v4226 = vld [vmem:[%s4113 + $0x380] sm:$0xff]
        %v4227 = vld [vmem:[%s4113 + $0x388] sm:$0xff]
        %v4228 = vld [vmem:[%s4113 + $0x390] sm:$0xff]
        %v4229 = vld [vmem:[%s4113 + $0x398] sm:$0xff]
        %v4230 = vld [vmem:[%s4113 + $0x3a0] sm:$0xff]
        %v4231 = vld [vmem:[%s4113 + $0x3a8] sm:$0xff]
        %v4232 = vld [vmem:[%s4113 + $0x3b0] sm:$0xff]
        %v4233 = vld [vmem:[%s4113 + $0x3b8] sm:$0xff]
        %v4234 = vld [vmem:[%s4113 + $0x3c0] sm:$0xff]
        %v4235 = vld [vmem:[%s4113 + $0x3c8] sm:$0xff]
        %v4236 = vld [vmem:[%s4113 + $0x3d0] sm:$0xff]
        %v4237 = vld [vmem:[%s4113 + $0x3d8] sm:$0xff]
        %v4238 = vld [vmem:[%s4113 + $0x3e0] sm:$0xff]
        %v4239 = vld [vmem:[%s4113 + $0x3e8] sm:$0xff]
        %v4240 = vld [vmem:[%s4113 + $0x3f0] sm:$0xff]
        %v4241 = vld [vmem:[%s4113 + $0x3f8] sm:$0xff]
        %v4244 = vrot.slane %v3567, 1
        %v4245 = vrot.slane %v3568, 1
        %4248 = vmatprep.subr.mxu0 %v4175
        %4249 = vmatpush1.msra.mxu0 %v4174
        %4250 = vmatprep.subr.mxu0 %v4171
        %4251 = vmatpush1.msra.mxu0 %v4170
        %4252 = vmatprep.subr.mxu0 %v4167
        %4253 = vmatpush1.msra.mxu0 %v4166
        %4254 = vmatprep.subr.mxu0 %v4163
        %4255 = vmatpush1.msra.mxu0 %v4162
        %4256 = vmatprep.subr.mxu0 %v4159
        %4257 = vmatpush1.msra.mxu0 %v4158
        %4258 = vmatprep.subr.mxu0 %v4155
        %4259 = vmatpush1.msra.mxu0 %v4154
        %4260 = vmatprep.subr.mxu0 %v4151
        %4261 = vmatpush1.msra.mxu0 %v4150
        %4262 = vmatprep.subr.mxu0 %v4147
        %4263 = vmatpush1.msra.mxu0 %v4146
        %4264 = vmatprep.subr.mxu0 %v4143
        %4265 = vmatpush1.msra.mxu0 %v4142
        %4266 = vmatprep.subr.mxu0 %v4139
        %4267 = vmatpush1.msra.mxu0 %v4138
        %4268 = vmatprep.subr.mxu0 %v4135
        %4269 = vmatpush1.msra.mxu0 %v4134
        %4270 = vmatprep.subr.mxu0 %v4131
        %4271 = vmatpush1.msra.mxu0 %v4130
        %4272 = vmatprep.subr.mxu0 %v4127
        %4273 = vmatpush1.msra.mxu0 %v4126
        %4274 = vmatprep.subr.mxu0 %v4123
        %4275 = vmatpush1.msra.mxu0 %v4122
        %4276 = vmatprep.subr.mxu0 %v4119
        %4277 = vmatpush1.msra.mxu0 %v4118
        %4278 = vmatprep.subr.mxu0 %v4115
        %4279 = vmatpush1.msra.mxu0 %v4114
        %4280 = vmatprep.subr.mxu0 %v4239
        %4281 = vmatpush2.msra.mxu0 %v4238
        %4282 = vmatprep.subr.mxu0 %v4235
        %4283 = vmatpush2.msra.mxu0 %v4234
        %4284 = vmatprep.subr.mxu0 %v4231
        %4285 = vmatpush2.msra.mxu0 %v4230
        %4286 = vmatprep.subr.mxu0 %v4227
        %4287 = vmatpush2.msra.mxu0 %v4226
        %4288 = vmatprep.subr.mxu0 %v4223
        %4289 = vmatpush2.msra.mxu0 %v4222
        %4290 = vmatprep.subr.mxu0 %v4219
        %4291 = vmatpush2.msra.mxu0 %v4218
        %4292 = vmatprep.subr.mxu0 %v4215
        %4293 = vmatpush2.msra.mxu0 %v4214
        %4294 = vmatprep.subr.mxu0 %v4211
        %4295 = vmatpush2.msra.mxu0 %v4210
        %4296 = vmatprep.subr.mxu0 %v4207
        %4297 = vmatpush2.msra.mxu0 %v4206
        %4298 = vmatprep.subr.mxu0 %v4203
        %4299 = vmatpush2.msra.mxu0 %v4202
        %4300 = vmatprep.subr.mxu0 %v4199
        %4301 = vmatpush2.msra.mxu0 %v4198
        %4302 = vmatprep.subr.mxu0 %v4195
        %4303 = vmatpush2.msra.mxu0 %v4194
        %4304 = vmatprep.subr.mxu0 %v4191
        %4305 = vmatpush2.msra.mxu0 %v4190
        %4306 = vmatprep.subr.mxu0 %v4187
        %4307 = vmatpush2.msra.mxu0 %v4186
        %4308 = vmatprep.subr.mxu0 %v4183
        %4309 = vmatpush2.msra.mxu0 %v4182
        %4310 = vmatprep.subr.mxu0 %v4179
        %4311 = vmatpush2.msra.mxu0 %v4178
        %4312 = vmatprep.mubr.f32.mxu0 %v4245
        %4313 = vmatmul.mubr.f32.gmra.mxu0 %v4244
        %v4314 = vpop.f32.mrf.mxu0
        %v4315 = vadd.f32 0.0, %v4314
        %v4316 = vpop.f32.mrf.mxu0
        %v4317 = vadd.f32 0.0, %v4316
        %4318 = vdwg.mxu0
        %4319 = vmatprep.subr.mxu0 %v4177
        %4320 = vmatpush1.msra.mxu0 %v4176
        %4321 = vmatprep.subr.mxu0 %v4173
        %4322 = vmatpush1.msra.mxu0 %v4172
        %4323 = vmatprep.subr.mxu0 %v4169
        %4324 = vmatpush1.msra.mxu0 %v4168
        %4325 = vmatprep.subr.mxu0 %v4165
        %4326 = vmatpush1.msra.mxu0 %v4164
        %4327 = vmatprep.subr.mxu0 %v4161
        %4328 = vmatpush1.msra.mxu0 %v4160
        %4329 = vmatprep.subr.mxu0 %v4157
        %4330 = vmatpush1.msra.mxu0 %v4156
        %4331 = vmatprep.subr.mxu0 %v4153
        %4332 = vmatpush1.msra.mxu0 %v4152
        %4333 = vmatprep.subr.mxu0 %v4149
        %4334 = vmatpush1.msra.mxu0 %v4148
        %4335 = vmatprep.subr.mxu0 %v4145
        %4336 = vmatpush1.msra.mxu0 %v4144
        %4337 = vmatprep.subr.mxu0 %v4141
        %4338 = vmatpush1.msra.mxu0 %v4140
        %4339 = vmatprep.subr.mxu0 %v4137
        %4340 = vmatpush1.msra.mxu0 %v4136
        %4341 = vmatprep.subr.mxu0 %v4133
        %4342 = vmatpush1.msra.mxu0 %v4132
        %4343 = vmatprep.subr.mxu0 %v4129
        %4344 = vmatpush1.msra.mxu0 %v4128
        %4345 = vmatprep.subr.mxu0 %v4125
        %4346 = vmatpush1.msra.mxu0 %v4124
        %4347 = vmatprep.subr.mxu0 %v4121
        %4348 = vmatpush1.msra.mxu0 %v4120
        %4349 = vmatprep.subr.mxu0 %v4117
        %4350 = vmatpush1.msra.mxu0 %v4116
        %4351 = vmatprep.subr.mxu0 %v4241
        %4352 = vmatpush2.msra.mxu0 %v4240
        %4353 = vmatprep.subr.mxu0 %v4237
        %4354 = vmatpush2.msra.mxu0 %v4236
        %4355 = vmatprep.subr.mxu0 %v4233
        %4356 = vmatpush2.msra.mxu0 %v4232
        %4357 = vmatprep.subr.mxu0 %v4229
        %4358 = vmatpush2.msra.mxu0 %v4228
        %4359 = vmatprep.subr.mxu0 %v4225
        %4360 = vmatpush2.msra.mxu0 %v4224
        %4361 = vmatprep.subr.mxu0 %v4221
        %4362 = vmatpush2.msra.mxu0 %v4220
        %4363 = vmatprep.subr.mxu0 %v4217
        %4364 = vmatpush2.msra.mxu0 %v4216
        %4365 = vmatprep.subr.mxu0 %v4213
        %4366 = vmatpush2.msra.mxu0 %v4212
        %4367 = vmatprep.subr.mxu0 %v4209
        %4368 = vmatpush2.msra.mxu0 %v4208
        %4369 = vmatprep.subr.mxu0 %v4205
        %4370 = vmatpush2.msra.mxu0 %v4204
        %4371 = vmatprep.subr.mxu0 %v4201
        %4372 = vmatpush2.msra.mxu0 %v4200
        %4373 = vmatprep.subr.mxu0 %v4197
        %4374 = vmatpush2.msra.mxu0 %v4196
        %4375 = vmatprep.subr.mxu0 %v4193
        %4376 = vmatpush2.msra.mxu0 %v4192
        %4377 = vmatprep.subr.mxu0 %v4189
        %4378 = vmatpush2.msra.mxu0 %v4188
        %4379 = vmatprep.subr.mxu0 %v4185
        %4380 = vmatpush2.msra.mxu0 %v4184
        %4381 = vmatprep.subr.mxu0 %v4181
        %4382 = vmatpush2.msra.mxu0 %v4180
        %4383 = vmatprep.mubr.f32.mxu0 %v4245
        %4384 = vmatmul.mubr.f32.gmra.mxu0 %v4244
        %v4385 = vpop.f32.mrf.mxu0
        %v4386 = vadd.f32 0.0, %v4385
        %v4387 = vpop.f32.mrf.mxu0
        %v4388 = vadd.f32 0.0, %v4387
        %4389 = vdwg.mxu0
        %v4390 = vadd.f32 %v4038, %v4315
        %v4391 = vadd.f32 %v4040, %v4317
        %v4392 = vadd.f32 %v4109, %v4386
        %v4393 = vadd.f32 %v4111, %v4388
        %s4394 = scalar_lea.vmem [#allocation7], 3072
        %v4395 = vld [vmem:[%s4394] sm:$0xff]
        %v4396 = vld [vmem:[%s4394 + $0x8] sm:$0xff]
        %v4397 = vld [vmem:[%s4394 + $0x10] sm:$0xff]
        %v4398 = vld [vmem:[%s4394 + $0x18] sm:$0xff]
        %v4399 = vld [vmem:[%s4394 + $0x20] sm:$0xff]
        %v4400 = vld [vmem:[%s4394 + $0x28] sm:$0xff]
        %v4401 = vld [vmem:[%s4394 + $0x30] sm:$0xff]
        %v4402 = vld [vmem:[%s4394 + $0x38] sm:$0xff]
        %v4403 = vld [vmem:[%s4394 + $0x40] sm:$0xff]
        %v4404 = vld [vmem:[%s4394 + $0x48] sm:$0xff]
        %v4405 = vld [vmem:[%s4394 + $0x50] sm:$0xff]
        %v4406 = vld [vmem:[%s4394 + $0x58] sm:$0xff]
        %v4407 = vld [vmem:[%s4394 + $0x60] sm:$0xff]
        %v4408 = vld [vmem:[%s4394 + $0x68] sm:$0xff]
        %v4409 = vld [vmem:[%s4394 + $0x70] sm:$0xff]
        %v4410 = vld [vmem:[%s4394 + $0x78] sm:$0xff]
        %v4411 = vld [vmem:[%s4394 + $0x80] sm:$0xff]
        %v4412 = vld [vmem:[%s4394 + $0x88] sm:$0xff]
        %v4413 = vld [vmem:[%s4394 + $0x90] sm:$0xff]
        %v4414 = vld [vmem:[%s4394 + $0x98] sm:$0xff]
        %v4415 = vld [vmem:[%s4394 + $0xa0] sm:$0xff]
        %v4416 = vld [vmem:[%s4394 + $0xa8] sm:$0xff]
        %v4417 = vld [vmem:[%s4394 + $0xb0] sm:$0xff]
        %v4418 = vld [vmem:[%s4394 + $0xb8] sm:$0xff]
        %v4419 = vld [vmem:[%s4394 + $0xc0] sm:$0xff]
        %v4420 = vld [vmem:[%s4394 + $0xc8] sm:$0xff]
        %v4421 = vld [vmem:[%s4394 + $0xd0] sm:$0xff]
        %v4422 = vld [vmem:[%s4394 + $0xd8] sm:$0xff]
        %v4423 = vld [vmem:[%s4394 + $0xe0] sm:$0xff]
        %v4424 = vld [vmem:[%s4394 + $0xe8] sm:$0xff]
        %v4425 = vld [vmem:[%s4394 + $0xf0] sm:$0xff]
        %v4426 = vld [vmem:[%s4394 + $0xf8] sm:$0xff]
        %v4427 = vld [vmem:[%s4394 + $0x100] sm:$0xff]
        %v4428 = vld [vmem:[%s4394 + $0x108] sm:$0xff]
        %v4429 = vld [vmem:[%s4394 + $0x110] sm:$0xff]
        %v4430 = vld [vmem:[%s4394 + $0x118] sm:$0xff]
        %v4431 = vld [vmem:[%s4394 + $0x120] sm:$0xff]
        %v4432 = vld [vmem:[%s4394 + $0x128] sm:$0xff]
        %v4433 = vld [vmem:[%s4394 + $0x130] sm:$0xff]
        %v4434 = vld [vmem:[%s4394 + $0x138] sm:$0xff]
        %v4435 = vld [vmem:[%s4394 + $0x140] sm:$0xff]
        %v4436 = vld [vmem:[%s4394 + $0x148] sm:$0xff]
        %v4437 = vld [vmem:[%s4394 + $0x150] sm:$0xff]
        %v4438 = vld [vmem:[%s4394 + $0x158] sm:$0xff]
        %v4439 = vld [vmem:[%s4394 + $0x160] sm:$0xff]
        %v4440 = vld [vmem:[%s4394 + $0x168] sm:$0xff]
        %v4441 = vld [vmem:[%s4394 + $0x170] sm:$0xff]
        %v4442 = vld [vmem:[%s4394 + $0x178] sm:$0xff]
        %v4443 = vld [vmem:[%s4394 + $0x180] sm:$0xff]
        %v4444 = vld [vmem:[%s4394 + $0x188] sm:$0xff]
        %v4445 = vld [vmem:[%s4394 + $0x190] sm:$0xff]
        %v4446 = vld [vmem:[%s4394 + $0x198] sm:$0xff]
        %v4447 = vld [vmem:[%s4394 + $0x1a0] sm:$0xff]
        %v4448 = vld [vmem:[%s4394 + $0x1a8] sm:$0xff]
        %v4449 = vld [vmem:[%s4394 + $0x1b0] sm:$0xff]
        %v4450 = vld [vmem:[%s4394 + $0x1b8] sm:$0xff]
        %v4451 = vld [vmem:[%s4394 + $0x1c0] sm:$0xff]
        %v4452 = vld [vmem:[%s4394 + $0x1c8] sm:$0xff]
        %v4453 = vld [vmem:[%s4394 + $0x1d0] sm:$0xff]
        %v4454 = vld [vmem:[%s4394 + $0x1d8] sm:$0xff]
        %v4455 = vld [vmem:[%s4394 + $0x1e0] sm:$0xff]
        %v4456 = vld [vmem:[%s4394 + $0x1e8] sm:$0xff]
        %v4457 = vld [vmem:[%s4394 + $0x1f0] sm:$0xff]
        %v4458 = vld [vmem:[%s4394 + $0x1f8] sm:$0xff]
        %v4459 = vld [vmem:[%s4394 + $0x200] sm:$0xff]
        %v4460 = vld [vmem:[%s4394 + $0x208] sm:$0xff]
        %v4461 = vld [vmem:[%s4394 + $0x210] sm:$0xff]
        %v4462 = vld [vmem:[%s4394 + $0x218] sm:$0xff]
        %v4463 = vld [vmem:[%s4394 + $0x220] sm:$0xff]
        %v4464 = vld [vmem:[%s4394 + $0x228] sm:$0xff]
        %v4465 = vld [vmem:[%s4394 + $0x230] sm:$0xff]
        %v4466 = vld [vmem:[%s4394 + $0x238] sm:$0xff]
        %v4467 = vld [vmem:[%s4394 + $0x240] sm:$0xff]
        %v4468 = vld [vmem:[%s4394 + $0x248] sm:$0xff]
        %v4469 = vld [vmem:[%s4394 + $0x250] sm:$0xff]
        %v4470 = vld [vmem:[%s4394 + $0x258] sm:$0xff]
        %v4471 = vld [vmem:[%s4394 + $0x260] sm:$0xff]
        %v4472 = vld [vmem:[%s4394 + $0x268] sm:$0xff]
        %v4473 = vld [vmem:[%s4394 + $0x270] sm:$0xff]
        %v4474 = vld [vmem:[%s4394 + $0x278] sm:$0xff]
        %v4475 = vld [vmem:[%s4394 + $0x280] sm:$0xff]
        %v4476 = vld [vmem:[%s4394 + $0x288] sm:$0xff]
        %v4477 = vld [vmem:[%s4394 + $0x290] sm:$0xff]
        %v4478 = vld [vmem:[%s4394 + $0x298] sm:$0xff]
        %v4479 = vld [vmem:[%s4394 + $0x2a0] sm:$0xff]
        %v4480 = vld [vmem:[%s4394 + $0x2a8] sm:$0xff]
        %v4481 = vld [vmem:[%s4394 + $0x2b0] sm:$0xff]
        %v4482 = vld [vmem:[%s4394 + $0x2b8] sm:$0xff]
        %v4483 = vld [vmem:[%s4394 + $0x2c0] sm:$0xff]
        %v4484 = vld [vmem:[%s4394 + $0x2c8] sm:$0xff]
        %v4485 = vld [vmem:[%s4394 + $0x2d0] sm:$0xff]
        %v4486 = vld [vmem:[%s4394 + $0x2d8] sm:$0xff]
        %v4487 = vld [vmem:[%s4394 + $0x2e0] sm:$0xff]
        %v4488 = vld [vmem:[%s4394 + $0x2e8] sm:$0xff]
        %v4489 = vld [vmem:[%s4394 + $0x2f0] sm:$0xff]
        %v4490 = vld [vmem:[%s4394 + $0x2f8] sm:$0xff]
        %v4491 = vld [vmem:[%s4394 + $0x300] sm:$0xff]
        %v4492 = vld [vmem:[%s4394 + $0x308] sm:$0xff]
        %v4493 = vld [vmem:[%s4394 + $0x310] sm:$0xff]
        %v4494 = vld [vmem:[%s4394 + $0x318] sm:$0xff]
        %v4495 = vld [vmem:[%s4394 + $0x320] sm:$0xff]
        %v4496 = vld [vmem:[%s4394 + $0x328] sm:$0xff]
        %v4497 = vld [vmem:[%s4394 + $0x330] sm:$0xff]
        %v4498 = vld [vmem:[%s4394 + $0x338] sm:$0xff]
        %v4499 = vld [vmem:[%s4394 + $0x340] sm:$0xff]
        %v4500 = vld [vmem:[%s4394 + $0x348] sm:$0xff]
        %v4501 = vld [vmem:[%s4394 + $0x350] sm:$0xff]
        %v4502 = vld [vmem:[%s4394 + $0x358] sm:$0xff]
        %v4503 = vld [vmem:[%s4394 + $0x360] sm:$0xff]
        %v4504 = vld [vmem:[%s4394 + $0x368] sm:$0xff]
        %v4505 = vld [vmem:[%s4394 + $0x370] sm:$0xff]
        %v4506 = vld [vmem:[%s4394 + $0x378] sm:$0xff]
        %v4507 = vld [vmem:[%s4394 + $0x380] sm:$0xff]
        %v4508 = vld [vmem:[%s4394 + $0x388] sm:$0xff]
        %v4509 = vld [vmem:[%s4394 + $0x390] sm:$0xff]
        %v4510 = vld [vmem:[%s4394 + $0x398] sm:$0xff]
        %v4511 = vld [vmem:[%s4394 + $0x3a0] sm:$0xff]
        %v4512 = vld [vmem:[%s4394 + $0x3a8] sm:$0xff]
        %v4513 = vld [vmem:[%s4394 + $0x3b0] sm:$0xff]
        %v4514 = vld [vmem:[%s4394 + $0x3b8] sm:$0xff]
        %v4515 = vld [vmem:[%s4394 + $0x3c0] sm:$0xff]
        %v4516 = vld [vmem:[%s4394 + $0x3c8] sm:$0xff]
        %v4517 = vld [vmem:[%s4394 + $0x3d0] sm:$0xff]
        %v4518 = vld [vmem:[%s4394 + $0x3d8] sm:$0xff]
        %v4519 = vld [vmem:[%s4394 + $0x3e0] sm:$0xff]
        %v4520 = vld [vmem:[%s4394 + $0x3e8] sm:$0xff]
        %v4521 = vld [vmem:[%s4394 + $0x3f0] sm:$0xff]
        %v4522 = vld [vmem:[%s4394 + $0x3f8] sm:$0xff]
        %v4525 = vrot.slane %v3569, 1
        %v4526 = vrot.slane %v3570, 1
        %4529 = vmatprep.subr.mxu0 %v4456
        %4530 = vmatpush1.msra.mxu0 %v4455
        %4531 = vmatprep.subr.mxu0 %v4452
        %4532 = vmatpush1.msra.mxu0 %v4451
        %4533 = vmatprep.subr.mxu0 %v4448
        %4534 = vmatpush1.msra.mxu0 %v4447
        %4535 = vmatprep.subr.mxu0 %v4444
        %4536 = vmatpush1.msra.mxu0 %v4443
        %4537 = vmatprep.subr.mxu0 %v4440
        %4538 = vmatpush1.msra.mxu0 %v4439
        %4539 = vmatprep.subr.mxu0 %v4436
        %4540 = vmatpush1.msra.mxu0 %v4435
        %4541 = vmatprep.subr.mxu0 %v4432
        %4542 = vmatpush1.msra.mxu0 %v4431
        %4543 = vmatprep.subr.mxu0 %v4428
        %4544 = vmatpush1.msra.mxu0 %v4427
        %4545 = vmatprep.subr.mxu0 %v4424
        %4546 = vmatpush1.msra.mxu0 %v4423
        %4547 = vmatprep.subr.mxu0 %v4420
        %4548 = vmatpush1.msra.mxu0 %v4419
        %4549 = vmatprep.subr.mxu0 %v4416
        %4550 = vmatpush1.msra.mxu0 %v4415
        %4551 = vmatprep.subr.mxu0 %v4412
        %4552 = vmatpush1.msra.mxu0 %v4411
        %4553 = vmatprep.subr.mxu0 %v4408
        %4554 = vmatpush1.msra.mxu0 %v4407
        %4555 = vmatprep.subr.mxu0 %v4404
        %4556 = vmatpush1.msra.mxu0 %v4403
        %4557 = vmatprep.subr.mxu0 %v4400
        %4558 = vmatpush1.msra.mxu0 %v4399
        %4559 = vmatprep.subr.mxu0 %v4396
        %4560 = vmatpush1.msra.mxu0 %v4395
        %4561 = vmatprep.subr.mxu0 %v4520
        %4562 = vmatpush2.msra.mxu0 %v4519
        %4563 = vmatprep.subr.mxu0 %v4516
        %4564 = vmatpush2.msra.mxu0 %v4515
        %4565 = vmatprep.subr.mxu0 %v4512
        %4566 = vmatpush2.msra.mxu0 %v4511
        %4567 = vmatprep.subr.mxu0 %v4508
        %4568 = vmatpush2.msra.mxu0 %v4507
        %4569 = vmatprep.subr.mxu0 %v4504
        %4570 = vmatpush2.msra.mxu0 %v4503
        %4571 = vmatprep.subr.mxu0 %v4500
        %4572 = vmatpush2.msra.mxu0 %v4499
        %4573 = vmatprep.subr.mxu0 %v4496
        %4574 = vmatpush2.msra.mxu0 %v4495
        %4575 = vmatprep.subr.mxu0 %v4492
        %4576 = vmatpush2.msra.mxu0 %v4491
        %4577 = vmatprep.subr.mxu0 %v4488
        %4578 = vmatpush2.msra.mxu0 %v4487
        %4579 = vmatprep.subr.mxu0 %v4484
        %4580 = vmatpush2.msra.mxu0 %v4483
        %4581 = vmatprep.subr.mxu0 %v4480
        %4582 = vmatpush2.msra.mxu0 %v4479
        %4583 = vmatprep.subr.mxu0 %v4476
        %4584 = vmatpush2.msra.mxu0 %v4475
        %4585 = vmatprep.subr.mxu0 %v4472
        %4586 = vmatpush2.msra.mxu0 %v4471
        %4587 = vmatprep.subr.mxu0 %v4468
        %4588 = vmatpush2.msra.mxu0 %v4467
        %4589 = vmatprep.subr.mxu0 %v4464
        %4590 = vmatpush2.msra.mxu0 %v4463
        %4591 = vmatprep.subr.mxu0 %v4460
        %4592 = vmatpush2.msra.mxu0 %v4459
        %4593 = vmatprep.mubr.f32.mxu0 %v4526
        %4594 = vmatmul.mubr.f32.gmra.mxu0 %v4525
        %v4595 = vpop.f32.mrf.mxu0
        %v4596 = vadd.f32 0.0, %v4595
        %v4597 = vpop.f32.mrf.mxu0
        %v4598 = vadd.f32 0.0, %v4597
        %4599 = vdwg.mxu0
        %4600 = vmatprep.subr.mxu0 %v4458
        %4601 = vmatpush1.msra.mxu0 %v4457
        %4602 = vmatprep.subr.mxu0 %v4454
        %4603 = vmatpush1.msra.mxu0 %v4453
        %4604 = vmatprep.subr.mxu0 %v4450
        %4605 = vmatpush1.msra.mxu0 %v4449
        %4606 = vmatprep.subr.mxu0 %v4446
        %4607 = vmatpush1.msra.mxu0 %v4445
        %4608 = vmatprep.subr.mxu0 %v4442
        %4609 = vmatpush1.msra.mxu0 %v4441
        %4610 = vmatprep.subr.mxu0 %v4438
        %4611 = vmatpush1.msra.mxu0 %v4437
        %4612 = vmatprep.subr.mxu0 %v4434
        %4613 = vmatpush1.msra.mxu0 %v4433
        %4614 = vmatprep.subr.mxu0 %v4430
        %4615 = vmatpush1.msra.mxu0 %v4429
        %4616 = vmatprep.subr.mxu0 %v4426
        %4617 = vmatpush1.msra.mxu0 %v4425
        %4618 = vmatprep.subr.mxu0 %v4422
        %4619 = vmatpush1.msra.mxu0 %v4421
        %4620 = vmatprep.subr.mxu0 %v4418
        %4621 = vmatpush1.msra.mxu0 %v4417
        %4622 = vmatprep.subr.mxu0 %v4414
        %4623 = vmatpush1.msra.mxu0 %v4413
        %4624 = vmatprep.subr.mxu0 %v4410
        %4625 = vmatpush1.msra.mxu0 %v4409
        %4626 = vmatprep.subr.mxu0 %v4406
        %4627 = vmatpush1.msra.mxu0 %v4405
        %4628 = vmatprep.subr.mxu0 %v4402
        %4629 = vmatpush1.msra.mxu0 %v4401
        %4630 = vmatprep.subr.mxu0 %v4398
        %4631 = vmatpush1.msra.mxu0 %v4397
        %4632 = vmatprep.subr.mxu0 %v4522
        %4633 = vmatpush2.msra.mxu0 %v4521
        %4634 = vmatprep.subr.mxu0 %v4518
        %4635 = vmatpush2.msra.mxu0 %v4517
        %4636 = vmatprep.subr.mxu0 %v4514
        %4637 = vmatpush2.msra.mxu0 %v4513
        %4638 = vmatprep.subr.mxu0 %v4510
        %4639 = vmatpush2.msra.mxu0 %v4509
        %4640 = vmatprep.subr.mxu0 %v4506
        %4641 = vmatpush2.msra.mxu0 %v4505
        %4642 = vmatprep.subr.mxu0 %v4502
        %4643 = vmatpush2.msra.mxu0 %v4501
        %4644 = vmatprep.subr.mxu0 %v4498
        %4645 = vmatpush2.msra.mxu0 %v4497
        %4646 = vmatprep.subr.mxu0 %v4494
        %4647 = vmatpush2.msra.mxu0 %v4493
        %4648 = vmatprep.subr.mxu0 %v4490
        %4649 = vmatpush2.msra.mxu0 %v4489
        %4650 = vmatprep.subr.mxu0 %v4486
        %4651 = vmatpush2.msra.mxu0 %v4485
        %4652 = vmatprep.subr.mxu0 %v4482
        %4653 = vmatpush2.msra.mxu0 %v4481
        %4654 = vmatprep.subr.mxu0 %v4478
        %4655 = vmatpush2.msra.mxu0 %v4477
        %4656 = vmatprep.subr.mxu0 %v4474
        %4657 = vmatpush2.msra.mxu0 %v4473
        %4658 = vmatprep.subr.mxu0 %v4470
        %4659 = vmatpush2.msra.mxu0 %v4469
        %4660 = vmatprep.subr.mxu0 %v4466
        %4661 = vmatpush2.msra.mxu0 %v4465
        %4662 = vmatprep.subr.mxu0 %v4462
        %4663 = vmatpush2.msra.mxu0 %v4461
        %4664 = vmatprep.mubr.f32.mxu0 %v4526
        %4665 = vmatmul.mubr.f32.gmra.mxu0 %v4525
        %v4666 = vpop.f32.mrf.mxu0
        %v4667 = vadd.f32 0.0, %v4666
        %v4668 = vpop.f32.mrf.mxu0
        %v4669 = vadd.f32 0.0, %v4668
        %4670 = vdwg.mxu0
        %v4671 = vadd.f32 %v4390, %v4596
        %v4672 = vadd.f32 %v4391, %v4598
        %v4673 = vadd.f32 %v4392, %v4667
        %v4674 = vadd.f32 %v4393, %v4669
        %s4675 = scalar_lea.vmem [#allocation7], 4096
        %v4676 = vld [vmem:[%s4675] sm:$0xff]
        %v4677 = vld [vmem:[%s4675 + $0x8] sm:$0xff]
        %v4678 = vld [vmem:[%s4675 + $0x10] sm:$0xff]
        %v4679 = vld [vmem:[%s4675 + $0x18] sm:$0xff]
        %v4680 = vld [vmem:[%s4675 + $0x20] sm:$0xff]
        %v4681 = vld [vmem:[%s4675 + $0x28] sm:$0xff]
        %v4682 = vld [vmem:[%s4675 + $0x30] sm:$0xff]
        %v4683 = vld [vmem:[%s4675 + $0x38] sm:$0xff]
        %v4684 = vld [vmem:[%s4675 + $0x40] sm:$0xff]
        %v4685 = vld [vmem:[%s4675 + $0x48] sm:$0xff]
        %v4686 = vld [vmem:[%s4675 + $0x50] sm:$0xff]
        %v4687 = vld [vmem:[%s4675 + $0x58] sm:$0xff]
        %v4688 = vld [vmem:[%s4675 + $0x60] sm:$0xff]
        %v4689 = vld [vmem:[%s4675 + $0x68] sm:$0xff]
        %v4690 = vld [vmem:[%s4675 + $0x70] sm:$0xff]
        %v4691 = vld [vmem:[%s4675 + $0x78] sm:$0xff]
        %v4692 = vld [vmem:[%s4675 + $0x80] sm:$0xff]
        %v4693 = vld [vmem:[%s4675 + $0x88] sm:$0xff]
        %v4694 = vld [vmem:[%s4675 + $0x90] sm:$0xff]
        %v4695 = vld [vmem:[%s4675 + $0x98] sm:$0xff]
        %v4696 = vld [vmem:[%s4675 + $0xa0] sm:$0xff]
        %v4697 = vld [vmem:[%s4675 + $0xa8] sm:$0xff]
        %v4698 = vld [vmem:[%s4675 + $0xb0] sm:$0xff]
        %v4699 = vld [vmem:[%s4675 + $0xb8] sm:$0xff]
        %v4700 = vld [vmem:[%s4675 + $0xc0] sm:$0xff]
        %v4701 = vld [vmem:[%s4675 + $0xc8] sm:$0xff]
        %v4702 = vld [vmem:[%s4675 + $0xd0] sm:$0xff]
        %v4703 = vld [vmem:[%s4675 + $0xd8] sm:$0xff]
        %v4704 = vld [vmem:[%s4675 + $0xe0] sm:$0xff]
        %v4705 = vld [vmem:[%s4675 + $0xe8] sm:$0xff]
        %v4706 = vld [vmem:[%s4675 + $0xf0] sm:$0xff]
        %v4707 = vld [vmem:[%s4675 + $0xf8] sm:$0xff]
        %v4708 = vld [vmem:[%s4675 + $0x100] sm:$0xff]
        %v4709 = vld [vmem:[%s4675 + $0x108] sm:$0xff]
        %v4710 = vld [vmem:[%s4675 + $0x110] sm:$0xff]
        %v4711 = vld [vmem:[%s4675 + $0x118] sm:$0xff]
        %v4712 = vld [vmem:[%s4675 + $0x120] sm:$0xff]
        %v4713 = vld [vmem:[%s4675 + $0x128] sm:$0xff]
        %v4714 = vld [vmem:[%s4675 + $0x130] sm:$0xff]
        %v4715 = vld [vmem:[%s4675 + $0x138] sm:$0xff]
        %v4716 = vld [vmem:[%s4675 + $0x140] sm:$0xff]
        %v4717 = vld [vmem:[%s4675 + $0x148] sm:$0xff]
        %v4718 = vld [vmem:[%s4675 + $0x150] sm:$0xff]
        %v4719 = vld [vmem:[%s4675 + $0x158] sm:$0xff]
        %v4720 = vld [vmem:[%s4675 + $0x160] sm:$0xff]
        %v4721 = vld [vmem:[%s4675 + $0x168] sm:$0xff]
        %v4722 = vld [vmem:[%s4675 + $0x170] sm:$0xff]
        %v4723 = vld [vmem:[%s4675 + $0x178] sm:$0xff]
        %v4724 = vld [vmem:[%s4675 + $0x180] sm:$0xff]
        %v4725 = vld [vmem:[%s4675 + $0x188] sm:$0xff]
        %v4726 = vld [vmem:[%s4675 + $0x190] sm:$0xff]
        %v4727 = vld [vmem:[%s4675 + $0x198] sm:$0xff]
        %v4728 = vld [vmem:[%s4675 + $0x1a0] sm:$0xff]
        %v4729 = vld [vmem:[%s4675 + $0x1a8] sm:$0xff]
        %v4730 = vld [vmem:[%s4675 + $0x1b0] sm:$0xff]
        %v4731 = vld [vmem:[%s4675 + $0x1b8] sm:$0xff]
        %v4732 = vld [vmem:[%s4675 + $0x1c0] sm:$0xff]
        %v4733 = vld [vmem:[%s4675 + $0x1c8] sm:$0xff]
        %v4734 = vld [vmem:[%s4675 + $0x1d0] sm:$0xff]
        %v4735 = vld [vmem:[%s4675 + $0x1d8] sm:$0xff]
        %v4736 = vld [vmem:[%s4675 + $0x1e0] sm:$0xff]
        %v4737 = vld [vmem:[%s4675 + $0x1e8] sm:$0xff]
        %v4738 = vld [vmem:[%s4675 + $0x1f0] sm:$0xff]
        %v4739 = vld [vmem:[%s4675 + $0x1f8] sm:$0xff]
        %v4740 = vld [vmem:[%s4675 + $0x200] sm:$0xff]
        %v4741 = vld [vmem:[%s4675 + $0x208] sm:$0xff]
        %v4742 = vld [vmem:[%s4675 + $0x210] sm:$0xff]
        %v4743 = vld [vmem:[%s4675 + $0x218] sm:$0xff]
        %v4744 = vld [vmem:[%s4675 + $0x220] sm:$0xff]
        %v4745 = vld [vmem:[%s4675 + $0x228] sm:$0xff]
        %v4746 = vld [vmem:[%s4675 + $0x230] sm:$0xff]
        %v4747 = vld [vmem:[%s4675 + $0x238] sm:$0xff]
        %v4748 = vld [vmem:[%s4675 + $0x240] sm:$0xff]
        %v4749 = vld [vmem:[%s4675 + $0x248] sm:$0xff]
        %v4750 = vld [vmem:[%s4675 + $0x250] sm:$0xff]
        %v4751 = vld [vmem:[%s4675 + $0x258] sm:$0xff]
        %v4752 = vld [vmem:[%s4675 + $0x260] sm:$0xff]
        %v4753 = vld [vmem:[%s4675 + $0x268] sm:$0xff]
        %v4754 = vld [vmem:[%s4675 + $0x270] sm:$0xff]
        %v4755 = vld [vmem:[%s4675 + $0x278] sm:$0xff]
        %v4756 = vld [vmem:[%s4675 + $0x280] sm:$0xff]
        %v4757 = vld [vmem:[%s4675 + $0x288] sm:$0xff]
        %v4758 = vld [vmem:[%s4675 + $0x290] sm:$0xff]
        %v4759 = vld [vmem:[%s4675 + $0x298] sm:$0xff]
        %v4760 = vld [vmem:[%s4675 + $0x2a0] sm:$0xff]
        %v4761 = vld [vmem:[%s4675 + $0x2a8] sm:$0xff]
        %v4762 = vld [vmem:[%s4675 + $0x2b0] sm:$0xff]
        %v4763 = vld [vmem:[%s4675 + $0x2b8] sm:$0xff]
        %v4764 = vld [vmem:[%s4675 + $0x2c0] sm:$0xff]
        %v4765 = vld [vmem:[%s4675 + $0x2c8] sm:$0xff]
        %v4766 = vld [vmem:[%s4675 + $0x2d0] sm:$0xff]
        %v4767 = vld [vmem:[%s4675 + $0x2d8] sm:$0xff]
        %v4768 = vld [vmem:[%s4675 + $0x2e0] sm:$0xff]
        %v4769 = vld [vmem:[%s4675 + $0x2e8] sm:$0xff]
        %v4770 = vld [vmem:[%s4675 + $0x2f0] sm:$0xff]
        %v4771 = vld [vmem:[%s4675 + $0x2f8] sm:$0xff]
        %v4772 = vld [vmem:[%s4675 + $0x300] sm:$0xff]
        %v4773 = vld [vmem:[%s4675 + $0x308] sm:$0xff]
        %v4774 = vld [vmem:[%s4675 + $0x310] sm:$0xff]
        %v4775 = vld [vmem:[%s4675 + $0x318] sm:$0xff]
        %v4776 = vld [vmem:[%s4675 + $0x320] sm:$0xff]
        %v4777 = vld [vmem:[%s4675 + $0x328] sm:$0xff]
        %v4778 = vld [vmem:[%s4675 + $0x330] sm:$0xff]
        %v4779 = vld [vmem:[%s4675 + $0x338] sm:$0xff]
        %v4780 = vld [vmem:[%s4675 + $0x340] sm:$0xff]
        %v4781 = vld [vmem:[%s4675 + $0x348] sm:$0xff]
        %v4782 = vld [vmem:[%s4675 + $0x350] sm:$0xff]
        %v4783 = vld [vmem:[%s4675 + $0x358] sm:$0xff]
        %v4784 = vld [vmem:[%s4675 + $0x360] sm:$0xff]
        %v4785 = vld [vmem:[%s4675 + $0x368] sm:$0xff]
        %v4786 = vld [vmem:[%s4675 + $0x370] sm:$0xff]
        %v4787 = vld [vmem:[%s4675 + $0x378] sm:$0xff]
        %v4788 = vld [vmem:[%s4675 + $0x380] sm:$0xff]
        %v4789 = vld [vmem:[%s4675 + $0x388] sm:$0xff]
        %v4790 = vld [vmem:[%s4675 + $0x390] sm:$0xff]
        %v4791 = vld [vmem:[%s4675 + $0x398] sm:$0xff]
        %v4792 = vld [vmem:[%s4675 + $0x3a0] sm:$0xff]
        %v4793 = vld [vmem:[%s4675 + $0x3a8] sm:$0xff]
        %v4794 = vld [vmem:[%s4675 + $0x3b0] sm:$0xff]
        %v4795 = vld [vmem:[%s4675 + $0x3b8] sm:$0xff]
        %v4796 = vld [vmem:[%s4675 + $0x3c0] sm:$0xff]
        %v4797 = vld [vmem:[%s4675 + $0x3c8] sm:$0xff]
        %v4798 = vld [vmem:[%s4675 + $0x3d0] sm:$0xff]
        %v4799 = vld [vmem:[%s4675 + $0x3d8] sm:$0xff]
        %v4800 = vld [vmem:[%s4675 + $0x3e0] sm:$0xff]
        %v4801 = vld [vmem:[%s4675 + $0x3e8] sm:$0xff]
        %v4802 = vld [vmem:[%s4675 + $0x3f0] sm:$0xff]
        %v4803 = vld [vmem:[%s4675 + $0x3f8] sm:$0xff]
        %v4804 = vrot.slane %v3567, 2
        %v4805 = vrot.slane %v3568, 2
        %4808 = vmatprep.subr.mxu0 %v4737
        %4809 = vmatpush1.msra.mxu0 %v4736
        %4810 = vmatprep.subr.mxu0 %v4733
        %4811 = vmatpush1.msra.mxu0 %v4732
        %4812 = vmatprep.subr.mxu0 %v4729
        %4813 = vmatpush1.msra.mxu0 %v4728
        %4814 = vmatprep.subr.mxu0 %v4725
        %4815 = vmatpush1.msra.mxu0 %v4724
        %4816 = vmatprep.subr.mxu0 %v4721
        %4817 = vmatpush1.msra.mxu0 %v4720
        %4818 = vmatprep.subr.mxu0 %v4717
        %4819 = vmatpush1.msra.mxu0 %v4716
        %4820 = vmatprep.subr.mxu0 %v4713
        %4821 = vmatpush1.msra.mxu0 %v4712
        %4822 = vmatprep.subr.mxu0 %v4709
        %4823 = vmatpush1.msra.mxu0 %v4708
        %4824 = vmatprep.subr.mxu0 %v4705
        %4825 = vmatpush1.msra.mxu0 %v4704
        %4826 = vmatprep.subr.mxu0 %v4701
        %4827 = vmatpush1.msra.mxu0 %v4700
        %4828 = vmatprep.subr.mxu0 %v4697
        %4829 = vmatpush1.msra.mxu0 %v4696
        %4830 = vmatprep.subr.mxu0 %v4693
        %4831 = vmatpush1.msra.mxu0 %v4692
        %4832 = vmatprep.subr.mxu0 %v4689
        %4833 = vmatpush1.msra.mxu0 %v4688
        %4834 = vmatprep.subr.mxu0 %v4685
        %4835 = vmatpush1.msra.mxu0 %v4684
        %4836 = vmatprep.subr.mxu0 %v4681
        %4837 = vmatpush1.msra.mxu0 %v4680
        %4838 = vmatprep.subr.mxu0 %v4677
        %4839 = vmatpush1.msra.mxu0 %v4676
        %4840 = vmatprep.subr.mxu0 %v4801
        %4841 = vmatpush2.msra.mxu0 %v4800
        %4842 = vmatprep.subr.mxu0 %v4797
        %4843 = vmatpush2.msra.mxu0 %v4796
        %4844 = vmatprep.subr.mxu0 %v4793
        %4845 = vmatpush2.msra.mxu0 %v4792
        %4846 = vmatprep.subr.mxu0 %v4789
        %4847 = vmatpush2.msra.mxu0 %v4788
        %4848 = vmatprep.subr.mxu0 %v4785
        %4849 = vmatpush2.msra.mxu0 %v4784
        %4850 = vmatprep.subr.mxu0 %v4781
        %4851 = vmatpush2.msra.mxu0 %v4780
        %4852 = vmatprep.subr.mxu0 %v4777
        %4853 = vmatpush2.msra.mxu0 %v4776
        %4854 = vmatprep.subr.mxu0 %v4773
        %4855 = vmatpush2.msra.mxu0 %v4772
        %4856 = vmatprep.subr.mxu0 %v4769
        %4857 = vmatpush2.msra.mxu0 %v4768
        %4858 = vmatprep.subr.mxu0 %v4765
        %4859 = vmatpush2.msra.mxu0 %v4764
        %4860 = vmatprep.subr.mxu0 %v4761
        %4861 = vmatpush2.msra.mxu0 %v4760
        %4862 = vmatprep.subr.mxu0 %v4757
        %4863 = vmatpush2.msra.mxu0 %v4756
        %4864 = vmatprep.subr.mxu0 %v4753
        %4865 = vmatpush2.msra.mxu0 %v4752
        %4866 = vmatprep.subr.mxu0 %v4749
        %4867 = vmatpush2.msra.mxu0 %v4748
        %4868 = vmatprep.subr.mxu0 %v4745
        %4869 = vmatpush2.msra.mxu0 %v4744
        %4870 = vmatprep.subr.mxu0 %v4741
        %4871 = vmatpush2.msra.mxu0 %v4740
        %4872 = vmatprep.mubr.f32.mxu0 %v4805
        %4873 = vmatmul.mubr.f32.gmra.mxu0 %v4804
        %v4874 = vpop.f32.mrf.mxu0
        %v4875 = vadd.f32 0.0, %v4874
        %v4876 = vpop.f32.mrf.mxu0
        %v4877 = vadd.f32 0.0, %v4876
        %4878 = vdwg.mxu0
        %4879 = vmatprep.subr.mxu0 %v4739
        %4880 = vmatpush1.msra.mxu0 %v4738
        %4881 = vmatprep.subr.mxu0 %v4735
        %4882 = vmatpush1.msra.mxu0 %v4734
        %4883 = vmatprep.subr.mxu0 %v4731
        %4884 = vmatpush1.msra.mxu0 %v4730
        %4885 = vmatprep.subr.mxu0 %v4727
        %4886 = vmatpush1.msra.mxu0 %v4726
        %4887 = vmatprep.subr.mxu0 %v4723
        %4888 = vmatpush1.msra.mxu0 %v4722
        %4889 = vmatprep.subr.mxu0 %v4719
        %4890 = vmatpush1.msra.mxu0 %v4718
        %4891 = vmatprep.subr.mxu0 %v4715
        %4892 = vmatpush1.msra.mxu0 %v4714
        %4893 = vmatprep.subr.mxu0 %v4711
        %4894 = vmatpush1.msra.mxu0 %v4710
        %4895 = vmatprep.subr.mxu0 %v4707
        %4896 = vmatpush1.msra.mxu0 %v4706
        %4897 = vmatprep.subr.mxu0 %v4703
        %4898 = vmatpush1.msra.mxu0 %v4702
        %4899 = vmatprep.subr.mxu0 %v4699
        %4900 = vmatpush1.msra.mxu0 %v4698
        %4901 = vmatprep.subr.mxu0 %v4695
        %4902 = vmatpush1.msra.mxu0 %v4694
        %4903 = vmatprep.subr.mxu0 %v4691
        %4904 = vmatpush1.msra.mxu0 %v4690
        %4905 = vmatprep.subr.mxu0 %v4687
        %4906 = vmatpush1.msra.mxu0 %v4686
        %4907 = vmatprep.subr.mxu0 %v4683
        %4908 = vmatpush1.msra.mxu0 %v4682
        %4909 = vmatprep.subr.mxu0 %v4679
        %4910 = vmatpush1.msra.mxu0 %v4678
        %4911 = vmatprep.subr.mxu0 %v4803
        %4912 = vmatpush2.msra.mxu0 %v4802
        %4913 = vmatprep.subr.mxu0 %v4799
        %4914 = vmatpush2.msra.mxu0 %v4798
        %4915 = vmatprep.subr.mxu0 %v4795
        %4916 = vmatpush2.msra.mxu0 %v4794
        %4917 = vmatprep.subr.mxu0 %v4791
        %4918 = vmatpush2.msra.mxu0 %v4790
        %4919 = vmatprep.subr.mxu0 %v4787
        %4920 = vmatpush2.msra.mxu0 %v4786
        %4921 = vmatprep.subr.mxu0 %v4783
        %4922 = vmatpush2.msra.mxu0 %v4782
        %4923 = vmatprep.subr.mxu0 %v4779
        %4924 = vmatpush2.msra.mxu0 %v4778
        %4925 = vmatprep.subr.mxu0 %v4775
        %4926 = vmatpush2.msra.mxu0 %v4774
        %4927 = vmatprep.subr.mxu0 %v4771
        %4928 = vmatpush2.msra.mxu0 %v4770
        %4929 = vmatprep.subr.mxu0 %v4767
        %4930 = vmatpush2.msra.mxu0 %v4766
        %4931 = vmatprep.subr.mxu0 %v4763
        %4932 = vmatpush2.msra.mxu0 %v4762
        %4933 = vmatprep.subr.mxu0 %v4759
        %4934 = vmatpush2.msra.mxu0 %v4758
        %4935 = vmatprep.subr.mxu0 %v4755
        %4936 = vmatpush2.msra.mxu0 %v4754
        %4937 = vmatprep.subr.mxu0 %v4751
        %4938 = vmatpush2.msra.mxu0 %v4750
        %4939 = vmatprep.subr.mxu0 %v4747
        %4940 = vmatpush2.msra.mxu0 %v4746
        %4941 = vmatprep.subr.mxu0 %v4743
        %4942 = vmatpush2.msra.mxu0 %v4742
        %4943 = vmatprep.mubr.f32.mxu0 %v4805
        %4944 = vmatmul.mubr.f32.gmra.mxu0 %v4804
        %v4945 = vpop.f32.mrf.mxu0
        %v4946 = vadd.f32 0.0, %v4945
        %v4947 = vpop.f32.mrf.mxu0
        %v4948 = vadd.f32 0.0, %v4947
        %4949 = vdwg.mxu0
        %v4950 = vadd.f32 %v4671, %v4875
        %v4951 = vadd.f32 %v4672, %v4877
        %v4952 = vadd.f32 %v4673, %v4946
        %v4953 = vadd.f32 %v4674, %v4948
        %v4955 = vlaneseq
        %v4956 = vshrl.u32 %v4955, 7
        %v4957 = vsub.s32 0, %v4956
        %v4958 = vrot.slane %v3571, %v4957
        %v4959 = vlaneseq
        %v4960 = vshrl.u32 %v4959, 7
        %v4961 = vsub.s32 1, %v4960
        %v4962 = vrot.slane %v3571, %v4961
        %v4963 = vlaneseq
        %v4964 = vshrl.u32 %v4963, 7
        %v4965 = vsub.s32 2, %v4964
        %v4966 = vrot.slane %v3571, %v4965
        %v4967 = vlaneseq
        %v4968 = vshrl.u32 %v4967, 7
        %v4969 = vsub.s32 3, %v4968
        %v4970 = vrot.slane %v3571, %v4969
        %v4975 = vadd.f32 %v4950, %v4958
        %v4976 = vadd.f32 %v4951, %v4962
        %v4977 = vadd.f32 %v4952, %v4966
        %v4978 = vadd.f32 %v4953, %v4970
        %v4979 = vmax.f32 %v4975, 0.0
        %v4980 = vmax.f32 %v4976, 0.0
        %v4981 = vmax.f32 %v4977, 0.0
        %v4982 = vmax.f32 %v4978, 0.0
        %v4983 = vmax.f32 %v4979, %v4981
        %v4984 = vmax.f32 %v4980, %v4982
        %4985 = vmatprep.subr.mxu0 %v3762
        %4986 = vmatpush1.msra.mxu0 %v3761
        %4987 = vmatprep.subr.mxu0 %v3758
        %4988 = vmatpush1.msra.mxu0 %v3757
        %4989 = vmatprep.subr.mxu0 %v3754
        %4990 = vmatpush1.msra.mxu0 %v3753
        %4991 = vmatprep.subr.mxu0 %v3750
        %4992 = vmatpush1.msra.mxu0 %v3749
        %4993 = vmatprep.subr.mxu0 %v3746
        %4994 = vmatpush1.msra.mxu0 %v3745
        %4995 = vmatprep.subr.mxu0 %v3742
        %4996 = vmatpush1.msra.mxu0 %v3741
        %4997 = vmatprep.subr.mxu0 %v3738
        %4998 = vmatpush1.msra.mxu0 %v3737
        %4999 = vmatprep.subr.mxu0 %v3734
        %5000 = vmatpush1.msra.mxu0 %v3733
        %5001 = vmatprep.subr.mxu0 %v3730
        %5002 = vmatpush1.msra.mxu0 %v3729
        %5003 = vmatprep.subr.mxu0 %v3726
        %5004 = vmatpush1.msra.mxu0 %v3725
        %5005 = vmatprep.subr.mxu0 %v3722
        %5006 = vmatpush1.msra.mxu0 %v3721
        %5007 = vmatprep.subr.mxu0 %v3718
        %5008 = vmatpush1.msra.mxu0 %v3717
        %5009 = vmatprep.subr.mxu0 %v3714
        %5010 = vmatpush1.msra.mxu0 %v3713
        %5011 = vmatprep.subr.mxu0 %v3710
        %5012 = vmatpush1.msra.mxu0 %v3709
        %5013 = vmatprep.subr.mxu0 %v3706
        %5014 = vmatpush1.msra.mxu0 %v3705
        %5015 = vmatprep.subr.mxu0 %v3702
        %5016 = vmatpush1.msra.mxu0 %v3701
        %5017 = vmatprep.subr.mxu0 %v3826
        %5018 = vmatpush2.msra.mxu0 %v3825
        %5019 = vmatprep.subr.mxu0 %v3822
        %5020 = vmatpush2.msra.mxu0 %v3821
        %5021 = vmatprep.subr.mxu0 %v3818
        %5022 = vmatpush2.msra.mxu0 %v3817
        %5023 = vmatprep.subr.mxu0 %v3814
        %5024 = vmatpush2.msra.mxu0 %v3813
        %5025 = vmatprep.subr.mxu0 %v3810
        %5026 = vmatpush2.msra.mxu0 %v3809
        %5027 = vmatprep.subr.mxu0 %v3806
        %5028 = vmatpush2.msra.mxu0 %v3805
        %5029 = vmatprep.subr.mxu0 %v3802
        %5030 = vmatpush2.msra.mxu0 %v3801
        %5031 = vmatprep.subr.mxu0 %v3798
        %5032 = vmatpush2.msra.mxu0 %v3797
        %5033 = vmatprep.subr.mxu0 %v3794
        %5034 = vmatpush2.msra.mxu0 %v3793
        %5035 = vmatprep.subr.mxu0 %v3790
        %5036 = vmatpush2.msra.mxu0 %v3789
        %5037 = vmatprep.subr.mxu0 %v3786
        %5038 = vmatpush2.msra.mxu0 %v3785
        %5039 = vmatprep.subr.mxu0 %v3782
        %5040 = vmatpush2.msra.mxu0 %v3781
        %5041 = vmatprep.subr.mxu0 %v3778
        %5042 = vmatpush2.msra.mxu0 %v3777
        %5043 = vmatprep.subr.mxu0 %v3774
        %5044 = vmatpush2.msra.mxu0 %v3773
        %5045 = vmatprep.subr.mxu0 %v3770
        %5046 = vmatpush2.msra.mxu0 %v3769
        %5047 = vmatprep.subr.mxu0 %v3766
        %5048 = vmatpush2.msra.mxu0 %v3765
        %5049 = vmatprep.mubr.f32.mxu0 %v4245
        %5050 = vmatmul.mubr.f32.gmra.mxu0 %v4244
        %v5051 = vpop.f32.mrf.mxu0
        %v5052 = vadd.f32 0.0, %v5051
        %v5053 = vpop.f32.mrf.mxu0
        %v5054 = vadd.f32 0.0, %v5053
        %5055 = vdwg.mxu0
        %5056 = vmatprep.subr.mxu0 %v3764
        %5057 = vmatpush1.msra.mxu0 %v3763
        %5058 = vmatprep.subr.mxu0 %v3760
        %5059 = vmatpush1.msra.mxu0 %v3759
        %5060 = vmatprep.subr.mxu0 %v3756
        %5061 = vmatpush1.msra.mxu0 %v3755
        %5062 = vmatprep.subr.mxu0 %v3752
        %5063 = vmatpush1.msra.mxu0 %v3751
        %5064 = vmatprep.subr.mxu0 %v3748
        %5065 = vmatpush1.msra.mxu0 %v3747
        %5066 = vmatprep.subr.mxu0 %v3744
        %5067 = vmatpush1.msra.mxu0 %v3743
        %5068 = vmatprep.subr.mxu0 %v3740
        %5069 = vmatpush1.msra.mxu0 %v3739
        %5070 = vmatprep.subr.mxu0 %v3736
        %5071 = vmatpush1.msra.mxu0 %v3735
        %5072 = vmatprep.subr.mxu0 %v3732
        %5073 = vmatpush1.msra.mxu0 %v3731
        %5074 = vmatprep.subr.mxu0 %v3728
        %5075 = vmatpush1.msra.mxu0 %v3727
        %5076 = vmatprep.subr.mxu0 %v3724
        %5077 = vmatpush1.msra.mxu0 %v3723
        %5078 = vmatprep.subr.mxu0 %v3720
        %5079 = vmatpush1.msra.mxu0 %v3719
        %5080 = vmatprep.subr.mxu0 %v3716
        %5081 = vmatpush1.msra.mxu0 %v3715
        %5082 = vmatprep.subr.mxu0 %v3712
        %5083 = vmatpush1.msra.mxu0 %v3711
        %5084 = vmatprep.subr.mxu0 %v3708
        %5085 = vmatpush1.msra.mxu0 %v3707
        %5086 = vmatprep.subr.mxu0 %v3704
        %5087 = vmatpush1.msra.mxu0 %v3703
        %5088 = vmatprep.subr.mxu0 %v3828
        %5089 = vmatpush2.msra.mxu0 %v3827
        %5090 = vmatprep.subr.mxu0 %v3824
        %5091 = vmatpush2.msra.mxu0 %v3823
        %5092 = vmatprep.subr.mxu0 %v3820
        %5093 = vmatpush2.msra.mxu0 %v3819
        %5094 = vmatprep.subr.mxu0 %v3816
        %5095 = vmatpush2.msra.mxu0 %v3815
        %5096 = vmatprep.subr.mxu0 %v3812
        %5097 = vmatpush2.msra.mxu0 %v3811
        %5098 = vmatprep.subr.mxu0 %v3808
        %5099 = vmatpush2.msra.mxu0 %v3807
        %5100 = vmatprep.subr.mxu0 %v3804
        %5101 = vmatpush2.msra.mxu0 %v3803
        %5102 = vmatprep.subr.mxu0 %v3800
        %5103 = vmatpush2.msra.mxu0 %v3799
        %5104 = vmatprep.subr.mxu0 %v3796
        %5105 = vmatpush2.msra.mxu0 %v3795
        %5106 = vmatprep.subr.mxu0 %v3792
        %5107 = vmatpush2.msra.mxu0 %v3791
        %5108 = vmatprep.subr.mxu0 %v3788
        %5109 = vmatpush2.msra.mxu0 %v3787
        %5110 = vmatprep.subr.mxu0 %v3784
        %5111 = vmatpush2.msra.mxu0 %v3783
        %5112 = vmatprep.subr.mxu0 %v3780
        %5113 = vmatpush2.msra.mxu0 %v3779
        %5114 = vmatprep.subr.mxu0 %v3776
        %5115 = vmatpush2.msra.mxu0 %v3775
        %5116 = vmatprep.subr.mxu0 %v3772
        %5117 = vmatpush2.msra.mxu0 %v3771
        %5118 = vmatprep.subr.mxu0 %v3768
        %5119 = vmatpush2.msra.mxu0 %v3767
        %5120 = vmatprep.mubr.f32.mxu0 %v4245
        %5121 = vmatmul.mubr.f32.gmra.mxu0 %v4244
        %v5122 = vpop.f32.mrf.mxu0
        %v5123 = vadd.f32 0.0, %v5122
        %v5124 = vpop.f32.mrf.mxu0
        %v5125 = vadd.f32 0.0, %v5124
        %5126 = vdwg.mxu0
        %5127 = vmatprep.subr.mxu0 %v3633
        %5128 = vmatpush1.msra.mxu0 %v3632
        %5129 = vmatprep.subr.mxu0 %v3629
        %5130 = vmatpush1.msra.mxu0 %v3628
        %5131 = vmatprep.subr.mxu0 %v3625
        %5132 = vmatpush1.msra.mxu0 %v3624
        %5133 = vmatprep.subr.mxu0 %v3621
        %5134 = vmatpush1.msra.mxu0 %v3620
        %5135 = vmatprep.subr.mxu0 %v3617
        %5136 = vmatpush1.msra.mxu0 %v3616
        %5137 = vmatprep.subr.mxu0 %v3613
        %5138 = vmatpush1.msra.mxu0 %v3612
        %5139 = vmatprep.subr.mxu0 %v3609
        %5140 = vmatpush1.msra.mxu0 %v3608
        %5141 = vmatprep.subr.mxu0 %v3605
        %5142 = vmatpush1.msra.mxu0 %v3604
        %5143 = vmatprep.subr.mxu0 %v3601
        %5144 = vmatpush1.msra.mxu0 %v3600
        %5145 = vmatprep.subr.mxu0 %v3597
        %5146 = vmatpush1.msra.mxu0 %v3596
        %5147 = vmatprep.subr.mxu0 %v3593
        %5148 = vmatpush1.msra.mxu0 %v3592
        %5149 = vmatprep.subr.mxu0 %v3589
        %5150 = vmatpush1.msra.mxu0 %v3588
        %5151 = vmatprep.subr.mxu0 %v3585
        %5152 = vmatpush1.msra.mxu0 %v3584
        %5153 = vmatprep.subr.mxu0 %v3581
        %5154 = vmatpush1.msra.mxu0 %v3580
        %5155 = vmatprep.subr.mxu0 %v3577
        %5156 = vmatpush1.msra.mxu0 %v3576
        %5157 = vmatprep.subr.mxu0 %v3573
        %5158 = vmatpush1.msra.mxu0 %v3572
        %5159 = vmatprep.subr.mxu0 %v3697
        %5160 = vmatpush2.msra.mxu0 %v3696
        %5161 = vmatprep.subr.mxu0 %v3693
        %5162 = vmatpush2.msra.mxu0 %v3692
        %5163 = vmatprep.subr.mxu0 %v3689
        %5164 = vmatpush2.msra.mxu0 %v3688
        %5165 = vmatprep.subr.mxu0 %v3685
        %5166 = vmatpush2.msra.mxu0 %v3684
        %5167 = vmatprep.subr.mxu0 %v3681
        %5168 = vmatpush2.msra.mxu0 %v3680
        %5169 = vmatprep.subr.mxu0 %v3677
        %5170 = vmatpush2.msra.mxu0 %v3676
        %5171 = vmatprep.subr.mxu0 %v3673
        %5172 = vmatpush2.msra.mxu0 %v3672
        %5173 = vmatprep.subr.mxu0 %v3669
        %5174 = vmatpush2.msra.mxu0 %v3668
        %5175 = vmatprep.subr.mxu0 %v3665
        %5176 = vmatpush2.msra.mxu0 %v3664
        %5177 = vmatprep.subr.mxu0 %v3661
        %5178 = vmatpush2.msra.mxu0 %v3660
        %5179 = vmatprep.subr.mxu0 %v3657
        %5180 = vmatpush2.msra.mxu0 %v3656
        %5181 = vmatprep.subr.mxu0 %v3653
        %5182 = vmatpush2.msra.mxu0 %v3652
        %5183 = vmatprep.subr.mxu0 %v3649
        %5184 = vmatpush2.msra.mxu0 %v3648
        %5185 = vmatprep.subr.mxu0 %v3645
        %5186 = vmatpush2.msra.mxu0 %v3644
        %5187 = vmatprep.subr.mxu0 %v3641
        %5188 = vmatpush2.msra.mxu0 %v3640
        %5189 = vmatprep.subr.mxu0 %v3637
        %5190 = vmatpush2.msra.mxu0 %v3636
        %5191 = vmatprep.mubr.f32.mxu0 %v3570
        %5192 = vmatmul.mubr.f32.gmra.mxu0 %v3569
        %v5193 = vpop.f32.mrf.mxu0
        %v5194 = vadd.f32 %v5052, %v5193
        %v5195 = vpop.f32.mrf.mxu0
        %v5196 = vadd.f32 %v5054, %v5195
        %5197 = vdwg.mxu0
        %5198 = vmatprep.subr.mxu0 %v3635
        %5199 = vmatpush1.msra.mxu0 %v3634
        %5200 = vmatprep.subr.mxu0 %v3631
        %5201 = vmatpush1.msra.mxu0 %v3630
        %5202 = vmatprep.subr.mxu0 %v3627
        %5203 = vmatpush1.msra.mxu0 %v3626
        %5204 = vmatprep.subr.mxu0 %v3623
        %5205 = vmatpush1.msra.mxu0 %v3622
        %5206 = vmatprep.subr.mxu0 %v3619
        %5207 = vmatpush1.msra.mxu0 %v3618
        %5208 = vmatprep.subr.mxu0 %v3615
        %5209 = vmatpush1.msra.mxu0 %v3614
        %5210 = vmatprep.subr.mxu0 %v3611
        %5211 = vmatpush1.msra.mxu0 %v3610
        %5212 = vmatprep.subr.mxu0 %v3607
        %5213 = vmatpush1.msra.mxu0 %v3606
        %5214 = vmatprep.subr.mxu0 %v3603
        %5215 = vmatpush1.msra.mxu0 %v3602
        %5216 = vmatprep.subr.mxu0 %v3599
        %5217 = vmatpush1.msra.mxu0 %v3598
        %5218 = vmatprep.subr.mxu0 %v3595
        %5219 = vmatpush1.msra.mxu0 %v3594
        %5220 = vmatprep.subr.mxu0 %v3591
        %5221 = vmatpush1.msra.mxu0 %v3590
        %5222 = vmatprep.subr.mxu0 %v3587
        %5223 = vmatpush1.msra.mxu0 %v3586
        %5224 = vmatprep.subr.mxu0 %v3583
        %5225 = vmatpush1.msra.mxu0 %v3582
        %5226 = vmatprep.subr.mxu0 %v3579
        %5227 = vmatpush1.msra.mxu0 %v3578
        %5228 = vmatprep.subr.mxu0 %v3575
        %5229 = vmatpush1.msra.mxu0 %v3574
        %5230 = vmatprep.subr.mxu0 %v3699
        %5231 = vmatpush2.msra.mxu0 %v3698
        %5232 = vmatprep.subr.mxu0 %v3695
        %5233 = vmatpush2.msra.mxu0 %v3694
        %5234 = vmatprep.subr.mxu0 %v3691
        %5235 = vmatpush2.msra.mxu0 %v3690
        %5236 = vmatprep.subr.mxu0 %v3687
        %5237 = vmatpush2.msra.mxu0 %v3686
        %5238 = vmatprep.subr.mxu0 %v3683
        %5239 = vmatpush2.msra.mxu0 %v3682
        %5240 = vmatprep.subr.mxu0 %v3679
        %5241 = vmatpush2.msra.mxu0 %v3678
        %5242 = vmatprep.subr.mxu0 %v3675
        %5243 = vmatpush2.msra.mxu0 %v3674
        %5244 = vmatprep.subr.mxu0 %v3671
        %5245 = vmatpush2.msra.mxu0 %v3670
        %5246 = vmatprep.subr.mxu0 %v3667
        %5247 = vmatpush2.msra.mxu0 %v3666
        %5248 = vmatprep.subr.mxu0 %v3663
        %5249 = vmatpush2.msra.mxu0 %v3662
        %5250 = vmatprep.subr.mxu0 %v3659
        %5251 = vmatpush2.msra.mxu0 %v3658
        %5252 = vmatprep.subr.mxu0 %v3655
        %5253 = vmatpush2.msra.mxu0 %v3654
        %5254 = vmatprep.subr.mxu0 %v3651
        %5255 = vmatpush2.msra.mxu0 %v3650
        %5256 = vmatprep.subr.mxu0 %v3647
        %5257 = vmatpush2.msra.mxu0 %v3646
        %5258 = vmatprep.subr.mxu0 %v3643
        %5259 = vmatpush2.msra.mxu0 %v3642
        %5260 = vmatprep.subr.mxu0 %v3639
        %5261 = vmatpush2.msra.mxu0 %v3638
        %5262 = vmatprep.mubr.f32.mxu0 %v3570
        %5263 = vmatmul.mubr.f32.gmra.mxu0 %v3569
        %v5264 = vpop.f32.mrf.mxu0
        %v5265 = vadd.f32 %v5123, %v5264
        %v5266 = vpop.f32.mrf.mxu0
        %v5267 = vadd.f32 %v5125, %v5266
        %5268 = vdwg.mxu0
        %5269 = vmatprep.subr.mxu0 %v4175
        %5270 = vmatpush1.msra.mxu0 %v4174
        %5271 = vmatprep.subr.mxu0 %v4171
        %5272 = vmatpush1.msra.mxu0 %v4170
        %5273 = vmatprep.subr.mxu0 %v4167
        %5274 = vmatpush1.msra.mxu0 %v4166
        %5275 = vmatprep.subr.mxu0 %v4163
        %5276 = vmatpush1.msra.mxu0 %v4162
        %5277 = vmatprep.subr.mxu0 %v4159
        %5278 = vmatpush1.msra.mxu0 %v4158
        %5279 = vmatprep.subr.mxu0 %v4155
        %5280 = vmatpush1.msra.mxu0 %v4154
        %5281 = vmatprep.subr.mxu0 %v4151
        %5282 = vmatpush1.msra.mxu0 %v4150
        %5283 = vmatprep.subr.mxu0 %v4147
        %5284 = vmatpush1.msra.mxu0 %v4146
        %5285 = vmatprep.subr.mxu0 %v4143
        %5286 = vmatpush1.msra.mxu0 %v4142
        %5287 = vmatprep.subr.mxu0 %v4139
        %5288 = vmatpush1.msra.mxu0 %v4138
        %5289 = vmatprep.subr.mxu0 %v4135
        %5290 = vmatpush1.msra.mxu0 %v4134
        %5291 = vmatprep.subr.mxu0 %v4131
        %5292 = vmatpush1.msra.mxu0 %v4130
        %5293 = vmatprep.subr.mxu0 %v4127
        %5294 = vmatpush1.msra.mxu0 %v4126
        %5295 = vmatprep.subr.mxu0 %v4123
        %5296 = vmatpush1.msra.mxu0 %v4122
        %5297 = vmatprep.subr.mxu0 %v4119
        %5298 = vmatpush1.msra.mxu0 %v4118
        %5299 = vmatprep.subr.mxu0 %v4115
        %5300 = vmatpush1.msra.mxu0 %v4114
        %5301 = vmatprep.subr.mxu0 %v4239
        %5302 = vmatpush2.msra.mxu0 %v4238
        %5303 = vmatprep.subr.mxu0 %v4235
        %5304 = vmatpush2.msra.mxu0 %v4234
        %5305 = vmatprep.subr.mxu0 %v4231
        %5306 = vmatpush2.msra.mxu0 %v4230
        %5307 = vmatprep.subr.mxu0 %v4227
        %5308 = vmatpush2.msra.mxu0 %v4226
        %5309 = vmatprep.subr.mxu0 %v4223
        %5310 = vmatpush2.msra.mxu0 %v4222
        %5311 = vmatprep.subr.mxu0 %v4219
        %5312 = vmatpush2.msra.mxu0 %v4218
        %5313 = vmatprep.subr.mxu0 %v4215
        %5314 = vmatpush2.msra.mxu0 %v4214
        %5315 = vmatprep.subr.mxu0 %v4211
        %5316 = vmatpush2.msra.mxu0 %v4210
        %5317 = vmatprep.subr.mxu0 %v4207
        %5318 = vmatpush2.msra.mxu0 %v4206
        %5319 = vmatprep.subr.mxu0 %v4203
        %5320 = vmatpush2.msra.mxu0 %v4202
        %5321 = vmatprep.subr.mxu0 %v4199
        %5322 = vmatpush2.msra.mxu0 %v4198
        %5323 = vmatprep.subr.mxu0 %v4195
        %5324 = vmatpush2.msra.mxu0 %v4194
        %5325 = vmatprep.subr.mxu0 %v4191
        %5326 = vmatpush2.msra.mxu0 %v4190
        %5327 = vmatprep.subr.mxu0 %v4187
        %5328 = vmatpush2.msra.mxu0 %v4186
        %5329 = vmatprep.subr.mxu0 %v4183
        %5330 = vmatpush2.msra.mxu0 %v4182
        %5331 = vmatprep.subr.mxu0 %v4179
        %5332 = vmatpush2.msra.mxu0 %v4178
        %5333 = vmatprep.mubr.f32.mxu0 %v4526
        %5334 = vmatmul.mubr.f32.gmra.mxu0 %v4525
        %v5335 = vpop.f32.mrf.mxu0
        %v5336 = vadd.f32 0.0, %v5335
        %v5337 = vpop.f32.mrf.mxu0
        %v5338 = vadd.f32 0.0, %v5337
        %5339 = vdwg.mxu0
        %5340 = vmatprep.subr.mxu0 %v4177
        %5341 = vmatpush1.msra.mxu0 %v4176
        %5342 = vmatprep.subr.mxu0 %v4173
        %5343 = vmatpush1.msra.mxu0 %v4172
        %5344 = vmatprep.subr.mxu0 %v4169
        %5345 = vmatpush1.msra.mxu0 %v4168
        %5346 = vmatprep.subr.mxu0 %v4165
        %5347 = vmatpush1.msra.mxu0 %v4164
        %5348 = vmatprep.subr.mxu0 %v4161
        %5349 = vmatpush1.msra.mxu0 %v4160
        %5350 = vmatprep.subr.mxu0 %v4157
        %5351 = vmatpush1.msra.mxu0 %v4156
        %5352 = vmatprep.subr.mxu0 %v4153
        %5353 = vmatpush1.msra.mxu0 %v4152
        %5354 = vmatprep.subr.mxu0 %v4149
        %5355 = vmatpush1.msra.mxu0 %v4148
        %5356 = vmatprep.subr.mxu0 %v4145
        %5357 = vmatpush1.msra.mxu0 %v4144
        %5358 = vmatprep.subr.mxu0 %v4141
        %5359 = vmatpush1.msra.mxu0 %v4140
        %5360 = vmatprep.subr.mxu0 %v4137
        %5361 = vmatpush1.msra.mxu0 %v4136
        %5362 = vmatprep.subr.mxu0 %v4133
        %5363 = vmatpush1.msra.mxu0 %v4132
        %5364 = vmatprep.subr.mxu0 %v4129
        %5365 = vmatpush1.msra.mxu0 %v4128
        %5366 = vmatprep.subr.mxu0 %v4125
        %5367 = vmatpush1.msra.mxu0 %v4124
        %5368 = vmatprep.subr.mxu0 %v4121
        %5369 = vmatpush1.msra.mxu0 %v4120
        %5370 = vmatprep.subr.mxu0 %v4117
        %5371 = vmatpush1.msra.mxu0 %v4116
        %5372 = vmatprep.subr.mxu0 %v4241
        %5373 = vmatpush2.msra.mxu0 %v4240
        %5374 = vmatprep.subr.mxu0 %v4237
        %5375 = vmatpush2.msra.mxu0 %v4236
        %5376 = vmatprep.subr.mxu0 %v4233
        %5377 = vmatpush2.msra.mxu0 %v4232
        %5378 = vmatprep.subr.mxu0 %v4229
        %5379 = vmatpush2.msra.mxu0 %v4228
        %5380 = vmatprep.subr.mxu0 %v4225
        %5381 = vmatpush2.msra.mxu0 %v4224
        %5382 = vmatprep.subr.mxu0 %v4221
        %5383 = vmatpush2.msra.mxu0 %v4220
        %5384 = vmatprep.subr.mxu0 %v4217
        %5385 = vmatpush2.msra.mxu0 %v4216
        %5386 = vmatprep.subr.mxu0 %v4213
        %5387 = vmatpush2.msra.mxu0 %v4212
        %5388 = vmatprep.subr.mxu0 %v4209
        %5389 = vmatpush2.msra.mxu0 %v4208
        %5390 = vmatprep.subr.mxu0 %v4205
        %5391 = vmatpush2.msra.mxu0 %v4204
        %5392 = vmatprep.subr.mxu0 %v4201
        %5393 = vmatpush2.msra.mxu0 %v4200
        %5394 = vmatprep.subr.mxu0 %v4197
        %5395 = vmatpush2.msra.mxu0 %v4196
        %5396 = vmatprep.subr.mxu0 %v4193
        %5397 = vmatpush2.msra.mxu0 %v4192
        %5398 = vmatprep.subr.mxu0 %v4189
        %5399 = vmatpush2.msra.mxu0 %v4188
        %5400 = vmatprep.subr.mxu0 %v4185
        %5401 = vmatpush2.msra.mxu0 %v4184
        %5402 = vmatprep.subr.mxu0 %v4181
        %5403 = vmatpush2.msra.mxu0 %v4180
        %5404 = vmatprep.mubr.f32.mxu0 %v4526
        %5405 = vmatmul.mubr.f32.gmra.mxu0 %v4525
        %v5406 = vpop.f32.mrf.mxu0
        %v5407 = vadd.f32 0.0, %v5406
        %v5408 = vpop.f32.mrf.mxu0
        %v5409 = vadd.f32 0.0, %v5408
        %5410 = vdwg.mxu0
        %v5411 = vadd.f32 %v5194, %v5336
        %v5412 = vadd.f32 %v5196, %v5338
        %v5413 = vadd.f32 %v5265, %v5407
        %v5414 = vadd.f32 %v5267, %v5409
        %5415 = vmatprep.subr.mxu0 %v4456
        %5416 = vmatpush1.msra.mxu0 %v4455
        %5417 = vmatprep.subr.mxu0 %v4452
        %5418 = vmatpush1.msra.mxu0 %v4451
        %5419 = vmatprep.subr.mxu0 %v4448
        %5420 = vmatpush1.msra.mxu0 %v4447
        %5421 = vmatprep.subr.mxu0 %v4444
        %5422 = vmatpush1.msra.mxu0 %v4443
        %5423 = vmatprep.subr.mxu0 %v4440
        %5424 = vmatpush1.msra.mxu0 %v4439
        %5425 = vmatprep.subr.mxu0 %v4436
        %5426 = vmatpush1.msra.mxu0 %v4435
        %5427 = vmatprep.subr.mxu0 %v4432
        %5428 = vmatpush1.msra.mxu0 %v4431
        %5429 = vmatprep.subr.mxu0 %v4428
        %5430 = vmatpush1.msra.mxu0 %v4427
        %5431 = vmatprep.subr.mxu0 %v4424
        %5432 = vmatpush1.msra.mxu0 %v4423
        %5433 = vmatprep.subr.mxu0 %v4420
        %5434 = vmatpush1.msra.mxu0 %v4419
        %5435 = vmatprep.subr.mxu0 %v4416
        %5436 = vmatpush1.msra.mxu0 %v4415
        %5437 = vmatprep.subr.mxu0 %v4412
        %5438 = vmatpush1.msra.mxu0 %v4411
        %5439 = vmatprep.subr.mxu0 %v4408
        %5440 = vmatpush1.msra.mxu0 %v4407
        %5441 = vmatprep.subr.mxu0 %v4404
        %5442 = vmatpush1.msra.mxu0 %v4403
        %5443 = vmatprep.subr.mxu0 %v4400
        %5444 = vmatpush1.msra.mxu0 %v4399
        %5445 = vmatprep.subr.mxu0 %v4396
        %5446 = vmatpush1.msra.mxu0 %v4395
        %5447 = vmatprep.subr.mxu0 %v4520
        %5448 = vmatpush2.msra.mxu0 %v4519
        %5449 = vmatprep.subr.mxu0 %v4516
        %5450 = vmatpush2.msra.mxu0 %v4515
        %5451 = vmatprep.subr.mxu0 %v4512
        %5452 = vmatpush2.msra.mxu0 %v4511
        %5453 = vmatprep.subr.mxu0 %v4508
        %5454 = vmatpush2.msra.mxu0 %v4507
        %5455 = vmatprep.subr.mxu0 %v4504
        %5456 = vmatpush2.msra.mxu0 %v4503
        %5457 = vmatprep.subr.mxu0 %v4500
        %5458 = vmatpush2.msra.mxu0 %v4499
        %5459 = vmatprep.subr.mxu0 %v4496
        %5460 = vmatpush2.msra.mxu0 %v4495
        %5461 = vmatprep.subr.mxu0 %v4492
        %5462 = vmatpush2.msra.mxu0 %v4491
        %5463 = vmatprep.subr.mxu0 %v4488
        %5464 = vmatpush2.msra.mxu0 %v4487
        %5465 = vmatprep.subr.mxu0 %v4484
        %5466 = vmatpush2.msra.mxu0 %v4483
        %5467 = vmatprep.subr.mxu0 %v4480
        %5468 = vmatpush2.msra.mxu0 %v4479
        %5469 = vmatprep.subr.mxu0 %v4476
        %5470 = vmatpush2.msra.mxu0 %v4475
        %5471 = vmatprep.subr.mxu0 %v4472
        %5472 = vmatpush2.msra.mxu0 %v4471
        %5473 = vmatprep.subr.mxu0 %v4468
        %5474 = vmatpush2.msra.mxu0 %v4467
        %5475 = vmatprep.subr.mxu0 %v4464
        %5476 = vmatpush2.msra.mxu0 %v4463
        %5477 = vmatprep.subr.mxu0 %v4460
        %5478 = vmatpush2.msra.mxu0 %v4459
        %5479 = vmatprep.mubr.f32.mxu0 %v4805
        %5480 = vmatmul.mubr.f32.gmra.mxu0 %v4804
        %v5481 = vpop.f32.mrf.mxu0
        %v5482 = vadd.f32 0.0, %v5481
        %v5483 = vpop.f32.mrf.mxu0
        %v5484 = vadd.f32 0.0, %v5483
        %5485 = vdwg.mxu0
        %5486 = vmatprep.subr.mxu0 %v4458
        %5487 = vmatpush1.msra.mxu0 %v4457
        %5488 = vmatprep.subr.mxu0 %v4454
        %5489 = vmatpush1.msra.mxu0 %v4453
        %5490 = vmatprep.subr.mxu0 %v4450
        %5491 = vmatpush1.msra.mxu0 %v4449
        %5492 = vmatprep.subr.mxu0 %v4446
        %5493 = vmatpush1.msra.mxu0 %v4445
        %5494 = vmatprep.subr.mxu0 %v4442
        %5495 = vmatpush1.msra.mxu0 %v4441
        %5496 = vmatprep.subr.mxu0 %v4438
        %5497 = vmatpush1.msra.mxu0 %v4437
        %5498 = vmatprep.subr.mxu0 %v4434
        %5499 = vmatpush1.msra.mxu0 %v4433
        %5500 = vmatprep.subr.mxu0 %v4430
        %5501 = vmatpush1.msra.mxu0 %v4429
        %5502 = vmatprep.subr.mxu0 %v4426
        %5503 = vmatpush1.msra.mxu0 %v4425
        %5504 = vmatprep.subr.mxu0 %v4422
        %5505 = vmatpush1.msra.mxu0 %v4421
        %5506 = vmatprep.subr.mxu0 %v4418
        %5507 = vmatpush1.msra.mxu0 %v4417
        %5508 = vmatprep.subr.mxu0 %v4414
        %5509 = vmatpush1.msra.mxu0 %v4413
        %5510 = vmatprep.subr.mxu0 %v4410
        %5511 = vmatpush1.msra.mxu0 %v4409
        %5512 = vmatprep.subr.mxu0 %v4406
        %5513 = vmatpush1.msra.mxu0 %v4405
        %5514 = vmatprep.subr.mxu0 %v4402
        %5515 = vmatpush1.msra.mxu0 %v4401
        %5516 = vmatprep.subr.mxu0 %v4398
        %5517 = vmatpush1.msra.mxu0 %v4397
        %5518 = vmatprep.subr.mxu0 %v4522
        %5519 = vmatpush2.msra.mxu0 %v4521
        %5520 = vmatprep.subr.mxu0 %v4518
        %5521 = vmatpush2.msra.mxu0 %v4517
        %5522 = vmatprep.subr.mxu0 %v4514
        %5523 = vmatpush2.msra.mxu0 %v4513
        %5524 = vmatprep.subr.mxu0 %v4510
        %5525 = vmatpush2.msra.mxu0 %v4509
        %5526 = vmatprep.subr.mxu0 %v4506
        %5527 = vmatpush2.msra.mxu0 %v4505
        %5528 = vmatprep.subr.mxu0 %v4502
        %5529 = vmatpush2.msra.mxu0 %v4501
        %5530 = vmatprep.subr.mxu0 %v4498
        %5531 = vmatpush2.msra.mxu0 %v4497
        %5532 = vmatprep.subr.mxu0 %v4494
        %5533 = vmatpush2.msra.mxu0 %v4493
        %5534 = vmatprep.subr.mxu0 %v4490
        %5535 = vmatpush2.msra.mxu0 %v4489
        %5536 = vmatprep.subr.mxu0 %v4486
        %5537 = vmatpush2.msra.mxu0 %v4485
        %5538 = vmatprep.subr.mxu0 %v4482
        %5539 = vmatpush2.msra.mxu0 %v4481
        %5540 = vmatprep.subr.mxu0 %v4478
        %5541 = vmatpush2.msra.mxu0 %v4477
        %5542 = vmatprep.subr.mxu0 %v4474
        %5543 = vmatpush2.msra.mxu0 %v4473
        %5544 = vmatprep.subr.mxu0 %v4470
        %5545 = vmatpush2.msra.mxu0 %v4469
        %5546 = vmatprep.subr.mxu0 %v4466
        %5547 = vmatpush2.msra.mxu0 %v4465
        %5548 = vmatprep.subr.mxu0 %v4462
        %5549 = vmatpush2.msra.mxu0 %v4461
        %5550 = vmatprep.mubr.f32.mxu0 %v4805
        %5551 = vmatmul.mubr.f32.gmra.mxu0 %v4804
        %v5552 = vpop.f32.mrf.mxu0
        %v5553 = vadd.f32 0.0, %v5552
        %v5554 = vpop.f32.mrf.mxu0
        %v5555 = vadd.f32 0.0, %v5554
        %5556 = vdwg.mxu0
        %v5557 = vadd.f32 %v5411, %v5482
        %v5558 = vadd.f32 %v5412, %v5484
        %v5559 = vadd.f32 %v5413, %v5553
        %v5560 = vadd.f32 %v5414, %v5555
        %v5561 = vrot.slane %v3569, 2
        %v5562 = vrot.slane %v3570, 2
        %5565 = vmatprep.subr.mxu0 %v4737
        %5566 = vmatpush1.msra.mxu0 %v4736
        %5567 = vmatprep.subr.mxu0 %v4733
        %5568 = vmatpush1.msra.mxu0 %v4732
        %5569 = vmatprep.subr.mxu0 %v4729
        %5570 = vmatpush1.msra.mxu0 %v4728
        %5571 = vmatprep.subr.mxu0 %v4725
        %5572 = vmatpush1.msra.mxu0 %v4724
        %5573 = vmatprep.subr.mxu0 %v4721
        %5574 = vmatpush1.msra.mxu0 %v4720
        %5575 = vmatprep.subr.mxu0 %v4717
        %5576 = vmatpush1.msra.mxu0 %v4716
        %5577 = vmatprep.subr.mxu0 %v4713
        %5578 = vmatpush1.msra.mxu0 %v4712
        %5579 = vmatprep.subr.mxu0 %v4709
        %5580 = vmatpush1.msra.mxu0 %v4708
        %5581 = vmatprep.subr.mxu0 %v4705
        %5582 = vmatpush1.msra.mxu0 %v4704
        %5583 = vmatprep.subr.mxu0 %v4701
        %5584 = vmatpush1.msra.mxu0 %v4700
        %5585 = vmatprep.subr.mxu0 %v4697
        %5586 = vmatpush1.msra.mxu0 %v4696
        %5587 = vmatprep.subr.mxu0 %v4693
        %5588 = vmatpush1.msra.mxu0 %v4692
        %5589 = vmatprep.subr.mxu0 %v4689
        %5590 = vmatpush1.msra.mxu0 %v4688
        %5591 = vmatprep.subr.mxu0 %v4685
        %5592 = vmatpush1.msra.mxu0 %v4684
        %5593 = vmatprep.subr.mxu0 %v4681
        %5594 = vmatpush1.msra.mxu0 %v4680
        %5595 = vmatprep.subr.mxu0 %v4677
        %5596 = vmatpush1.msra.mxu0 %v4676
        %5597 = vmatprep.subr.mxu0 %v4801
        %5598 = vmatpush2.msra.mxu0 %v4800
        %5599 = vmatprep.subr.mxu0 %v4797
        %5600 = vmatpush2.msra.mxu0 %v4796
        %5601 = vmatprep.subr.mxu0 %v4793
        %5602 = vmatpush2.msra.mxu0 %v4792
        %5603 = vmatprep.subr.mxu0 %v4789
        %5604 = vmatpush2.msra.mxu0 %v4788
        %5605 = vmatprep.subr.mxu0 %v4785
        %5606 = vmatpush2.msra.mxu0 %v4784
        %5607 = vmatprep.subr.mxu0 %v4781
        %5608 = vmatpush2.msra.mxu0 %v4780
        %5609 = vmatprep.subr.mxu0 %v4777
        %5610 = vmatpush2.msra.mxu0 %v4776
        %5611 = vmatprep.subr.mxu0 %v4773
        %5612 = vmatpush2.msra.mxu0 %v4772
        %5613 = vmatprep.subr.mxu0 %v4769
        %5614 = vmatpush2.msra.mxu0 %v4768
        %5615 = vmatprep.subr.mxu0 %v4765
        %5616 = vmatpush2.msra.mxu0 %v4764
        %5617 = vmatprep.subr.mxu0 %v4761
        %5618 = vmatpush2.msra.mxu0 %v4760
        %5619 = vmatprep.subr.mxu0 %v4757
        %5620 = vmatpush2.msra.mxu0 %v4756
        %5621 = vmatprep.subr.mxu0 %v4753
        %5622 = vmatpush2.msra.mxu0 %v4752
        %5623 = vmatprep.subr.mxu0 %v4749
        %5624 = vmatpush2.msra.mxu0 %v4748
        %5625 = vmatprep.subr.mxu0 %v4745
        %5626 = vmatpush2.msra.mxu0 %v4744
        %5627 = vmatprep.subr.mxu0 %v4741
        %5628 = vmatpush2.msra.mxu0 %v4740
        %5629 = vmatprep.mubr.f32.mxu0 %v5562
        %5630 = vmatmul.mubr.f32.gmra.mxu0 %v5561
        %v5631 = vpop.f32.mrf.mxu0
        %v5632 = vadd.f32 0.0, %v5631
        %v5633 = vpop.f32.mrf.mxu0
        %v5634 = vadd.f32 0.0, %v5633
        %5635 = vdwg.mxu0
        %5636 = vmatprep.subr.mxu0 %v4739
        %5637 = vmatpush1.msra.mxu0 %v4738
        %5638 = vmatprep.subr.mxu0 %v4735
        %5639 = vmatpush1.msra.mxu0 %v4734
        %5640 = vmatprep.subr.mxu0 %v4731
        %5641 = vmatpush1.msra.mxu0 %v4730
        %5642 = vmatprep.subr.mxu0 %v4727
        %5643 = vmatpush1.msra.mxu0 %v4726
        %5644 = vmatprep.subr.mxu0 %v4723
        %5645 = vmatpush1.msra.mxu0 %v4722
        %5646 = vmatprep.subr.mxu0 %v4719
        %5647 = vmatpush1.msra.mxu0 %v4718
        %5648 = vmatprep.subr.mxu0 %v4715
        %5649 = vmatpush1.msra.mxu0 %v4714
        %5650 = vmatprep.subr.mxu0 %v4711
        %5651 = vmatpush1.msra.mxu0 %v4710
        %5652 = vmatprep.subr.mxu0 %v4707
        %5653 = vmatpush1.msra.mxu0 %v4706
        %5654 = vmatprep.subr.mxu0 %v4703
        %5655 = vmatpush1.msra.mxu0 %v4702
        %5656 = vmatprep.subr.mxu0 %v4699
        %5657 = vmatpush1.msra.mxu0 %v4698
        %5658 = vmatprep.subr.mxu0 %v4695
        %5659 = vmatpush1.msra.mxu0 %v4694
        %5660 = vmatprep.subr.mxu0 %v4691
        %5661 = vmatpush1.msra.mxu0 %v4690
        %5662 = vmatprep.subr.mxu0 %v4687
        %5663 = vmatpush1.msra.mxu0 %v4686
        %5664 = vmatprep.subr.mxu0 %v4683
        %5665 = vmatpush1.msra.mxu0 %v4682
        %5666 = vmatprep.subr.mxu0 %v4679
        %5667 = vmatpush1.msra.mxu0 %v4678
        %5668 = vmatprep.subr.mxu0 %v4803
        %5669 = vmatpush2.msra.mxu0 %v4802
        %5670 = vmatprep.subr.mxu0 %v4799
        %5671 = vmatpush2.msra.mxu0 %v4798
        %5672 = vmatprep.subr.mxu0 %v4795
        %5673 = vmatpush2.msra.mxu0 %v4794
        %5674 = vmatprep.subr.mxu0 %v4791
        %5675 = vmatpush2.msra.mxu0 %v4790
        %5676 = vmatprep.subr.mxu0 %v4787
        %5677 = vmatpush2.msra.mxu0 %v4786
        %5678 = vmatprep.subr.mxu0 %v4783
        %5679 = vmatpush2.msra.mxu0 %v4782
        %5680 = vmatprep.subr.mxu0 %v4779
        %5681 = vmatpush2.msra.mxu0 %v4778
        %5682 = vmatprep.subr.mxu0 %v4775
        %5683 = vmatpush2.msra.mxu0 %v4774
        %5684 = vmatprep.subr.mxu0 %v4771
        %5685 = vmatpush2.msra.mxu0 %v4770
        %5686 = vmatprep.subr.mxu0 %v4767
        %5687 = vmatpush2.msra.mxu0 %v4766
        %5688 = vmatprep.subr.mxu0 %v4763
        %5689 = vmatpush2.msra.mxu0 %v4762
        %5690 = vmatprep.subr.mxu0 %v4759
        %5691 = vmatpush2.msra.mxu0 %v4758
        %5692 = vmatprep.subr.mxu0 %v4755
        %5693 = vmatpush2.msra.mxu0 %v4754
        %5694 = vmatprep.subr.mxu0 %v4751
        %5695 = vmatpush2.msra.mxu0 %v4750
        %5696 = vmatprep.subr.mxu0 %v4747
        %5697 = vmatpush2.msra.mxu0 %v4746
        %5698 = vmatprep.subr.mxu0 %v4743
        %5699 = vmatpush2.msra.mxu0 %v4742
        %5700 = vmatprep.mubr.f32.mxu0 %v5562
        %5701 = vmatmul.mubr.f32.gmra.mxu0 %v5561
        %v5702 = vpop.f32.mrf.mxu0
        %v5703 = vadd.f32 0.0, %v5702
        %v5704 = vpop.f32.mrf.mxu0
        %v5705 = vadd.f32 0.0, %v5704
        %5706 = vdwg.mxu0
        %v5707 = vadd.f32 %v5557, %v5632
        %v5708 = vadd.f32 %v5558, %v5634
        %v5709 = vadd.f32 %v5559, %v5703
        %v5710 = vadd.f32 %v5560, %v5705
        %v5711 = vadd.f32 %v5707, %v4958
        %v5712 = vadd.f32 %v5708, %v4962
        %v5713 = vadd.f32 %v5709, %v4966
        %v5714 = vadd.f32 %v5710, %v4970
        %v5715 = vmax.f32 %v5711, 0.0
        %v5716 = vmax.f32 %v5712, 0.0
        %v5717 = vmax.f32 %v5713, 0.0
        %v5718 = vmax.f32 %v5714, 0.0
        %v5719 = vmax.f32 %v5715, %v5717
        %v5720 = vmax.f32 %v5716, %v5718
        %v5721 = vmax.f32 %v4983, %v5719
        %v5722 = vmax.f32 %v4984, %v5720
        %v5723 = vld [vmem:[#allocation10] sm:$0xff]
        %v5724 = vld [vmem:[#allocation10 + $0x8] sm:$0xff]
        %v5725 = vld [vmem:[#allocation10 + $0x10] sm:$0xff]
        %v5726 = vld [vmem:[#allocation10 + $0x18] sm:$0xff]
        %v5727 = vld [vmem:[#allocation10 + $0x20] sm:$0xff]
        %v5728 = vld [vmem:[#allocation10 + $0x28] sm:$0xff]
        %v5729 = vld [vmem:[#allocation10 + $0x30] sm:$0xff]
        %v5730 = vld [vmem:[#allocation10 + $0x38] sm:$0xff]
        %v5731 = vld [vmem:[#allocation10 + $0x40] sm:$0xff]
        %v5732 = vld [vmem:[#allocation10 + $0x48] sm:$0xff]
        %v5733 = vld [vmem:[#allocation10 + $0x50] sm:$0xff]
        %v5734 = vld [vmem:[#allocation10 + $0x58] sm:$0xff]
        %v5735 = vld [vmem:[#allocation10 + $0x60] sm:$0xff]
        %v5736 = vld [vmem:[#allocation10 + $0x68] sm:$0xff]
        %v5737 = vld [vmem:[#allocation10 + $0x70] sm:$0xff]
        %v5738 = vld [vmem:[#allocation10 + $0x78] sm:$0xff]
        %v5739 = vld [vmem:[#allocation10 + $0x80] sm:$0xff]
        %v5740 = vld [vmem:[#allocation10 + $0x88] sm:$0xff]
        %v5741 = vld [vmem:[#allocation10 + $0x90] sm:$0xff]
        %v5742 = vld [vmem:[#allocation10 + $0x98] sm:$0xff]
        %v5743 = vld [vmem:[#allocation10 + $0xa0] sm:$0xff]
        %v5744 = vld [vmem:[#allocation10 + $0xa8] sm:$0xff]
        %v5745 = vld [vmem:[#allocation10 + $0xb0] sm:$0xff]
        %v5746 = vld [vmem:[#allocation10 + $0xb8] sm:$0xff]
        %v5747 = vld [vmem:[#allocation10 + $0xc0] sm:$0xff]
        %v5748 = vld [vmem:[#allocation10 + $0xc8] sm:$0xff]
        %v5749 = vld [vmem:[#allocation10 + $0xd0] sm:$0xff]
        %v5750 = vld [vmem:[#allocation10 + $0xd8] sm:$0xff]
        %v5751 = vld [vmem:[#allocation10 + $0xe0] sm:$0xff]
        %v5752 = vld [vmem:[#allocation10 + $0xe8] sm:$0xff]
        %v5753 = vld [vmem:[#allocation10 + $0xf0] sm:$0xff]
        %v5754 = vld [vmem:[#allocation10 + $0xf8] sm:$0xff]
        %v5755 = vld [vmem:[#allocation10 + $0x100] sm:$0xff]
        %v5756 = vld [vmem:[#allocation10 + $0x108] sm:$0xff]
        %v5757 = vld [vmem:[#allocation10 + $0x110] sm:$0xff]
        %v5758 = vld [vmem:[#allocation10 + $0x118] sm:$0xff]
        %v5759 = vld [vmem:[#allocation10 + $0x120] sm:$0xff]
        %v5760 = vld [vmem:[#allocation10 + $0x128] sm:$0xff]
        %v5761 = vld [vmem:[#allocation10 + $0x130] sm:$0xff]
        %v5762 = vld [vmem:[#allocation10 + $0x138] sm:$0xff]
        %v5763 = vld [vmem:[#allocation10 + $0x140] sm:$0xff]
        %v5764 = vld [vmem:[#allocation10 + $0x148] sm:$0xff]
        %v5765 = vld [vmem:[#allocation10 + $0x150] sm:$0xff]
        %v5766 = vld [vmem:[#allocation10 + $0x158] sm:$0xff]
        %v5767 = vld [vmem:[#allocation10 + $0x160] sm:$0xff]
        %v5768 = vld [vmem:[#allocation10 + $0x168] sm:$0xff]
        %v5769 = vld [vmem:[#allocation10 + $0x170] sm:$0xff]
        %v5770 = vld [vmem:[#allocation10 + $0x178] sm:$0xff]
        %v5771 = vld [vmem:[#allocation10 + $0x180] sm:$0xff]
        %v5772 = vld [vmem:[#allocation10 + $0x188] sm:$0xff]
        %v5773 = vld [vmem:[#allocation10 + $0x190] sm:$0xff]
        %v5774 = vld [vmem:[#allocation10 + $0x198] sm:$0xff]
        %v5775 = vld [vmem:[#allocation10 + $0x1a0] sm:$0xff]
        %v5776 = vld [vmem:[#allocation10 + $0x1a8] sm:$0xff]
        %v5777 = vld [vmem:[#allocation10 + $0x1b0] sm:$0xff]
        %v5778 = vld [vmem:[#allocation10 + $0x1b8] sm:$0xff]
        %v5779 = vld [vmem:[#allocation10 + $0x1c0] sm:$0xff]
        %v5780 = vld [vmem:[#allocation10 + $0x1c8] sm:$0xff]
        %v5781 = vld [vmem:[#allocation10 + $0x1d0] sm:$0xff]
        %v5782 = vld [vmem:[#allocation10 + $0x1d8] sm:$0xff]
        %v5783 = vld [vmem:[#allocation10 + $0x1e0] sm:$0xff]
        %v5784 = vld [vmem:[#allocation10 + $0x1e8] sm:$0xff]
        %v5785 = vld [vmem:[#allocation10 + $0x1f0] sm:$0xff]
        %v5786 = vld [vmem:[#allocation10 + $0x1f8] sm:$0xff]
        %v5787 = vld [vmem:[#allocation10 + $0x200] sm:$0xff]
        %v5788 = vld [vmem:[#allocation10 + $0x208] sm:$0xff]
        %v5789 = vld [vmem:[#allocation10 + $0x210] sm:$0xff]
        %v5790 = vld [vmem:[#allocation10 + $0x218] sm:$0xff]
        %v5791 = vld [vmem:[#allocation10 + $0x220] sm:$0xff]
        %v5792 = vld [vmem:[#allocation10 + $0x228] sm:$0xff]
        %v5793 = vld [vmem:[#allocation10 + $0x230] sm:$0xff]
        %v5794 = vld [vmem:[#allocation10 + $0x238] sm:$0xff]
        %v5795 = vld [vmem:[#allocation10 + $0x240] sm:$0xff]
        %v5796 = vld [vmem:[#allocation10 + $0x248] sm:$0xff]
        %v5797 = vld [vmem:[#allocation10 + $0x250] sm:$0xff]
        %v5798 = vld [vmem:[#allocation10 + $0x258] sm:$0xff]
        %v5799 = vld [vmem:[#allocation10 + $0x260] sm:$0xff]
        %v5800 = vld [vmem:[#allocation10 + $0x268] sm:$0xff]
        %v5801 = vld [vmem:[#allocation10 + $0x270] sm:$0xff]
        %v5802 = vld [vmem:[#allocation10 + $0x278] sm:$0xff]
        %v5803 = vld [vmem:[#allocation10 + $0x280] sm:$0xff]
        %v5804 = vld [vmem:[#allocation10 + $0x288] sm:$0xff]
        %v5805 = vld [vmem:[#allocation10 + $0x290] sm:$0xff]
        %v5806 = vld [vmem:[#allocation10 + $0x298] sm:$0xff]
        %v5807 = vld [vmem:[#allocation10 + $0x2a0] sm:$0xff]
        %v5808 = vld [vmem:[#allocation10 + $0x2a8] sm:$0xff]
        %v5809 = vld [vmem:[#allocation10 + $0x2b0] sm:$0xff]
        %v5810 = vld [vmem:[#allocation10 + $0x2b8] sm:$0xff]
        %v5811 = vld [vmem:[#allocation10 + $0x2c0] sm:$0xff]
        %v5812 = vld [vmem:[#allocation10 + $0x2c8] sm:$0xff]
        %v5813 = vld [vmem:[#allocation10 + $0x2d0] sm:$0xff]
        %v5814 = vld [vmem:[#allocation10 + $0x2d8] sm:$0xff]
        %v5815 = vld [vmem:[#allocation10 + $0x2e0] sm:$0xff]
        %v5816 = vld [vmem:[#allocation10 + $0x2e8] sm:$0xff]
        %v5817 = vld [vmem:[#allocation10 + $0x2f0] sm:$0xff]
        %v5818 = vld [vmem:[#allocation10 + $0x2f8] sm:$0xff]
        %v5819 = vld [vmem:[#allocation10 + $0x300] sm:$0xff]
        %v5820 = vld [vmem:[#allocation10 + $0x308] sm:$0xff]
        %v5821 = vld [vmem:[#allocation10 + $0x310] sm:$0xff]
        %v5822 = vld [vmem:[#allocation10 + $0x318] sm:$0xff]
        %v5823 = vld [vmem:[#allocation10 + $0x320] sm:$0xff]
        %v5824 = vld [vmem:[#allocation10 + $0x328] sm:$0xff]
        %v5825 = vld [vmem:[#allocation10 + $0x330] sm:$0xff]
        %v5826 = vld [vmem:[#allocation10 + $0x338] sm:$0xff]
        %v5827 = vld [vmem:[#allocation10 + $0x340] sm:$0xff]
        %v5828 = vld [vmem:[#allocation10 + $0x348] sm:$0xff]
        %v5829 = vld [vmem:[#allocation10 + $0x350] sm:$0xff]
        %v5830 = vld [vmem:[#allocation10 + $0x358] sm:$0xff]
        %v5831 = vld [vmem:[#allocation10 + $0x360] sm:$0xff]
        %v5832 = vld [vmem:[#allocation10 + $0x368] sm:$0xff]
        %v5833 = vld [vmem:[#allocation10 + $0x370] sm:$0xff]
        %v5834 = vld [vmem:[#allocation10 + $0x378] sm:$0xff]
        %v5835 = vld [vmem:[#allocation10 + $0x380] sm:$0xff]
        %v5836 = vld [vmem:[#allocation10 + $0x388] sm:$0xff]
        %v5837 = vld [vmem:[#allocation10 + $0x390] sm:$0xff]
        %v5838 = vld [vmem:[#allocation10 + $0x398] sm:$0xff]
        %v5839 = vld [vmem:[#allocation10 + $0x3a0] sm:$0xff]
        %v5840 = vld [vmem:[#allocation10 + $0x3a8] sm:$0xff]
        %v5841 = vld [vmem:[#allocation10 + $0x3b0] sm:$0xff]
        %v5842 = vld [vmem:[#allocation10 + $0x3b8] sm:$0xff]
        %v5843 = vld [vmem:[#allocation10 + $0x3c0] sm:$0xff]
        %v5844 = vld [vmem:[#allocation10 + $0x3c8] sm:$0xff]
        %v5845 = vld [vmem:[#allocation10 + $0x3d0] sm:$0xff]
        %v5846 = vld [vmem:[#allocation10 + $0x3d8] sm:$0xff]
        %v5847 = vld [vmem:[#allocation10 + $0x3e0] sm:$0xff]
        %v5848 = vld [vmem:[#allocation10 + $0x3e8] sm:$0xff]
        %v5849 = vld [vmem:[#allocation10 + $0x3f0] sm:$0xff]
        %v5850 = vld [vmem:[#allocation10 + $0x3f8] sm:$0xff]
        %s5851 = scalar_lea.vmem [#allocation10], 1024
        %v5852 = vld [vmem:[%s5851] sm:$0xff]
        %v5853 = vld [vmem:[%s5851 + $0x8] sm:$0xff]
        %v5854 = vld [vmem:[%s5851 + $0x10] sm:$0xff]
        %v5855 = vld [vmem:[%s5851 + $0x18] sm:$0xff]
        %v5856 = vld [vmem:[%s5851 + $0x20] sm:$0xff]
        %v5857 = vld [vmem:[%s5851 + $0x28] sm:$0xff]
        %v5858 = vld [vmem:[%s5851 + $0x30] sm:$0xff]
        %v5859 = vld [vmem:[%s5851 + $0x38] sm:$0xff]
        %v5860 = vld [vmem:[%s5851 + $0x40] sm:$0xff]
        %v5861 = vld [vmem:[%s5851 + $0x48] sm:$0xff]
        %v5862 = vld [vmem:[%s5851 + $0x50] sm:$0xff]
        %v5863 = vld [vmem:[%s5851 + $0x58] sm:$0xff]
        %v5864 = vld [vmem:[%s5851 + $0x60] sm:$0xff]
        %v5865 = vld [vmem:[%s5851 + $0x68] sm:$0xff]
        %v5866 = vld [vmem:[%s5851 + $0x70] sm:$0xff]
        %v5867 = vld [vmem:[%s5851 + $0x78] sm:$0xff]
        %v5868 = vld [vmem:[%s5851 + $0x80] sm:$0xff]
        %v5869 = vld [vmem:[%s5851 + $0x88] sm:$0xff]
        %v5870 = vld [vmem:[%s5851 + $0x90] sm:$0xff]
        %v5871 = vld [vmem:[%s5851 + $0x98] sm:$0xff]
        %v5872 = vld [vmem:[%s5851 + $0xa0] sm:$0xff]
        %v5873 = vld [vmem:[%s5851 + $0xa8] sm:$0xff]
        %v5874 = vld [vmem:[%s5851 + $0xb0] sm:$0xff]
        %v5875 = vld [vmem:[%s5851 + $0xb8] sm:$0xff]
        %v5876 = vld [vmem:[%s5851 + $0xc0] sm:$0xff]
        %v5877 = vld [vmem:[%s5851 + $0xc8] sm:$0xff]
        %v5878 = vld [vmem:[%s5851 + $0xd0] sm:$0xff]
        %v5879 = vld [vmem:[%s5851 + $0xd8] sm:$0xff]
        %v5880 = vld [vmem:[%s5851 + $0xe0] sm:$0xff]
        %v5881 = vld [vmem:[%s5851 + $0xe8] sm:$0xff]
        %v5882 = vld [vmem:[%s5851 + $0xf0] sm:$0xff]
        %v5883 = vld [vmem:[%s5851 + $0xf8] sm:$0xff]
        %v5884 = vld [vmem:[%s5851 + $0x100] sm:$0xff]
        %v5885 = vld [vmem:[%s5851 + $0x108] sm:$0xff]
        %v5886 = vld [vmem:[%s5851 + $0x110] sm:$0xff]
        %v5887 = vld [vmem:[%s5851 + $0x118] sm:$0xff]
        %v5888 = vld [vmem:[%s5851 + $0x120] sm:$0xff]
        %v5889 = vld [vmem:[%s5851 + $0x128] sm:$0xff]
        %v5890 = vld [vmem:[%s5851 + $0x130] sm:$0xff]
        %v5891 = vld [vmem:[%s5851 + $0x138] sm:$0xff]
        %v5892 = vld [vmem:[%s5851 + $0x140] sm:$0xff]
        %v5893 = vld [vmem:[%s5851 + $0x148] sm:$0xff]
        %v5894 = vld [vmem:[%s5851 + $0x150] sm:$0xff]
        %v5895 = vld [vmem:[%s5851 + $0x158] sm:$0xff]
        %v5896 = vld [vmem:[%s5851 + $0x160] sm:$0xff]
        %v5897 = vld [vmem:[%s5851 + $0x168] sm:$0xff]
        %v5898 = vld [vmem:[%s5851 + $0x170] sm:$0xff]
        %v5899 = vld [vmem:[%s5851 + $0x178] sm:$0xff]
        %v5900 = vld [vmem:[%s5851 + $0x180] sm:$0xff]
        %v5901 = vld [vmem:[%s5851 + $0x188] sm:$0xff]
        %v5902 = vld [vmem:[%s5851 + $0x190] sm:$0xff]
        %v5903 = vld [vmem:[%s5851 + $0x198] sm:$0xff]
        %v5904 = vld [vmem:[%s5851 + $0x1a0] sm:$0xff]
        %v5905 = vld [vmem:[%s5851 + $0x1a8] sm:$0xff]
        %v5906 = vld [vmem:[%s5851 + $0x1b0] sm:$0xff]
        %v5907 = vld [vmem:[%s5851 + $0x1b8] sm:$0xff]
        %v5908 = vld [vmem:[%s5851 + $0x1c0] sm:$0xff]
        %v5909 = vld [vmem:[%s5851 + $0x1c8] sm:$0xff]
        %v5910 = vld [vmem:[%s5851 + $0x1d0] sm:$0xff]
        %v5911 = vld [vmem:[%s5851 + $0x1d8] sm:$0xff]
        %v5912 = vld [vmem:[%s5851 + $0x1e0] sm:$0xff]
        %v5913 = vld [vmem:[%s5851 + $0x1e8] sm:$0xff]
        %v5914 = vld [vmem:[%s5851 + $0x1f0] sm:$0xff]
        %v5915 = vld [vmem:[%s5851 + $0x1f8] sm:$0xff]
        %v5916 = vld [vmem:[%s5851 + $0x200] sm:$0xff]
        %v5917 = vld [vmem:[%s5851 + $0x208] sm:$0xff]
        %v5918 = vld [vmem:[%s5851 + $0x210] sm:$0xff]
        %v5919 = vld [vmem:[%s5851 + $0x218] sm:$0xff]
        %v5920 = vld [vmem:[%s5851 + $0x220] sm:$0xff]
        %v5921 = vld [vmem:[%s5851 + $0x228] sm:$0xff]
        %v5922 = vld [vmem:[%s5851 + $0x230] sm:$0xff]
        %v5923 = vld [vmem:[%s5851 + $0x238] sm:$0xff]
        %v5924 = vld [vmem:[%s5851 + $0x240] sm:$0xff]
        %v5925 = vld [vmem:[%s5851 + $0x248] sm:$0xff]
        %v5926 = vld [vmem:[%s5851 + $0x250] sm:$0xff]
        %v5927 = vld [vmem:[%s5851 + $0x258] sm:$0xff]
        %v5928 = vld [vmem:[%s5851 + $0x260] sm:$0xff]
        %v5929 = vld [vmem:[%s5851 + $0x268] sm:$0xff]
        %v5930 = vld [vmem:[%s5851 + $0x270] sm:$0xff]
        %v5931 = vld [vmem:[%s5851 + $0x278] sm:$0xff]
        %v5932 = vld [vmem:[%s5851 + $0x280] sm:$0xff]
        %v5933 = vld [vmem:[%s5851 + $0x288] sm:$0xff]
        %v5934 = vld [vmem:[%s5851 + $0x290] sm:$0xff]
        %v5935 = vld [vmem:[%s5851 + $0x298] sm:$0xff]
        %v5936 = vld [vmem:[%s5851 + $0x2a0] sm:$0xff]
        %v5937 = vld [vmem:[%s5851 + $0x2a8] sm:$0xff]
        %v5938 = vld [vmem:[%s5851 + $0x2b0] sm:$0xff]
        %v5939 = vld [vmem:[%s5851 + $0x2b8] sm:$0xff]
        %v5940 = vld [vmem:[%s5851 + $0x2c0] sm:$0xff]
        %v5941 = vld [vmem:[%s5851 + $0x2c8] sm:$0xff]
        %v5942 = vld [vmem:[%s5851 + $0x2d0] sm:$0xff]
        %v5943 = vld [vmem:[%s5851 + $0x2d8] sm:$0xff]
        %v5944 = vld [vmem:[%s5851 + $0x2e0] sm:$0xff]
        %v5945 = vld [vmem:[%s5851 + $0x2e8] sm:$0xff]
        %v5946 = vld [vmem:[%s5851 + $0x2f0] sm:$0xff]
        %v5947 = vld [vmem:[%s5851 + $0x2f8] sm:$0xff]
        %v5948 = vld [vmem:[%s5851 + $0x300] sm:$0xff]
        %v5949 = vld [vmem:[%s5851 + $0x308] sm:$0xff]
        %v5950 = vld [vmem:[%s5851 + $0x310] sm:$0xff]
        %v5951 = vld [vmem:[%s5851 + $0x318] sm:$0xff]
        %v5952 = vld [vmem:[%s5851 + $0x320] sm:$0xff]
        %v5953 = vld [vmem:[%s5851 + $0x328] sm:$0xff]
        %v5954 = vld [vmem:[%s5851 + $0x330] sm:$0xff]
        %v5955 = vld [vmem:[%s5851 + $0x338] sm:$0xff]
        %v5956 = vld [vmem:[%s5851 + $0x340] sm:$0xff]
        %v5957 = vld [vmem:[%s5851 + $0x348] sm:$0xff]
        %v5958 = vld [vmem:[%s5851 + $0x350] sm:$0xff]
        %v5959 = vld [vmem:[%s5851 + $0x358] sm:$0xff]
        %v5960 = vld [vmem:[%s5851 + $0x360] sm:$0xff]
        %v5961 = vld [vmem:[%s5851 + $0x368] sm:$0xff]
        %v5962 = vld [vmem:[%s5851 + $0x370] sm:$0xff]
        %v5963 = vld [vmem:[%s5851 + $0x378] sm:$0xff]
        %v5964 = vld [vmem:[%s5851 + $0x380] sm:$0xff]
        %v5965 = vld [vmem:[%s5851 + $0x388] sm:$0xff]
        %v5966 = vld [vmem:[%s5851 + $0x390] sm:$0xff]
        %v5967 = vld [vmem:[%s5851 + $0x398] sm:$0xff]
        %v5968 = vld [vmem:[%s5851 + $0x3a0] sm:$0xff]
        %v5969 = vld [vmem:[%s5851 + $0x3a8] sm:$0xff]
        %v5970 = vld [vmem:[%s5851 + $0x3b0] sm:$0xff]
        %v5971 = vld [vmem:[%s5851 + $0x3b8] sm:$0xff]
        %v5972 = vld [vmem:[%s5851 + $0x3c0] sm:$0xff]
        %v5973 = vld [vmem:[%s5851 + $0x3c8] sm:$0xff]
        %v5974 = vld [vmem:[%s5851 + $0x3d0] sm:$0xff]
        %v5975 = vld [vmem:[%s5851 + $0x3d8] sm:$0xff]
        %v5976 = vld [vmem:[%s5851 + $0x3e0] sm:$0xff]
        %v5977 = vld [vmem:[%s5851 + $0x3e8] sm:$0xff]
        %v5978 = vld [vmem:[%s5851 + $0x3f0] sm:$0xff]
        %v5979 = vld [vmem:[%s5851 + $0x3f8] sm:$0xff]
        %v5982 = vrot.slane %v5721, 1
        %v5983 = vrot.slane %v5722, 1
        %5986 = vmatprep.subr.mxu0 %v5913
        %5987 = vmatpush1.msra.mxu0 %v5912
        %5988 = vmatprep.subr.mxu0 %v5909
        %5989 = vmatpush1.msra.mxu0 %v5908
        %5990 = vmatprep.subr.mxu0 %v5905
        %5991 = vmatpush1.msra.mxu0 %v5904
        %5992 = vmatprep.subr.mxu0 %v5901
        %5993 = vmatpush1.msra.mxu0 %v5900
        %5994 = vmatprep.subr.mxu0 %v5897
        %5995 = vmatpush1.msra.mxu0 %v5896
        %5996 = vmatprep.subr.mxu0 %v5893
        %5997 = vmatpush1.msra.mxu0 %v5892
        %5998 = vmatprep.subr.mxu0 %v5889
        %5999 = vmatpush1.msra.mxu0 %v5888
        %6000 = vmatprep.subr.mxu0 %v5885
        %6001 = vmatpush1.msra.mxu0 %v5884
        %6002 = vmatprep.subr.mxu0 %v5881
        %6003 = vmatpush1.msra.mxu0 %v5880
        %6004 = vmatprep.subr.mxu0 %v5877
        %6005 = vmatpush1.msra.mxu0 %v5876
        %6006 = vmatprep.subr.mxu0 %v5873
        %6007 = vmatpush1.msra.mxu0 %v5872
        %6008 = vmatprep.subr.mxu0 %v5869
        %6009 = vmatpush1.msra.mxu0 %v5868
        %6010 = vmatprep.subr.mxu0 %v5865
        %6011 = vmatpush1.msra.mxu0 %v5864
        %6012 = vmatprep.subr.mxu0 %v5861
        %6013 = vmatpush1.msra.mxu0 %v5860
        %6014 = vmatprep.subr.mxu0 %v5857
        %6015 = vmatpush1.msra.mxu0 %v5856
        %6016 = vmatprep.subr.mxu0 %v5853
        %6017 = vmatpush1.msra.mxu0 %v5852
        %6018 = vmatprep.subr.mxu0 %v5977
        %6019 = vmatpush2.msra.mxu0 %v5976
        %6020 = vmatprep.subr.mxu0 %v5973
        %6021 = vmatpush2.msra.mxu0 %v5972
        %6022 = vmatprep.subr.mxu0 %v5969
        %6023 = vmatpush2.msra.mxu0 %v5968
        %6024 = vmatprep.subr.mxu0 %v5965
        %6025 = vmatpush2.msra.mxu0 %v5964
        %6026 = vmatprep.subr.mxu0 %v5961
        %6027 = vmatpush2.msra.mxu0 %v5960
        %6028 = vmatprep.subr.mxu0 %v5957
        %6029 = vmatpush2.msra.mxu0 %v5956
        %6030 = vmatprep.subr.mxu0 %v5953
        %6031 = vmatpush2.msra.mxu0 %v5952
        %6032 = vmatprep.subr.mxu0 %v5949
        %6033 = vmatpush2.msra.mxu0 %v5948
        %6034 = vmatprep.subr.mxu0 %v5945
        %6035 = vmatpush2.msra.mxu0 %v5944
        %6036 = vmatprep.subr.mxu0 %v5941
        %6037 = vmatpush2.msra.mxu0 %v5940
        %6038 = vmatprep.subr.mxu0 %v5937
        %6039 = vmatpush2.msra.mxu0 %v5936
        %6040 = vmatprep.subr.mxu0 %v5933
        %6041 = vmatpush2.msra.mxu0 %v5932
        %6042 = vmatprep.subr.mxu0 %v5929
        %6043 = vmatpush2.msra.mxu0 %v5928
        %6044 = vmatprep.subr.mxu0 %v5925
        %6045 = vmatpush2.msra.mxu0 %v5924
        %6046 = vmatprep.subr.mxu0 %v5921
        %6047 = vmatpush2.msra.mxu0 %v5920
        %6048 = vmatprep.subr.mxu0 %v5917
        %6049 = vmatpush2.msra.mxu0 %v5916
        %6050 = vmatprep.mubr.f32.mxu0 %v5983
        %6051 = vmatmul.mubr.f32.gmra.mxu0 %v5982
        %v6052 = vpop.f32.mrf.mxu0
        %v6053 = vadd.f32 0.0, %v6052
        %v6054 = vpop.f32.mrf.mxu0
        %v6055 = vadd.f32 0.0, %v6054
        %6056 = vdwg.mxu0
        %6057 = vmatprep.subr.mxu0 %v5915
        %6058 = vmatpush1.msra.mxu0 %v5914
        %6059 = vmatprep.subr.mxu0 %v5911
        %6060 = vmatpush1.msra.mxu0 %v5910
        %6061 = vmatprep.subr.mxu0 %v5907
        %6062 = vmatpush1.msra.mxu0 %v5906
        %6063 = vmatprep.subr.mxu0 %v5903
        %6064 = vmatpush1.msra.mxu0 %v5902
        %6065 = vmatprep.subr.mxu0 %v5899
        %6066 = vmatpush1.msra.mxu0 %v5898
        %6067 = vmatprep.subr.mxu0 %v5895
        %6068 = vmatpush1.msra.mxu0 %v5894
        %6069 = vmatprep.subr.mxu0 %v5891
        %6070 = vmatpush1.msra.mxu0 %v5890
        %6071 = vmatprep.subr.mxu0 %v5887
        %6072 = vmatpush1.msra.mxu0 %v5886
        %6073 = vmatprep.subr.mxu0 %v5883
        %6074 = vmatpush1.msra.mxu0 %v5882
        %6075 = vmatprep.subr.mxu0 %v5879
        %6076 = vmatpush1.msra.mxu0 %v5878
        %6077 = vmatprep.subr.mxu0 %v5875
        %6078 = vmatpush1.msra.mxu0 %v5874
        %6079 = vmatprep.subr.mxu0 %v5871
        %6080 = vmatpush1.msra.mxu0 %v5870
        %6081 = vmatprep.subr.mxu0 %v5867
        %6082 = vmatpush1.msra.mxu0 %v5866
        %6083 = vmatprep.subr.mxu0 %v5863
        %6084 = vmatpush1.msra.mxu0 %v5862
        %6085 = vmatprep.subr.mxu0 %v5859
        %6086 = vmatpush1.msra.mxu0 %v5858
        %6087 = vmatprep.subr.mxu0 %v5855
        %6088 = vmatpush1.msra.mxu0 %v5854
        %6089 = vmatprep.subr.mxu0 %v5979
        %6090 = vmatpush2.msra.mxu0 %v5978
        %6091 = vmatprep.subr.mxu0 %v5975
        %6092 = vmatpush2.msra.mxu0 %v5974
        %6093 = vmatprep.subr.mxu0 %v5971
        %6094 = vmatpush2.msra.mxu0 %v5970
        %6095 = vmatprep.subr.mxu0 %v5967
        %6096 = vmatpush2.msra.mxu0 %v5966
        %6097 = vmatprep.subr.mxu0 %v5963
        %6098 = vmatpush2.msra.mxu0 %v5962
        %6099 = vmatprep.subr.mxu0 %v5959
        %6100 = vmatpush2.msra.mxu0 %v5958
        %6101 = vmatprep.subr.mxu0 %v5955
        %6102 = vmatpush2.msra.mxu0 %v5954
        %6103 = vmatprep.subr.mxu0 %v5951
        %6104 = vmatpush2.msra.mxu0 %v5950
        %6105 = vmatprep.subr.mxu0 %v5947
        %6106 = vmatpush2.msra.mxu0 %v5946
        %6107 = vmatprep.subr.mxu0 %v5943
        %6108 = vmatpush2.msra.mxu0 %v5942
        %6109 = vmatprep.subr.mxu0 %v5939
        %6110 = vmatpush2.msra.mxu0 %v5938
        %6111 = vmatprep.subr.mxu0 %v5935
        %6112 = vmatpush2.msra.mxu0 %v5934
        %6113 = vmatprep.subr.mxu0 %v5931
        %6114 = vmatpush2.msra.mxu0 %v5930
        %6115 = vmatprep.subr.mxu0 %v5927
        %6116 = vmatpush2.msra.mxu0 %v5926
        %6117 = vmatprep.subr.mxu0 %v5923
        %6118 = vmatpush2.msra.mxu0 %v5922
        %6119 = vmatprep.subr.mxu0 %v5919
        %6120 = vmatpush2.msra.mxu0 %v5918
        %6121 = vmatprep.mubr.f32.mxu0 %v5983
        %6122 = vmatmul.mubr.f32.gmra.mxu0 %v5982
        %v6123 = vpop.f32.mrf.mxu0
        %v6124 = vadd.f32 0.0, %v6123
        %v6125 = vpop.f32.mrf.mxu0
        %v6126 = vadd.f32 0.0, %v6125
        %6127 = vdwg.mxu0
        %6128 = vmatprep.subr.mxu0 %v5784
        %6129 = vmatpush1.msra.mxu0 %v5783
        %6130 = vmatprep.subr.mxu0 %v5780
        %6131 = vmatpush1.msra.mxu0 %v5779
        %6132 = vmatprep.subr.mxu0 %v5776
        %6133 = vmatpush1.msra.mxu0 %v5775
        %6134 = vmatprep.subr.mxu0 %v5772
        %6135 = vmatpush1.msra.mxu0 %v5771
        %6136 = vmatprep.subr.mxu0 %v5768
        %6137 = vmatpush1.msra.mxu0 %v5767
        %6138 = vmatprep.subr.mxu0 %v5764
        %6139 = vmatpush1.msra.mxu0 %v5763
        %6140 = vmatprep.subr.mxu0 %v5760
        %6141 = vmatpush1.msra.mxu0 %v5759
        %6142 = vmatprep.subr.mxu0 %v5756
        %6143 = vmatpush1.msra.mxu0 %v5755
        %6144 = vmatprep.subr.mxu0 %v5752
        %6145 = vmatpush1.msra.mxu0 %v5751
        %6146 = vmatprep.subr.mxu0 %v5748
        %6147 = vmatpush1.msra.mxu0 %v5747
        %6148 = vmatprep.subr.mxu0 %v5744
        %6149 = vmatpush1.msra.mxu0 %v5743
        %6150 = vmatprep.subr.mxu0 %v5740
        %6151 = vmatpush1.msra.mxu0 %v5739
        %6152 = vmatprep.subr.mxu0 %v5736
        %6153 = vmatpush1.msra.mxu0 %v5735
        %6154 = vmatprep.subr.mxu0 %v5732
        %6155 = vmatpush1.msra.mxu0 %v5731
        %6156 = vmatprep.subr.mxu0 %v5728
        %6157 = vmatpush1.msra.mxu0 %v5727
        %6158 = vmatprep.subr.mxu0 %v5724
        %6159 = vmatpush1.msra.mxu0 %v5723
        %6160 = vmatprep.subr.mxu0 %v5848
        %6161 = vmatpush2.msra.mxu0 %v5847
        %6162 = vmatprep.subr.mxu0 %v5844
        %6163 = vmatpush2.msra.mxu0 %v5843
        %6164 = vmatprep.subr.mxu0 %v5840
        %6165 = vmatpush2.msra.mxu0 %v5839
        %6166 = vmatprep.subr.mxu0 %v5836
        %6167 = vmatpush2.msra.mxu0 %v5835
        %6168 = vmatprep.subr.mxu0 %v5832
        %6169 = vmatpush2.msra.mxu0 %v5831
        %6170 = vmatprep.subr.mxu0 %v5828
        %6171 = vmatpush2.msra.mxu0 %v5827
        %6172 = vmatprep.subr.mxu0 %v5824
        %6173 = vmatpush2.msra.mxu0 %v5823
        %6174 = vmatprep.subr.mxu0 %v5820
        %6175 = vmatpush2.msra.mxu0 %v5819
        %6176 = vmatprep.subr.mxu0 %v5816
        %6177 = vmatpush2.msra.mxu0 %v5815
        %6178 = vmatprep.subr.mxu0 %v5812
        %6179 = vmatpush2.msra.mxu0 %v5811
        %6180 = vmatprep.subr.mxu0 %v5808
        %6181 = vmatpush2.msra.mxu0 %v5807
        %6182 = vmatprep.subr.mxu0 %v5804
        %6183 = vmatpush2.msra.mxu0 %v5803
        %6184 = vmatprep.subr.mxu0 %v5800
        %6185 = vmatpush2.msra.mxu0 %v5799
        %6186 = vmatprep.subr.mxu0 %v5796
        %6187 = vmatpush2.msra.mxu0 %v5795
        %6188 = vmatprep.subr.mxu0 %v5792
        %6189 = vmatpush2.msra.mxu0 %v5791
        %6190 = vmatprep.subr.mxu0 %v5788
        %6191 = vmatpush2.msra.mxu0 %v5787
        %6192 = vmatprep.mubr.f32.mxu0 %v5722
        %6193 = vmatmul.mubr.f32.gmra.mxu0 %v5721
        %v6194 = vpop.f32.mrf.mxu0
        %v6195 = vadd.f32 %v6053, %v6194
        %v6196 = vpop.f32.mrf.mxu0
        %v6197 = vadd.f32 %v6055, %v6196
        %6198 = vdwg.mxu0
        %6199 = vmatprep.subr.mxu0 %v5786
        %6200 = vmatpush1.msra.mxu0 %v5785
        %6201 = vmatprep.subr.mxu0 %v5782
        %6202 = vmatpush1.msra.mxu0 %v5781
        %6203 = vmatprep.subr.mxu0 %v5778
        %6204 = vmatpush1.msra.mxu0 %v5777
        %6205 = vmatprep.subr.mxu0 %v5774
        %6206 = vmatpush1.msra.mxu0 %v5773
        %6207 = vmatprep.subr.mxu0 %v5770
        %6208 = vmatpush1.msra.mxu0 %v5769
        %6209 = vmatprep.subr.mxu0 %v5766
        %6210 = vmatpush1.msra.mxu0 %v5765
        %6211 = vmatprep.subr.mxu0 %v5762
        %6212 = vmatpush1.msra.mxu0 %v5761
        %6213 = vmatprep.subr.mxu0 %v5758
        %6214 = vmatpush1.msra.mxu0 %v5757
        %6215 = vmatprep.subr.mxu0 %v5754
        %6216 = vmatpush1.msra.mxu0 %v5753
        %6217 = vmatprep.subr.mxu0 %v5750
        %6218 = vmatpush1.msra.mxu0 %v5749
        %6219 = vmatprep.subr.mxu0 %v5746
        %6220 = vmatpush1.msra.mxu0 %v5745
        %6221 = vmatprep.subr.mxu0 %v5742
        %6222 = vmatpush1.msra.mxu0 %v5741
        %6223 = vmatprep.subr.mxu0 %v5738
        %6224 = vmatpush1.msra.mxu0 %v5737
        %6225 = vmatprep.subr.mxu0 %v5734
        %6226 = vmatpush1.msra.mxu0 %v5733
        %6227 = vmatprep.subr.mxu0 %v5730
        %6228 = vmatpush1.msra.mxu0 %v5729
        %6229 = vmatprep.subr.mxu0 %v5726
        %6230 = vmatpush1.msra.mxu0 %v5725
        %6231 = vmatprep.subr.mxu0 %v5850
        %6232 = vmatpush2.msra.mxu0 %v5849
        %6233 = vmatprep.subr.mxu0 %v5846
        %6234 = vmatpush2.msra.mxu0 %v5845
        %6235 = vmatprep.subr.mxu0 %v5842
        %6236 = vmatpush2.msra.mxu0 %v5841
        %6237 = vmatprep.subr.mxu0 %v5838
        %6238 = vmatpush2.msra.mxu0 %v5837
        %6239 = vmatprep.subr.mxu0 %v5834
        %6240 = vmatpush2.msra.mxu0 %v5833
        %6241 = vmatprep.subr.mxu0 %v5830
        %6242 = vmatpush2.msra.mxu0 %v5829
        %6243 = vmatprep.subr.mxu0 %v5826
        %6244 = vmatpush2.msra.mxu0 %v5825
        %6245 = vmatprep.subr.mxu0 %v5822
        %6246 = vmatpush2.msra.mxu0 %v5821
        %6247 = vmatprep.subr.mxu0 %v5818
        %6248 = vmatpush2.msra.mxu0 %v5817
        %6249 = vmatprep.subr.mxu0 %v5814
        %6250 = vmatpush2.msra.mxu0 %v5813
        %6251 = vmatprep.subr.mxu0 %v5810
        %6252 = vmatpush2.msra.mxu0 %v5809
        %6253 = vmatprep.subr.mxu0 %v5806
        %6254 = vmatpush2.msra.mxu0 %v5805
        %6255 = vmatprep.subr.mxu0 %v5802
        %6256 = vmatpush2.msra.mxu0 %v5801
        %6257 = vmatprep.subr.mxu0 %v5798
        %6258 = vmatpush2.msra.mxu0 %v5797
        %6259 = vmatprep.subr.mxu0 %v5794
        %6260 = vmatpush2.msra.mxu0 %v5793
        %6261 = vmatprep.subr.mxu0 %v5790
        %6262 = vmatpush2.msra.mxu0 %v5789
        %6263 = vmatprep.mubr.f32.mxu0 %v5722
        %6264 = vmatmul.mubr.f32.gmra.mxu0 %v5721
        %v6265 = vpop.f32.mrf.mxu0
        %v6266 = vadd.f32 %v6124, %v6265
        %v6267 = vpop.f32.mrf.mxu0
        %v6268 = vadd.f32 %v6126, %v6267
        %6269 = vdwg.mxu0
        %s6270 = scalar_lea.vmem [#allocation10], 2048
        %v6271 = vld [vmem:[%s6270] sm:$0xff]
        %v6272 = vld [vmem:[%s6270 + $0x8] sm:$0xff]
        %v6273 = vld [vmem:[%s6270 + $0x10] sm:$0xff]
        %v6274 = vld [vmem:[%s6270 + $0x18] sm:$0xff]
        %v6275 = vld [vmem:[%s6270 + $0x20] sm:$0xff]
        %v6276 = vld [vmem:[%s6270 + $0x28] sm:$0xff]
        %v6277 = vld [vmem:[%s6270 + $0x30] sm:$0xff]
        %v6278 = vld [vmem:[%s6270 + $0x38] sm:$0xff]
        %v6279 = vld [vmem:[%s6270 + $0x40] sm:$0xff]
        %v6280 = vld [vmem:[%s6270 + $0x48] sm:$0xff]
        %v6281 = vld [vmem:[%s6270 + $0x50] sm:$0xff]
        %v6282 = vld [vmem:[%s6270 + $0x58] sm:$0xff]
        %v6283 = vld [vmem:[%s6270 + $0x60] sm:$0xff]
        %v6284 = vld [vmem:[%s6270 + $0x68] sm:$0xff]
        %v6285 = vld [vmem:[%s6270 + $0x70] sm:$0xff]
        %v6286 = vld [vmem:[%s6270 + $0x78] sm:$0xff]
        %v6287 = vld [vmem:[%s6270 + $0x80] sm:$0xff]
        %v6288 = vld [vmem:[%s6270 + $0x88] sm:$0xff]
        %v6289 = vld [vmem:[%s6270 + $0x90] sm:$0xff]
        %v6290 = vld [vmem:[%s6270 + $0x98] sm:$0xff]
        %v6291 = vld [vmem:[%s6270 + $0xa0] sm:$0xff]
        %v6292 = vld [vmem:[%s6270 + $0xa8] sm:$0xff]
        %v6293 = vld [vmem:[%s6270 + $0xb0] sm:$0xff]
        %v6294 = vld [vmem:[%s6270 + $0xb8] sm:$0xff]
        %v6295 = vld [vmem:[%s6270 + $0xc0] sm:$0xff]
        %v6296 = vld [vmem:[%s6270 + $0xc8] sm:$0xff]
        %v6297 = vld [vmem:[%s6270 + $0xd0] sm:$0xff]
        %v6298 = vld [vmem:[%s6270 + $0xd8] sm:$0xff]
        %v6299 = vld [vmem:[%s6270 + $0xe0] sm:$0xff]
        %v6300 = vld [vmem:[%s6270 + $0xe8] sm:$0xff]
        %v6301 = vld [vmem:[%s6270 + $0xf0] sm:$0xff]
        %v6302 = vld [vmem:[%s6270 + $0xf8] sm:$0xff]
        %v6303 = vld [vmem:[%s6270 + $0x100] sm:$0xff]
        %v6304 = vld [vmem:[%s6270 + $0x108] sm:$0xff]
        %v6305 = vld [vmem:[%s6270 + $0x110] sm:$0xff]
        %v6306 = vld [vmem:[%s6270 + $0x118] sm:$0xff]
        %v6307 = vld [vmem:[%s6270 + $0x120] sm:$0xff]
        %v6308 = vld [vmem:[%s6270 + $0x128] sm:$0xff]
        %v6309 = vld [vmem:[%s6270 + $0x130] sm:$0xff]
        %v6310 = vld [vmem:[%s6270 + $0x138] sm:$0xff]
        %v6311 = vld [vmem:[%s6270 + $0x140] sm:$0xff]
        %v6312 = vld [vmem:[%s6270 + $0x148] sm:$0xff]
        %v6313 = vld [vmem:[%s6270 + $0x150] sm:$0xff]
        %v6314 = vld [vmem:[%s6270 + $0x158] sm:$0xff]
        %v6315 = vld [vmem:[%s6270 + $0x160] sm:$0xff]
        %v6316 = vld [vmem:[%s6270 + $0x168] sm:$0xff]
        %v6317 = vld [vmem:[%s6270 + $0x170] sm:$0xff]
        %v6318 = vld [vmem:[%s6270 + $0x178] sm:$0xff]
        %v6319 = vld [vmem:[%s6270 + $0x180] sm:$0xff]
        %v6320 = vld [vmem:[%s6270 + $0x188] sm:$0xff]
        %v6321 = vld [vmem:[%s6270 + $0x190] sm:$0xff]
        %v6322 = vld [vmem:[%s6270 + $0x198] sm:$0xff]
        %v6323 = vld [vmem:[%s6270 + $0x1a0] sm:$0xff]
        %v6324 = vld [vmem:[%s6270 + $0x1a8] sm:$0xff]
        %v6325 = vld [vmem:[%s6270 + $0x1b0] sm:$0xff]
        %v6326 = vld [vmem:[%s6270 + $0x1b8] sm:$0xff]
        %v6327 = vld [vmem:[%s6270 + $0x1c0] sm:$0xff]
        %v6328 = vld [vmem:[%s6270 + $0x1c8] sm:$0xff]
        %v6329 = vld [vmem:[%s6270 + $0x1d0] sm:$0xff]
        %v6330 = vld [vmem:[%s6270 + $0x1d8] sm:$0xff]
        %v6331 = vld [vmem:[%s6270 + $0x1e0] sm:$0xff]
        %v6332 = vld [vmem:[%s6270 + $0x1e8] sm:$0xff]
        %v6333 = vld [vmem:[%s6270 + $0x1f0] sm:$0xff]
        %v6334 = vld [vmem:[%s6270 + $0x1f8] sm:$0xff]
        %v6335 = vld [vmem:[%s6270 + $0x200] sm:$0xff]
        %v6336 = vld [vmem:[%s6270 + $0x208] sm:$0xff]
        %v6337 = vld [vmem:[%s6270 + $0x210] sm:$0xff]
        %v6338 = vld [vmem:[%s6270 + $0x218] sm:$0xff]
        %v6339 = vld [vmem:[%s6270 + $0x220] sm:$0xff]
        %v6340 = vld [vmem:[%s6270 + $0x228] sm:$0xff]
        %v6341 = vld [vmem:[%s6270 + $0x230] sm:$0xff]
        %v6342 = vld [vmem:[%s6270 + $0x238] sm:$0xff]
        %v6343 = vld [vmem:[%s6270 + $0x240] sm:$0xff]
        %v6344 = vld [vmem:[%s6270 + $0x248] sm:$0xff]
        %v6345 = vld [vmem:[%s6270 + $0x250] sm:$0xff]
        %v6346 = vld [vmem:[%s6270 + $0x258] sm:$0xff]
        %v6347 = vld [vmem:[%s6270 + $0x260] sm:$0xff]
        %v6348 = vld [vmem:[%s6270 + $0x268] sm:$0xff]
        %v6349 = vld [vmem:[%s6270 + $0x270] sm:$0xff]
        %v6350 = vld [vmem:[%s6270 + $0x278] sm:$0xff]
        %v6351 = vld [vmem:[%s6270 + $0x280] sm:$0xff]
        %v6352 = vld [vmem:[%s6270 + $0x288] sm:$0xff]
        %v6353 = vld [vmem:[%s6270 + $0x290] sm:$0xff]
        %v6354 = vld [vmem:[%s6270 + $0x298] sm:$0xff]
        %v6355 = vld [vmem:[%s6270 + $0x2a0] sm:$0xff]
        %v6356 = vld [vmem:[%s6270 + $0x2a8] sm:$0xff]
        %v6357 = vld [vmem:[%s6270 + $0x2b0] sm:$0xff]
        %v6358 = vld [vmem:[%s6270 + $0x2b8] sm:$0xff]
        %v6359 = vld [vmem:[%s6270 + $0x2c0] sm:$0xff]
        %v6360 = vld [vmem:[%s6270 + $0x2c8] sm:$0xff]
        %v6361 = vld [vmem:[%s6270 + $0x2d0] sm:$0xff]
        %v6362 = vld [vmem:[%s6270 + $0x2d8] sm:$0xff]
        %v6363 = vld [vmem:[%s6270 + $0x2e0] sm:$0xff]
        %v6364 = vld [vmem:[%s6270 + $0x2e8] sm:$0xff]
        %v6365 = vld [vmem:[%s6270 + $0x2f0] sm:$0xff]
        %v6366 = vld [vmem:[%s6270 + $0x2f8] sm:$0xff]
        %v6367 = vld [vmem:[%s6270 + $0x300] sm:$0xff]
        %v6368 = vld [vmem:[%s6270 + $0x308] sm:$0xff]
        %v6369 = vld [vmem:[%s6270 + $0x310] sm:$0xff]
        %v6370 = vld [vmem:[%s6270 + $0x318] sm:$0xff]
        %v6371 = vld [vmem:[%s6270 + $0x320] sm:$0xff]
        %v6372 = vld [vmem:[%s6270 + $0x328] sm:$0xff]
        %v6373 = vld [vmem:[%s6270 + $0x330] sm:$0xff]
        %v6374 = vld [vmem:[%s6270 + $0x338] sm:$0xff]
        %v6375 = vld [vmem:[%s6270 + $0x340] sm:$0xff]
        %v6376 = vld [vmem:[%s6270 + $0x348] sm:$0xff]
        %v6377 = vld [vmem:[%s6270 + $0x350] sm:$0xff]
        %v6378 = vld [vmem:[%s6270 + $0x358] sm:$0xff]
        %v6379 = vld [vmem:[%s6270 + $0x360] sm:$0xff]
        %v6380 = vld [vmem:[%s6270 + $0x368] sm:$0xff]
        %v6381 = vld [vmem:[%s6270 + $0x370] sm:$0xff]
        %v6382 = vld [vmem:[%s6270 + $0x378] sm:$0xff]
        %v6383 = vld [vmem:[%s6270 + $0x380] sm:$0xff]
        %v6384 = vld [vmem:[%s6270 + $0x388] sm:$0xff]
        %v6385 = vld [vmem:[%s6270 + $0x390] sm:$0xff]
        %v6386 = vld [vmem:[%s6270 + $0x398] sm:$0xff]
        %v6387 = vld [vmem:[%s6270 + $0x3a0] sm:$0xff]
        %v6388 = vld [vmem:[%s6270 + $0x3a8] sm:$0xff]
        %v6389 = vld [vmem:[%s6270 + $0x3b0] sm:$0xff]
        %v6390 = vld [vmem:[%s6270 + $0x3b8] sm:$0xff]
        %v6391 = vld [vmem:[%s6270 + $0x3c0] sm:$0xff]
        %v6392 = vld [vmem:[%s6270 + $0x3c8] sm:$0xff]
        %v6393 = vld [vmem:[%s6270 + $0x3d0] sm:$0xff]
        %v6394 = vld [vmem:[%s6270 + $0x3d8] sm:$0xff]
        %v6395 = vld [vmem:[%s6270 + $0x3e0] sm:$0xff]
        %v6396 = vld [vmem:[%s6270 + $0x3e8] sm:$0xff]
        %v6397 = vld [vmem:[%s6270 + $0x3f0] sm:$0xff]
        %v6398 = vld [vmem:[%s6270 + $0x3f8] sm:$0xff]
        %v6399 = vrot.slane %v5721, 2
        %v6400 = vrot.slane %v5722, 2
        %6403 = vmatprep.subr.mxu0 %v6332
        %6404 = vmatpush1.msra.mxu0 %v6331
        %6405 = vmatprep.subr.mxu0 %v6328
        %6406 = vmatpush1.msra.mxu0 %v6327
        %6407 = vmatprep.subr.mxu0 %v6324
        %6408 = vmatpush1.msra.mxu0 %v6323
        %6409 = vmatprep.subr.mxu0 %v6320
        %6410 = vmatpush1.msra.mxu0 %v6319
        %6411 = vmatprep.subr.mxu0 %v6316
        %6412 = vmatpush1.msra.mxu0 %v6315
        %6413 = vmatprep.subr.mxu0 %v6312
        %6414 = vmatpush1.msra.mxu0 %v6311
        %6415 = vmatprep.subr.mxu0 %v6308
        %6416 = vmatpush1.msra.mxu0 %v6307
        %6417 = vmatprep.subr.mxu0 %v6304
        %6418 = vmatpush1.msra.mxu0 %v6303
        %6419 = vmatprep.subr.mxu0 %v6300
        %6420 = vmatpush1.msra.mxu0 %v6299
        %6421 = vmatprep.subr.mxu0 %v6296
        %6422 = vmatpush1.msra.mxu0 %v6295
        %6423 = vmatprep.subr.mxu0 %v6292
        %6424 = vmatpush1.msra.mxu0 %v6291
        %6425 = vmatprep.subr.mxu0 %v6288
        %6426 = vmatpush1.msra.mxu0 %v6287
        %6427 = vmatprep.subr.mxu0 %v6284
        %6428 = vmatpush1.msra.mxu0 %v6283
        %6429 = vmatprep.subr.mxu0 %v6280
        %6430 = vmatpush1.msra.mxu0 %v6279
        %6431 = vmatprep.subr.mxu0 %v6276
        %6432 = vmatpush1.msra.mxu0 %v6275
        %6433 = vmatprep.subr.mxu0 %v6272
        %6434 = vmatpush1.msra.mxu0 %v6271
        %6435 = vmatprep.subr.mxu0 %v6396
        %6436 = vmatpush2.msra.mxu0 %v6395
        %6437 = vmatprep.subr.mxu0 %v6392
        %6438 = vmatpush2.msra.mxu0 %v6391
        %6439 = vmatprep.subr.mxu0 %v6388
        %6440 = vmatpush2.msra.mxu0 %v6387
        %6441 = vmatprep.subr.mxu0 %v6384
        %6442 = vmatpush2.msra.mxu0 %v6383
        %6443 = vmatprep.subr.mxu0 %v6380
        %6444 = vmatpush2.msra.mxu0 %v6379
        %6445 = vmatprep.subr.mxu0 %v6376
        %6446 = vmatpush2.msra.mxu0 %v6375
        %6447 = vmatprep.subr.mxu0 %v6372
        %6448 = vmatpush2.msra.mxu0 %v6371
        %6449 = vmatprep.subr.mxu0 %v6368
        %6450 = vmatpush2.msra.mxu0 %v6367
        %6451 = vmatprep.subr.mxu0 %v6364
        %6452 = vmatpush2.msra.mxu0 %v6363
        %6453 = vmatprep.subr.mxu0 %v6360
        %6454 = vmatpush2.msra.mxu0 %v6359
        %6455 = vmatprep.subr.mxu0 %v6356
        %6456 = vmatpush2.msra.mxu0 %v6355
        %6457 = vmatprep.subr.mxu0 %v6352
        %6458 = vmatpush2.msra.mxu0 %v6351
        %6459 = vmatprep.subr.mxu0 %v6348
        %6460 = vmatpush2.msra.mxu0 %v6347
        %6461 = vmatprep.subr.mxu0 %v6344
        %6462 = vmatpush2.msra.mxu0 %v6343
        %6463 = vmatprep.subr.mxu0 %v6340
        %6464 = vmatpush2.msra.mxu0 %v6339
        %6465 = vmatprep.subr.mxu0 %v6336
        %6466 = vmatpush2.msra.mxu0 %v6335
        %6467 = vmatprep.mubr.f32.mxu0 %v6400
        %6468 = vmatmul.mubr.f32.gmra.mxu0 %v6399
        %v6469 = vpop.f32.mrf.mxu0
        %v6470 = vadd.f32 0.0, %v6469
        %v6471 = vpop.f32.mrf.mxu0
        %v6472 = vadd.f32 0.0, %v6471
        %6473 = vdwg.mxu0
        %6474 = vmatprep.subr.mxu0 %v6334
        %6475 = vmatpush1.msra.mxu0 %v6333
        %6476 = vmatprep.subr.mxu0 %v6330
        %6477 = vmatpush1.msra.mxu0 %v6329
        %6478 = vmatprep.subr.mxu0 %v6326
        %6479 = vmatpush1.msra.mxu0 %v6325
        %6480 = vmatprep.subr.mxu0 %v6322
        %6481 = vmatpush1.msra.mxu0 %v6321
        %6482 = vmatprep.subr.mxu0 %v6318
        %6483 = vmatpush1.msra.mxu0 %v6317
        %6484 = vmatprep.subr.mxu0 %v6314
        %6485 = vmatpush1.msra.mxu0 %v6313
        %6486 = vmatprep.subr.mxu0 %v6310
        %6487 = vmatpush1.msra.mxu0 %v6309
        %6488 = vmatprep.subr.mxu0 %v6306
        %6489 = vmatpush1.msra.mxu0 %v6305
        %6490 = vmatprep.subr.mxu0 %v6302
        %6491 = vmatpush1.msra.mxu0 %v6301
        %6492 = vmatprep.subr.mxu0 %v6298
        %6493 = vmatpush1.msra.mxu0 %v6297
        %6494 = vmatprep.subr.mxu0 %v6294
        %6495 = vmatpush1.msra.mxu0 %v6293
        %6496 = vmatprep.subr.mxu0 %v6290
        %6497 = vmatpush1.msra.mxu0 %v6289
        %6498 = vmatprep.subr.mxu0 %v6286
        %6499 = vmatpush1.msra.mxu0 %v6285
        %6500 = vmatprep.subr.mxu0 %v6282
        %6501 = vmatpush1.msra.mxu0 %v6281
        %6502 = vmatprep.subr.mxu0 %v6278
        %6503 = vmatpush1.msra.mxu0 %v6277
        %6504 = vmatprep.subr.mxu0 %v6274
        %6505 = vmatpush1.msra.mxu0 %v6273
        %6506 = vmatprep.subr.mxu0 %v6398
        %6507 = vmatpush2.msra.mxu0 %v6397
        %6508 = vmatprep.subr.mxu0 %v6394
        %6509 = vmatpush2.msra.mxu0 %v6393
        %6510 = vmatprep.subr.mxu0 %v6390
        %6511 = vmatpush2.msra.mxu0 %v6389
        %6512 = vmatprep.subr.mxu0 %v6386
        %6513 = vmatpush2.msra.mxu0 %v6385
        %6514 = vmatprep.subr.mxu0 %v6382
        %6515 = vmatpush2.msra.mxu0 %v6381
        %6516 = vmatprep.subr.mxu0 %v6378
        %6517 = vmatpush2.msra.mxu0 %v6377
        %6518 = vmatprep.subr.mxu0 %v6374
        %6519 = vmatpush2.msra.mxu0 %v6373
        %6520 = vmatprep.subr.mxu0 %v6370
        %6521 = vmatpush2.msra.mxu0 %v6369
        %6522 = vmatprep.subr.mxu0 %v6366
        %6523 = vmatpush2.msra.mxu0 %v6365
        %6524 = vmatprep.subr.mxu0 %v6362
        %6525 = vmatpush2.msra.mxu0 %v6361
        %6526 = vmatprep.subr.mxu0 %v6358
        %6527 = vmatpush2.msra.mxu0 %v6357
        %6528 = vmatprep.subr.mxu0 %v6354
        %6529 = vmatpush2.msra.mxu0 %v6353
        %6530 = vmatprep.subr.mxu0 %v6350
        %6531 = vmatpush2.msra.mxu0 %v6349
        %6532 = vmatprep.subr.mxu0 %v6346
        %6533 = vmatpush2.msra.mxu0 %v6345
        %6534 = vmatprep.subr.mxu0 %v6342
        %6535 = vmatpush2.msra.mxu0 %v6341
        %6536 = vmatprep.subr.mxu0 %v6338
        %6537 = vmatpush2.msra.mxu0 %v6337
        %6538 = vmatprep.mubr.f32.mxu0 %v6400
        %6539 = vmatmul.mubr.f32.gmra.mxu0 %v6399
        %v6540 = vpop.f32.mrf.mxu0
        %v6541 = vadd.f32 0.0, %v6540
        %v6542 = vpop.f32.mrf.mxu0
        %v6543 = vadd.f32 0.0, %v6542
        %6544 = vdwg.mxu0
        %v6545 = vadd.f32 %v6195, %v6470
        %v6546 = vadd.f32 %v6197, %v6472
        %v6547 = vadd.f32 %v6266, %v6541
        %v6548 = vadd.f32 %v6268, %v6543
        %s6549 = scalar_lea.vmem [#allocation10], 3072
        %v6550 = vld [vmem:[%s6549] sm:$0xff]
        %v6551 = vld [vmem:[%s6549 + $0x8] sm:$0xff]
        %v6552 = vld [vmem:[%s6549 + $0x10] sm:$0xff]
        %v6553 = vld [vmem:[%s6549 + $0x18] sm:$0xff]
        %v6554 = vld [vmem:[%s6549 + $0x20] sm:$0xff]
        %v6555 = vld [vmem:[%s6549 + $0x28] sm:$0xff]
        %v6556 = vld [vmem:[%s6549 + $0x30] sm:$0xff]
        %v6557 = vld [vmem:[%s6549 + $0x38] sm:$0xff]
        %v6558 = vld [vmem:[%s6549 + $0x40] sm:$0xff]
        %v6559 = vld [vmem:[%s6549 + $0x48] sm:$0xff]
        %v6560 = vld [vmem:[%s6549 + $0x50] sm:$0xff]
        %v6561 = vld [vmem:[%s6549 + $0x58] sm:$0xff]
        %v6562 = vld [vmem:[%s6549 + $0x60] sm:$0xff]
        %v6563 = vld [vmem:[%s6549 + $0x68] sm:$0xff]
        %v6564 = vld [vmem:[%s6549 + $0x70] sm:$0xff]
        %v6565 = vld [vmem:[%s6549 + $0x78] sm:$0xff]
        %v6566 = vld [vmem:[%s6549 + $0x80] sm:$0xff]
        %v6567 = vld [vmem:[%s6549 + $0x88] sm:$0xff]
        %v6568 = vld [vmem:[%s6549 + $0x90] sm:$0xff]
        %v6569 = vld [vmem:[%s6549 + $0x98] sm:$0xff]
        %v6570 = vld [vmem:[%s6549 + $0xa0] sm:$0xff]
        %v6571 = vld [vmem:[%s6549 + $0xa8] sm:$0xff]
        %v6572 = vld [vmem:[%s6549 + $0xb0] sm:$0xff]
        %v6573 = vld [vmem:[%s6549 + $0xb8] sm:$0xff]
        %v6574 = vld [vmem:[%s6549 + $0xc0] sm:$0xff]
        %v6575 = vld [vmem:[%s6549 + $0xc8] sm:$0xff]
        %v6576 = vld [vmem:[%s6549 + $0xd0] sm:$0xff]
        %v6577 = vld [vmem:[%s6549 + $0xd8] sm:$0xff]
        %v6578 = vld [vmem:[%s6549 + $0xe0] sm:$0xff]
        %v6579 = vld [vmem:[%s6549 + $0xe8] sm:$0xff]
        %v6580 = vld [vmem:[%s6549 + $0xf0] sm:$0xff]
        %v6581 = vld [vmem:[%s6549 + $0xf8] sm:$0xff]
        %v6582 = vld [vmem:[%s6549 + $0x100] sm:$0xff]
        %v6583 = vld [vmem:[%s6549 + $0x108] sm:$0xff]
        %v6584 = vld [vmem:[%s6549 + $0x110] sm:$0xff]
        %v6585 = vld [vmem:[%s6549 + $0x118] sm:$0xff]
        %v6586 = vld [vmem:[%s6549 + $0x120] sm:$0xff]
        %v6587 = vld [vmem:[%s6549 + $0x128] sm:$0xff]
        %v6588 = vld [vmem:[%s6549 + $0x130] sm:$0xff]
        %v6589 = vld [vmem:[%s6549 + $0x138] sm:$0xff]
        %v6590 = vld [vmem:[%s6549 + $0x140] sm:$0xff]
        %v6591 = vld [vmem:[%s6549 + $0x148] sm:$0xff]
        %v6592 = vld [vmem:[%s6549 + $0x150] sm:$0xff]
        %v6593 = vld [vmem:[%s6549 + $0x158] sm:$0xff]
        %v6594 = vld [vmem:[%s6549 + $0x160] sm:$0xff]
        %v6595 = vld [vmem:[%s6549 + $0x168] sm:$0xff]
        %v6596 = vld [vmem:[%s6549 + $0x170] sm:$0xff]
        %v6597 = vld [vmem:[%s6549 + $0x178] sm:$0xff]
        %v6598 = vld [vmem:[%s6549 + $0x180] sm:$0xff]
        %v6599 = vld [vmem:[%s6549 + $0x188] sm:$0xff]
        %v6600 = vld [vmem:[%s6549 + $0x190] sm:$0xff]
        %v6601 = vld [vmem:[%s6549 + $0x198] sm:$0xff]
        %v6602 = vld [vmem:[%s6549 + $0x1a0] sm:$0xff]
        %v6603 = vld [vmem:[%s6549 + $0x1a8] sm:$0xff]
        %v6604 = vld [vmem:[%s6549 + $0x1b0] sm:$0xff]
        %v6605 = vld [vmem:[%s6549 + $0x1b8] sm:$0xff]
        %v6606 = vld [vmem:[%s6549 + $0x1c0] sm:$0xff]
        %v6607 = vld [vmem:[%s6549 + $0x1c8] sm:$0xff]
        %v6608 = vld [vmem:[%s6549 + $0x1d0] sm:$0xff]
        %v6609 = vld [vmem:[%s6549 + $0x1d8] sm:$0xff]
        %v6610 = vld [vmem:[%s6549 + $0x1e0] sm:$0xff]
        %v6611 = vld [vmem:[%s6549 + $0x1e8] sm:$0xff]
        %v6612 = vld [vmem:[%s6549 + $0x1f0] sm:$0xff]
        %v6613 = vld [vmem:[%s6549 + $0x1f8] sm:$0xff]
        %v6614 = vld [vmem:[%s6549 + $0x200] sm:$0xff]
        %v6615 = vld [vmem:[%s6549 + $0x208] sm:$0xff]
        %v6616 = vld [vmem:[%s6549 + $0x210] sm:$0xff]
        %v6617 = vld [vmem:[%s6549 + $0x218] sm:$0xff]
        %v6618 = vld [vmem:[%s6549 + $0x220] sm:$0xff]
        %v6619 = vld [vmem:[%s6549 + $0x228] sm:$0xff]
        %v6620 = vld [vmem:[%s6549 + $0x230] sm:$0xff]
        %v6621 = vld [vmem:[%s6549 + $0x238] sm:$0xff]
        %v6622 = vld [vmem:[%s6549 + $0x240] sm:$0xff]
        %v6623 = vld [vmem:[%s6549 + $0x248] sm:$0xff]
        %v6624 = vld [vmem:[%s6549 + $0x250] sm:$0xff]
        %v6625 = vld [vmem:[%s6549 + $0x258] sm:$0xff]
        %v6626 = vld [vmem:[%s6549 + $0x260] sm:$0xff]
        %v6627 = vld [vmem:[%s6549 + $0x268] sm:$0xff]
        %v6628 = vld [vmem:[%s6549 + $0x270] sm:$0xff]
        %v6629 = vld [vmem:[%s6549 + $0x278] sm:$0xff]
        %v6630 = vld [vmem:[%s6549 + $0x280] sm:$0xff]
        %v6631 = vld [vmem:[%s6549 + $0x288] sm:$0xff]
        %v6632 = vld [vmem:[%s6549 + $0x290] sm:$0xff]
        %v6633 = vld [vmem:[%s6549 + $0x298] sm:$0xff]
        %v6634 = vld [vmem:[%s6549 + $0x2a0] sm:$0xff]
        %v6635 = vld [vmem:[%s6549 + $0x2a8] sm:$0xff]
        %v6636 = vld [vmem:[%s6549 + $0x2b0] sm:$0xff]
        %v6637 = vld [vmem:[%s6549 + $0x2b8] sm:$0xff]
        %v6638 = vld [vmem:[%s6549 + $0x2c0] sm:$0xff]
        %v6639 = vld [vmem:[%s6549 + $0x2c8] sm:$0xff]
        %v6640 = vld [vmem:[%s6549 + $0x2d0] sm:$0xff]
        %v6641 = vld [vmem:[%s6549 + $0x2d8] sm:$0xff]
        %v6642 = vld [vmem:[%s6549 + $0x2e0] sm:$0xff]
        %v6643 = vld [vmem:[%s6549 + $0x2e8] sm:$0xff]
        %v6644 = vld [vmem:[%s6549 + $0x2f0] sm:$0xff]
        %v6645 = vld [vmem:[%s6549 + $0x2f8] sm:$0xff]
        %v6646 = vld [vmem:[%s6549 + $0x300] sm:$0xff]
        %v6647 = vld [vmem:[%s6549 + $0x308] sm:$0xff]
        %v6648 = vld [vmem:[%s6549 + $0x310] sm:$0xff]
        %v6649 = vld [vmem:[%s6549 + $0x318] sm:$0xff]
        %v6650 = vld [vmem:[%s6549 + $0x320] sm:$0xff]
        %v6651 = vld [vmem:[%s6549 + $0x328] sm:$0xff]
        %v6652 = vld [vmem:[%s6549 + $0x330] sm:$0xff]
        %v6653 = vld [vmem:[%s6549 + $0x338] sm:$0xff]
        %v6654 = vld [vmem:[%s6549 + $0x340] sm:$0xff]
        %v6655 = vld [vmem:[%s6549 + $0x348] sm:$0xff]
        %v6656 = vld [vmem:[%s6549 + $0x350] sm:$0xff]
        %v6657 = vld [vmem:[%s6549 + $0x358] sm:$0xff]
        %v6658 = vld [vmem:[%s6549 + $0x360] sm:$0xff]
        %v6659 = vld [vmem:[%s6549 + $0x368] sm:$0xff]
        %v6660 = vld [vmem:[%s6549 + $0x370] sm:$0xff]
        %v6661 = vld [vmem:[%s6549 + $0x378] sm:$0xff]
        %v6662 = vld [vmem:[%s6549 + $0x380] sm:$0xff]
        %v6663 = vld [vmem:[%s6549 + $0x388] sm:$0xff]
        %v6664 = vld [vmem:[%s6549 + $0x390] sm:$0xff]
        %v6665 = vld [vmem:[%s6549 + $0x398] sm:$0xff]
        %v6666 = vld [vmem:[%s6549 + $0x3a0] sm:$0xff]
        %v6667 = vld [vmem:[%s6549 + $0x3a8] sm:$0xff]
        %v6668 = vld [vmem:[%s6549 + $0x3b0] sm:$0xff]
        %v6669 = vld [vmem:[%s6549 + $0x3b8] sm:$0xff]
        %v6670 = vld [vmem:[%s6549 + $0x3c0] sm:$0xff]
        %v6671 = vld [vmem:[%s6549 + $0x3c8] sm:$0xff]
        %v6672 = vld [vmem:[%s6549 + $0x3d0] sm:$0xff]
        %v6673 = vld [vmem:[%s6549 + $0x3d8] sm:$0xff]
        %v6674 = vld [vmem:[%s6549 + $0x3e0] sm:$0xff]
        %v6675 = vld [vmem:[%s6549 + $0x3e8] sm:$0xff]
        %v6676 = vld [vmem:[%s6549 + $0x3f0] sm:$0xff]
        %v6677 = vld [vmem:[%s6549 + $0x3f8] sm:$0xff]
        %v6678 = vrot.slane %v5721, 3
        %v6679 = vrot.slane %v5722, 3
        %6682 = vmatprep.subr.mxu0 %v6611
        %6683 = vmatpush1.msra.mxu0 %v6610
        %6684 = vmatprep.subr.mxu0 %v6607
        %6685 = vmatpush1.msra.mxu0 %v6606
        %6686 = vmatprep.subr.mxu0 %v6603
        %6687 = vmatpush1.msra.mxu0 %v6602
        %6688 = vmatprep.subr.mxu0 %v6599
        %6689 = vmatpush1.msra.mxu0 %v6598
        %6690 = vmatprep.subr.mxu0 %v6595
        %6691 = vmatpush1.msra.mxu0 %v6594
        %6692 = vmatprep.subr.mxu0 %v6591
        %6693 = vmatpush1.msra.mxu0 %v6590
        %6694 = vmatprep.subr.mxu0 %v6587
        %6695 = vmatpush1.msra.mxu0 %v6586
        %6696 = vmatprep.subr.mxu0 %v6583
        %6697 = vmatpush1.msra.mxu0 %v6582
        %6698 = vmatprep.subr.mxu0 %v6579
        %6699 = vmatpush1.msra.mxu0 %v6578
        %6700 = vmatprep.subr.mxu0 %v6575
        %6701 = vmatpush1.msra.mxu0 %v6574
        %6702 = vmatprep.subr.mxu0 %v6571
        %6703 = vmatpush1.msra.mxu0 %v6570
        %6704 = vmatprep.subr.mxu0 %v6567
        %6705 = vmatpush1.msra.mxu0 %v6566
        %6706 = vmatprep.subr.mxu0 %v6563
        %6707 = vmatpush1.msra.mxu0 %v6562
        %6708 = vmatprep.subr.mxu0 %v6559
        %6709 = vmatpush1.msra.mxu0 %v6558
        %6710 = vmatprep.subr.mxu0 %v6555
        %6711 = vmatpush1.msra.mxu0 %v6554
        %6712 = vmatprep.subr.mxu0 %v6551
        %6713 = vmatpush1.msra.mxu0 %v6550
        %6714 = vmatprep.subr.mxu0 %v6675
        %6715 = vmatpush2.msra.mxu0 %v6674
        %6716 = vmatprep.subr.mxu0 %v6671
        %6717 = vmatpush2.msra.mxu0 %v6670
        %6718 = vmatprep.subr.mxu0 %v6667
        %6719 = vmatpush2.msra.mxu0 %v6666
        %6720 = vmatprep.subr.mxu0 %v6663
        %6721 = vmatpush2.msra.mxu0 %v6662
        %6722 = vmatprep.subr.mxu0 %v6659
        %6723 = vmatpush2.msra.mxu0 %v6658
        %6724 = vmatprep.subr.mxu0 %v6655
        %6725 = vmatpush2.msra.mxu0 %v6654
        %6726 = vmatprep.subr.mxu0 %v6651
        %6727 = vmatpush2.msra.mxu0 %v6650
        %6728 = vmatprep.subr.mxu0 %v6647
        %6729 = vmatpush2.msra.mxu0 %v6646
        %6730 = vmatprep.subr.mxu0 %v6643
        %6731 = vmatpush2.msra.mxu0 %v6642
        %6732 = vmatprep.subr.mxu0 %v6639
        %6733 = vmatpush2.msra.mxu0 %v6638
        %6734 = vmatprep.subr.mxu0 %v6635
        %6735 = vmatpush2.msra.mxu0 %v6634
        %6736 = vmatprep.subr.mxu0 %v6631
        %6737 = vmatpush2.msra.mxu0 %v6630
        %6738 = vmatprep.subr.mxu0 %v6627
        %6739 = vmatpush2.msra.mxu0 %v6626
        %6740 = vmatprep.subr.mxu0 %v6623
        %6741 = vmatpush2.msra.mxu0 %v6622
        %6742 = vmatprep.subr.mxu0 %v6619
        %6743 = vmatpush2.msra.mxu0 %v6618
        %6744 = vmatprep.subr.mxu0 %v6615
        %6745 = vmatpush2.msra.mxu0 %v6614
        %6746 = vmatprep.mubr.f32.mxu0 %v6679
        %6747 = vmatmul.mubr.f32.gmra.mxu0 %v6678
        %v6748 = vpop.f32.mrf.mxu0
        %v6749 = vadd.f32 0.0, %v6748
        %v6750 = vpop.f32.mrf.mxu0
        %v6751 = vadd.f32 0.0, %v6750
        %6752 = vdwg.mxu0
        %6753 = vmatprep.subr.mxu0 %v6613
        %6754 = vmatpush1.msra.mxu0 %v6612
        %6755 = vmatprep.subr.mxu0 %v6609
        %6756 = vmatpush1.msra.mxu0 %v6608
        %6757 = vmatprep.subr.mxu0 %v6605
        %6758 = vmatpush1.msra.mxu0 %v6604
        %6759 = vmatprep.subr.mxu0 %v6601
        %6760 = vmatpush1.msra.mxu0 %v6600
        %6761 = vmatprep.subr.mxu0 %v6597
        %6762 = vmatpush1.msra.mxu0 %v6596
        %6763 = vmatprep.subr.mxu0 %v6593
        %6764 = vmatpush1.msra.mxu0 %v6592
        %6765 = vmatprep.subr.mxu0 %v6589
        %6766 = vmatpush1.msra.mxu0 %v6588
        %6767 = vmatprep.subr.mxu0 %v6585
        %6768 = vmatpush1.msra.mxu0 %v6584
        %6769 = vmatprep.subr.mxu0 %v6581
        %6770 = vmatpush1.msra.mxu0 %v6580
        %6771 = vmatprep.subr.mxu0 %v6577
        %6772 = vmatpush1.msra.mxu0 %v6576
        %6773 = vmatprep.subr.mxu0 %v6573
        %6774 = vmatpush1.msra.mxu0 %v6572
        %6775 = vmatprep.subr.mxu0 %v6569
        %6776 = vmatpush1.msra.mxu0 %v6568
        %6777 = vmatprep.subr.mxu0 %v6565
        %6778 = vmatpush1.msra.mxu0 %v6564
        %6779 = vmatprep.subr.mxu0 %v6561
        %6780 = vmatpush1.msra.mxu0 %v6560
        %6781 = vmatprep.subr.mxu0 %v6557
        %6782 = vmatpush1.msra.mxu0 %v6556
        %6783 = vmatprep.subr.mxu0 %v6553
        %6784 = vmatpush1.msra.mxu0 %v6552
        %6785 = vmatprep.subr.mxu0 %v6677
        %6786 = vmatpush2.msra.mxu0 %v6676
        %6787 = vmatprep.subr.mxu0 %v6673
        %6788 = vmatpush2.msra.mxu0 %v6672
        %6789 = vmatprep.subr.mxu0 %v6669
        %6790 = vmatpush2.msra.mxu0 %v6668
        %6791 = vmatprep.subr.mxu0 %v6665
        %6792 = vmatpush2.msra.mxu0 %v6664
        %6793 = vmatprep.subr.mxu0 %v6661
        %6794 = vmatpush2.msra.mxu0 %v6660
        %6795 = vmatprep.subr.mxu0 %v6657
        %6796 = vmatpush2.msra.mxu0 %v6656
        %6797 = vmatprep.subr.mxu0 %v6653
        %6798 = vmatpush2.msra.mxu0 %v6652
        %6799 = vmatprep.subr.mxu0 %v6649
        %6800 = vmatpush2.msra.mxu0 %v6648
        %6801 = vmatprep.subr.mxu0 %v6645
        %6802 = vmatpush2.msra.mxu0 %v6644
        %6803 = vmatprep.subr.mxu0 %v6641
        %6804 = vmatpush2.msra.mxu0 %v6640
        %6805 = vmatprep.subr.mxu0 %v6637
        %6806 = vmatpush2.msra.mxu0 %v6636
        %6807 = vmatprep.subr.mxu0 %v6633
        %6808 = vmatpush2.msra.mxu0 %v6632
        %6809 = vmatprep.subr.mxu0 %v6629
        %6810 = vmatpush2.msra.mxu0 %v6628
        %6811 = vmatprep.subr.mxu0 %v6625
        %6812 = vmatpush2.msra.mxu0 %v6624
        %6813 = vmatprep.subr.mxu0 %v6621
        %6814 = vmatpush2.msra.mxu0 %v6620
        %6815 = vmatprep.subr.mxu0 %v6617
        %6816 = vmatpush2.msra.mxu0 %v6616
        %6817 = vmatprep.mubr.f32.mxu0 %v6679
        %6818 = vmatmul.mubr.f32.gmra.mxu0 %v6678
        %v6819 = vpop.f32.mrf.mxu0
        %v6820 = vadd.f32 0.0, %v6819
        %v6821 = vpop.f32.mrf.mxu0
        %v6822 = vadd.f32 0.0, %v6821
        %6823 = vdwg.mxu0
        %v6824 = vadd.f32 %v6545, %v6749
        %v6825 = vadd.f32 %v6546, %v6751
        %v6826 = vadd.f32 %v6547, %v6820
        %v6827 = vadd.f32 %v6548, %v6822
        %v6828 = vld [vmem:[#allocation11] sm:$0xf]
        %v6830 = vlaneseq
        %v6831 = vshrl.u32 %v6830, 7
        %v6832 = vsub.s32 0, %v6831
        %v6833 = vrot.slane %v6828, %v6832
        %v6834 = vlaneseq
        %v6835 = vshrl.u32 %v6834, 7
        %v6836 = vsub.s32 1, %v6835
        %v6837 = vrot.slane %v6828, %v6836
        %v6838 = vlaneseq
        %v6839 = vshrl.u32 %v6838, 7
        %v6840 = vsub.s32 2, %v6839
        %v6841 = vrot.slane %v6828, %v6840
        %v6842 = vlaneseq
        %v6843 = vshrl.u32 %v6842, 7
        %v6844 = vsub.s32 3, %v6843
        %v6845 = vrot.slane %v6828, %v6844
        %v6850 = vadd.f32 %v6824, %v6833
        %v6851 = vadd.f32 %v6825, %v6837
        %v6852 = vadd.f32 %v6826, %v6841
        %v6853 = vadd.f32 %v6827, %v6845
        %v6854 = vmax.f32 %v6850, 0.0
        %v6855 = vmax.f32 %v6851, 0.0
        %v6856 = vmax.f32 %v6852, 0.0
        %v6857 = vmax.f32 %v6853, 0.0
        %v6858 = vld [vmem:[#allocation13] sm:$0xff]
        %v6859 = vld [vmem:[#allocation13 + $0x8] sm:$0xff]
        %v6860 = vld [vmem:[#allocation13 + $0x10] sm:$0xff]
        %v6861 = vld [vmem:[#allocation13 + $0x18] sm:$0xff]
        %v6862 = vld [vmem:[#allocation13 + $0x20] sm:$0xff]
        %v6863 = vld [vmem:[#allocation13 + $0x28] sm:$0xff]
        %v6864 = vld [vmem:[#allocation13 + $0x30] sm:$0xff]
        %v6865 = vld [vmem:[#allocation13 + $0x38] sm:$0xff]
        %v6866 = vld [vmem:[#allocation13 + $0x40] sm:$0xff]
        %v6867 = vld [vmem:[#allocation13 + $0x48] sm:$0xff]
        %v6868 = vld [vmem:[#allocation13 + $0x50] sm:$0xff]
        %v6869 = vld [vmem:[#allocation13 + $0x58] sm:$0xff]
        %v6870 = vld [vmem:[#allocation13 + $0x60] sm:$0xff]
        %v6871 = vld [vmem:[#allocation13 + $0x68] sm:$0xff]
        %v6872 = vld [vmem:[#allocation13 + $0x70] sm:$0xff]
        %v6873 = vld [vmem:[#allocation13 + $0x78] sm:$0xff]
        %v6874 = vld [vmem:[#allocation13 + $0x80] sm:$0xff]
        %v6875 = vld [vmem:[#allocation13 + $0x88] sm:$0xff]
        %v6876 = vld [vmem:[#allocation13 + $0x90] sm:$0xff]
        %v6877 = vld [vmem:[#allocation13 + $0x98] sm:$0xff]
        %v6878 = vld [vmem:[#allocation13 + $0xa0] sm:$0xff]
        %v6879 = vld [vmem:[#allocation13 + $0xa8] sm:$0xff]
        %v6880 = vld [vmem:[#allocation13 + $0xb0] sm:$0xff]
        %v6881 = vld [vmem:[#allocation13 + $0xb8] sm:$0xff]
        %v6882 = vld [vmem:[#allocation13 + $0xc0] sm:$0xff]
        %v6883 = vld [vmem:[#allocation13 + $0xc8] sm:$0xff]
        %v6884 = vld [vmem:[#allocation13 + $0xd0] sm:$0xff]
        %v6885 = vld [vmem:[#allocation13 + $0xd8] sm:$0xff]
        %v6886 = vld [vmem:[#allocation13 + $0xe0] sm:$0xff]
        %v6887 = vld [vmem:[#allocation13 + $0xe8] sm:$0xff]
        %v6888 = vld [vmem:[#allocation13 + $0xf0] sm:$0xff]
        %v6889 = vld [vmem:[#allocation13 + $0xf8] sm:$0xff]
        %v6890 = vld [vmem:[#allocation13 + $0x100] sm:$0xff]
        %v6891 = vld [vmem:[#allocation13 + $0x108] sm:$0xff]
        %v6892 = vld [vmem:[#allocation13 + $0x110] sm:$0xff]
        %v6893 = vld [vmem:[#allocation13 + $0x118] sm:$0xff]
        %v6894 = vld [vmem:[#allocation13 + $0x120] sm:$0xff]
        %v6895 = vld [vmem:[#allocation13 + $0x128] sm:$0xff]
        %v6896 = vld [vmem:[#allocation13 + $0x130] sm:$0xff]
        %v6897 = vld [vmem:[#allocation13 + $0x138] sm:$0xff]
        %v6898 = vld [vmem:[#allocation13 + $0x140] sm:$0xff]
        %v6899 = vld [vmem:[#allocation13 + $0x148] sm:$0xff]
        %v6900 = vld [vmem:[#allocation13 + $0x150] sm:$0xff]
        %v6901 = vld [vmem:[#allocation13 + $0x158] sm:$0xff]
        %v6902 = vld [vmem:[#allocation13 + $0x160] sm:$0xff]
        %v6903 = vld [vmem:[#allocation13 + $0x168] sm:$0xff]
        %v6904 = vld [vmem:[#allocation13 + $0x170] sm:$0xff]
        %v6905 = vld [vmem:[#allocation13 + $0x178] sm:$0xff]
        %v6906 = vld [vmem:[#allocation13 + $0x180] sm:$0xff]
        %v6907 = vld [vmem:[#allocation13 + $0x188] sm:$0xff]
        %v6908 = vld [vmem:[#allocation13 + $0x190] sm:$0xff]
        %v6909 = vld [vmem:[#allocation13 + $0x198] sm:$0xff]
        %v6910 = vld [vmem:[#allocation13 + $0x1a0] sm:$0xff]
        %v6911 = vld [vmem:[#allocation13 + $0x1a8] sm:$0xff]
        %v6912 = vld [vmem:[#allocation13 + $0x1b0] sm:$0xff]
        %v6913 = vld [vmem:[#allocation13 + $0x1b8] sm:$0xff]
        %v6914 = vld [vmem:[#allocation13 + $0x1c0] sm:$0xff]
        %v6915 = vld [vmem:[#allocation13 + $0x1c8] sm:$0xff]
        %v6916 = vld [vmem:[#allocation13 + $0x1d0] sm:$0xff]
        %v6917 = vld [vmem:[#allocation13 + $0x1d8] sm:$0xff]
        %v6918 = vld [vmem:[#allocation13 + $0x1e0] sm:$0xff]
        %v6919 = vld [vmem:[#allocation13 + $0x1e8] sm:$0xff]
        %v6920 = vld [vmem:[#allocation13 + $0x1f0] sm:$0xff]
        %v6921 = vld [vmem:[#allocation13 + $0x1f8] sm:$0xff]
        %v6922 = vld [vmem:[#allocation14] sm:$0x1]
        %6923 = vmatprep.subr.mxu0 0.0
        %6924 = vmatpush1.msra.mxu0 %v6873
        %6925 = vmatprep.subr.mxu0 0.0
        %6926 = vmatpush1.msra.mxu0 %v6872
        %6927 = vmatprep.subr.mxu0 0.0
        %6928 = vmatpush1.msra.mxu0 %v6871
        %6929 = vmatprep.subr.mxu0 0.0
        %6930 = vmatpush1.msra.mxu0 %v6870
        %6931 = vmatprep.subr.mxu0 0.0
        %6932 = vmatpush1.msra.mxu0 %v6869
        %6933 = vmatprep.subr.mxu0 0.0
        %6934 = vmatpush1.msra.mxu0 %v6868
        %6935 = vmatprep.subr.mxu0 0.0
        %6936 = vmatpush1.msra.mxu0 %v6867
        %6937 = vmatprep.subr.mxu0 0.0
        %6938 = vmatpush1.msra.mxu0 %v6866
        %6939 = vmatprep.subr.mxu0 0.0
        %6940 = vmatpush1.msra.mxu0 %v6865
        %6941 = vmatprep.subr.mxu0 0.0
        %6942 = vmatpush1.msra.mxu0 %v6864
        %6943 = vmatprep.subr.mxu0 0.0
        %6944 = vmatpush1.msra.mxu0 %v6863
        %6945 = vmatprep.subr.mxu0 0.0
        %6946 = vmatpush1.msra.mxu0 %v6862
        %6947 = vmatprep.subr.mxu0 0.0
        %6948 = vmatpush1.msra.mxu0 %v6861
        %6949 = vmatprep.subr.mxu0 0.0
        %6950 = vmatpush1.msra.mxu0 %v6860
        %6951 = vmatprep.subr.mxu0 0.0
        %6952 = vmatpush1.msra.mxu0 %v6859
        %6953 = vmatprep.subr.mxu0 0.0
        %6954 = vmatpush1.msra.mxu0 %v6858
        %6955 = vmatprep.subr.mxu0 0.0
        %6956 = vmatpush2.msra.mxu0 %v6889
        %6957 = vmatprep.subr.mxu0 0.0
        %6958 = vmatpush2.msra.mxu0 %v6888
        %6959 = vmatprep.subr.mxu0 0.0
        %6960 = vmatpush2.msra.mxu0 %v6887
        %6961 = vmatprep.subr.mxu0 0.0
        %6962 = vmatpush2.msra.mxu0 %v6886
        %6963 = vmatprep.subr.mxu0 0.0
        %6964 = vmatpush2.msra.mxu0 %v6885
        %6965 = vmatprep.subr.mxu0 0.0
        %6966 = vmatpush2.msra.mxu0 %v6884
        %6967 = vmatprep.subr.mxu0 0.0
        %6968 = vmatpush2.msra.mxu0 %v6883
        %6969 = vmatprep.subr.mxu0 0.0
        %6970 = vmatpush2.msra.mxu0 %v6882
        %6971 = vmatprep.subr.mxu0 0.0
        %6972 = vmatpush2.msra.mxu0 %v6881
        %6973 = vmatprep.subr.mxu0 0.0
        %6974 = vmatpush2.msra.mxu0 %v6880
        %6975 = vmatprep.subr.mxu0 0.0
        %6976 = vmatpush2.msra.mxu0 %v6879
        %6977 = vmatprep.subr.mxu0 0.0
        %6978 = vmatpush2.msra.mxu0 %v6878
        %6979 = vmatprep.subr.mxu0 0.0
        %6980 = vmatpush2.msra.mxu0 %v6877
        %6981 = vmatprep.subr.mxu0 0.0
        %6982 = vmatpush2.msra.mxu0 %v6876
        %6983 = vmatprep.subr.mxu0 0.0
        %6984 = vmatpush2.msra.mxu0 %v6875
        %6985 = vmatprep.subr.mxu0 0.0
        %6986 = vmatpush2.msra.mxu0 %v6874
        %6987 = vmatprep.mubr.f32.mxu0 %v6855
        %6988 = vmatmul.mubr.f32.gmra.mxu0 %v6854
        %v6989 = vpop.f32.mrf.mxu0
        %v6990 = vadd.f32 %v6922, %v6989
        %v6991 = vpop.f32.mrf.mxu0
        %6992 = vdwg.mxu0
        %6993 = vmatprep.subr.mxu0 0.0
        %6994 = vmatpush1.msra.mxu0 %v6905
        %6995 = vmatprep.subr.mxu0 0.0
        %6996 = vmatpush1.msra.mxu0 %v6904
        %6997 = vmatprep.subr.mxu0 0.0
        %6998 = vmatpush1.msra.mxu0 %v6903
        %6999 = vmatprep.subr.mxu0 0.0
        %7000 = vmatpush1.msra.mxu0 %v6902
        %7001 = vmatprep.subr.mxu0 0.0
        %7002 = vmatpush1.msra.mxu0 %v6901
        %7003 = vmatprep.subr.mxu0 0.0
        %7004 = vmatpush1.msra.mxu0 %v6900
        %7005 = vmatprep.subr.mxu0 0.0
        %7006 = vmatpush1.msra.mxu0 %v6899
        %7007 = vmatprep.subr.mxu0 0.0
        %7008 = vmatpush1.msra.mxu0 %v6898
        %7009 = vmatprep.subr.mxu0 0.0
        %7010 = vmatpush1.msra.mxu0 %v6897
        %7011 = vmatprep.subr.mxu0 0.0
        %7012 = vmatpush1.msra.mxu0 %v6896
        %7013 = vmatprep.subr.mxu0 0.0
        %7014 = vmatpush1.msra.mxu0 %v6895
        %7015 = vmatprep.subr.mxu0 0.0
        %7016 = vmatpush1.msra.mxu0 %v6894
        %7017 = vmatprep.subr.mxu0 0.0
        %7018 = vmatpush1.msra.mxu0 %v6893
        %7019 = vmatprep.subr.mxu0 0.0
        %7020 = vmatpush1.msra.mxu0 %v6892
        %7021 = vmatprep.subr.mxu0 0.0
        %7022 = vmatpush1.msra.mxu0 %v6891
        %7023 = vmatprep.subr.mxu0 0.0
        %7024 = vmatpush1.msra.mxu0 %v6890
        %7025 = vmatprep.subr.mxu0 0.0
        %7026 = vmatpush2.msra.mxu0 %v6921
        %7027 = vmatprep.subr.mxu0 0.0
        %7028 = vmatpush2.msra.mxu0 %v6920
        %7029 = vmatprep.subr.mxu0 0.0
        %7030 = vmatpush2.msra.mxu0 %v6919
        %7031 = vmatprep.subr.mxu0 0.0
        %7032 = vmatpush2.msra.mxu0 %v6918
        %7033 = vmatprep.subr.mxu0 0.0
        %7034 = vmatpush2.msra.mxu0 %v6917
        %7035 = vmatprep.subr.mxu0 0.0
        %7036 = vmatpush2.msra.mxu0 %v6916
        %7037 = vmatprep.subr.mxu0 0.0
        %7038 = vmatpush2.msra.mxu0 %v6915
        %7039 = vmatprep.subr.mxu0 0.0
        %7040 = vmatpush2.msra.mxu0 %v6914
        %7041 = vmatprep.subr.mxu0 0.0
        %7042 = vmatpush2.msra.mxu0 %v6913
        %7043 = vmatprep.subr.mxu0 0.0
        %7044 = vmatpush2.msra.mxu0 %v6912
        %7045 = vmatprep.subr.mxu0 0.0
        %7046 = vmatpush2.msra.mxu0 %v6911
        %7047 = vmatprep.subr.mxu0 0.0
        %7048 = vmatpush2.msra.mxu0 %v6910
        %7049 = vmatprep.subr.mxu0 0.0
        %7050 = vmatpush2.msra.mxu0 %v6909
        %7051 = vmatprep.subr.mxu0 0.0
        %7052 = vmatpush2.msra.mxu0 %v6908
        %7053 = vmatprep.subr.mxu0 0.0
        %7054 = vmatpush2.msra.mxu0 %v6907
        %7055 = vmatprep.subr.mxu0 0.0
        %7056 = vmatpush2.msra.mxu0 %v6906
        %7057 = vmatprep.mubr.f32.mxu0 %v6857
        %7058 = vmatmul.mubr.f32.gmra.mxu0 %v6856
        %v7059 = vpop.f32.mrf.mxu0
        %v7060 = vadd.f32 %v6990, %v7059
        %v7061 = vpop.f32.mrf.mxu0
        %7062 = vdwg.mxu0
        %vm7063 = vcmask 1040384
        %v7064 = vsel %vm7063, %v7060, -inf
        %7065 = vmax.xlane.f32.xlu0 %v7064
        %v7066 = vpop.xlane.xlu0 %7065
        %v7067 = vsub.f32 %v7060, %v7066
        %v7068 = vmul.f32 %v7067, 1.442695
        %v7069 = vpow.pop %v7068
        %v7070 = vsel %vm7063, %v7069, 0.0
        %7071 = vadd.xlane.f32.xlu0 %v7070
        %v7072 = vpop.xlane.xlu0 %7071
        %v7073 = vlog2.pop %v7072
        %v7074 = vmul.f32 %v7073, 0.6931472
        %v7075 = vsub.f32 %v7067, %v7074
        %7076 = vst [vmem:[%s433] sm:$0x1] %v7075
        %s7077 = sand.u32 %s230, 1
        %s7078 = scalar_lea.sflag [#allocation4], %s7077
        %s7079 = sand.u32 %s230, 1
        %s7080 = scalar_lea.vmem [#allocation16], %s7079
        // Predicated region
        $region89: #{small_cnn_forward.1} parent=55 // pred_check
          %p7081 = pneg %p240
        $region90: #{small_cnn_forward.1} parent=55 // pred_check_branch
          %7083 = sbr.rel (%p7081) target = $region92
        $region91: #{small_cnn_forward.1} parent=55 // pred_region
          %s7085 = ssub.s32 16, 16
          %7086 = vsyncadd %s7078, %s7085
          %s7087 = smul.addr %s28, 16
          %s7088 = scalar_lea.hbm %s9, %s7087
          %s7090 = sshll.u32 %s7080, 4
          %s7091 = int_to_ptr.vmem [resolvable:$true] %s7090
          %7093 = dma.vmem_to_hbm [thread:$0]  %s7091, 16, %s7088, %s7078
        $region92: #{small_cnn_forward.1} parent=55 // pred_fallthru
          _
      $region56: #{small_cnn_forward.1} parent=5 // pred_fallthru
        _
      %p7094 = scmp.le.s32.totalorder 2, %s23
      // Predicated region
      $region93: #{small_cnn_forward.1} parent=5 // pred_check
        %p7095 = pneg %p7094
      $region94: #{small_cnn_forward.1} parent=5 // pred_check_branch
        %7097 = sbr.rel (%p7095) target = $region96
      $region95: #{small_cnn_forward.1} parent=5 // pred_region
        %s7098 = ssub.s32 %s23, 2
        // Predicated region
        $region97: #{small_cnn_forward.1} parent=95 // pred_check
          %p7099 = pneg %p246
        $region98: #{small_cnn_forward.1} parent=95 // pred_check_branch
          %7101 = sbr.rel (%p7099) target = $region100
        $region99: #{small_cnn_forward.1} parent=95 // pred_region
          %s7102 = sand.u32 %s231, 1
          %s7103 = scalar_lea.sflag [#allocation4], %s7102
          %s7104 = sand.u32 %s231, 1
          %s7105 = scalar_lea.vmem [#allocation16], %s7104
          %7106 = dma.done %s7103, 16
        $region100: #{small_cnn_forward.1} parent=95 // pred_fallthru
          _
      $region96: #{small_cnn_forward.1} parent=5 // pred_fallthru
        _
    $region6: #{small_cnn_forward.1} parent=1 // loop_footer
      %s27 = sadd.s32 1, %s23
    $region7: #{small_cnn_forward.1} parent=1 // loop_footer_branch
      %22 = sbr.rel target = $region3
    $region8: #{small_cnn_forward.1} parent=1 // loop_exit
      _
    %7107 = vsyncpa [#allocation3], 1
    %s7108 = scalar_lea.sflag [#allocation3], 1
    %7109 = vsyncpa %s7108, 1
    %7110 = vsyncpa [#allocation6], 1
    %7111 = vsyncpa [#allocation9], 1
    %7112 = vsyncpa [#allocation12], 1
    %7113 = vsyncpa [#allocation15], 1
    %7114 = vsyncpa [#allocation4], 1
    %s7115 = scalar_lea.sflag [#allocation4], 1
    %7116 = vsyncpa %s7115, 1

</llo_original>
